<compile_context>
chip_gen: v7x
topology: tpu7x:2x2x1
jax: 0.10.0
libtpu: 0.0.40
codegen_flags: <defaults>
</compile_context>

<pallas_src>
import jax
import jax.numpy as jnp
from jax.experimental import pallas as pl
from jax.experimental.pallas import tpu as pltpu


# ----------------------------------------------------------------------------
# Fused Inception kernel (one batch element per grid step)
# ----------------------------------------------------------------------------
def make_inception_kernel(H, W, Cin, C1, C3r, C3, C5r, C5, Cp):
    M = H * W
    Ct = C1 + C3 + C5 + Cp

    def dense_relu(a2d_f32, w_ref, b_ref):
        # a2d_f32: (M, K) f32, w_ref: (K, Cout) bf16, b_ref: (1, Cout) f32
        y = jnp.dot(a2d_f32.astype(jnp.bfloat16), w_ref[...],
                    preferred_element_type=jnp.float32)
        return jnp.maximum(y + b_ref[...], 0.0)

    def kernel(x_ref,
               w1_ref, b1_ref,
               w3r_ref, b3r_ref, w3_ref, b3_ref,
               w5r_ref, b5r_ref, w5_ref, b5_ref,
               wp_ref, bp_ref,
               o_ref,
               pad3_ref, pad5_ref, padp_ref,
               patch3_ref, patch5_ref):
        x = x_ref[0]                       # (H, W, Cin) f32
        x2d = x.reshape(M, Cin)            # rows = pixels, lanes = channels

        # ---- branch 1: 1x1 conv + ReLU ------------------------------------
        out1 = dense_relu(x2d, w1_ref, b1_ref)                    # (M, C1)

        # ---- KxK conv via im2col: pad in VMEM, build (M, K*K*C) patch mat,
        #      single MXU matmul, bias + ReLU --------------------------------
        def conv_kxk(r2d, K, C, pad_ref, patch_ref, w_ref, b_ref):
            p = (K - 1) // 2
            pad_ref[...] = jnp.zeros(pad_ref.shape, jnp.float32)
            pad_ref[p:p + H, p:p + W, :] = r2d.reshape(H, W, C)
            t = 0
            for dh in range(K):
                for dw in range(K):
                    tap = pad_ref[dh:dh + H, dw:dw + W, :].reshape(M, C)
                    patch_ref[:, t * C:(t + 1) * C] = tap
                    t += 1
            return dense_relu(patch_ref[...], w_ref, b_ref)

        # ---- branch 2: 1x1 reduce -> 3x3 -----------------------------------
        r3 = dense_relu(x2d, w3r_ref, b3r_ref)                    # (M, C3r)
        out3 = conv_kxk(r3, 3, C3r, pad3_ref, patch3_ref, w3_ref, b3_ref)

        # ---- branch 3: 1x1 reduce -> 5x5 -----------------------------------
        r5 = dense_relu(x2d, w5r_ref, b5r_ref)                    # (M, C5r)
        out5 = conv_kxk(r5, 5, C5r, pad5_ref, patch5_ref, w5_ref, b5_ref)

        # ---- branch 4: maxpool(3,1,1) -> 1x1 conv ---------------------------
        padp_ref[...] = jnp.full(padp_ref.shape, -jnp.inf, jnp.float32)
        padp_ref[1:1 + H, 1:1 + W, :] = x
        pooled = padp_ref[0:H, 0:W, :]
        for dh in range(3):
            for dw in range(3):
                if dh == 0 and dw == 0:
                    continue
                pooled = jnp.maximum(pooled, padp_ref[dh:dh + H, dw:dw + W, :])
        outp = dense_relu(pooled.reshape(M, Cin), wp_ref, bp_ref)  # (M, Cp)

        # ---- write each branch directly into its channel slab --------------
        o_ref[0, :, 0:C1] = out1
        o_ref[0, :, C1:C1 + C3] = out3
        o_ref[0, :, C1 + C3:C1 + C3 + C5] = out5
        o_ref[0, :, C1 + C3 + C5:Ct] = outp

    return kernel


# ----------------------------------------------------------------------------
# Inception forward (NCHW in / NCHW out, matching the PyTorch module)
# ----------------------------------------------------------------------------
@jax.jit
def inception_forward(x_nchw, params):
    N, Cin, H, W = x_nchw.shape
    x = jnp.transpose(x_nchw, (0, 2, 3, 1))          # -> NHWC
    M = H * W

    w1 = params["w1x1"][0, 0];  C1 = w1.shape[-1]
    w3r = params["w3r"][0, 0];  C3r = w3r.shape[-1]
    w3 = params["w3"];          C3 = w3.shape[-1]
    w5r = params["w5r"][0, 0];  C5r = w5r.shape[-1]
    w5 = params["w5"];          C5 = w5.shape[-1]
    wp = params["wp"][0, 0];    Cp = wp.shape[-1]
    Ct = C1 + C3 + C5 + Cp

    bf16 = jnp.bfloat16
    w1b = w1.astype(bf16)
    w3rb = w3r.astype(bf16)
    w3b = w3.reshape(9 * C3r, C3).astype(bf16)        # im2col (kh,kw,cin) order
    w5rb = w5r.astype(bf16)
    w5b = w5.reshape(25 * C5r, C5).astype(bf16)
    wpb = wp.astype(bf16)

    b1 = params["b1x1"].reshape(1, C1)
    b3r = params["b3r"].reshape(1, C3r)
    b3 = params["b3"].reshape(1, C3)
    b5r = params["b5r"].reshape(1, C5r)
    b5 = params["b5"].reshape(1, C5)
    bp = params["bp"].reshape(1, Cp)

    def rep0(shape):
        nd = len(shape)
        return pl.BlockSpec(shape, lambda n, nd=nd: (0,) * nd)

    kernel = make_inception_kernel(H, W, Cin, C1, C3r, C3, C5r, C5, Cp)

    out = pl.pallas_call(
        kernel,
        out_shape=jax.ShapeDtypeStruct((N, M, Ct), jnp.float32),
        grid=(N,),
        in_specs=[
            pl.BlockSpec((1, H, W, Cin), lambda n: (n, 0, 0, 0)),
            rep0((Cin, C1)), rep0((1, C1)),
            rep0((Cin, C3r)), rep0((1, C3r)),
            rep0((9 * C3r, C3)), rep0((1, C3)),
            rep0((Cin, C5r)), rep0((1, C5r)),
            rep0((25 * C5r, C5)), rep0((1, C5)),
            rep0((Cin, Cp)), rep0((1, Cp)),
        ],
        out_specs=pl.BlockSpec((1, M, Ct), lambda n: (n, 0, 0)),
        scratch_shapes=[
            pltpu.VMEM((H + 2, W + 2, C3r), jnp.float32),   # zero-padded r3
            pltpu.VMEM((H + 4, W + 4, C5r), jnp.float32),   # zero-padded r5
            pltpu.VMEM((H + 2, W + 2, Cin), jnp.float32),   # -inf-padded x (pool)
            pltpu.VMEM((M, 9 * C3r), jnp.float32),          # im2col patches 3x3
            pltpu.VMEM((M, 25 * C5r), jnp.float32),         # im2col patches 5x5
        ],
        compiler_params=pltpu.CompilerParams(
            dimension_semantics=("parallel",)),
    )(x, w1b, b1, w3rb, b3r, w3b, b3, w5rb, b5r, w5b, b5, wpb, bp)

    out = out.reshape(N, H, W, Ct)
    return jnp.transpose(out, (0, 3, 1, 2))           # back to NCHW


# ----------------------------------------------------------------------------
# Pure-JAX reference (correctness sanity check)
# ----------------------------------------------------------------------------
def _ref_conv_relu(x_nhwc, w, b, pad):
    y = jax.lax.conv_general_dilated(
        x_nhwc, w, window_strides=(1, 1),
        padding=[(pad, pad), (pad, pad)],
        dimension_numbers=("NHWC", "HWIO", "NHWC"))
    return jax.nn.relu(y + b)


def _ref_forward(x_nchw, p):
    x = jnp.transpose(x_nchw, (0, 2, 3, 1))
    b1 = _ref_conv_relu(x, p["w1x1"], p["b1x1"], 0)
    b3 = _ref_conv_relu(_ref_conv_relu(x, p["w3r"], p["b3r"], 0), p["w3"], p["b3"], 1)
    b5 = _ref_conv_relu(_ref_conv_relu(x, p["w5r"], p["b5r"], 0), p["w5"], p["b5"], 2)
    pooled = jax.lax.reduce_window(
        x, -jnp.inf, jax.lax.max, (1, 3, 3, 1), (1, 1, 1, 1),
        padding=[(0, 0), (1, 1), (1, 1), (0, 0)])
    bp = _ref_conv_relu(pooled, p["wp"], p["bp"], 0)
    out = jnp.concatenate([b1, b3, b5, bp], axis=-1)
    return jnp.transpose(out, (0, 3, 1, 2))


# ----------------------------------------------------------------------------
# Deterministic parameter init (PyTorch Conv2d default-style uniform)
# ----------------------------------------------------------------------------
def init_conv(key, K, Cin, Cout):
    kw, kb = jax.random.split(key)
    bound = 1.0 / float(Cin * K * K) ** 0.5
    w = jax.random.uniform(kw, (K, K, Cin, Cout), jnp.float32, -bound, bound)
    b = jax.random.uniform(kb, (Cout,), jnp.float32, -bound, bound)
    return w, b


if __name__ == "__main__":
    key = jax.random.PRNGKey(0)
    keys = jax.random.split(key, 7)

    # Inception(in_channels=4, ch1_1=8, ch1_2=8, ch2_1=8, ch2_2=16, ch2_3=8, ch2_4=8)
    in_ch, ch1_1, ch1_2 = 4, 8, 8
    ch2_1, ch2_2, ch2_3, ch2_4 = 8, 16, 8, 8

    x = jax.random.normal(keys[0], (2, in_ch, 16, 16), jnp.float32)  # NCHW

    params = {}
    params["w1x1"], params["b1x1"] = init_conv(keys[1], 1, in_ch, ch2_1)
    params["w3r"], params["b3r"] = init_conv(keys[2], 1, in_ch, ch1_1)
    params["w3"], params["b3"] = init_conv(keys[3], 3, ch1_1, ch2_2)
    params["w5r"], params["b5r"] = init_conv(keys[4], 1, in_ch, ch1_2)
    params["w5"], params["b5"] = init_conv(keys[5], 5, ch1_2, ch2_3)
    params["wp"], params["bp"] = init_conv(keys[6], 1, in_ch, ch2_4)

    out = inception_forward(x, params)
    jax.block_until_ready(out)

    expected_channels = ch2_1 + ch2_2 + ch2_3 + ch2_4
    assert out.shape == (2, expected_channels, 16, 16), out.shape

    ref = _ref_forward(x, params)
    # bf16 MXU inputs with f32 accumulation -> slightly looser tolerance.
    assert jnp.allclose(out, ref, atol=2e-2, rtol=2e-2), (
        float(jnp.max(jnp.abs(out - ref))))

    print("KERNEL_OK")
</pallas_src>

<mosaic_0001>
module attributes {stable_mosaic.version = 11 : i64} {
  func.func @kernel(%arg0: i32, %arg1: memref<1x16x16x4xf32, #tpu.memory_space<vmem>>, %arg2: memref<4x8xbf16, #tpu.memory_space<vmem>>, %arg3: memref<1x8xf32, #tpu.memory_space<vmem>>, %arg4: memref<4x8xbf16, #tpu.memory_space<vmem>>, %arg5: memref<1x8xf32, #tpu.memory_space<vmem>>, %arg6: memref<72x16xbf16, #tpu.memory_space<vmem>>, %arg7: memref<1x16xf32, #tpu.memory_space<vmem>>, %arg8: memref<4x8xbf16, #tpu.memory_space<vmem>>, %arg9: memref<1x8xf32, #tpu.memory_space<vmem>>, %arg10: memref<200x8xbf16, #tpu.memory_space<vmem>>, %arg11: memref<1x8xf32, #tpu.memory_space<vmem>>, %arg12: memref<4x8xbf16, #tpu.memory_space<vmem>>, %arg13: memref<1x8xf32, #tpu.memory_space<vmem>>, %arg14: memref<1x256x40xf32, #tpu.memory_space<vmem>>, %arg15: memref<18x18x8xf32, #tpu.memory_space<vmem>>, %arg16: memref<20x20x8xf32, #tpu.memory_space<vmem>>, %arg17: memref<18x18x4xf32, #tpu.memory_space<vmem>>, %arg18: memref<256x72xf32, #tpu.memory_space<vmem>>, %arg19: memref<256x200xf32, #tpu.memory_space<vmem>>) attributes {dimension_semantics = [#tpu.dimension_semantics<parallel>], iteration_bounds = array<i64: 2>, scalar_prefetch = 0 : i64, scratch_operands = 5 : i64, tpu.core_type = #tpu.core_type<tc>, window_params = [{transform_indices = @transform_0, window_bounds = array<i64: 1, 16, 16, 4>}, {pipeline_mode = #tpu.pipeline_mode<synchronous>, transform_indices = @transform_1, window_bounds = array<i64: 4, 8>}, {pipeline_mode = #tpu.pipeline_mode<synchronous>, transform_indices = @transform_2, window_bounds = array<i64: 1, 8>}, {pipeline_mode = #tpu.pipeline_mode<synchronous>, transform_indices = @transform_3, window_bounds = array<i64: 4, 8>}, {pipeline_mode = #tpu.pipeline_mode<synchronous>, transform_indices = @transform_4, window_bounds = array<i64: 1, 8>}, {pipeline_mode = #tpu.pipeline_mode<synchronous>, transform_indices = @transform_5, window_bounds = array<i64: 72, 16>}, {pipeline_mode = #tpu.pipeline_mode<synchronous>, transform_indices = @transform_6, window_bounds = array<i64: 1, 16>}, {pipeline_mode = #tpu.pipeline_mode<synchronous>, transform_indices = @transform_7, window_bounds = array<i64: 4, 8>}, {pipeline_mode = #tpu.pipeline_mode<synchronous>, transform_indices = @transform_8, window_bounds = array<i64: 1, 8>}, {pipeline_mode = #tpu.pipeline_mode<synchronous>, transform_indices = @transform_9, window_bounds = array<i64: 200, 8>}, {pipeline_mode = #tpu.pipeline_mode<synchronous>, transform_indices = @transform_10, window_bounds = array<i64: 1, 8>}, {pipeline_mode = #tpu.pipeline_mode<synchronous>, transform_indices = @transform_11, window_bounds = array<i64: 4, 8>}, {pipeline_mode = #tpu.pipeline_mode<synchronous>, transform_indices = @transform_12, window_bounds = array<i64: 1, 8>}, {transform_indices = @transform_13, window_bounds = array<i64: 1, 256, 40>}]} {
    %c0 = arith.constant 0 : index
    %c0_0 = arith.constant 0 : index
    %c0_1 = arith.constant 0 : index
    %c0_2 = arith.constant 0 : index
    %0 = vector.load %arg1[%c0, %c0_0, %c0_1, %c0_2] : memref<1x16x16x4xf32, #tpu.memory_space<vmem>>, vector<1x16x16x4xf32>
    %1 = vector.shape_cast %0 : vector<1x16x16x4xf32> to vector<16x16x4xf32>
    %2 = vector.shape_cast %1 : vector<16x16x4xf32> to vector<256x4xf32>
    %3 = arith.truncf %2 : vector<256x4xf32> to vector<256x4xbf16>
    %c0_3 = arith.constant 0 : index
    %c0_4 = arith.constant 0 : index
    %4 = vector.load %arg2[%c0_3, %c0_4] : memref<4x8xbf16, #tpu.memory_space<vmem>>, vector<4x8xbf16>
    %cst = arith.constant dense<0.000000e+00> : vector<256x8xf32>
    %5 = tpu.matmul %3, %4, %cst {dimension_numbers = #tpu.dot_dimension_numbers<[1], [0], [0], [1], [0, 0, 1, 1], [], []>} : vector<256x4xbf16>, vector<4x8xbf16>, vector<256x8xf32> -> vector<256x8xf32>
    %c0_5 = arith.constant 0 : index
    %c0_6 = arith.constant 0 : index
    %6 = vector.load %arg3[%c0_5, %c0_6] : memref<1x8xf32, #tpu.memory_space<vmem>>, vector<1x8xf32>
    %7 = vector.broadcast %6 : vector<1x8xf32> to vector<256x8xf32>
    %8 = arith.addf %5, %7 : vector<256x8xf32>
    %cst_7 = arith.constant 0.000000e+00 : f32
    %9 = vector.broadcast %cst_7 : f32 to vector<256x8xf32>
    %10 = arith.maximumf %8, %9 : vector<256x8xf32>
    %11 = arith.truncf %2 : vector<256x4xf32> to vector<256x4xbf16>
    %c0_8 = arith.constant 0 : index
    %c0_9 = arith.constant 0 : index
    %12 = vector.load %arg4[%c0_8, %c0_9] : memref<4x8xbf16, #tpu.memory_space<vmem>>, vector<4x8xbf16>
    %cst_10 = arith.constant dense<0.000000e+00> : vector<256x8xf32>
    %13 = tpu.matmul %11, %12, %cst_10 {dimension_numbers = #tpu.dot_dimension_numbers<[1], [0], [0], [1], [0, 0, 1, 1], [], []>} : vector<256x4xbf16>, vector<4x8xbf16>, vector<256x8xf32> -> vector<256x8xf32>
    %c0_11 = arith.constant 0 : index
    %c0_12 = arith.constant 0 : index
    %14 = vector.load %arg5[%c0_11, %c0_12] : memref<1x8xf32, #tpu.memory_space<vmem>>, vector<1x8xf32>
    %15 = vector.broadcast %14 : vector<1x8xf32> to vector<256x8xf32>
    %16 = arith.addf %13, %15 : vector<256x8xf32>
    %cst_13 = arith.constant 0.000000e+00 : f32
    %17 = vector.broadcast %cst_13 : f32 to vector<256x8xf32>
    %18 = arith.maximumf %16, %17 : vector<256x8xf32>
    %cst_14 = arith.constant 0.000000e+00 : f32
    %19 = vector.broadcast %cst_14 : f32 to vector<18x18x8xf32>
    %c0_15 = arith.constant 0 : index
    %c0_16 = arith.constant 0 : index
    %c0_17 = arith.constant 0 : index
    %20 = vector.load %arg15[%c0_15, %c0_16, %c0_17] : memref<18x18x8xf32, #tpu.memory_space<vmem>>, vector<18x18x8xf32>
    tpu.vector_store %arg15[%c0_15, %c0_16, %c0_17], %19 {strides = array<i32>} : memref<18x18x8xf32, #tpu.memory_space<vmem>>, vector<18x18x8xf32>,
    %21 = vector.shape_cast %18 : vector<256x8xf32> to vector<16x16x8xf32>
    %c1 = arith.constant 1 : index
    %c1_18 = arith.constant 1 : index
    %c0_19 = arith.constant 0 : index
    %22 = vector.load %arg15[%c1, %c1_18, %c0_19] : memref<18x18x8xf32, #tpu.memory_space<vmem>>, vector<16x16x8xf32>
    tpu.vector_store %arg15[%c1, %c1_18, %c0_19], %21 {strides = array<i32>} : memref<18x18x8xf32, #tpu.memory_space<vmem>>, vector<16x16x8xf32>,
    %c0_20 = arith.constant 0 : index
    %c0_21 = arith.constant 0 : index
    %c0_22 = arith.constant 0 : index
    %23 = vector.load %arg15[%c0_20, %c0_21, %c0_22] : memref<18x18x8xf32, #tpu.memory_space<vmem>>, vector<16x16x8xf32>
    %24 = vector.shape_cast %23 : vector<16x16x8xf32> to vector<256x8xf32>
    %c0_23 = arith.constant 0 : index
    %c0_24 = arith.constant 0 : index
    %25 = vector.load %arg18[%c0_23, %c0_24] : memref<256x72xf32, #tpu.memory_space<vmem>>, vector<256x8xf32>
    tpu.vector_store %arg18[%c0_23, %c0_24], %24 {strides = array<i32>} : memref<256x72xf32, #tpu.memory_space<vmem>>, vector<256x8xf32>,
    %c0_25 = arith.constant 0 : index
    %c1_26 = arith.constant 1 : index
    %c0_27 = arith.constant 0 : index
    %26 = vector.load %arg15[%c0_25, %c1_26, %c0_27] : memref<18x18x8xf32, #tpu.memory_space<vmem>>, vector<16x16x8xf32>
    %27 = vector.shape_cast %26 : vector<16x16x8xf32> to vector<256x8xf32>
    %c0_28 = arith.constant 0 : index
    %c8 = arith.constant 8 : index
    %28 = vector.load %arg18[%c0_28, %c8] : memref<256x72xf32, #tpu.memory_space<vmem>>, vector<256x8xf32>
    tpu.vector_store %arg18[%c0_28, %c8], %27 {strides = array<i32>} : memref<256x72xf32, #tpu.memory_space<vmem>>, vector<256x8xf32>,
    %c0_29 = arith.constant 0 : index
    %c2 = arith.constant 2 : index
    %c0_30 = arith.constant 0 : index
    %29 = vector.load %arg15[%c0_29, %c2, %c0_30] : memref<18x18x8xf32, #tpu.memory_space<vmem>>, vector<16x16x8xf32>
    %30 = vector.shape_cast %29 : vector<16x16x8xf32> to vector<256x8xf32>
    %c0_31 = arith.constant 0 : index
    %c16 = arith.constant 16 : index
    %31 = vector.load %arg18[%c0_31, %c16] : memref<256x72xf32, #tpu.memory_space<vmem>>, vector<256x8xf32>
    tpu.vector_store %arg18[%c0_31, %c16], %30 {strides = array<i32>} : memref<256x72xf32, #tpu.memory_space<vmem>>, vector<256x8xf32>,
    %c1_32 = arith.constant 1 : index
    %c0_33 = arith.constant 0 : index
    %c0_34 = arith.constant 0 : index
    %32 = vector.load %arg15[%c1_32, %c0_33, %c0_34] : memref<18x18x8xf32, #tpu.memory_space<vmem>>, vector<16x16x8xf32>
    %33 = vector.shape_cast %32 : vector<16x16x8xf32> to vector<256x8xf32>
    %c0_35 = arith.constant 0 : index
    %c24 = arith.constant 24 : index
    %34 = vector.load %arg18[%c0_35, %c24] : memref<256x72xf32, #tpu.memory_space<vmem>>, vector<256x8xf32>
    tpu.vector_store %arg18[%c0_35, %c24], %33 {strides = array<i32>} : memref<256x72xf32, #tpu.memory_space<vmem>>, vector<256x8xf32>,
    %c1_36 = arith.constant 1 : index
    %c1_37 = arith.constant 1 : index
    %c0_38 = arith.constant 0 : index
    %35 = vector.load %arg15[%c1_36, %c1_37, %c0_38] : memref<18x18x8xf32, #tpu.memory_space<vmem>>, vector<16x16x8xf32>
    %36 = vector.shape_cast %35 : vector<16x16x8xf32> to vector<256x8xf32>
    %c0_39 = arith.constant 0 : index
    %c32 = arith.constant 32 : index
    %37 = vector.load %arg18[%c0_39, %c32] : memref<256x72xf32, #tpu.memory_space<vmem>>, vector<256x8xf32>
    tpu.vector_store %arg18[%c0_39, %c32], %36 {strides = array<i32>} : memref<256x72xf32, #tpu.memory_space<vmem>>, vector<256x8xf32>,
    %c1_40 = arith.constant 1 : index
    %c2_41 = arith.constant 2 : index
    %c0_42 = arith.constant 0 : index
    %38 = vector.load %arg15[%c1_40, %c2_41, %c0_42] : memref<18x18x8xf32, #tpu.memory_space<vmem>>, vector<16x16x8xf32>
    %39 = vector.shape_cast %38 : vector<16x16x8xf32> to vector<256x8xf32>
    %c0_43 = arith.constant 0 : index
    %c40 = arith.constant 40 : index
    %40 = vector.load %arg18[%c0_43, %c40] : memref<256x72xf32, #tpu.memory_space<vmem>>, vector<256x8xf32>
    tpu.vector_store %arg18[%c0_43, %c40], %39 {strides = array<i32>} : memref<256x72xf32, #tpu.memory_space<vmem>>, vector<256x8xf32>,
    %c2_44 = arith.constant 2 : index
    %c0_45 = arith.constant 0 : index
    %c0_46 = arith.constant 0 : index
    %41 = vector.load %arg15[%c2_44, %c0_45, %c0_46] : memref<18x18x8xf32, #tpu.memory_space<vmem>>, vector<16x16x8xf32>
    %42 = vector.shape_cast %41 : vector<16x16x8xf32> to vector<256x8xf32>
    %c0_47 = arith.constant 0 : index
    %c48 = arith.constant 48 : index
    %43 = vector.load %arg18[%c0_47, %c48] : memref<256x72xf32, #tpu.memory_space<vmem>>, vector<256x8xf32>
    tpu.vector_store %arg18[%c0_47, %c48], %42 {strides = array<i32>} : memref<256x72xf32, #tpu.memory_space<vmem>>, vector<256x8xf32>,
    %c2_48 = arith.constant 2 : index
    %c1_49 = arith.constant 1 : index
    %c0_50 = arith.constant 0 : index
    %44 = vector.load %arg15[%c2_48, %c1_49, %c0_50] : memref<18x18x8xf32, #tpu.memory_space<vmem>>, vector<16x16x8xf32>
    %45 = vector.shape_cast %44 : vector<16x16x8xf32> to vector<256x8xf32>
    %c0_51 = arith.constant 0 : index
    %c56 = arith.constant 56 : index
    %46 = vector.load %arg18[%c0_51, %c56] : memref<256x72xf32, #tpu.memory_space<vmem>>, vector<256x8xf32>
    tpu.vector_store %arg18[%c0_51, %c56], %45 {strides = array<i32>} : memref<256x72xf32, #tpu.memory_space<vmem>>, vector<256x8xf32>,
    %c2_52 = arith.constant 2 : index
    %c2_53 = arith.constant 2 : index
    %c0_54 = arith.constant 0 : index
    %47 = vector.load %arg15[%c2_52, %c2_53, %c0_54] : memref<18x18x8xf32, #tpu.memory_space<vmem>>, vector<16x16x8xf32>
    %48 = vector.shape_cast %47 : vector<16x16x8xf32> to vector<256x8xf32>
    %c0_55 = arith.constant 0 : index
    %c64 = arith.constant 64 : index
    %49 = vector.load %arg18[%c0_55, %c64] : memref<256x72xf32, #tpu.memory_space<vmem>>, vector<256x8xf32>
    tpu.vector_store %arg18[%c0_55, %c64], %48 {strides = array<i32>} : memref<256x72xf32, #tpu.memory_space<vmem>>, vector<256x8xf32>,
    %c0_56 = arith.constant 0 : index
    %c0_57 = arith.constant 0 : index
    %50 = vector.load %arg18[%c0_56, %c0_57] : memref<256x72xf32, #tpu.memory_space<vmem>>, vector<256x72xf32>
    %51 = arith.truncf %50 : vector<256x72xf32> to vector<256x72xbf16>
    %c0_58 = arith.constant 0 : index
    %c0_59 = arith.constant 0 : index
    %52 = vector.load %arg6[%c0_58, %c0_59] : memref<72x16xbf16, #tpu.memory_space<vmem>>, vector<72x16xbf16>
    %cst_60 = arith.constant dense<0.000000e+00> : vector<256x16xf32>
    %53 = tpu.matmul %51, %52, %cst_60 {dimension_numbers = #tpu.dot_dimension_numbers<[1], [0], [0], [1], [0, 0, 1, 1], [], []>} : vector<256x72xbf16>, vector<72x16xbf16>, vector<256x16xf32> -> vector<256x16xf32>
    %c0_61 = arith.constant 0 : index
    %c0_62 = arith.constant 0 : index
    %54 = vector.load %arg7[%c0_61, %c0_62] : memref<1x16xf32, #tpu.memory_space<vmem>>, vector<1x16xf32>
    %55 = vector.broadcast %54 : vector<1x16xf32> to vector<256x16xf32>
    %56 = arith.addf %53, %55 : vector<256x16xf32>
    %cst_63 = arith.constant 0.000000e+00 : f32
    %57 = vector.broadcast %cst_63 : f32 to vector<256x16xf32>
    %58 = arith.maximumf %56, %57 : vector<256x16xf32>
    %59 = arith.truncf %2 : vector<256x4xf32> to vector<256x4xbf16>
    %c0_64 = arith.constant 0 : index
    %c0_65 = arith.constant 0 : index
    %60 = vector.load %arg8[%c0_64, %c0_65] : memref<4x8xbf16, #tpu.memory_space<vmem>>, vector<4x8xbf16>
    %cst_66 = arith.constant dense<0.000000e+00> : vector<256x8xf32>
    %61 = tpu.matmul %59, %60, %cst_66 {dimension_numbers = #tpu.dot_dimension_numbers<[1], [0], [0], [1], [0, 0, 1, 1], [], []>} : vector<256x4xbf16>, vector<4x8xbf16>, vector<256x8xf32> -> vector<256x8xf32>
    %c0_67 = arith.constant 0 : index
    %c0_68 = arith.constant 0 : index
    %62 = vector.load %arg9[%c0_67, %c0_68] : memref<1x8xf32, #tpu.memory_space<vmem>>, vector<1x8xf32>
    %63 = vector.broadcast %62 : vector<1x8xf32> to vector<256x8xf32>
    %64 = arith.addf %61, %63 : vector<256x8xf32>
    %cst_69 = arith.constant 0.000000e+00 : f32
    %65 = vector.broadcast %cst_69 : f32 to vector<256x8xf32>
    %66 = arith.maximumf %64, %65 : vector<256x8xf32>
    %cst_70 = arith.constant 0.000000e+00 : f32
    %67 = vector.broadcast %cst_70 : f32 to vector<20x20x8xf32>
    %c0_71 = arith.constant 0 : index
    %c0_72 = arith.constant 0 : index
    %c0_73 = arith.constant 0 : index
    %68 = vector.load %arg16[%c0_71, %c0_72, %c0_73] : memref<20x20x8xf32, #tpu.memory_space<vmem>>, vector<20x20x8xf32>
    tpu.vector_store %arg16[%c0_71, %c0_72, %c0_73], %67 {strides = array<i32>} : memref<20x20x8xf32, #tpu.memory_space<vmem>>, vector<20x20x8xf32>,
    %69 = vector.shape_cast %66 : vector<256x8xf32> to vector<16x16x8xf32>
    %c2_74 = arith.constant 2 : index
    %c2_75 = arith.constant 2 : index
    %c0_76 = arith.constant 0 : index
    %70 = vector.load %arg16[%c2_74, %c2_75, %c0_76] : memref<20x20x8xf32, #tpu.memory_space<vmem>>, vector<16x16x8xf32>
    tpu.vector_store %arg16[%c2_74, %c2_75, %c0_76], %69 {strides = array<i32>} : memref<20x20x8xf32, #tpu.memory_space<vmem>>, vector<16x16x8xf32>,
    %c0_77 = arith.constant 0 : index
    %c0_78 = arith.constant 0 : index
    %c0_79 = arith.constant 0 : index
    %71 = vector.load %arg16[%c0_77, %c0_78, %c0_79] : memref<20x20x8xf32, #tpu.memory_space<vmem>>, vector<16x16x8xf32>
    %72 = vector.shape_cast %71 : vector<16x16x8xf32> to vector<256x8xf32>
    %c0_80 = arith.constant 0 : index
    %c0_81 = arith.constant 0 : index
    %73 = vector.load %arg19[%c0_80, %c0_81] : memref<256x200xf32, #tpu.memory_space<vmem>>, vector<256x8xf32>
    tpu.vector_store %arg19[%c0_80, %c0_81], %72 {strides = array<i32>} : memref<256x200xf32, #tpu.memory_space<vmem>>, vector<256x8xf32>,
    %c0_82 = arith.constant 0 : index
    %c1_83 = arith.constant 1 : index
    %c0_84 = arith.constant 0 : index
    %74 = vector.load %arg16[%c0_82, %c1_83, %c0_84] : memref<20x20x8xf32, #tpu.memory_space<vmem>>, vector<16x16x8xf32>
    %75 = vector.shape_cast %74 : vector<16x16x8xf32> to vector<256x8xf32>
    %c0_85 = arith.constant 0 : index
    %c8_86 = arith.constant 8 : index
    %76 = vector.load %arg19[%c0_85, %c8_86] : memref<256x200xf32, #tpu.memory_space<vmem>>, vector<256x8xf32>
    tpu.vector_store %arg19[%c0_85, %c8_86], %75 {strides = array<i32>} : memref<256x200xf32, #tpu.memory_space<vmem>>, vector<256x8xf32>,
    %c0_87 = arith.constant 0 : index
    %c2_88 = arith.constant 2 : index
    %c0_89 = arith.constant 0 : index
    %77 = vector.load %arg16[%c0_87, %c2_88, %c0_89] : memref<20x20x8xf32, #tpu.memory_space<vmem>>, vector<16x16x8xf32>
    %78 = vector.shape_cast %77 : vector<16x16x8xf32> to vector<256x8xf32>
    %c0_90 = arith.constant 0 : index
    %c16_91 = arith.constant 16 : index
    %79 = vector.load %arg19[%c0_90, %c16_91] : memref<256x200xf32, #tpu.memory_space<vmem>>, vector<256x8xf32>
    tpu.vector_store %arg19[%c0_90, %c16_91], %78 {strides = array<i32>} : memref<256x200xf32, #tpu.memory_space<vmem>>, vector<256x8xf32>,
    %c0_92 = arith.constant 0 : index
    %c3 = arith.constant 3 : index
    %c0_93 = arith.constant 0 : index
    %80 = vector.load %arg16[%c0_92, %c3, %c0_93] : memref<20x20x8xf32, #tpu.memory_space<vmem>>, vector<16x16x8xf32>
    %81 = vector.shape_cast %80 : vector<16x16x8xf32> to vector<256x8xf32>
    %c0_94 = arith.constant 0 : index
    %c24_95 = arith.constant 24 : index
    %82 = vector.load %arg19[%c0_94, %c24_95] : memref<256x200xf32, #tpu.memory_space<vmem>>, vector<256x8xf32>
    tpu.vector_store %arg19[%c0_94, %c24_95], %81 {strides = array<i32>} : memref<256x200xf32, #tpu.memory_space<vmem>>, vector<256x8xf32>,
    %c0_96 = arith.constant 0 : index
    %c4 = arith.constant 4 : index
    %c0_97 = arith.constant 0 : index
    %83 = vector.load %arg16[%c0_96, %c4, %c0_97] : memref<20x20x8xf32, #tpu.memory_space<vmem>>, vector<16x16x8xf32>
    %84 = vector.shape_cast %83 : vector<16x16x8xf32> to vector<256x8xf32>
    %c0_98 = arith.constant 0 : index
    %c32_99 = arith.constant 32 : index
    %85 = vector.load %arg19[%c0_98, %c32_99] : memref<256x200xf32, #tpu.memory_space<vmem>>, vector<256x8xf32>
    tpu.vector_store %arg19[%c0_98, %c32_99], %84 {strides = array<i32>} : memref<256x200xf32, #tpu.memory_space<vmem>>, vector<256x8xf32>,
    %c1_100 = arith.constant 1 : index
    %c0_101 = arith.constant 0 : index
    %c0_102 = arith.constant 0 : index
    %86 = vector.load %arg16[%c1_100, %c0_101, %c0_102] : memref<20x20x8xf32, #tpu.memory_space<vmem>>, vector<16x16x8xf32>
    %87 = vector.shape_cast %86 : vector<16x16x8xf32> to vector<256x8xf32>
    %c0_103 = arith.constant 0 : index
    %c40_104 = arith.constant 40 : index
    %88 = vector.load %arg19[%c0_103, %c40_104] : memref<256x200xf32, #tpu.memory_space<vmem>>, vector<256x8xf32>
    tpu.vector_store %arg19[%c0_103, %c40_104], %87 {strides = array<i32>} : memref<256x200xf32, #tpu.memory_space<vmem>>, vector<256x8xf32>,
    %c1_105 = arith.constant 1 : index
    %c1_106 = arith.constant 1 : index
    %c0_107 = arith.constant 0 : index
    %89 = vector.load %arg16[%c1_105, %c1_106, %c0_107] : memref<20x20x8xf32, #tpu.memory_space<vmem>>, vector<16x16x8xf32>
    %90 = vector.shape_cast %89 : vector<16x16x8xf32> to vector<256x8xf32>
    %c0_108 = arith.constant 0 : index
    %c48_109 = arith.constant 48 : index
    %91 = vector.load %arg19[%c0_108, %c48_109] : memref<256x200xf32, #tpu.memory_space<vmem>>, vector<256x8xf32>
    tpu.vector_store %arg19[%c0_108, %c48_109], %90 {strides = array<i32>} : memref<256x200xf32, #tpu.memory_space<vmem>>, vector<256x8xf32>,
    %c1_110 = arith.constant 1 : index
    %c2_111 = arith.constant 2 : index
    %c0_112 = arith.constant 0 : index
    %92 = vector.load %arg16[%c1_110, %c2_111, %c0_112] : memref<20x20x8xf32, #tpu.memory_space<vmem>>, vector<16x16x8xf32>
    %93 = vector.shape_cast %92 : vector<16x16x8xf32> to vector<256x8xf32>
    %c0_113 = arith.constant 0 : index
    %c56_114 = arith.constant 56 : index
    %94 = vector.load %arg19[%c0_113, %c56_114] : memref<256x200xf32, #tpu.memory_space<vmem>>, vector<256x8xf32>
    tpu.vector_store %arg19[%c0_113, %c56_114], %93 {strides = array<i32>} : memref<256x200xf32, #tpu.memory_space<vmem>>, vector<256x8xf32>,
    %c1_115 = arith.constant 1 : index
    %c3_116 = arith.constant 3 : index
    %c0_117 = arith.constant 0 : index
    %95 = vector.load %arg16[%c1_115, %c3_116, %c0_117] : memref<20x20x8xf32, #tpu.memory_space<vmem>>, vector<16x16x8xf32>
    %96 = vector.shape_cast %95 : vector<16x16x8xf32> to vector<256x8xf32>
    %c0_118 = arith.constant 0 : index
    %c64_119 = arith.constant 64 : index
    %97 = vector.load %arg19[%c0_118, %c64_119] : memref<256x200xf32, #tpu.memory_space<vmem>>, vector<256x8xf32>
    tpu.vector_store %arg19[%c0_118, %c64_119], %96 {strides = array<i32>} : memref<256x200xf32, #tpu.memory_space<vmem>>, vector<256x8xf32>,
    %c1_120 = arith.constant 1 : index
    %c4_121 = arith.constant 4 : index
    %c0_122 = arith.constant 0 : index
    %98 = vector.load %arg16[%c1_120, %c4_121, %c0_122] : memref<20x20x8xf32, #tpu.memory_space<vmem>>, vector<16x16x8xf32>
    %99 = vector.shape_cast %98 : vector<16x16x8xf32> to vector<256x8xf32>
    %c0_123 = arith.constant 0 : index
    %c72 = arith.constant 72 : index
    %100 = vector.load %arg19[%c0_123, %c72] : memref<256x200xf32, #tpu.memory_space<vmem>>, vector<256x8xf32>
    tpu.vector_store %arg19[%c0_123, %c72], %99 {strides = array<i32>} : memref<256x200xf32, #tpu.memory_space<vmem>>, vector<256x8xf32>,
    %c2_124 = arith.constant 2 : index
    %c0_125 = arith.constant 0 : index
    %c0_126 = arith.constant 0 : index
    %101 = vector.load %arg16[%c2_124, %c0_125, %c0_126] : memref<20x20x8xf32, #tpu.memory_space<vmem>>, vector<16x16x8xf32>
    %102 = vector.shape_cast %101 : vector<16x16x8xf32> to vector<256x8xf32>
    %c0_127 = arith.constant 0 : index
    %c80 = arith.constant 80 : index
    %103 = vector.load %arg19[%c0_127, %c80] : memref<256x200xf32, #tpu.memory_space<vmem>>, vector<256x8xf32>
    tpu.vector_store %arg19[%c0_127, %c80], %102 {strides = array<i32>} : memref<256x200xf32, #tpu.memory_space<vmem>>, vector<256x8xf32>,
    %c2_128 = arith.constant 2 : index
    %c1_129 = arith.constant 1 : index
    %c0_130 = arith.constant 0 : index
    %104 = vector.load %arg16[%c2_128, %c1_129, %c0_130] : memref<20x20x8xf32, #tpu.memory_space<vmem>>, vector<16x16x8xf32>
    %105 = vector.shape_cast %104 : vector<16x16x8xf32> to vector<256x8xf32>
    %c0_131 = arith.constant 0 : index
    %c88 = arith.constant 88 : index
    %106 = vector.load %arg19[%c0_131, %c88] : memref<256x200xf32, #tpu.memory_space<vmem>>, vector<256x8xf32>
    tpu.vector_store %arg19[%c0_131, %c88], %105 {strides = array<i32>} : memref<256x200xf32, #tpu.memory_space<vmem>>, vector<256x8xf32>,
    %c2_132 = arith.constant 2 : index
    %c2_133 = arith.constant 2 : index
    %c0_134 = arith.constant 0 : index
    %107 = vector.load %arg16[%c2_132, %c2_133, %c0_134] : memref<20x20x8xf32, #tpu.memory_space<vmem>>, vector<16x16x8xf32>
    %108 = vector.shape_cast %107 : vector<16x16x8xf32> to vector<256x8xf32>
    %c0_135 = arith.constant 0 : index
    %c96 = arith.constant 96 : index
    %109 = vector.load %arg19[%c0_135, %c96] : memref<256x200xf32, #tpu.memory_space<vmem>>, vector<256x8xf32>
    tpu.vector_store %arg19[%c0_135, %c96], %108 {strides = array<i32>} : memref<256x200xf32, #tpu.memory_space<vmem>>, vector<256x8xf32>,
    %c2_136 = arith.constant 2 : index
    %c3_137 = arith.constant 3 : index
    %c0_138 = arith.constant 0 : index
    %110 = vector.load %arg16[%c2_136, %c3_137, %c0_138] : memref<20x20x8xf32, #tpu.memory_space<vmem>>, vector<16x16x8xf32>
    %111 = vector.shape_cast %110 : vector<16x16x8xf32> to vector<256x8xf32>
    %c0_139 = arith.constant 0 : index
    %c104 = arith.constant 104 : index
    %112 = vector.load %arg19[%c0_139, %c104] : memref<256x200xf32, #tpu.memory_space<vmem>>, vector<256x8xf32>
    tpu.vector_store %arg19[%c0_139, %c104], %111 {strides = array<i32>} : memref<256x200xf32, #tpu.memory_space<vmem>>, vector<256x8xf32>,
    %c2_140 = arith.constant 2 : index
    %c4_141 = arith.constant 4 : index
    %c0_142 = arith.constant 0 : index
    %113 = vector.load %arg16[%c2_140, %c4_141, %c0_142] : memref<20x20x8xf32, #tpu.memory_space<vmem>>, vector<16x16x8xf32>
    %114 = vector.shape_cast %113 : vector<16x16x8xf32> to vector<256x8xf32>
    %c0_143 = arith.constant 0 : index
    %c112 = arith.constant 112 : index
    %115 = vector.load %arg19[%c0_143, %c112] : memref<256x200xf32, #tpu.memory_space<vmem>>, vector<256x8xf32>
    tpu.vector_store %arg19[%c0_143, %c112], %114 {strides = array<i32>} : memref<256x200xf32, #tpu.memory_space<vmem>>, vector<256x8xf32>,
    %c3_144 = arith.constant 3 : index
    %c0_145 = arith.constant 0 : index
    %c0_146 = arith.constant 0 : index
    %116 = vector.load %arg16[%c3_144, %c0_145, %c0_146] : memref<20x20x8xf32, #tpu.memory_space<vmem>>, vector<16x16x8xf32>
    %117 = vector.shape_cast %116 : vector<16x16x8xf32> to vector<256x8xf32>
    %c0_147 = arith.constant 0 : index
    %c120 = arith.constant 120 : index
    %118 = vector.load %arg19[%c0_147, %c120] : memref<256x200xf32, #tpu.memory_space<vmem>>, vector<256x8xf32>
    tpu.vector_store %arg19[%c0_147, %c120], %117 {strides = array<i32>} : memref<256x200xf32, #tpu.memory_space<vmem>>, vector<256x8xf32>,
    %c3_148 = arith.constant 3 : index
    %c1_149 = arith.constant 1 : index
    %c0_150 = arith.constant 0 : index
    %119 = vector.load %arg16[%c3_148, %c1_149, %c0_150] : memref<20x20x8xf32, #tpu.memory_space<vmem>>, vector<16x16x8xf32>
    %120 = vector.shape_cast %119 : vector<16x16x8xf32> to vector<256x8xf32>
    %c0_151 = arith.constant 0 : index
    %c128 = arith.constant 128 : index
    %121 = vector.load %arg19[%c0_151, %c128] : memref<256x200xf32, #tpu.memory_space<vmem>>, vector<256x8xf32>
    tpu.vector_store %arg19[%c0_151, %c128], %120 {strides = array<i32>} : memref<256x200xf32, #tpu.memory_space<vmem>>, vector<256x8xf32>,
    %c3_152 = arith.constant 3 : index
    %c2_153 = arith.constant 2 : index
    %c0_154 = arith.constant 0 : index
    %122 = vector.load %arg16[%c3_152, %c2_153, %c0_154] : memref<20x20x8xf32, #tpu.memory_space<vmem>>, vector<16x16x8xf32>
    %123 = vector.shape_cast %122 : vector<16x16x8xf32> to vector<256x8xf32>
    %c0_155 = arith.constant 0 : index
    %c136 = arith.constant 136 : index
    %124 = vector.load %arg19[%c0_155, %c136] : memref<256x200xf32, #tpu.memory_space<vmem>>, vector<256x8xf32>
    tpu.vector_store %arg19[%c0_155, %c136], %123 {strides = array<i32>} : memref<256x200xf32, #tpu.memory_space<vmem>>, vector<256x8xf32>,
    %c3_156 = arith.constant 3 : index
    %c3_157 = arith.constant 3 : index
    %c0_158 = arith.constant 0 : index
    %125 = vector.load %arg16[%c3_156, %c3_157, %c0_158] : memref<20x20x8xf32, #tpu.memory_space<vmem>>, vector<16x16x8xf32>
    %126 = vector.shape_cast %125 : vector<16x16x8xf32> to vector<256x8xf32>
    %c0_159 = arith.constant 0 : index
    %c144 = arith.constant 144 : index
    %127 = vector.load %arg19[%c0_159, %c144] : memref<256x200xf32, #tpu.memory_space<vmem>>, vector<256x8xf32>
    tpu.vector_store %arg19[%c0_159, %c144], %126 {strides = array<i32>} : memref<256x200xf32, #tpu.memory_space<vmem>>, vector<256x8xf32>,
    %c3_160 = arith.constant 3 : index
    %c4_161 = arith.constant 4 : index
    %c0_162 = arith.constant 0 : index
    %128 = vector.load %arg16[%c3_160, %c4_161, %c0_162] : memref<20x20x8xf32, #tpu.memory_space<vmem>>, vector<16x16x8xf32>
    %129 = vector.shape_cast %128 : vector<16x16x8xf32> to vector<256x8xf32>
    %c0_163 = arith.constant 0 : index
    %c152 = arith.constant 152 : index
    %130 = vector.load %arg19[%c0_163, %c152] : memref<256x200xf32, #tpu.memory_space<vmem>>, vector<256x8xf32>
    tpu.vector_store %arg19[%c0_163, %c152], %129 {strides = array<i32>} : memref<256x200xf32, #tpu.memory_space<vmem>>, vector<256x8xf32>,
    %c4_164 = arith.constant 4 : index
    %c0_165 = arith.constant 0 : index
    %c0_166 = arith.constant 0 : index
    %131 = vector.load %arg16[%c4_164, %c0_165, %c0_166] : memref<20x20x8xf32, #tpu.memory_space<vmem>>, vector<16x16x8xf32>
    %132 = vector.shape_cast %131 : vector<16x16x8xf32> to vector<256x8xf32>
    %c0_167 = arith.constant 0 : index
    %c160 = arith.constant 160 : index
    %133 = vector.load %arg19[%c0_167, %c160] : memref<256x200xf32, #tpu.memory_space<vmem>>, vector<256x8xf32>
    tpu.vector_store %arg19[%c0_167, %c160], %132 {strides = array<i32>} : memref<256x200xf32, #tpu.memory_space<vmem>>, vector<256x8xf32>,
    %c4_168 = arith.constant 4 : index
    %c1_169 = arith.constant 1 : index
    %c0_170 = arith.constant 0 : index
    %134 = vector.load %arg16[%c4_168, %c1_169, %c0_170] : memref<20x20x8xf32, #tpu.memory_space<vmem>>, vector<16x16x8xf32>
    %135 = vector.shape_cast %134 : vector<16x16x8xf32> to vector<256x8xf32>
    %c0_171 = arith.constant 0 : index
    %c168 = arith.constant 168 : index
    %136 = vector.load %arg19[%c0_171, %c168] : memref<256x200xf32, #tpu.memory_space<vmem>>, vector<256x8xf32>
    tpu.vector_store %arg19[%c0_171, %c168], %135 {strides = array<i32>} : memref<256x200xf32, #tpu.memory_space<vmem>>, vector<256x8xf32>,
    %c4_172 = arith.constant 4 : index
    %c2_173 = arith.constant 2 : index
    %c0_174 = arith.constant 0 : index
    %137 = vector.load %arg16[%c4_172, %c2_173, %c0_174] : memref<20x20x8xf32, #tpu.memory_space<vmem>>, vector<16x16x8xf32>
    %138 = vector.shape_cast %137 : vector<16x16x8xf32> to vector<256x8xf32>
    %c0_175 = arith.constant 0 : index
    %c176 = arith.constant 176 : index
    %139 = vector.load %arg19[%c0_175, %c176] : memref<256x200xf32, #tpu.memory_space<vmem>>, vector<256x8xf32>
    tpu.vector_store %arg19[%c0_175, %c176], %138 {strides = array<i32>} : memref<256x200xf32, #tpu.memory_space<vmem>>, vector<256x8xf32>,
    %c4_176 = arith.constant 4 : index
    %c3_177 = arith.constant 3 : index
    %c0_178 = arith.constant 0 : index
    %140 = vector.load %arg16[%c4_176, %c3_177, %c0_178] : memref<20x20x8xf32, #tpu.memory_space<vmem>>, vector<16x16x8xf32>
    %141 = vector.shape_cast %140 : vector<16x16x8xf32> to vector<256x8xf32>
    %c0_179 = arith.constant 0 : index
    %c184 = arith.constant 184 : index
    %142 = vector.load %arg19[%c0_179, %c184] : memref<256x200xf32, #tpu.memory_space<vmem>>, vector<256x8xf32>
    tpu.vector_store %arg19[%c0_179, %c184], %141 {strides = array<i32>} : memref<256x200xf32, #tpu.memory_space<vmem>>, vector<256x8xf32>,
    %c4_180 = arith.constant 4 : index
    %c4_181 = arith.constant 4 : index
    %c0_182 = arith.constant 0 : index
    %143 = vector.load %arg16[%c4_180, %c4_181, %c0_182] : memref<20x20x8xf32, #tpu.memory_space<vmem>>, vector<16x16x8xf32>
    %144 = vector.shape_cast %143 : vector<16x16x8xf32> to vector<256x8xf32>
    %c0_183 = arith.constant 0 : index
    %c192 = arith.constant 192 : index
    %145 = vector.load %arg19[%c0_183, %c192] : memref<256x200xf32, #tpu.memory_space<vmem>>, vector<256x8xf32>
    tpu.vector_store %arg19[%c0_183, %c192], %144 {strides = array<i32>} : memref<256x200xf32, #tpu.memory_space<vmem>>, vector<256x8xf32>,
    %c0_184 = arith.constant 0 : index
    %c0_185 = arith.constant 0 : index
    %146 = vector.load %arg19[%c0_184, %c0_185] : memref<256x200xf32, #tpu.memory_space<vmem>>, vector<256x200xf32>
    %147 = arith.truncf %146 : vector<256x200xf32> to vector<256x200xbf16>
    %c0_186 = arith.constant 0 : index
    %c0_187 = arith.constant 0 : index
    %148 = vector.load %arg10[%c0_186, %c0_187] : memref<200x8xbf16, #tpu.memory_space<vmem>>, vector<200x8xbf16>
    %cst_188 = arith.constant dense<0.000000e+00> : vector<256x8xf32>
    %149 = tpu.matmul %147, %148, %cst_188 {dimension_numbers = #tpu.dot_dimension_numbers<[1], [0], [0], [1], [0, 0, 1, 1], [], []>} : vector<256x200xbf16>, vector<200x8xbf16>, vector<256x8xf32> -> vector<256x8xf32>
    %c0_189 = arith.constant 0 : index
    %c0_190 = arith.constant 0 : index
    %150 = vector.load %arg11[%c0_189, %c0_190] : memref<1x8xf32, #tpu.memory_space<vmem>>, vector<1x8xf32>
    %151 = vector.broadcast %150 : vector<1x8xf32> to vector<256x8xf32>
    %152 = arith.addf %149, %151 : vector<256x8xf32>
    %cst_191 = arith.constant 0.000000e+00 : f32
    %153 = vector.broadcast %cst_191 : f32 to vector<256x8xf32>
    %154 = arith.maximumf %152, %153 : vector<256x8xf32>
    %cst_192 = arith.constant 0xFF800000 : f32
    %155 = vector.broadcast %cst_192 : f32 to vector<18x18x4xf32>
    %c0_193 = arith.constant 0 : index
    %c0_194 = arith.constant 0 : index
    %c0_195 = arith.constant 0 : index
    %156 = vector.load %arg17[%c0_193, %c0_194, %c0_195] : memref<18x18x4xf32, #tpu.memory_space<vmem>>, vector<18x18x4xf32>
    tpu.vector_store %arg17[%c0_193, %c0_194, %c0_195], %155 {strides = array<i32>} : memref<18x18x4xf32, #tpu.memory_space<vmem>>, vector<18x18x4xf32>,
    %c1_196 = arith.constant 1 : index
    %c1_197 = arith.constant 1 : index
    %c0_198 = arith.constant 0 : index
    %157 = vector.load %arg17[%c1_196, %c1_197, %c0_198] : memref<18x18x4xf32, #tpu.memory_space<vmem>>, vector<16x16x4xf32>
    tpu.vector_store %arg17[%c1_196, %c1_197, %c0_198], %1 {strides = array<i32>} : memref<18x18x4xf32, #tpu.memory_space<vmem>>, vector<16x16x4xf32>,
    %c0_199 = arith.constant 0 : index
    %c0_200 = arith.constant 0 : index
    %c0_201 = arith.constant 0 : index
    %158 = vector.load %arg17[%c0_199, %c0_200, %c0_201] : memref<18x18x4xf32, #tpu.memory_space<vmem>>, vector<16x16x4xf32>
    %c0_202 = arith.constant 0 : index
    %c1_203 = arith.constant 1 : index
    %c0_204 = arith.constant 0 : index
    %159 = vector.load %arg17[%c0_202, %c1_203, %c0_204] : memref<18x18x4xf32, #tpu.memory_space<vmem>>, vector<16x16x4xf32>
    %160 = arith.maximumf %158, %159 : vector<16x16x4xf32>
    %c0_205 = arith.constant 0 : index
    %c2_206 = arith.constant 2 : index
    %c0_207 = arith.constant 0 : index
    %161 = vector.load %arg17[%c0_205, %c2_206, %c0_207] : memref<18x18x4xf32, #tpu.memory_space<vmem>>, vector<16x16x4xf32>
    %162 = arith.maximumf %160, %161 : vector<16x16x4xf32>
    %c1_208 = arith.constant 1 : index
    %c0_209 = arith.constant 0 : index
    %c0_210 = arith.constant 0 : index
    %163 = vector.load %arg17[%c1_208, %c0_209, %c0_210] : memref<18x18x4xf32, #tpu.memory_space<vmem>>, vector<16x16x4xf32>
    %164 = arith.maximumf %162, %163 : vector<16x16x4xf32>
    %c1_211 = arith.constant 1 : index
    %c1_212 = arith.constant 1 : index
    %c0_213 = arith.constant 0 : index
    %165 = vector.load %arg17[%c1_211, %c1_212, %c0_213] : memref<18x18x4xf32, #tpu.memory_space<vmem>>, vector<16x16x4xf32>
    %166 = arith.maximumf %164, %165 : vector<16x16x4xf32>
    %c1_214 = arith.constant 1 : index
    %c2_215 = arith.constant 2 : index
    %c0_216 = arith.constant 0 : index
    %167 = vector.load %arg17[%c1_214, %c2_215, %c0_216] : memref<18x18x4xf32, #tpu.memory_space<vmem>>, vector<16x16x4xf32>
    %168 = arith.maximumf %166, %167 : vector<16x16x4xf32>
    %c2_217 = arith.constant 2 : index
    %c0_218 = arith.constant 0 : index
    %c0_219 = arith.constant 0 : index
    %169 = vector.load %arg17[%c2_217, %c0_218, %c0_219] : memref<18x18x4xf32, #tpu.memory_space<vmem>>, vector<16x16x4xf32>
    %170 = arith.maximumf %168, %169 : vector<16x16x4xf32>
    %c2_220 = arith.constant 2 : index
    %c1_221 = arith.constant 1 : index
    %c0_222 = arith.constant 0 : index
    %171 = vector.load %arg17[%c2_220, %c1_221, %c0_222] : memref<18x18x4xf32, #tpu.memory_space<vmem>>, vector<16x16x4xf32>
    %172 = arith.maximumf %170, %171 : vector<16x16x4xf32>
    %c2_223 = arith.constant 2 : index
    %c2_224 = arith.constant 2 : index
    %c0_225 = arith.constant 0 : index
    %173 = vector.load %arg17[%c2_223, %c2_224, %c0_225] : memref<18x18x4xf32, #tpu.memory_space<vmem>>, vector<16x16x4xf32>
    %174 = arith.maximumf %172, %173 : vector<16x16x4xf32>
    %175 = vector.shape_cast %174 : vector<16x16x4xf32> to vector<256x4xf32>
    %176 = arith.truncf %175 : vector<256x4xf32> to vector<256x4xbf16>
    %c0_226 = arith.constant 0 : index
    %c0_227 = arith.constant 0 : index
    %177 = vector.load %arg12[%c0_226, %c0_227] : memref<4x8xbf16, #tpu.memory_space<vmem>>, vector<4x8xbf16>
    %cst_228 = arith.constant dense<0.000000e+00> : vector<256x8xf32>
    %178 = tpu.matmul %176, %177, %cst_228 {dimension_numbers = #tpu.dot_dimension_numbers<[1], [0], [0], [1], [0, 0, 1, 1], [], []>} : vector<256x4xbf16>, vector<4x8xbf16>, vector<256x8xf32> -> vector<256x8xf32>
    %c0_229 = arith.constant 0 : index
    %c0_230 = arith.constant 0 : index
    %179 = vector.load %arg13[%c0_229, %c0_230] : memref<1x8xf32, #tpu.memory_space<vmem>>, vector<1x8xf32>
    %180 = vector.broadcast %179 : vector<1x8xf32> to vector<256x8xf32>
    %181 = arith.addf %178, %180 : vector<256x8xf32>
    %cst_231 = arith.constant 0.000000e+00 : f32
    %182 = vector.broadcast %cst_231 : f32 to vector<256x8xf32>
    %183 = arith.maximumf %181, %182 : vector<256x8xf32>
    %c0_232 = arith.constant 0 : index
    %c0_233 = arith.constant 0 : index
    %c0_234 = arith.constant 0 : index
    %184 = vector.load %arg14[%c0_232, %c0_233, %c0_234] : memref<1x256x40xf32, #tpu.memory_space<vmem>>, vector<1x256x8xf32>
    %185 = vector.shape_cast %184 : vector<1x256x8xf32> to vector<256x8xf32>
    %186 = vector.shape_cast %10 : vector<256x8xf32> to vector<1x256x8xf32>
    tpu.vector_store %arg14[%c0_232, %c0_233, %c0_234], %186 {strides = array<i32>} : memref<1x256x40xf32, #tpu.memory_space<vmem>>, vector<1x256x8xf32>,
    %c0_235 = arith.constant 0 : index
    %c0_236 = arith.constant 0 : index
    %c8_237 = arith.constant 8 : index
    %187 = vector.load %arg14[%c0_235, %c0_236, %c8_237] : memref<1x256x40xf32, #tpu.memory_space<vmem>>, vector<1x256x16xf32>
    %188 = vector.shape_cast %187 : vector<1x256x16xf32> to vector<256x16xf32>
    %189 = vector.shape_cast %58 : vector<256x16xf32> to vector<1x256x16xf32>
    tpu.vector_store %arg14[%c0_235, %c0_236, %c8_237], %189 {strides = array<i32>} : memref<1x256x40xf32, #tpu.memory_space<vmem>>, vector<1x256x16xf32>,
    %c0_238 = arith.constant 0 : index
    %c0_239 = arith.constant 0 : index
    %c24_240 = arith.constant 24 : index
    %190 = vector.load %arg14[%c0_238, %c0_239, %c24_240] : memref<1x256x40xf32, #tpu.memory_space<vmem>>, vector<1x256x8xf32>
    %191 = vector.shape_cast %190 : vector<1x256x8xf32> to vector<256x8xf32>
    %192 = vector.shape_cast %154 : vector<256x8xf32> to vector<1x256x8xf32>
    tpu.vector_store %arg14[%c0_238, %c0_239, %c24_240], %192 {strides = array<i32>} : memref<1x256x40xf32, #tpu.memory_space<vmem>>, vector<1x256x8xf32>,
    %c0_241 = arith.constant 0 : index
    %c0_242 = arith.constant 0 : index
    %c32_243 = arith.constant 32 : index
    %193 = vector.load %arg14[%c0_241, %c0_242, %c32_243] : memref<1x256x40xf32, #tpu.memory_space<vmem>>, vector<1x256x8xf32>
    %194 = vector.shape_cast %193 : vector<1x256x8xf32> to vector<256x8xf32>
    %195 = vector.shape_cast %183 : vector<256x8xf32> to vector<1x256x8xf32>
    tpu.vector_store %arg14[%c0_241, %c0_242, %c32_243], %195 {strides = array<i32>} : memref<1x256x40xf32, #tpu.memory_space<vmem>>, vector<1x256x8xf32>,
    return
  }
  func.func @transform_0(%arg0: i32) -> (i32, i32, i32, i32) {
    %c0_i32 = arith.constant 0 : i32
    %c0_i32_0 = arith.constant 0 : i32
    %c0_i32_1 = arith.constant 0 : i32
    %c0_i32_2 = arith.constant 0 : i32
    return %arg0, %c0_i32, %c0_i32_0, %c0_i32_1 : i32, i32, i32, i32
  }
  func.func @transform_1(%arg0: i32) -> (i32, i32) {
    %c0_i32 = arith.constant 0 : i32
    %c0_i32_0 = arith.constant 0 : i32
    %c0_i32_1 = arith.constant 0 : i32
    return %c0_i32, %c0_i32_0 : i32, i32
  }
  func.func @transform_2(%arg0: i32) -> (i32, i32) {
    %c0_i32 = arith.constant 0 : i32
    %c0_i32_0 = arith.constant 0 : i32
    %c0_i32_1 = arith.constant 0 : i32
    return %c0_i32, %c0_i32_0 : i32, i32
  }
  func.func @transform_3(%arg0: i32) -> (i32, i32) {
    %c0_i32 = arith.constant 0 : i32
    %c0_i32_0 = arith.constant 0 : i32
    %c0_i32_1 = arith.constant 0 : i32
    return %c0_i32, %c0_i32_0 : i32, i32
  }
  func.func @transform_4(%arg0: i32) -> (i32, i32) {
    %c0_i32 = arith.constant 0 : i32
    %c0_i32_0 = arith.constant 0 : i32
    %c0_i32_1 = arith.constant 0 : i32
    return %c0_i32, %c0_i32_0 : i32, i32
  }
  func.func @transform_5(%arg0: i32) -> (i32, i32) {
    %c0_i32 = arith.constant 0 : i32
    %c0_i32_0 = arith.constant 0 : i32
    %c0_i32_1 = arith.constant 0 : i32
    return %c0_i32, %c0_i32_0 : i32, i32
  }
  func.func @transform_6(%arg0: i32) -> (i32, i32) {
    %c0_i32 = arith.constant 0 : i32
    %c0_i32_0 = arith.constant 0 : i32
    %c0_i32_1 = arith.constant 0 : i32
    return %c0_i32, %c0_i32_0 : i32, i32
  }
  func.func @transform_7(%arg0: i32) -> (i32, i32) {
    %c0_i32 = arith.constant 0 : i32
    %c0_i32_0 = arith.constant 0 : i32
    %c0_i32_1 = arith.constant 0 : i32
    return %c0_i32, %c0_i32_0 : i32, i32
  }
  func.func @transform_8(%arg0: i32) -> (i32, i32) {
    %c0_i32 = arith.constant 0 : i32
    %c0_i32_0 = arith.constant 0 : i32
    %c0_i32_1 = arith.constant 0 : i32
    return %c0_i32, %c0_i32_0 : i32, i32
  }
  func.func @transform_9(%arg0: i32) -> (i32, i32) {
    %c0_i32 = arith.constant 0 : i32
    %c0_i32_0 = arith.constant 0 : i32
    %c0_i32_1 = arith.constant 0 : i32
    return %c0_i32, %c0_i32_0 : i32, i32
  }
  func.func @transform_10(%arg0: i32) -> (i32, i32) {
    %c0_i32 = arith.constant 0 : i32
    %c0_i32_0 = arith.constant 0 : i32
    %c0_i32_1 = arith.constant 0 : i32
    return %c0_i32, %c0_i32_0 : i32, i32
  }
  func.func @transform_11(%arg0: i32) -> (i32, i32) {
    %c0_i32 = arith.constant 0 : i32
    %c0_i32_0 = arith.constant 0 : i32
    %c0_i32_1 = arith.constant 0 : i32
    return %c0_i32, %c0_i32_0 : i32, i32
  }
  func.func @transform_12(%arg0: i32) -> (i32, i32) {
    %c0_i32 = arith.constant 0 : i32
    %c0_i32_0 = arith.constant 0 : i32
    %c0_i32_1 = arith.constant 0 : i32
    return %c0_i32, %c0_i32_0 : i32, i32
  }
  func.func @transform_13(%arg0: i32) -> (i32, i32, i32) {
    %c0_i32 = arith.constant 0 : i32
    %c0_i32_0 = arith.constant 0 : i32
    %c0_i32_1 = arith.constant 0 : i32
    return %arg0, %c0_i32, %c0_i32_0 : i32, i32, i32
  }
}

</mosaic_0001>

<llo_original>
// kernel: inception_forward.1
$region0: #{inception_forward.1}
  #allocation0 [shape = 'u32[]', space=smem, size = 0x4, offset = 0x4, fixed_abs, tag = 'smem constant byte address 0x4 - core index']
  #allocation1 [shape = 'u32[144,128]{1,0:T(1,128)}', space=vmem, size = 0x12000, scoped, tag = 'internal scratch']
  #allocation2 [shape = 'f32[18,18,8]{2,1,0:T(8,128)}', space=vmem, size = 0x36000, scoped, tag = 'scratch operand']
  #allocation3 [shape = 'f32[20,20,8]{2,1,0:T(8,128)}', space=vmem, size = 0x3c000, scoped, tag = 'scratch operand']
  #allocation4 [shape = 'f32[18,18,4]{2,1,0:T(8,128)}', space=vmem, size = 0x36000, scoped, tag = 'scratch operand']
  #allocation5 [shape = 'f32[256,72]{1,0:T(8,128)}', space=vmem, size = 0x20000, scoped, tag = 'scratch operand']
  #allocation6 [shape = 'f32[256,200]{1,0:T(8,128)}', space=vmem, size = 0x40000, scoped, tag = 'scratch operand']
  %s0 = inlined_call_operand.vmem [shape: f32[2,16,16,4], index: 0, kind: input, shape index: {}]
  %s1 = inlined_call_operand.vmem [shape: bf16[4,8], index: 1, kind: input, shape index: {}]
  %s2 = inlined_call_operand.vmem [shape: f32[1,8], index: 2, kind: input, shape index: {}]
  %s3 = inlined_call_operand.vmem [shape: bf16[4,8], index: 3, kind: input, shape index: {}]
  %s4 = inlined_call_operand.vmem [shape: f32[1,8], index: 4, kind: input, shape index: {}]
  %s5 = inlined_call_operand.vmem [shape: bf16[72,16], index: 5, kind: input, shape index: {}]
  %s6 = inlined_call_operand.vmem [shape: f32[1,16], index: 6, kind: input, shape index: {}]
  %s7 = inlined_call_operand.vmem [shape: bf16[4,8], index: 7, kind: input, shape index: {}]
  %s8 = inlined_call_operand.vmem [shape: f32[1,8], index: 8, kind: input, shape index: {}]
  %s9 = inlined_call_operand.vmem [shape: bf16[200,8], index: 9, kind: input, shape index: {}]
  %s10 = inlined_call_operand.vmem [shape: f32[1,8], index: 10, kind: input, shape index: {}]
  %s11 = inlined_call_operand.vmem [shape: bf16[4,8], index: 11, kind: input, shape index: {}]
  %s12 = inlined_call_operand.vmem [shape: f32[1,8], index: 12, kind: input, shape index: {}]
  %s13 = inlined_call_operand.hbm [shape: f32[2,256,40], index: 13, kind: output, shape index: {}]
  %s14 = sld [smem:[#allocation0]]
  $region85: #{inception_forward.1} parent=0
    _
  %s16 = ssub.s32 1, %s14
  %s17 = scalar_select 0, %s16, %s14
  $region1: #{inception_forward.1} parent=0
    #allocation7 [shape = 'u8[262144]{0}', space=vmem, size = 0x40000, scoped, tag = 'output window, operand 0']
    #allocation8 [shape = 's32[2]{0}', space=sflag, size = 0x8, scoped, tag = 'scoped memory for inception_forward.1']
    %18 = vsyncpa [#allocation8], 0
    %s19 = scalar_lea.sflag [#allocation8], 1
    %20 = vsyncpa %s19, 0
    loop: start=0, step=1, limit=4
    $region2: #{inception_forward.1} parent=1 // loop_pre_header
      _
    $region3: #{inception_forward.1} parent=1 // loop_header
      %s22 = sphi 0, %s26
      %p23 = scmp.ge.s32.totalorder %s22, 4
      %s32 = sphi 0, %s34
      %s35 = sphi 0, %s32
      %s36 = sphi 0, %s35
      %s52 = sphi 0, %s36
      %s56 = sphi 0, %s56
      %s58 = sphi 0, %s56
      %s59 = sphi 0, %s58
      %s73 = sphi 0, %s59
      %s77 = sphi 0, %s77
      %s79 = sphi 0, %s77
      %s80 = sphi 0, %s79
      %s94 = sphi 0, %s80
      %s98 = sphi 0, %s98
      %s100 = sphi 0, %s98
      %s101 = sphi 0, %s100
      %s115 = sphi 0, %s101
      %s119 = sphi 0, %s119
      %s121 = sphi 0, %s119
      %s122 = sphi 0, %s121
      %s136 = sphi 0, %s122
      %s140 = sphi 0, %s140
      %s142 = sphi 0, %s140
      %s143 = sphi 0, %s142
      %s157 = sphi 0, %s143
      %s161 = sphi 0, %s161
      %s163 = sphi 0, %s161
      %s164 = sphi 0, %s163
      %s178 = sphi 0, %s164
      %s182 = sphi 0, %s182
      %s184 = sphi 0, %s182
      %s185 = sphi 0, %s184
      %s199 = sphi 0, %s185
      %s203 = sphi 0, %s203
      %s205 = sphi 0, %s203
      %s206 = sphi 0, %s205
      %s220 = sphi 0, %s206
      %s224 = sphi 0, %s224
      %s226 = sphi 0, %s224
      %s227 = sphi 0, %s226
      %s241 = sphi 0, %s227
      %s245 = sphi 0, %s245
      %s247 = sphi 0, %s245
      %s248 = sphi 0, %s247
      %s262 = sphi 0, %s248
      %s266 = sphi 0, %s266
      %s268 = sphi 0, %s266
      %s269 = sphi 0, %s268
      %s283 = sphi 0, %s269
      %s287 = sphi 0, %s287
      %s289 = sphi 0, %s287
      %s290 = sphi 0, %s289
      %s304 = sphi 0, %s290
      %s310 = sphi 0, %s312
      %s313 = sphi 0, %s310
      %s314 = sphi 0, %s313
      %s330 = sphi 0, %s314
    $region4: #{inception_forward.1} parent=1 // loop_header_branch
      %25 = sbr.rel (%p23) target = $region8
    $region5: #{inception_forward.1} parent=1 // loop_body
      %s27 = ssub.s32 %s22, 1
      %s28 = ssub.s32 %s22, 2
      %s29 = sadd.s32 %s22, 1
      %s30 = ssub.s32 %s22, %s29
      %p31 = scmp.eq.s32.totalorder %s30, 0
      %s33 = sadd.s32 %s32, 1
      %s34 = scalar_select %p31, %s32, %s33
      %p37 = pneg %p31
      %p38 = scmp.eq.s32.totalorder %s22, 1
      %p39 = por %p37, %p38
      %p40 = scmp.ne.s32.totalorder %s32, %s35
      %p41 = scmp.eq.s32.totalorder %s22, 0
      %p42 = por %p40, %p41
      %p43 = scmp.ne.s32.totalorder %s32, %s35
      %p44 = scmp.eq.s32.totalorder %s27, 1
      %p45 = por %p43, %p44
      %p46 = scmp.ne.s32.totalorder %s35, %s36
      %p47 = scmp.eq.s32.totalorder %s27, 0
      %p48 = por %p46, %p47
      %p49 = scmp.ne.s32.totalorder %s35, %s36
      %p50 = scmp.eq.s32.totalorder %s28, 1
      %p51 = por %p49, %p50
      %p53 = scmp.ne.s32.totalorder %s36, %s52
      %p54 = scmp.eq.s32.totalorder %s28, 0
      %p55 = por %p53, %p54
      %s57 = sadd.s32 %s56, 1
      %p60 = scmp.eq.s32.totalorder %s22, 1
      %p61 = scmp.ne.s32.totalorder %s56, %s58
      %p62 = scmp.eq.s32.totalorder %s22, 0
      %p63 = por %p61, %p62
      %p64 = scmp.ne.s32.totalorder %s56, %s58
      %p65 = scmp.eq.s32.totalorder %s27, 1
      %p66 = por %p64, %p65
      %p67 = scmp.ne.s32.totalorder %s58, %s59
      %p68 = scmp.eq.s32.totalorder %s27, 0
      %p69 = por %p67, %p68
      %p70 = scmp.ne.s32.totalorder %s58, %s59
      %p71 = scmp.eq.s32.totalorder %s28, 1
      %p72 = por %p70, %p71
      %p74 = scmp.ne.s32.totalorder %s59, %s73
      %p75 = scmp.eq.s32.totalorder %s28, 0
      %p76 = por %p74, %p75
      %s78 = sadd.s32 %s77, 1
      %p81 = scmp.eq.s32.totalorder %s22, 1
      %p82 = scmp.ne.s32.totalorder %s77, %s79
      %p83 = scmp.eq.s32.totalorder %s22, 0
      %p84 = por %p82, %p83
      %p85 = scmp.ne.s32.totalorder %s77, %s79
      %p86 = scmp.eq.s32.totalorder %s27, 1
      %p87 = por %p85, %p86
      %p88 = scmp.ne.s32.totalorder %s79, %s80
      %p89 = scmp.eq.s32.totalorder %s27, 0
      %p90 = por %p88, %p89
      %p91 = scmp.ne.s32.totalorder %s79, %s80
      %p92 = scmp.eq.s32.totalorder %s28, 1
      %p93 = por %p91, %p92
      %p95 = scmp.ne.s32.totalorder %s80, %s94
      %p96 = scmp.eq.s32.totalorder %s28, 0
      %p97 = por %p95, %p96
      %s99 = sadd.s32 %s98, 1
      %p102 = scmp.eq.s32.totalorder %s22, 1
      %p103 = scmp.ne.s32.totalorder %s98, %s100
      %p104 = scmp.eq.s32.totalorder %s22, 0
      %p105 = por %p103, %p104
      %p106 = scmp.ne.s32.totalorder %s98, %s100
      %p107 = scmp.eq.s32.totalorder %s27, 1
      %p108 = por %p106, %p107
      %p109 = scmp.ne.s32.totalorder %s100, %s101
      %p110 = scmp.eq.s32.totalorder %s27, 0
      %p111 = por %p109, %p110
      %p112 = scmp.ne.s32.totalorder %s100, %s101
      %p113 = scmp.eq.s32.totalorder %s28, 1
      %p114 = por %p112, %p113
      %p116 = scmp.ne.s32.totalorder %s101, %s115
      %p117 = scmp.eq.s32.totalorder %s28, 0
      %p118 = por %p116, %p117
      %s120 = sadd.s32 %s119, 1
      %p123 = scmp.eq.s32.totalorder %s22, 1
      %p124 = scmp.ne.s32.totalorder %s119, %s121
      %p125 = scmp.eq.s32.totalorder %s22, 0
      %p126 = por %p124, %p125
      %p127 = scmp.ne.s32.totalorder %s119, %s121
      %p128 = scmp.eq.s32.totalorder %s27, 1
      %p129 = por %p127, %p128
      %p130 = scmp.ne.s32.totalorder %s121, %s122
      %p131 = scmp.eq.s32.totalorder %s27, 0
      %p132 = por %p130, %p131
      %p133 = scmp.ne.s32.totalorder %s121, %s122
      %p134 = scmp.eq.s32.totalorder %s28, 1
      %p135 = por %p133, %p134
      %p137 = scmp.ne.s32.totalorder %s122, %s136
      %p138 = scmp.eq.s32.totalorder %s28, 0
      %p139 = por %p137, %p138
      %s141 = sadd.s32 %s140, 1
      %p144 = scmp.eq.s32.totalorder %s22, 1
      %p145 = scmp.ne.s32.totalorder %s140, %s142
      %p146 = scmp.eq.s32.totalorder %s22, 0
      %p147 = por %p145, %p146
      %p148 = scmp.ne.s32.totalorder %s140, %s142
      %p149 = scmp.eq.s32.totalorder %s27, 1
      %p150 = por %p148, %p149
      %p151 = scmp.ne.s32.totalorder %s142, %s143
      %p152 = scmp.eq.s32.totalorder %s27, 0
      %p153 = por %p151, %p152
      %p154 = scmp.ne.s32.totalorder %s142, %s143
      %p155 = scmp.eq.s32.totalorder %s28, 1
      %p156 = por %p154, %p155
      %p158 = scmp.ne.s32.totalorder %s143, %s157
      %p159 = scmp.eq.s32.totalorder %s28, 0
      %p160 = por %p158, %p159
      %s162 = sadd.s32 %s161, 1
      %p165 = scmp.eq.s32.totalorder %s22, 1
      %p166 = scmp.ne.s32.totalorder %s161, %s163
      %p167 = scmp.eq.s32.totalorder %s22, 0
      %p168 = por %p166, %p167
      %p169 = scmp.ne.s32.totalorder %s161, %s163
      %p170 = scmp.eq.s32.totalorder %s27, 1
      %p171 = por %p169, %p170
      %p172 = scmp.ne.s32.totalorder %s163, %s164
      %p173 = scmp.eq.s32.totalorder %s27, 0
      %p174 = por %p172, %p173
      %p175 = scmp.ne.s32.totalorder %s163, %s164
      %p176 = scmp.eq.s32.totalorder %s28, 1
      %p177 = por %p175, %p176
      %p179 = scmp.ne.s32.totalorder %s164, %s178
      %p180 = scmp.eq.s32.totalorder %s28, 0
      %p181 = por %p179, %p180
      %s183 = sadd.s32 %s182, 1
      %p186 = scmp.eq.s32.totalorder %s22, 1
      %p187 = scmp.ne.s32.totalorder %s182, %s184
      %p188 = scmp.eq.s32.totalorder %s22, 0
      %p189 = por %p187, %p188
      %p190 = scmp.ne.s32.totalorder %s182, %s184
      %p191 = scmp.eq.s32.totalorder %s27, 1
      %p192 = por %p190, %p191
      %p193 = scmp.ne.s32.totalorder %s184, %s185
      %p194 = scmp.eq.s32.totalorder %s27, 0
      %p195 = por %p193, %p194
      %p196 = scmp.ne.s32.totalorder %s184, %s185
      %p197 = scmp.eq.s32.totalorder %s28, 1
      %p198 = por %p196, %p197
      %p200 = scmp.ne.s32.totalorder %s185, %s199
      %p201 = scmp.eq.s32.totalorder %s28, 0
      %p202 = por %p200, %p201
      %s204 = sadd.s32 %s203, 1
      %p207 = scmp.eq.s32.totalorder %s22, 1
      %p208 = scmp.ne.s32.totalorder %s203, %s205
      %p209 = scmp.eq.s32.totalorder %s22, 0
      %p210 = por %p208, %p209
      %p211 = scmp.ne.s32.totalorder %s203, %s205
      %p212 = scmp.eq.s32.totalorder %s27, 1
      %p213 = por %p211, %p212
      %p214 = scmp.ne.s32.totalorder %s205, %s206
      %p215 = scmp.eq.s32.totalorder %s27, 0
      %p216 = por %p214, %p215
      %p217 = scmp.ne.s32.totalorder %s205, %s206
      %p218 = scmp.eq.s32.totalorder %s28, 1
      %p219 = por %p217, %p218
      %p221 = scmp.ne.s32.totalorder %s206, %s220
      %p222 = scmp.eq.s32.totalorder %s28, 0
      %p223 = por %p221, %p222
      %s225 = sadd.s32 %s224, 1
      %p228 = scmp.eq.s32.totalorder %s22, 1
      %p229 = scmp.ne.s32.totalorder %s224, %s226
      %p230 = scmp.eq.s32.totalorder %s22, 0
      %p231 = por %p229, %p230
      %p232 = scmp.ne.s32.totalorder %s224, %s226
      %p233 = scmp.eq.s32.totalorder %s27, 1
      %p234 = por %p232, %p233
      %p235 = scmp.ne.s32.totalorder %s226, %s227
      %p236 = scmp.eq.s32.totalorder %s27, 0
      %p237 = por %p235, %p236
      %p238 = scmp.ne.s32.totalorder %s226, %s227
      %p239 = scmp.eq.s32.totalorder %s28, 1
      %p240 = por %p238, %p239
      %p242 = scmp.ne.s32.totalorder %s227, %s241
      %p243 = scmp.eq.s32.totalorder %s28, 0
      %p244 = por %p242, %p243
      %s246 = sadd.s32 %s245, 1
      %p249 = scmp.eq.s32.totalorder %s22, 1
      %p250 = scmp.ne.s32.totalorder %s245, %s247
      %p251 = scmp.eq.s32.totalorder %s22, 0
      %p252 = por %p250, %p251
      %p253 = scmp.ne.s32.totalorder %s245, %s247
      %p254 = scmp.eq.s32.totalorder %s27, 1
      %p255 = por %p253, %p254
      %p256 = scmp.ne.s32.totalorder %s247, %s248
      %p257 = scmp.eq.s32.totalorder %s27, 0
      %p258 = por %p256, %p257
      %p259 = scmp.ne.s32.totalorder %s247, %s248
      %p260 = scmp.eq.s32.totalorder %s28, 1
      %p261 = por %p259, %p260
      %p263 = scmp.ne.s32.totalorder %s248, %s262
      %p264 = scmp.eq.s32.totalorder %s28, 0
      %p265 = por %p263, %p264
      %s267 = sadd.s32 %s266, 1
      %p270 = scmp.eq.s32.totalorder %s22, 1
      %p271 = scmp.ne.s32.totalorder %s266, %s268
      %p272 = scmp.eq.s32.totalorder %s22, 0
      %p273 = por %p271, %p272
      %p274 = scmp.ne.s32.totalorder %s266, %s268
      %p275 = scmp.eq.s32.totalorder %s27, 1
      %p276 = por %p274, %p275
      %p277 = scmp.ne.s32.totalorder %s268, %s269
      %p278 = scmp.eq.s32.totalorder %s27, 0
      %p279 = por %p277, %p278
      %p280 = scmp.ne.s32.totalorder %s268, %s269
      %p281 = scmp.eq.s32.totalorder %s28, 1
      %p282 = por %p280, %p281
      %p284 = scmp.ne.s32.totalorder %s269, %s283
      %p285 = scmp.eq.s32.totalorder %s28, 0
      %p286 = por %p284, %p285
      %s288 = sadd.s32 %s287, 1
      %p291 = scmp.eq.s32.totalorder %s22, 1
      %p292 = scmp.ne.s32.totalorder %s287, %s289
      %p293 = scmp.eq.s32.totalorder %s22, 0
      %p294 = por %p292, %p293
      %p295 = scmp.ne.s32.totalorder %s287, %s289
      %p296 = scmp.eq.s32.totalorder %s27, 1
      %p297 = por %p295, %p296
      %p298 = scmp.ne.s32.totalorder %s289, %s290
      %p299 = scmp.eq.s32.totalorder %s27, 0
      %p300 = por %p298, %p299
      %p301 = scmp.ne.s32.totalorder %s289, %s290
      %p302 = scmp.eq.s32.totalorder %s28, 1
      %p303 = por %p301, %p302
      %p305 = scmp.ne.s32.totalorder %s290, %s304
      %p306 = scmp.eq.s32.totalorder %s28, 0
      %p307 = por %p305, %p306
      %s308 = ssub.s32 %s22, %s29
      %p309 = scmp.eq.s32.totalorder %s308, 0
      %s311 = sadd.s32 %s310, 1
      %s312 = scalar_select %p309, %s310, %s311
      %p315 = pneg %p309
      %p316 = scmp.eq.s32.totalorder %s22, 1
      %p317 = por %p315, %p316
      %p318 = scmp.ne.s32.totalorder %s310, %s313
      %p319 = scmp.eq.s32.totalorder %s22, 0
      %p320 = por %p318, %p319
      %p321 = scmp.ne.s32.totalorder %s310, %s313
      %p322 = scmp.eq.s32.totalorder %s27, 1
      %p323 = por %p321, %p322
      %p324 = scmp.ne.s32.totalorder %s313, %s314
      %p325 = scmp.eq.s32.totalorder %s27, 0
      %p326 = por %p324, %p325
      %p327 = scmp.ne.s32.totalorder %s313, %s314
      %p328 = scmp.eq.s32.totalorder %s28, 1
      %p329 = por %p327, %p328
      %p331 = scmp.ne.s32.totalorder %s314, %s330
      %p332 = scmp.eq.s32.totalorder %s28, 0
      %p333 = por %p331, %p332
      %p334 = scmp.le.s32.totalorder 1, %s22
      %p335 = scmp.lt.s32.totalorder %s22, 3
      %p336 = pnand %p334, %p335
      %p337 = pneg %p336
      // Predicated region
      $region9: #{inception_forward.1} parent=5 // pred_check
        _
      $region10: #{inception_forward.1} parent=5 // pred_check_branch
        %339 = sbr.rel (%p336) target = $region12
      $region11: #{inception_forward.1} parent=5 // pred_region
        %s340 = ssub.s32 %s22, 1
        // Predicated region
        $region13: #{inception_forward.1} parent=11 // pred_check
          %p341 = pneg %p69
        $region14: #{inception_forward.1} parent=11 // pred_check_branch
          %343 = sbr.rel (%p341) target = $region16
        $region15: #{inception_forward.1} parent=11 // pred_region
          _
        $region16: #{inception_forward.1} parent=11 // pred_fallthru
          _
        // Predicated region
        $region17: #{inception_forward.1} parent=11 // pred_check
          %p344 = pneg %p90
        $region18: #{inception_forward.1} parent=11 // pred_check_branch
          %346 = sbr.rel (%p344) target = $region20
        $region19: #{inception_forward.1} parent=11 // pred_region
          _
        $region20: #{inception_forward.1} parent=11 // pred_fallthru
          _
        // Predicated region
        $region21: #{inception_forward.1} parent=11 // pred_check
          %p347 = pneg %p111
        $region22: #{inception_forward.1} parent=11 // pred_check_branch
          %349 = sbr.rel (%p347) target = $region24
        $region23: #{inception_forward.1} parent=11 // pred_region
          _
        $region24: #{inception_forward.1} parent=11 // pred_fallthru
          _
        // Predicated region
        $region25: #{inception_forward.1} parent=11 // pred_check
          %p350 = pneg %p132
        $region26: #{inception_forward.1} parent=11 // pred_check_branch
          %352 = sbr.rel (%p350) target = $region28
        $region27: #{inception_forward.1} parent=11 // pred_region
          _
        $region28: #{inception_forward.1} parent=11 // pred_fallthru
          _
        // Predicated region
        $region29: #{inception_forward.1} parent=11 // pred_check
          %p353 = pneg %p153
        $region30: #{inception_forward.1} parent=11 // pred_check_branch
          %355 = sbr.rel (%p353) target = $region32
        $region31: #{inception_forward.1} parent=11 // pred_region
          _
        $region32: #{inception_forward.1} parent=11 // pred_fallthru
          _
        // Predicated region
        $region33: #{inception_forward.1} parent=11 // pred_check
          %p356 = pneg %p174
        $region34: #{inception_forward.1} parent=11 // pred_check_branch
          %358 = sbr.rel (%p356) target = $region36
        $region35: #{inception_forward.1} parent=11 // pred_region
          _
        $region36: #{inception_forward.1} parent=11 // pred_fallthru
          _
        // Predicated region
        $region37: #{inception_forward.1} parent=11 // pred_check
          %p359 = pneg %p195
        $region38: #{inception_forward.1} parent=11 // pred_check_branch
          %361 = sbr.rel (%p359) target = $region40
        $region39: #{inception_forward.1} parent=11 // pred_region
          _
        $region40: #{inception_forward.1} parent=11 // pred_fallthru
          _
        // Predicated region
        $region41: #{inception_forward.1} parent=11 // pred_check
          %p362 = pneg %p216
        $region42: #{inception_forward.1} parent=11 // pred_check_branch
          %364 = sbr.rel (%p362) target = $region44
        $region43: #{inception_forward.1} parent=11 // pred_region
          _
        $region44: #{inception_forward.1} parent=11 // pred_fallthru
          _
        // Predicated region
        $region45: #{inception_forward.1} parent=11 // pred_check
          %p365 = pneg %p237
        $region46: #{inception_forward.1} parent=11 // pred_check_branch
          %367 = sbr.rel (%p365) target = $region48
        $region47: #{inception_forward.1} parent=11 // pred_region
          _
        $region48: #{inception_forward.1} parent=11 // pred_fallthru
          _
        // Predicated region
        $region49: #{inception_forward.1} parent=11 // pred_check
          %p368 = pneg %p258
        $region50: #{inception_forward.1} parent=11 // pred_check_branch
          %370 = sbr.rel (%p368) target = $region52
        $region51: #{inception_forward.1} parent=11 // pred_region
          _
        $region52: #{inception_forward.1} parent=11 // pred_fallthru
          _
        // Predicated region
        $region53: #{inception_forward.1} parent=11 // pred_check
          %p371 = pneg %p279
        $region54: #{inception_forward.1} parent=11 // pred_check_branch
          %373 = sbr.rel (%p371) target = $region56
        $region55: #{inception_forward.1} parent=11 // pred_region
          _
        $region56: #{inception_forward.1} parent=11 // pred_fallthru
          _
        // Predicated region
        $region57: #{inception_forward.1} parent=11 // pred_check
          %p374 = pneg %p300
        $region58: #{inception_forward.1} parent=11 // pred_check_branch
          %376 = sbr.rel (%p374) target = $region60
        $region59: #{inception_forward.1} parent=11 // pred_region
          _
        $region60: #{inception_forward.1} parent=11 // pred_fallthru
          _
      $region12: #{inception_forward.1} parent=5 // pred_fallthru
        _
      %p377 = scmp.lt.s32.totalorder %s22, 2
      // Predicated region
      $region61: #{inception_forward.1} parent=5 // pred_check
        %p378 = pneg %p377
      $region62: #{inception_forward.1} parent=5 // pred_check_branch
        %380 = sbr.rel (%p378) target = $region64
      $region63: #{inception_forward.1} parent=5 // pred_region
        // Predicated region
        $region65: #{inception_forward.1} parent=63 // pred_check
          %p381 = pneg %p42
        $region66: #{inception_forward.1} parent=63 // pred_check_branch
          %383 = sbr.rel (%p381) target = $region68
        $region67: #{inception_forward.1} parent=63 // pred_region
          %p384 = scmp.lt.s32.totalorder %s22, 1
          %s385 = scalar_select %p384, %s22, 1
          %s386 = smul.addr %s385, 32
          %s387 = smul.addr %s386, 8
          %s388 = scalar_lea.vmem %s0, %s387
        $region68: #{inception_forward.1} parent=63 // pred_fallthru
          _
      $region64: #{inception_forward.1} parent=5 // pred_fallthru
        _
      %p389 = scmp.le.s32.totalorder 1, %s22
      %p390 = scmp.lt.s32.totalorder %s22, 3
      %p391 = pnand %p389, %p390
      %p392 = pneg %p391
      // Predicated region
      $region69: #{inception_forward.1} parent=5 // pred_check
        _
      $region70: #{inception_forward.1} parent=5 // pred_check_branch
        %394 = sbr.rel (%p391) target = $region72
      $region71: #{inception_forward.1} parent=5 // pred_region
        %s395 = ssub.s32 %s22, 1
        %p396 = scmp.lt.s32.totalorder %s27, 1
        %s397 = scalar_select %p396, %s27, 1
        %s398 = smul.addr %s397, 32
        %s399 = smul.addr %s398, 8
        %s400 = scalar_lea.vmem %s0, %s399
        %p401 = pneg %p48
        %p402 = pneg %p45
        %p403 = pneg %p69
        %p404 = pneg %p66
        %p405 = pneg %p90
        %p406 = pneg %p87
        %p407 = pneg %p111
        %p408 = pneg %p108
        %p409 = pneg %p132
        %p410 = pneg %p129
        %p411 = pneg %p153
        %p412 = pneg %p150
        %p413 = pneg %p174
        %p414 = pneg %p171
        %p415 = pneg %p195
        %p416 = pneg %p192
        %p417 = pneg %p216
        %p418 = pneg %p213
        %p419 = pneg %p237
        %p420 = pneg %p234
        %p421 = pneg %p258
        %p422 = pneg %p255
        %p423 = pneg %p279
        %p424 = pneg %p276
        %p425 = pneg %p300
        %p426 = pneg %p297
        %p427 = pneg %p326
        %p428 = pneg %p323
        %s429 = sand.u32 %s313, 1
        %s430 = scalar_lea.sflag [#allocation8], %s429
        %s431 = sand.u32 %s313, 1
        %s432 = smul.addr %s431, 256
        %s433 = scalar_lea.vmem [#allocation7], %s432
        %p434 = scmp.lt.s32.totalorder %s27, 1
        %s435 = scalar_select %p434, %s27, 1
        %s436 = smul.addr %s435, 32
        %s437 = smul.addr %s436, 8
        %s438 = scalar_lea.vmem %s0, %s437
        %v440 = vld [vmem:[%s438] sm:$0xff]
        %v441 = vld [vmem:[%s438 + $0x8] sm:$0xff]
        %v442 = vld [vmem:[%s438 + $0x10] sm:$0xff]
        %v443 = vld [vmem:[%s438 + $0x18] sm:$0xff]
        %v444 = vld [vmem:[%s438 + $0x20] sm:$0xff]
        %v445 = vld [vmem:[%s438 + $0x28] sm:$0xff]
        %v446 = vld [vmem:[%s438 + $0x30] sm:$0xff]
        %v447 = vld [vmem:[%s438 + $0x38] sm:$0xff]
        %v448 = vld [vmem:[%s438 + $0x40] sm:$0xff]
        %v449 = vld [vmem:[%s438 + $0x48] sm:$0xff]
        %v450 = vld [vmem:[%s438 + $0x50] sm:$0xff]
        %v451 = vld [vmem:[%s438 + $0x58] sm:$0xff]
        %v452 = vld [vmem:[%s438 + $0x60] sm:$0xff]
        %v453 = vld [vmem:[%s438 + $0x68] sm:$0xff]
        %v454 = vld [vmem:[%s438 + $0x70] sm:$0xff]
        %v455 = vld [vmem:[%s438 + $0x78] sm:$0xff]
        %v456 = vld [vmem:[%s438 + $0x80] sm:$0xff]
        %v457 = vld [vmem:[%s438 + $0x88] sm:$0xff]
        %v458 = vld [vmem:[%s438 + $0x90] sm:$0xff]
        %v459 = vld [vmem:[%s438 + $0x98] sm:$0xff]
        %v460 = vld [vmem:[%s438 + $0xa0] sm:$0xff]
        %v461 = vld [vmem:[%s438 + $0xa8] sm:$0xff]
        %v462 = vld [vmem:[%s438 + $0xb0] sm:$0xff]
        %v463 = vld [vmem:[%s438 + $0xb8] sm:$0xff]
        %v464 = vld [vmem:[%s438 + $0xc0] sm:$0xff]
        %v465 = vld [vmem:[%s438 + $0xc8] sm:$0xff]
        %v466 = vld [vmem:[%s438 + $0xd0] sm:$0xff]
        %v467 = vld [vmem:[%s438 + $0xd8] sm:$0xff]
        %v468 = vld [vmem:[%s438 + $0xe0] sm:$0xff]
        %v469 = vld [vmem:[%s438 + $0xe8] sm:$0xff]
        %v470 = vld [vmem:[%s438 + $0xf0] sm:$0xff]
        %v471 = vld [vmem:[%s438 + $0xf8] sm:$0xff]
        %v472 = vpack.c.bf16 %v441, %v440
        %v473 = vpack.c.bf16 %v443, %v442
        %v474 = vpack.c.bf16 %v445, %v444
        %v475 = vpack.c.bf16 %v447, %v446
        %v476 = vpack.c.bf16 %v449, %v448
        %v477 = vpack.c.bf16 %v451, %v450
        %v478 = vpack.c.bf16 %v453, %v452
        %v479 = vpack.c.bf16 %v455, %v454
        %v480 = vpack.c.bf16 %v457, %v456
        %v481 = vpack.c.bf16 %v459, %v458
        %v482 = vpack.c.bf16 %v461, %v460
        %v483 = vpack.c.bf16 %v463, %v462
        %v484 = vpack.c.bf16 %v465, %v464
        %v485 = vpack.c.bf16 %v467, %v466
        %v486 = vpack.c.bf16 %v469, %v468
        %v487 = vpack.c.bf16 %v471, %v470
        %v488 = vld [vmem:[%s1] sm:$0x3]
        %v489 = vld [vmem:[%s2] sm:$0x1]
        %v491 = vlaneseq
        %v492 = vshrl.u32 %v491, 7
        %v493 = vsub.s32 0, %v492
        %v494 = vrot.slane %v489, %v493
        %vm496 = vcmask 31744
        %v498 = vsel %vm496, %v472, 0
        %v501 = vsel %vm496, %v473, 0
        %v504 = vsel %vm496, %v474, 0
        %v507 = vsel %vm496, %v475, 0
        %v510 = vsel %vm496, %v476, 0
        %v513 = vsel %vm496, %v477, 0
        %v516 = vsel %vm496, %v478, 0
        %v519 = vsel %vm496, %v479, 0
        %v522 = vsel %vm496, %v480, 0
        %v525 = vsel %vm496, %v481, 0
        %v528 = vsel %vm496, %v482, 0
        %v531 = vsel %vm496, %v483, 0
        %v534 = vsel %vm496, %v484, 0
        %v537 = vsel %vm496, %v485, 0
        %v540 = vsel %vm496, %v486, 0
        %v543 = vsel %vm496, %v487, 0
        %vm545 = vcmask 1041408
        %v547 = vsel %vm545, %v488, 0
        %549 = vmatprep.subr.bf16.mxu0 0
        %550 = vmatpush1.bf16.msra.mxu0 %v547
        %551 = vmatprep.subr.bf16.mxu0 0
        %552 = vmatpush1.bf16.msra.mxu0 0
        %553 = vmatprep.subr.bf16.mxu0 0
        %554 = vmatpush1.bf16.msra.mxu0 0
        %555 = vmatprep.subr.bf16.mxu0 0
        %556 = vmatpush1.bf16.msra.mxu0 0
        %557 = vmatprep.subr.bf16.mxu0 0
        %558 = vmatpush1.bf16.msra.mxu0 0
        %559 = vmatprep.subr.bf16.mxu0 0
        %560 = vmatpush1.bf16.msra.mxu0 0
        %561 = vmatprep.subr.bf16.mxu0 0
        %562 = vmatpush1.bf16.msra.mxu0 0
        %563 = vmatprep.subr.bf16.mxu0 0
        %564 = vmatpush1.bf16.msra.mxu0 0
        %565 = vmatprep.subr.bf16.mxu0 0
        %566 = vmatpush1.bf16.msra.mxu0 0
        %567 = vmatprep.subr.bf16.mxu0 0
        %568 = vmatpush1.bf16.msra.mxu0 0
        %569 = vmatprep.subr.bf16.mxu0 0
        %570 = vmatpush1.bf16.msra.mxu0 0
        %571 = vmatprep.subr.bf16.mxu0 0
        %572 = vmatpush1.bf16.msra.mxu0 0
        %573 = vmatprep.subr.bf16.mxu0 0
        %574 = vmatpush1.bf16.msra.mxu0 0
        %575 = vmatprep.subr.bf16.mxu0 0
        %576 = vmatpush1.bf16.msra.mxu0 0
        %577 = vmatprep.subr.bf16.mxu0 0
        %578 = vmatpush1.bf16.msra.mxu0 0
        %579 = vmatprep.subr.bf16.mxu0 0
        %580 = vmatpush1.bf16.msra.mxu0 0
        %581 = vmatprep.mubr.bf16.mxu0 0
        %582 = vmatmul.mubr.bf16.gmra.mrb[0].mxu0 %v498
        %v583 = vpop.f32.mrb[0].mxu0
        %v584 = vadd.f32 %v494, %v583
        %v585 = vpop.f32.mrb[0].mxu0
        %v586 = vpop.f32.mrb[0].mxu0
        %v587 = vadd.f32 %v494, %v586
        %v588 = vpop.f32.mrb[0].mxu0
        %589 = vmatprep.mubr.bf16.mxu0 0
        %590 = vmatmul.mubr.bf16.gmra.mrb[0].mxu0 %v501
        %v591 = vpop.f32.mrb[0].mxu0
        %v592 = vadd.f32 %v494, %v591
        %v593 = vpop.f32.mrb[0].mxu0
        %v594 = vpop.f32.mrb[0].mxu0
        %v595 = vadd.f32 %v494, %v594
        %v596 = vpop.f32.mrb[0].mxu0
        %597 = vmatprep.mubr.bf16.mxu0 0
        %598 = vmatmul.mubr.bf16.gmra.mrb[0].mxu0 %v504
        %v599 = vpop.f32.mrb[0].mxu0
        %v600 = vadd.f32 %v494, %v599
        %v601 = vpop.f32.mrb[0].mxu0
        %v602 = vpop.f32.mrb[0].mxu0
        %v603 = vadd.f32 %v494, %v602
        %v604 = vpop.f32.mrb[0].mxu0
        %605 = vmatprep.mubr.bf16.mxu0 0
        %606 = vmatmul.mubr.bf16.gmra.mrb[0].mxu0 %v507
        %v607 = vpop.f32.mrb[0].mxu0
        %v608 = vadd.f32 %v494, %v607
        %v609 = vpop.f32.mrb[0].mxu0
        %v610 = vpop.f32.mrb[0].mxu0
        %v611 = vadd.f32 %v494, %v610
        %v612 = vpop.f32.mrb[0].mxu0
        %613 = vmatprep.mubr.bf16.mxu0 0
        %614 = vmatmul.mubr.bf16.gmra.mrb[0].mxu0 %v510
        %v615 = vpop.f32.mrb[0].mxu0
        %v616 = vadd.f32 %v494, %v615
        %v617 = vpop.f32.mrb[0].mxu0
        %v618 = vpop.f32.mrb[0].mxu0
        %v619 = vadd.f32 %v494, %v618
        %v620 = vpop.f32.mrb[0].mxu0
        %621 = vmatprep.mubr.bf16.mxu0 0
        %622 = vmatmul.mubr.bf16.gmra.mrb[0].mxu0 %v513
        %v623 = vpop.f32.mrb[0].mxu0
        %v624 = vadd.f32 %v494, %v623
        %v625 = vpop.f32.mrb[0].mxu0
        %v626 = vpop.f32.mrb[0].mxu0
        %v627 = vadd.f32 %v494, %v626
        %v628 = vpop.f32.mrb[0].mxu0
        %629 = vmatprep.mubr.bf16.mxu0 0
        %630 = vmatmul.mubr.bf16.gmra.mrb[0].mxu0 %v516
        %v631 = vpop.f32.mrb[0].mxu0
        %v632 = vadd.f32 %v494, %v631
        %v633 = vpop.f32.mrb[0].mxu0
        %v634 = vpop.f32.mrb[0].mxu0
        %v635 = vadd.f32 %v494, %v634
        %v636 = vpop.f32.mrb[0].mxu0
        %637 = vmatprep.mubr.bf16.mxu0 0
        %638 = vmatmul.mubr.bf16.gmra.mrb[0].mxu0 %v519
        %v639 = vpop.f32.mrb[0].mxu0
        %v640 = vadd.f32 %v494, %v639
        %v641 = vpop.f32.mrb[0].mxu0
        %v642 = vpop.f32.mrb[0].mxu0
        %v643 = vadd.f32 %v494, %v642
        %v644 = vpop.f32.mrb[0].mxu0
        %645 = vmatprep.mubr.bf16.mxu0 0
        %646 = vmatmul.mubr.bf16.gmra.mrb[0].mxu0 %v522
        %v647 = vpop.f32.mrb[0].mxu0
        %v648 = vadd.f32 %v494, %v647
        %v649 = vpop.f32.mrb[0].mxu0
        %v650 = vpop.f32.mrb[0].mxu0
        %v651 = vadd.f32 %v494, %v650
        %v652 = vpop.f32.mrb[0].mxu0
        %653 = vmatprep.mubr.bf16.mxu0 0
        %654 = vmatmul.mubr.bf16.gmra.mrb[0].mxu0 %v525
        %v655 = vpop.f32.mrb[0].mxu0
        %v656 = vadd.f32 %v494, %v655
        %v657 = vpop.f32.mrb[0].mxu0
        %v658 = vpop.f32.mrb[0].mxu0
        %v659 = vadd.f32 %v494, %v658
        %v660 = vpop.f32.mrb[0].mxu0
        %661 = vmatprep.mubr.bf16.mxu0 0
        %662 = vmatmul.mubr.bf16.gmra.mrb[0].mxu0 %v528
        %v663 = vpop.f32.mrb[0].mxu0
        %v664 = vadd.f32 %v494, %v663
        %v665 = vpop.f32.mrb[0].mxu0
        %v666 = vpop.f32.mrb[0].mxu0
        %v667 = vadd.f32 %v494, %v666
        %v668 = vpop.f32.mrb[0].mxu0
        %669 = vmatprep.mubr.bf16.mxu0 0
        %670 = vmatmul.mubr.bf16.gmra.mrb[0].mxu0 %v531
        %v671 = vpop.f32.mrb[0].mxu0
        %v672 = vadd.f32 %v494, %v671
        %v673 = vpop.f32.mrb[0].mxu0
        %v674 = vpop.f32.mrb[0].mxu0
        %v675 = vadd.f32 %v494, %v674
        %v676 = vpop.f32.mrb[0].mxu0
        %677 = vmatprep.mubr.bf16.mxu0 0
        %678 = vmatmul.mubr.bf16.gmra.mrb[0].mxu0 %v534
        %v679 = vpop.f32.mrb[0].mxu0
        %v680 = vadd.f32 %v494, %v679
        %v681 = vpop.f32.mrb[0].mxu0
        %v682 = vpop.f32.mrb[0].mxu0
        %v683 = vadd.f32 %v494, %v682
        %v684 = vpop.f32.mrb[0].mxu0
        %685 = vmatprep.mubr.bf16.mxu0 0
        %686 = vmatmul.mubr.bf16.gmra.mrb[0].mxu0 %v537
        %v687 = vpop.f32.mrb[0].mxu0
        %v688 = vadd.f32 %v494, %v687
        %v689 = vpop.f32.mrb[0].mxu0
        %v690 = vpop.f32.mrb[0].mxu0
        %v691 = vadd.f32 %v494, %v690
        %v692 = vpop.f32.mrb[0].mxu0
        %693 = vmatprep.mubr.bf16.mxu0 0
        %694 = vmatmul.mubr.bf16.gmra.mrb[0].mxu0 %v540
        %v695 = vpop.f32.mrb[0].mxu0
        %v696 = vadd.f32 %v494, %v695
        %v697 = vpop.f32.mrb[0].mxu0
        %v698 = vpop.f32.mrb[0].mxu0
        %v699 = vadd.f32 %v494, %v698
        %v700 = vpop.f32.mrb[0].mxu0
        %701 = vmatprep.mubr.bf16.mxu0 0
        %702 = vmatmul.mubr.bf16.gmra.mrb[0].mxu0 %v543
        %v703 = vpop.f32.mrb[0].mxu0
        %v704 = vadd.f32 %v494, %v703
        %v705 = vpop.f32.mrb[0].mxu0
        %v706 = vpop.f32.mrb[0].mxu0
        %v707 = vadd.f32 %v494, %v706
        %v708 = vpop.f32.mrb[0].mxu0
        %709 = vdwg.mxu0
        %v710 = vmax.f32 %v584, 0.0
        %v711 = vmax.f32 %v587, 0.0
        %v712 = vmax.f32 %v592, 0.0
        %v713 = vmax.f32 %v595, 0.0
        %v714 = vmax.f32 %v600, 0.0
        %v715 = vmax.f32 %v603, 0.0
        %v716 = vmax.f32 %v608, 0.0
        %v717 = vmax.f32 %v611, 0.0
        %v718 = vmax.f32 %v616, 0.0
        %v719 = vmax.f32 %v619, 0.0
        %v720 = vmax.f32 %v624, 0.0
        %v721 = vmax.f32 %v627, 0.0
        %v722 = vmax.f32 %v632, 0.0
        %v723 = vmax.f32 %v635, 0.0
        %v724 = vmax.f32 %v640, 0.0
        %v725 = vmax.f32 %v643, 0.0
        %v726 = vmax.f32 %v648, 0.0
        %v727 = vmax.f32 %v651, 0.0
        %v728 = vmax.f32 %v656, 0.0
        %v729 = vmax.f32 %v659, 0.0
        %v730 = vmax.f32 %v664, 0.0
        %v731 = vmax.f32 %v667, 0.0
        %v732 = vmax.f32 %v672, 0.0
        %v733 = vmax.f32 %v675, 0.0
        %v734 = vmax.f32 %v680, 0.0
        %v735 = vmax.f32 %v683, 0.0
        %v736 = vmax.f32 %v688, 0.0
        %v737 = vmax.f32 %v691, 0.0
        %v738 = vmax.f32 %v696, 0.0
        %v739 = vmax.f32 %v699, 0.0
        %v740 = vmax.f32 %v704, 0.0
        %v741 = vmax.f32 %v707, 0.0
        %v742 = vld [vmem:[%s3] sm:$0x3]
        %v743 = vld [vmem:[%s4] sm:$0x1]
        %v745 = vlaneseq
        %v746 = vshrl.u32 %v745, 7
        %v747 = vsub.s32 0, %v746
        %v748 = vrot.slane %v743, %v747
        %v751 = vsel %vm545, %v742, 0
        %753 = vmatprep.subr.bf16.mxu0 0
        %754 = vmatpush1.bf16.msra.mxu0 %v751
        %755 = vmatprep.subr.bf16.mxu0 0
        %756 = vmatpush1.bf16.msra.mxu0 0
        %757 = vmatprep.subr.bf16.mxu0 0
        %758 = vmatpush1.bf16.msra.mxu0 0
        %759 = vmatprep.subr.bf16.mxu0 0
        %760 = vmatpush1.bf16.msra.mxu0 0
        %761 = vmatprep.subr.bf16.mxu0 0
        %762 = vmatpush1.bf16.msra.mxu0 0
        %763 = vmatprep.subr.bf16.mxu0 0
        %764 = vmatpush1.bf16.msra.mxu0 0
        %765 = vmatprep.subr.bf16.mxu0 0
        %766 = vmatpush1.bf16.msra.mxu0 0
        %767 = vmatprep.subr.bf16.mxu0 0
        %768 = vmatpush1.bf16.msra.mxu0 0
        %769 = vmatprep.subr.bf16.mxu0 0
        %770 = vmatpush1.bf16.msra.mxu0 0
        %771 = vmatprep.subr.bf16.mxu0 0
        %772 = vmatpush1.bf16.msra.mxu0 0
        %773 = vmatprep.subr.bf16.mxu0 0
        %774 = vmatpush1.bf16.msra.mxu0 0
        %775 = vmatprep.subr.bf16.mxu0 0
        %776 = vmatpush1.bf16.msra.mxu0 0
        %777 = vmatprep.subr.bf16.mxu0 0
        %778 = vmatpush1.bf16.msra.mxu0 0
        %779 = vmatprep.subr.bf16.mxu0 0
        %780 = vmatpush1.bf16.msra.mxu0 0
        %781 = vmatprep.subr.bf16.mxu0 0
        %782 = vmatpush1.bf16.msra.mxu0 0
        %783 = vmatprep.subr.bf16.mxu0 0
        %784 = vmatpush1.bf16.msra.mxu0 0
        %785 = vmatprep.mubr.bf16.mxu0 0
        %786 = vmatmul.mubr.bf16.gmra.mrb[0].mxu0 %v498
        %v787 = vpop.f32.mrb[0].mxu0
        %v788 = vadd.f32 %v748, %v787
        %v789 = vpop.f32.mrb[0].mxu0
        %v790 = vpop.f32.mrb[0].mxu0
        %v791 = vadd.f32 %v748, %v790
        %v792 = vpop.f32.mrb[0].mxu0
        %793 = vmatprep.mubr.bf16.mxu0 0
        %794 = vmatmul.mubr.bf16.gmra.mrb[0].mxu0 %v501
        %v795 = vpop.f32.mrb[0].mxu0
        %v796 = vadd.f32 %v748, %v795
        %v797 = vpop.f32.mrb[0].mxu0
        %v798 = vpop.f32.mrb[0].mxu0
        %v799 = vadd.f32 %v748, %v798
        %v800 = vpop.f32.mrb[0].mxu0
        %801 = vmatprep.mubr.bf16.mxu0 0
        %802 = vmatmul.mubr.bf16.gmra.mrb[0].mxu0 %v504
        %v803 = vpop.f32.mrb[0].mxu0
        %v804 = vadd.f32 %v748, %v803
        %v805 = vpop.f32.mrb[0].mxu0
        %v806 = vpop.f32.mrb[0].mxu0
        %v807 = vadd.f32 %v748, %v806
        %v808 = vpop.f32.mrb[0].mxu0
        %809 = vmatprep.mubr.bf16.mxu0 0
        %810 = vmatmul.mubr.bf16.gmra.mrb[0].mxu0 %v507
        %v811 = vpop.f32.mrb[0].mxu0
        %v812 = vadd.f32 %v748, %v811
        %v813 = vpop.f32.mrb[0].mxu0
        %v814 = vpop.f32.mrb[0].mxu0
        %v815 = vadd.f32 %v748, %v814
        %v816 = vpop.f32.mrb[0].mxu0
        %817 = vmatprep.mubr.bf16.mxu0 0
        %818 = vmatmul.mubr.bf16.gmra.mrb[0].mxu0 %v510
        %v819 = vpop.f32.mrb[0].mxu0
        %v820 = vadd.f32 %v748, %v819
        %v821 = vpop.f32.mrb[0].mxu0
        %v822 = vpop.f32.mrb[0].mxu0
        %v823 = vadd.f32 %v748, %v822
        %v824 = vpop.f32.mrb[0].mxu0
        %825 = vmatprep.mubr.bf16.mxu0 0
        %826 = vmatmul.mubr.bf16.gmra.mrb[0].mxu0 %v513
        %v827 = vpop.f32.mrb[0].mxu0
        %v828 = vadd.f32 %v748, %v827
        %v829 = vpop.f32.mrb[0].mxu0
        %v830 = vpop.f32.mrb[0].mxu0
        %v831 = vadd.f32 %v748, %v830
        %v832 = vpop.f32.mrb[0].mxu0
        %833 = vmatprep.mubr.bf16.mxu0 0
        %834 = vmatmul.mubr.bf16.gmra.mrb[0].mxu0 %v516
        %v835 = vpop.f32.mrb[0].mxu0
        %v836 = vadd.f32 %v748, %v835
        %v837 = vpop.f32.mrb[0].mxu0
        %v838 = vpop.f32.mrb[0].mxu0
        %v839 = vadd.f32 %v748, %v838
        %v840 = vpop.f32.mrb[0].mxu0
        %841 = vmatprep.mubr.bf16.mxu0 0
        %842 = vmatmul.mubr.bf16.gmra.mrb[0].mxu0 %v519
        %v843 = vpop.f32.mrb[0].mxu0
        %v844 = vadd.f32 %v748, %v843
        %v845 = vpop.f32.mrb[0].mxu0
        %v846 = vpop.f32.mrb[0].mxu0
        %v847 = vadd.f32 %v748, %v846
        %v848 = vpop.f32.mrb[0].mxu0
        %849 = vmatprep.mubr.bf16.mxu0 0
        %850 = vmatmul.mubr.bf16.gmra.mrb[0].mxu0 %v522
        %v851 = vpop.f32.mrb[0].mxu0
        %v852 = vadd.f32 %v748, %v851
        %v853 = vpop.f32.mrb[0].mxu0
        %v854 = vpop.f32.mrb[0].mxu0
        %v855 = vadd.f32 %v748, %v854
        %v856 = vpop.f32.mrb[0].mxu0
        %857 = vmatprep.mubr.bf16.mxu0 0
        %858 = vmatmul.mubr.bf16.gmra.mrb[0].mxu0 %v525
        %v859 = vpop.f32.mrb[0].mxu0
        %v860 = vadd.f32 %v748, %v859
        %v861 = vpop.f32.mrb[0].mxu0
        %v862 = vpop.f32.mrb[0].mxu0
        %v863 = vadd.f32 %v748, %v862
        %v864 = vpop.f32.mrb[0].mxu0
        %865 = vmatprep.mubr.bf16.mxu0 0
        %866 = vmatmul.mubr.bf16.gmra.mrb[0].mxu0 %v528
        %v867 = vpop.f32.mrb[0].mxu0
        %v868 = vadd.f32 %v748, %v867
        %v869 = vpop.f32.mrb[0].mxu0
        %v870 = vpop.f32.mrb[0].mxu0
        %v871 = vadd.f32 %v748, %v870
        %v872 = vpop.f32.mrb[0].mxu0
        %873 = vmatprep.mubr.bf16.mxu0 0
        %874 = vmatmul.mubr.bf16.gmra.mrb[0].mxu0 %v531
        %v875 = vpop.f32.mrb[0].mxu0
        %v876 = vadd.f32 %v748, %v875
        %v877 = vpop.f32.mrb[0].mxu0
        %v878 = vpop.f32.mrb[0].mxu0
        %v879 = vadd.f32 %v748, %v878
        %v880 = vpop.f32.mrb[0].mxu0
        %881 = vmatprep.mubr.bf16.mxu0 0
        %882 = vmatmul.mubr.bf16.gmra.mrb[0].mxu0 %v534
        %v883 = vpop.f32.mrb[0].mxu0
        %v884 = vadd.f32 %v748, %v883
        %v885 = vpop.f32.mrb[0].mxu0
        %v886 = vpop.f32.mrb[0].mxu0
        %v887 = vadd.f32 %v748, %v886
        %v888 = vpop.f32.mrb[0].mxu0
        %889 = vmatprep.mubr.bf16.mxu0 0
        %890 = vmatmul.mubr.bf16.gmra.mrb[0].mxu0 %v537
        %v891 = vpop.f32.mrb[0].mxu0
        %v892 = vadd.f32 %v748, %v891
        %v893 = vpop.f32.mrb[0].mxu0
        %v894 = vpop.f32.mrb[0].mxu0
        %v895 = vadd.f32 %v748, %v894
        %v896 = vpop.f32.mrb[0].mxu0
        %897 = vmatprep.mubr.bf16.mxu0 0
        %898 = vmatmul.mubr.bf16.gmra.mrb[0].mxu0 %v540
        %v899 = vpop.f32.mrb[0].mxu0
        %v900 = vadd.f32 %v748, %v899
        %v901 = vpop.f32.mrb[0].mxu0
        %v902 = vpop.f32.mrb[0].mxu0
        %v903 = vadd.f32 %v748, %v902
        %v904 = vpop.f32.mrb[0].mxu0
        %905 = vmatprep.mubr.bf16.mxu0 0
        %906 = vmatmul.mubr.bf16.gmra.mrb[0].mxu0 %v543
        %v907 = vpop.f32.mrb[0].mxu0
        %v908 = vadd.f32 %v748, %v907
        %v909 = vpop.f32.mrb[0].mxu0
        %v910 = vpop.f32.mrb[0].mxu0
        %v911 = vadd.f32 %v748, %v910
        %v912 = vpop.f32.mrb[0].mxu0
        %913 = vdwg.mxu0
        %v914 = vmax.f32 %v788, 0.0
        %v915 = vmax.f32 %v791, 0.0
        %v916 = vmax.f32 %v796, 0.0
        %v917 = vmax.f32 %v799, 0.0
        %v918 = vmax.f32 %v804, 0.0
        %v919 = vmax.f32 %v807, 0.0
        %v920 = vmax.f32 %v812, 0.0
        %v921 = vmax.f32 %v815, 0.0
        %v922 = vmax.f32 %v820, 0.0
        %v923 = vmax.f32 %v823, 0.0
        %v924 = vmax.f32 %v828, 0.0
        %v925 = vmax.f32 %v831, 0.0
        %v926 = vmax.f32 %v836, 0.0
        %v927 = vmax.f32 %v839, 0.0
        %v928 = vmax.f32 %v844, 0.0
        %v929 = vmax.f32 %v847, 0.0
        %v930 = vmax.f32 %v852, 0.0
        %v931 = vmax.f32 %v855, 0.0
        %v932 = vmax.f32 %v860, 0.0
        %v933 = vmax.f32 %v863, 0.0
        %v934 = vmax.f32 %v868, 0.0
        %v935 = vmax.f32 %v871, 0.0
        %v936 = vmax.f32 %v876, 0.0
        %v937 = vmax.f32 %v879, 0.0
        %v938 = vmax.f32 %v884, 0.0
        %v939 = vmax.f32 %v887, 0.0
        %v940 = vmax.f32 %v892, 0.0
        %v941 = vmax.f32 %v895, 0.0
        %v942 = vmax.f32 %v900, 0.0
        %v943 = vmax.f32 %v903, 0.0
        %v944 = vmax.f32 %v908, 0.0
        %v945 = vmax.f32 %v911, 0.0
        %vm946 = vcmask 64512
        %947 = vst.msk [vmem:[#allocation2] sm:$0xff] %vm946, 0.0
        %948 = vst.msk [vmem:[#allocation2 + $0x8] sm:$0xff] %vm946, 0.0
        %vm949 = vcmask 58368
        %950 = vst.msk [vmem:[#allocation2 + $0x10] sm:$0x3] %vm949, 0.0
        %951 = vst.msk [vmem:[#allocation2 + $0x18] sm:$0xff] %vm946, 0.0
        %952 = vst.msk [vmem:[#allocation2 + $0x20] sm:$0xff] %vm946, 0.0
        %953 = vst.msk [vmem:[#allocation2 + $0x28] sm:$0x3] %vm949, 0.0
        %954 = vst.msk [vmem:[#allocation2 + $0x30] sm:$0xff] %vm946, 0.0
        %955 = vst.msk [vmem:[#allocation2 + $0x38] sm:$0xff] %vm946, 0.0
        %956 = vst.msk [vmem:[#allocation2 + $0x40] sm:$0x3] %vm949, 0.0
        %957 = vst.msk [vmem:[#allocation2 + $0x48] sm:$0xff] %vm946, 0.0
        %958 = vst.msk [vmem:[#allocation2 + $0x50] sm:$0xff] %vm946, 0.0
        %959 = vst.msk [vmem:[#allocation2 + $0x58] sm:$0x3] %vm949, 0.0
        %960 = vst.msk [vmem:[#allocation2 + $0x60] sm:$0xff] %vm946, 0.0
        %961 = vst.msk [vmem:[#allocation2 + $0x68] sm:$0xff] %vm946, 0.0
        %962 = vst.msk [vmem:[#allocation2 + $0x70] sm:$0x3] %vm949, 0.0
        %963 = vst.msk [vmem:[#allocation2 + $0x78] sm:$0xff] %vm946, 0.0
        %964 = vst.msk [vmem:[#allocation2 + $0x80] sm:$0xff] %vm946, 0.0
        %965 = vst.msk [vmem:[#allocation2 + $0x88] sm:$0x3] %vm949, 0.0
        %966 = vst.msk [vmem:[#allocation2 + $0x90] sm:$0xff] %vm946, 0.0
        %967 = vst.msk [vmem:[#allocation2 + $0x98] sm:$0xff] %vm946, 0.0
        %968 = vst.msk [vmem:[#allocation2 + $0xa0] sm:$0x3] %vm949, 0.0
        %969 = vst.msk [vmem:[#allocation2 + $0xa8] sm:$0xff] %vm946, 0.0
        %970 = vst.msk [vmem:[#allocation2 + $0xb0] sm:$0xff] %vm946, 0.0
        %971 = vst.msk [vmem:[#allocation2 + $0xb8] sm:$0x3] %vm949, 0.0
        %972 = vst.msk [vmem:[#allocation2 + $0xc0] sm:$0xff] %vm946, 0.0
        %973 = vst.msk [vmem:[#allocation2 + $0xc8] sm:$0xff] %vm946, 0.0
        %974 = vst.msk [vmem:[#allocation2 + $0xd0] sm:$0x3] %vm949, 0.0
        %975 = vst.msk [vmem:[#allocation2 + $0xd8] sm:$0xff] %vm946, 0.0
        %976 = vst.msk [vmem:[#allocation2 + $0xe0] sm:$0xff] %vm946, 0.0
        %977 = vst.msk [vmem:[#allocation2 + $0xe8] sm:$0x3] %vm949, 0.0
        %978 = vst.msk [vmem:[#allocation2 + $0xf0] sm:$0xff] %vm946, 0.0
        %979 = vst.msk [vmem:[#allocation2 + $0xf8] sm:$0xff] %vm946, 0.0
        %980 = vst.msk [vmem:[#allocation2 + $0x100] sm:$0x3] %vm949, 0.0
        %981 = vst.msk [vmem:[#allocation2 + $0x108] sm:$0xff] %vm946, 0.0
        %982 = vst.msk [vmem:[#allocation2 + $0x110] sm:$0xff] %vm946, 0.0
        %983 = vst.msk [vmem:[#allocation2 + $0x118] sm:$0x3] %vm949, 0.0
        %984 = vst.msk [vmem:[#allocation2 + $0x120] sm:$0xff] %vm946, 0.0
        %985 = vst.msk [vmem:[#allocation2 + $0x128] sm:$0xff] %vm946, 0.0
        %986 = vst.msk [vmem:[#allocation2 + $0x130] sm:$0x3] %vm949, 0.0
        %987 = vst.msk [vmem:[#allocation2 + $0x138] sm:$0xff] %vm946, 0.0
        %988 = vst.msk [vmem:[#allocation2 + $0x140] sm:$0xff] %vm946, 0.0
        %989 = vst.msk [vmem:[#allocation2 + $0x148] sm:$0x3] %vm949, 0.0
        %990 = vst.msk [vmem:[#allocation2 + $0x150] sm:$0xff] %vm946, 0.0
        %991 = vst.msk [vmem:[#allocation2 + $0x158] sm:$0xff] %vm946, 0.0
        %992 = vst.msk [vmem:[#allocation2 + $0x160] sm:$0x3] %vm949, 0.0
        %993 = vst.msk [vmem:[#allocation2 + $0x168] sm:$0xff] %vm946, 0.0
        %994 = vst.msk [vmem:[#allocation2 + $0x170] sm:$0xff] %vm946, 0.0
        %995 = vst.msk [vmem:[#allocation2 + $0x178] sm:$0x3] %vm949, 0.0
        %996 = vst.msk [vmem:[#allocation2 + $0x180] sm:$0xff] %vm946, 0.0
        %997 = vst.msk [vmem:[#allocation2 + $0x188] sm:$0xff] %vm946, 0.0
        %998 = vst.msk [vmem:[#allocation2 + $0x190] sm:$0x3] %vm949, 0.0
        %999 = vst.msk [vmem:[#allocation2 + $0x198] sm:$0xff] %vm946, 0.0
        %1000 = vst.msk [vmem:[#allocation2 + $0x1a0] sm:$0xff] %vm946, 0.0
        %1001 = vst.msk [vmem:[#allocation2 + $0x1a8] sm:$0x3] %vm949, 0.0
        %s1002 = scalar_lea.vmem [#allocation2], 24
        %1003 = vst.msk [vmem:[%s1002 + $0x1] sm:$0xff] %vm946, %v914
        %1004 = vst.msk [vmem:[%s1002 + $0x9] sm:$0xff] %vm946, %v915
        %1005 = vst.msk [vmem:[%s1002 + $0x19] sm:$0xff] %vm946, %v916
        %1006 = vst.msk [vmem:[%s1002 + $0x21] sm:$0xff] %vm946, %v917
        %1007 = vst.msk [vmem:[%s1002 + $0x31] sm:$0xff] %vm946, %v918
        %1008 = vst.msk [vmem:[%s1002 + $0x39] sm:$0xff] %vm946, %v919
        %1009 = vst.msk [vmem:[%s1002 + $0x49] sm:$0xff] %vm946, %v920
        %1010 = vst.msk [vmem:[%s1002 + $0x51] sm:$0xff] %vm946, %v921
        %1011 = vst.msk [vmem:[%s1002 + $0x61] sm:$0xff] %vm946, %v922
        %1012 = vst.msk [vmem:[%s1002 + $0x69] sm:$0xff] %vm946, %v923
        %1013 = vst.msk [vmem:[%s1002 + $0x79] sm:$0xff] %vm946, %v924
        %1014 = vst.msk [vmem:[%s1002 + $0x81] sm:$0xff] %vm946, %v925
        %1015 = vst.msk [vmem:[%s1002 + $0x91] sm:$0xff] %vm946, %v926
        %1016 = vst.msk [vmem:[%s1002 + $0x99] sm:$0xff] %vm946, %v927
        %1017 = vst.msk [vmem:[%s1002 + $0xa9] sm:$0xff] %vm946, %v928
        %1018 = vst.msk [vmem:[%s1002 + $0xb1] sm:$0xff] %vm946, %v929
        %1019 = vst.msk [vmem:[%s1002 + $0xc1] sm:$0xff] %vm946, %v930
        %1020 = vst.msk [vmem:[%s1002 + $0xc9] sm:$0xff] %vm946, %v931
        %1021 = vst.msk [vmem:[%s1002 + $0xd9] sm:$0xff] %vm946, %v932
        %1022 = vst.msk [vmem:[%s1002 + $0xe1] sm:$0xff] %vm946, %v933
        %1023 = vst.msk [vmem:[%s1002 + $0xf1] sm:$0xff] %vm946, %v934
        %1024 = vst.msk [vmem:[%s1002 + $0xf9] sm:$0xff] %vm946, %v935
        %1025 = vst.msk [vmem:[%s1002 + $0x109] sm:$0xff] %vm946, %v936
        %1026 = vst.msk [vmem:[%s1002 + $0x111] sm:$0xff] %vm946, %v937
        %1027 = vst.msk [vmem:[%s1002 + $0x121] sm:$0xff] %vm946, %v938
        %1028 = vst.msk [vmem:[%s1002 + $0x129] sm:$0xff] %vm946, %v939
        %1029 = vst.msk [vmem:[%s1002 + $0x139] sm:$0xff] %vm946, %v940
        %1030 = vst.msk [vmem:[%s1002 + $0x141] sm:$0xff] %vm946, %v941
        %1031 = vst.msk [vmem:[%s1002 + $0x151] sm:$0xff] %vm946, %v942
        %1032 = vst.msk [vmem:[%s1002 + $0x159] sm:$0xff] %vm946, %v943
        %1033 = vst.msk [vmem:[%s1002 + $0x169] sm:$0xff] %vm946, %v944
        %1034 = vst.msk [vmem:[%s1002 + $0x171] sm:$0xff] %vm946, %v945
        %v1035 = vld [vmem:[#allocation2] sm:$0xff]
        %v1036 = vld [vmem:[#allocation2 + $0x8] sm:$0xff]
        %v1037 = vld [vmem:[#allocation2 + $0x18] sm:$0xff]
        %v1038 = vld [vmem:[#allocation2 + $0x20] sm:$0xff]
        %v1039 = vld [vmem:[#allocation2 + $0x30] sm:$0xff]
        %v1040 = vld [vmem:[#allocation2 + $0x38] sm:$0xff]
        %v1041 = vld [vmem:[#allocation2 + $0x48] sm:$0xff]
        %v1042 = vld [vmem:[#allocation2 + $0x50] sm:$0xff]
        %v1043 = vld [vmem:[#allocation2 + $0x60] sm:$0xff]
        %v1044 = vld [vmem:[#allocation2 + $0x68] sm:$0xff]
        %v1045 = vld [vmem:[#allocation2 + $0x78] sm:$0xff]
        %v1046 = vld [vmem:[#allocation2 + $0x80] sm:$0xff]
        %v1047 = vld [vmem:[#allocation2 + $0x90] sm:$0xff]
        %v1048 = vld [vmem:[#allocation2 + $0x98] sm:$0xff]
        %v1049 = vld [vmem:[#allocation2 + $0xa8] sm:$0xff]
        %v1050 = vld [vmem:[#allocation2 + $0xb0] sm:$0xff]
        %v1051 = vld [vmem:[#allocation2 + $0xc0] sm:$0xff]
        %v1052 = vld [vmem:[#allocation2 + $0xc8] sm:$0xff]
        %v1053 = vld [vmem:[#allocation2 + $0xd8] sm:$0xff]
        %v1054 = vld [vmem:[#allocation2 + $0xe0] sm:$0xff]
        %v1055 = vld [vmem:[#allocation2 + $0xf0] sm:$0xff]
        %v1056 = vld [vmem:[#allocation2 + $0xf8] sm:$0xff]
        %v1057 = vld [vmem:[#allocation2 + $0x108] sm:$0xff]
        %v1058 = vld [vmem:[#allocation2 + $0x110] sm:$0xff]
        %v1059 = vld [vmem:[#allocation2 + $0x120] sm:$0xff]
        %v1060 = vld [vmem:[#allocation2 + $0x128] sm:$0xff]
        %v1061 = vld [vmem:[#allocation2 + $0x138] sm:$0xff]
        %v1062 = vld [vmem:[#allocation2 + $0x140] sm:$0xff]
        %v1063 = vld [vmem:[#allocation2 + $0x150] sm:$0xff]
        %v1064 = vld [vmem:[#allocation2 + $0x158] sm:$0xff]
        %v1065 = vld [vmem:[#allocation2 + $0x168] sm:$0xff]
        %v1066 = vld [vmem:[#allocation2 + $0x170] sm:$0xff]
        %1067 = vst.msk [vmem:[#allocation5] sm:$0xff] %vm946, %v1035
        %1068 = vst.msk [vmem:[#allocation5 + $0x8] sm:$0xff] %vm946, %v1036
        %1069 = vst.msk [vmem:[#allocation5 + $0x10] sm:$0xff] %vm946, %v1037
        %1070 = vst.msk [vmem:[#allocation5 + $0x18] sm:$0xff] %vm946, %v1038
        %1071 = vst.msk [vmem:[#allocation5 + $0x20] sm:$0xff] %vm946, %v1039
        %1072 = vst.msk [vmem:[#allocation5 + $0x28] sm:$0xff] %vm946, %v1040
        %1073 = vst.msk [vmem:[#allocation5 + $0x30] sm:$0xff] %vm946, %v1041
        %1074 = vst.msk [vmem:[#allocation5 + $0x38] sm:$0xff] %vm946, %v1042
        %1075 = vst.msk [vmem:[#allocation5 + $0x40] sm:$0xff] %vm946, %v1043
        %1076 = vst.msk [vmem:[#allocation5 + $0x48] sm:$0xff] %vm946, %v1044
        %1077 = vst.msk [vmem:[#allocation5 + $0x50] sm:$0xff] %vm946, %v1045
        %1078 = vst.msk [vmem:[#allocation5 + $0x58] sm:$0xff] %vm946, %v1046
        %1079 = vst.msk [vmem:[#allocation5 + $0x60] sm:$0xff] %vm946, %v1047
        %1080 = vst.msk [vmem:[#allocation5 + $0x68] sm:$0xff] %vm946, %v1048
        %1081 = vst.msk [vmem:[#allocation5 + $0x70] sm:$0xff] %vm946, %v1049
        %1082 = vst.msk [vmem:[#allocation5 + $0x78] sm:$0xff] %vm946, %v1050
        %1083 = vst.msk [vmem:[#allocation5 + $0x80] sm:$0xff] %vm946, %v1051
        %1084 = vst.msk [vmem:[#allocation5 + $0x88] sm:$0xff] %vm946, %v1052
        %1085 = vst.msk [vmem:[#allocation5 + $0x90] sm:$0xff] %vm946, %v1053
        %1086 = vst.msk [vmem:[#allocation5 + $0x98] sm:$0xff] %vm946, %v1054
        %1087 = vst.msk [vmem:[#allocation5 + $0xa0] sm:$0xff] %vm946, %v1055
        %1088 = vst.msk [vmem:[#allocation5 + $0xa8] sm:$0xff] %vm946, %v1056
        %1089 = vst.msk [vmem:[#allocation5 + $0xb0] sm:$0xff] %vm946, %v1057
        %1090 = vst.msk [vmem:[#allocation5 + $0xb8] sm:$0xff] %vm946, %v1058
        %1091 = vst.msk [vmem:[#allocation5 + $0xc0] sm:$0xff] %vm946, %v1059
        %1092 = vst.msk [vmem:[#allocation5 + $0xc8] sm:$0xff] %vm946, %v1060
        %1093 = vst.msk [vmem:[#allocation5 + $0xd0] sm:$0xff] %vm946, %v1061
        %1094 = vst.msk [vmem:[#allocation5 + $0xd8] sm:$0xff] %vm946, %v1062
        %1095 = vst.msk [vmem:[#allocation5 + $0xe0] sm:$0xff] %vm946, %v1063
        %1096 = vst.msk [vmem:[#allocation5 + $0xe8] sm:$0xff] %vm946, %v1064
        %1097 = vst.msk [vmem:[#allocation5 + $0xf0] sm:$0xff] %vm946, %v1065
        %1098 = vst.msk [vmem:[#allocation5 + $0xf8] sm:$0xff] %vm946, %v1066
        %v1099 = vld [vmem:[#allocation2 + $0x1] sm:$0xff]
        %v1100 = vld [vmem:[#allocation2 + $0x9] sm:$0xff]
        %v1101 = vld [vmem:[#allocation2 + $0x19] sm:$0xff]
        %v1102 = vld [vmem:[#allocation2 + $0x21] sm:$0xff]
        %v1103 = vld [vmem:[#allocation2 + $0x31] sm:$0xff]
        %v1104 = vld [vmem:[#allocation2 + $0x39] sm:$0xff]
        %v1105 = vld [vmem:[#allocation2 + $0x49] sm:$0xff]
        %v1106 = vld [vmem:[#allocation2 + $0x51] sm:$0xff]
        %v1107 = vld [vmem:[#allocation2 + $0x61] sm:$0xff]
        %v1108 = vld [vmem:[#allocation2 + $0x69] sm:$0xff]
        %v1109 = vld [vmem:[#allocation2 + $0x79] sm:$0xff]
        %v1110 = vld [vmem:[#allocation2 + $0x81] sm:$0xff]
        %v1111 = vld [vmem:[#allocation2 + $0x91] sm:$0xff]
        %v1112 = vld [vmem:[#allocation2 + $0x99] sm:$0xff]
        %v1113 = vld [vmem:[#allocation2 + $0xa9] sm:$0xff]
        %v1114 = vld [vmem:[#allocation2 + $0xb1] sm:$0xff]
        %v1115 = vld [vmem:[#allocation2 + $0xc1] sm:$0xff]
        %v1116 = vld [vmem:[#allocation2 + $0xc9] sm:$0xff]
        %v1117 = vld [vmem:[#allocation2 + $0xd9] sm:$0xff]
        %v1118 = vld [vmem:[#allocation2 + $0xe1] sm:$0xff]
        %v1119 = vld [vmem:[#allocation2 + $0xf1] sm:$0xff]
        %v1120 = vld [vmem:[#allocation2 + $0xf9] sm:$0xff]
        %v1121 = vld [vmem:[#allocation2 + $0x109] sm:$0xff]
        %v1122 = vld [vmem:[#allocation2 + $0x111] sm:$0xff]
        %v1123 = vld [vmem:[#allocation2 + $0x121] sm:$0xff]
        %v1124 = vld [vmem:[#allocation2 + $0x129] sm:$0xff]
        %v1125 = vld [vmem:[#allocation2 + $0x139] sm:$0xff]
        %v1126 = vld [vmem:[#allocation2 + $0x141] sm:$0xff]
        %v1127 = vld [vmem:[#allocation2 + $0x151] sm:$0xff]
        %v1128 = vld [vmem:[#allocation2 + $0x159] sm:$0xff]
        %v1129 = vld [vmem:[#allocation2 + $0x169] sm:$0xff]
        %v1130 = vld [vmem:[#allocation2 + $0x171] sm:$0xff]
        %1163 = vrot.lane.b32.xlu0 %v1099, 8
        %v1164 = vpop.permute.xlu0 %1163
        %1165 = vrot.lane.b32.xlu0 %v1100, 8
        %v1166 = vpop.permute.xlu0 %1165
        %1167 = vrot.lane.b32.xlu0 %v1101, 8
        %v1168 = vpop.permute.xlu0 %1167
        %1169 = vrot.lane.b32.xlu0 %v1102, 8
        %v1170 = vpop.permute.xlu0 %1169
        %1171 = vrot.lane.b32.xlu0 %v1103, 8
        %v1172 = vpop.permute.xlu0 %1171
        %1173 = vrot.lane.b32.xlu0 %v1104, 8
        %v1174 = vpop.permute.xlu0 %1173
        %1175 = vrot.lane.b32.xlu0 %v1105, 8
        %v1176 = vpop.permute.xlu0 %1175
        %1177 = vrot.lane.b32.xlu0 %v1106, 8
        %v1178 = vpop.permute.xlu0 %1177
        %1179 = vrot.lane.b32.xlu0 %v1107, 8
        %v1180 = vpop.permute.xlu0 %1179
        %1181 = vrot.lane.b32.xlu0 %v1108, 8
        %v1182 = vpop.permute.xlu0 %1181
        %1183 = vrot.lane.b32.xlu0 %v1109, 8
        %v1184 = vpop.permute.xlu0 %1183
        %1185 = vrot.lane.b32.xlu0 %v1110, 8
        %v1186 = vpop.permute.xlu0 %1185
        %1187 = vrot.lane.b32.xlu0 %v1111, 8
        %v1188 = vpop.permute.xlu0 %1187
        %1189 = vrot.lane.b32.xlu0 %v1112, 8
        %v1190 = vpop.permute.xlu0 %1189
        %1191 = vrot.lane.b32.xlu0 %v1113, 8
        %v1192 = vpop.permute.xlu0 %1191
        %1193 = vrot.lane.b32.xlu0 %v1114, 8
        %v1194 = vpop.permute.xlu0 %1193
        %1195 = vrot.lane.b32.xlu0 %v1115, 8
        %v1196 = vpop.permute.xlu0 %1195
        %1197 = vrot.lane.b32.xlu0 %v1116, 8
        %v1198 = vpop.permute.xlu0 %1197
        %1199 = vrot.lane.b32.xlu0 %v1117, 8
        %v1200 = vpop.permute.xlu0 %1199
        %1201 = vrot.lane.b32.xlu0 %v1118, 8
        %v1202 = vpop.permute.xlu0 %1201
        %1203 = vrot.lane.b32.xlu0 %v1119, 8
        %v1204 = vpop.permute.xlu0 %1203
        %1205 = vrot.lane.b32.xlu0 %v1120, 8
        %v1206 = vpop.permute.xlu0 %1205
        %1207 = vrot.lane.b32.xlu0 %v1121, 8
        %v1208 = vpop.permute.xlu0 %1207
        %1209 = vrot.lane.b32.xlu0 %v1122, 8
        %v1210 = vpop.permute.xlu0 %1209
        %1211 = vrot.lane.b32.xlu0 %v1123, 8
        %v1212 = vpop.permute.xlu0 %1211
        %1213 = vrot.lane.b32.xlu0 %v1124, 8
        %v1214 = vpop.permute.xlu0 %1213
        %1215 = vrot.lane.b32.xlu0 %v1125, 8
        %v1216 = vpop.permute.xlu0 %1215
        %1217 = vrot.lane.b32.xlu0 %v1126, 8
        %v1218 = vpop.permute.xlu0 %1217
        %1219 = vrot.lane.b32.xlu0 %v1127, 8
        %v1220 = vpop.permute.xlu0 %1219
        %1221 = vrot.lane.b32.xlu0 %v1128, 8
        %v1222 = vpop.permute.xlu0 %1221
        %1223 = vrot.lane.b32.xlu0 %v1129, 8
        %v1224 = vpop.permute.xlu0 %1223
        %1225 = vrot.lane.b32.xlu0 %v1130, 8
        %v1226 = vpop.permute.xlu0 %1225
        %vm1259 = vcmask 130112
        %1260 = vst.msk [vmem:[#allocation5] sm:$0xff] %vm1259, %v1164
        %1261 = vst.msk [vmem:[#allocation5 + $0x8] sm:$0xff] %vm1259, %v1166
        %1262 = vst.msk [vmem:[#allocation5 + $0x10] sm:$0xff] %vm1259, %v1168
        %1263 = vst.msk [vmem:[#allocation5 + $0x18] sm:$0xff] %vm1259, %v1170
        %1264 = vst.msk [vmem:[#allocation5 + $0x20] sm:$0xff] %vm1259, %v1172
        %1265 = vst.msk [vmem:[#allocation5 + $0x28] sm:$0xff] %vm1259, %v1174
        %1266 = vst.msk [vmem:[#allocation5 + $0x30] sm:$0xff] %vm1259, %v1176
        %1267 = vst.msk [vmem:[#allocation5 + $0x38] sm:$0xff] %vm1259, %v1178
        %1268 = vst.msk [vmem:[#allocation5 + $0x40] sm:$0xff] %vm1259, %v1180
        %1269 = vst.msk [vmem:[#allocation5 + $0x48] sm:$0xff] %vm1259, %v1182
        %1270 = vst.msk [vmem:[#allocation5 + $0x50] sm:$0xff] %vm1259, %v1184
        %1271 = vst.msk [vmem:[#allocation5 + $0x58] sm:$0xff] %vm1259, %v1186
        %1272 = vst.msk [vmem:[#allocation5 + $0x60] sm:$0xff] %vm1259, %v1188
        %1273 = vst.msk [vmem:[#allocation5 + $0x68] sm:$0xff] %vm1259, %v1190
        %1274 = vst.msk [vmem:[#allocation5 + $0x70] sm:$0xff] %vm1259, %v1192
        %1275 = vst.msk [vmem:[#allocation5 + $0x78] sm:$0xff] %vm1259, %v1194
        %1276 = vst.msk [vmem:[#allocation5 + $0x80] sm:$0xff] %vm1259, %v1196
        %1277 = vst.msk [vmem:[#allocation5 + $0x88] sm:$0xff] %vm1259, %v1198
        %1278 = vst.msk [vmem:[#allocation5 + $0x90] sm:$0xff] %vm1259, %v1200
        %1279 = vst.msk [vmem:[#allocation5 + $0x98] sm:$0xff] %vm1259, %v1202
        %1280 = vst.msk [vmem:[#allocation5 + $0xa0] sm:$0xff] %vm1259, %v1204
        %1281 = vst.msk [vmem:[#allocation5 + $0xa8] sm:$0xff] %vm1259, %v1206
        %1282 = vst.msk [vmem:[#allocation5 + $0xb0] sm:$0xff] %vm1259, %v1208
        %1283 = vst.msk [vmem:[#allocation5 + $0xb8] sm:$0xff] %vm1259, %v1210
        %1284 = vst.msk [vmem:[#allocation5 + $0xc0] sm:$0xff] %vm1259, %v1212
        %1285 = vst.msk [vmem:[#allocation5 + $0xc8] sm:$0xff] %vm1259, %v1214
        %1286 = vst.msk [vmem:[#allocation5 + $0xd0] sm:$0xff] %vm1259, %v1216
        %1287 = vst.msk [vmem:[#allocation5 + $0xd8] sm:$0xff] %vm1259, %v1218
        %1288 = vst.msk [vmem:[#allocation5 + $0xe0] sm:$0xff] %vm1259, %v1220
        %1289 = vst.msk [vmem:[#allocation5 + $0xe8] sm:$0xff] %vm1259, %v1222
        %1290 = vst.msk [vmem:[#allocation5 + $0xf0] sm:$0xff] %vm1259, %v1224
        %1291 = vst.msk [vmem:[#allocation5 + $0xf8] sm:$0xff] %vm1259, %v1226
        %v1292 = vld [vmem:[#allocation2 + $0x2] sm:$0xff]
        %v1293 = vld [vmem:[#allocation2 + $0xa] sm:$0xff]
        %v1294 = vld [vmem:[#allocation2 + $0x1a] sm:$0xff]
        %v1295 = vld [vmem:[#allocation2 + $0x22] sm:$0xff]
        %v1296 = vld [vmem:[#allocation2 + $0x32] sm:$0xff]
        %v1297 = vld [vmem:[#allocation2 + $0x3a] sm:$0xff]
        %v1298 = vld [vmem:[#allocation2 + $0x4a] sm:$0xff]
        %v1299 = vld [vmem:[#allocation2 + $0x52] sm:$0xff]
        %v1300 = vld [vmem:[#allocation2 + $0x62] sm:$0xff]
        %v1301 = vld [vmem:[#allocation2 + $0x6a] sm:$0xff]
        %v1302 = vld [vmem:[#allocation2 + $0x7a] sm:$0xff]
        %v1303 = vld [vmem:[#allocation2 + $0x82] sm:$0xff]
        %v1304 = vld [vmem:[#allocation2 + $0x92] sm:$0xff]
        %v1305 = vld [vmem:[#allocation2 + $0x9a] sm:$0xff]
        %v1306 = vld [vmem:[#allocation2 + $0xaa] sm:$0xff]
        %v1307 = vld [vmem:[#allocation2 + $0xb2] sm:$0xff]
        %v1308 = vld [vmem:[#allocation2 + $0xc2] sm:$0xff]
        %v1309 = vld [vmem:[#allocation2 + $0xca] sm:$0xff]
        %v1310 = vld [vmem:[#allocation2 + $0xda] sm:$0xff]
        %v1311 = vld [vmem:[#allocation2 + $0xe2] sm:$0xff]
        %v1312 = vld [vmem:[#allocation2 + $0xf2] sm:$0xff]
        %v1313 = vld [vmem:[#allocation2 + $0xfa] sm:$0xff]
        %v1314 = vld [vmem:[#allocation2 + $0x10a] sm:$0xff]
        %v1315 = vld [vmem:[#allocation2 + $0x112] sm:$0xff]
        %v1316 = vld [vmem:[#allocation2 + $0x122] sm:$0xff]
        %v1317 = vld [vmem:[#allocation2 + $0x12a] sm:$0xff]
        %v1318 = vld [vmem:[#allocation2 + $0x13a] sm:$0xff]
        %v1319 = vld [vmem:[#allocation2 + $0x142] sm:$0xff]
        %v1320 = vld [vmem:[#allocation2 + $0x152] sm:$0xff]
        %v1321 = vld [vmem:[#allocation2 + $0x15a] sm:$0xff]
        %v1322 = vld [vmem:[#allocation2 + $0x16a] sm:$0xff]
        %v1323 = vld [vmem:[#allocation2 + $0x172] sm:$0xff]
        %1356 = vrot.lane.b32.xlu0 %v1292, 16
        %v1357 = vpop.permute.xlu0 %1356
        %1358 = vrot.lane.b32.xlu0 %v1293, 16
        %v1359 = vpop.permute.xlu0 %1358
        %1360 = vrot.lane.b32.xlu0 %v1294, 16
        %v1361 = vpop.permute.xlu0 %1360
        %1362 = vrot.lane.b32.xlu0 %v1295, 16
        %v1363 = vpop.permute.xlu0 %1362
        %1364 = vrot.lane.b32.xlu0 %v1296, 16
        %v1365 = vpop.permute.xlu0 %1364
        %1366 = vrot.lane.b32.xlu0 %v1297, 16
        %v1367 = vpop.permute.xlu0 %1366
        %1368 = vrot.lane.b32.xlu0 %v1298, 16
        %v1369 = vpop.permute.xlu0 %1368
        %1370 = vrot.lane.b32.xlu0 %v1299, 16
        %v1371 = vpop.permute.xlu0 %1370
        %1372 = vrot.lane.b32.xlu0 %v1300, 16
        %v1373 = vpop.permute.xlu0 %1372
        %1374 = vrot.lane.b32.xlu0 %v1301, 16
        %v1375 = vpop.permute.xlu0 %1374
        %1376 = vrot.lane.b32.xlu0 %v1302, 16
        %v1377 = vpop.permute.xlu0 %1376
        %1378 = vrot.lane.b32.xlu0 %v1303, 16
        %v1379 = vpop.permute.xlu0 %1378
        %1380 = vrot.lane.b32.xlu0 %v1304, 16
        %v1381 = vpop.permute.xlu0 %1380
        %1382 = vrot.lane.b32.xlu0 %v1305, 16
        %v1383 = vpop.permute.xlu0 %1382
        %1384 = vrot.lane.b32.xlu0 %v1306, 16
        %v1385 = vpop.permute.xlu0 %1384
        %1386 = vrot.lane.b32.xlu0 %v1307, 16
        %v1387 = vpop.permute.xlu0 %1386
        %1388 = vrot.lane.b32.xlu0 %v1308, 16
        %v1389 = vpop.permute.xlu0 %1388
        %1390 = vrot.lane.b32.xlu0 %v1309, 16
        %v1391 = vpop.permute.xlu0 %1390
        %1392 = vrot.lane.b32.xlu0 %v1310, 16
        %v1393 = vpop.permute.xlu0 %1392
        %1394 = vrot.lane.b32.xlu0 %v1311, 16
        %v1395 = vpop.permute.xlu0 %1394
        %1396 = vrot.lane.b32.xlu0 %v1312, 16
        %v1397 = vpop.permute.xlu0 %1396
        %1398 = vrot.lane.b32.xlu0 %v1313, 16
        %v1399 = vpop.permute.xlu0 %1398
        %1400 = vrot.lane.b32.xlu0 %v1314, 16
        %v1401 = vpop.permute.xlu0 %1400
        %1402 = vrot.lane.b32.xlu0 %v1315, 16
        %v1403 = vpop.permute.xlu0 %1402
        %1404 = vrot.lane.b32.xlu0 %v1316, 16
        %v1405 = vpop.permute.xlu0 %1404
        %1406 = vrot.lane.b32.xlu0 %v1317, 16
        %v1407 = vpop.permute.xlu0 %1406
        %1408 = vrot.lane.b32.xlu0 %v1318, 16
        %v1409 = vpop.permute.xlu0 %1408
        %1410 = vrot.lane.b32.xlu0 %v1319, 16
        %v1411 = vpop.permute.xlu0 %1410
        %1412 = vrot.lane.b32.xlu0 %v1320, 16
        %v1413 = vpop.permute.xlu0 %1412
        %1414 = vrot.lane.b32.xlu0 %v1321, 16
        %v1415 = vpop.permute.xlu0 %1414
        %1416 = vrot.lane.b32.xlu0 %v1322, 16
        %v1417 = vpop.permute.xlu0 %1416
        %1418 = vrot.lane.b32.xlu0 %v1323, 16
        %v1419 = vpop.permute.xlu0 %1418
        %vm1452 = vcmask 195712
        %1453 = vst.msk [vmem:[#allocation5] sm:$0xff] %vm1452, %v1357
        %1454 = vst.msk [vmem:[#allocation5 + $0x8] sm:$0xff] %vm1452, %v1359
        %1455 = vst.msk [vmem:[#allocation5 + $0x10] sm:$0xff] %vm1452, %v1361
        %1456 = vst.msk [vmem:[#allocation5 + $0x18] sm:$0xff] %vm1452, %v1363
        %1457 = vst.msk [vmem:[#allocation5 + $0x20] sm:$0xff] %vm1452, %v1365
        %1458 = vst.msk [vmem:[#allocation5 + $0x28] sm:$0xff] %vm1452, %v1367
        %1459 = vst.msk [vmem:[#allocation5 + $0x30] sm:$0xff] %vm1452, %v1369
        %1460 = vst.msk [vmem:[#allocation5 + $0x38] sm:$0xff] %vm1452, %v1371
        %1461 = vst.msk [vmem:[#allocation5 + $0x40] sm:$0xff] %vm1452, %v1373
        %1462 = vst.msk [vmem:[#allocation5 + $0x48] sm:$0xff] %vm1452, %v1375
        %1463 = vst.msk [vmem:[#allocation5 + $0x50] sm:$0xff] %vm1452, %v1377
        %1464 = vst.msk [vmem:[#allocation5 + $0x58] sm:$0xff] %vm1452, %v1379
        %1465 = vst.msk [vmem:[#allocation5 + $0x60] sm:$0xff] %vm1452, %v1381
        %1466 = vst.msk [vmem:[#allocation5 + $0x68] sm:$0xff] %vm1452, %v1383
        %1467 = vst.msk [vmem:[#allocation5 + $0x70] sm:$0xff] %vm1452, %v1385
        %1468 = vst.msk [vmem:[#allocation5 + $0x78] sm:$0xff] %vm1452, %v1387
        %1469 = vst.msk [vmem:[#allocation5 + $0x80] sm:$0xff] %vm1452, %v1389
        %1470 = vst.msk [vmem:[#allocation5 + $0x88] sm:$0xff] %vm1452, %v1391
        %1471 = vst.msk [vmem:[#allocation5 + $0x90] sm:$0xff] %vm1452, %v1393
        %1472 = vst.msk [vmem:[#allocation5 + $0x98] sm:$0xff] %vm1452, %v1395
        %1473 = vst.msk [vmem:[#allocation5 + $0xa0] sm:$0xff] %vm1452, %v1397
        %1474 = vst.msk [vmem:[#allocation5 + $0xa8] sm:$0xff] %vm1452, %v1399
        %1475 = vst.msk [vmem:[#allocation5 + $0xb0] sm:$0xff] %vm1452, %v1401
        %1476 = vst.msk [vmem:[#allocation5 + $0xb8] sm:$0xff] %vm1452, %v1403
        %1477 = vst.msk [vmem:[#allocation5 + $0xc0] sm:$0xff] %vm1452, %v1405
        %1478 = vst.msk [vmem:[#allocation5 + $0xc8] sm:$0xff] %vm1452, %v1407
        %1479 = vst.msk [vmem:[#allocation5 + $0xd0] sm:$0xff] %vm1452, %v1409
        %1480 = vst.msk [vmem:[#allocation5 + $0xd8] sm:$0xff] %vm1452, %v1411
        %1481 = vst.msk [vmem:[#allocation5 + $0xe0] sm:$0xff] %vm1452, %v1413
        %1482 = vst.msk [vmem:[#allocation5 + $0xe8] sm:$0xff] %vm1452, %v1415
        %1483 = vst.msk [vmem:[#allocation5 + $0xf0] sm:$0xff] %vm1452, %v1417
        %1484 = vst.msk [vmem:[#allocation5 + $0xf8] sm:$0xff] %vm1452, %v1419
        %v1485 = vld [vmem:[%s1002] sm:$0xff]
        %v1486 = vld [vmem:[%s1002 + $0x8] sm:$0xff]
        %v1487 = vld [vmem:[%s1002 + $0x18] sm:$0xff]
        %v1488 = vld [vmem:[%s1002 + $0x20] sm:$0xff]
        %v1489 = vld [vmem:[%s1002 + $0x30] sm:$0xff]
        %v1490 = vld [vmem:[%s1002 + $0x38] sm:$0xff]
        %v1491 = vld [vmem:[%s1002 + $0x48] sm:$0xff]
        %v1492 = vld [vmem:[%s1002 + $0x50] sm:$0xff]
        %v1493 = vld [vmem:[%s1002 + $0x60] sm:$0xff]
        %v1494 = vld [vmem:[%s1002 + $0x68] sm:$0xff]
        %v1495 = vld [vmem:[%s1002 + $0x78] sm:$0xff]
        %v1496 = vld [vmem:[%s1002 + $0x80] sm:$0xff]
        %v1497 = vld [vmem:[%s1002 + $0x90] sm:$0xff]
        %v1498 = vld [vmem:[%s1002 + $0x98] sm:$0xff]
        %v1499 = vld [vmem:[%s1002 + $0xa8] sm:$0xff]
        %v1500 = vld [vmem:[%s1002 + $0xb0] sm:$0xff]
        %v1501 = vld [vmem:[%s1002 + $0xc0] sm:$0xff]
        %v1502 = vld [vmem:[%s1002 + $0xc8] sm:$0xff]
        %v1503 = vld [vmem:[%s1002 + $0xd8] sm:$0xff]
        %v1504 = vld [vmem:[%s1002 + $0xe0] sm:$0xff]
        %v1505 = vld [vmem:[%s1002 + $0xf0] sm:$0xff]
        %v1506 = vld [vmem:[%s1002 + $0xf8] sm:$0xff]
        %v1507 = vld [vmem:[%s1002 + $0x108] sm:$0xff]
        %v1508 = vld [vmem:[%s1002 + $0x110] sm:$0xff]
        %v1509 = vld [vmem:[%s1002 + $0x120] sm:$0xff]
        %v1510 = vld [vmem:[%s1002 + $0x128] sm:$0xff]
        %v1511 = vld [vmem:[%s1002 + $0x138] sm:$0xff]
        %v1512 = vld [vmem:[%s1002 + $0x140] sm:$0xff]
        %v1513 = vld [vmem:[%s1002 + $0x150] sm:$0xff]
        %v1514 = vld [vmem:[%s1002 + $0x158] sm:$0xff]
        %v1515 = vld [vmem:[%s1002 + $0x168] sm:$0xff]
        %v1516 = vld [vmem:[%s1002 + $0x170] sm:$0xff]
        %1549 = vrot.lane.b32.xlu0 %v1485, 24
        %v1550 = vpop.permute.xlu0 %1549
        %1551 = vrot.lane.b32.xlu0 %v1486, 24
        %v1552 = vpop.permute.xlu0 %1551
        %1553 = vrot.lane.b32.xlu0 %v1487, 24
        %v1554 = vpop.permute.xlu0 %1553
        %1555 = vrot.lane.b32.xlu0 %v1488, 24
        %v1556 = vpop.permute.xlu0 %1555
        %1557 = vrot.lane.b32.xlu0 %v1489, 24
        %v1558 = vpop.permute.xlu0 %1557
        %1559 = vrot.lane.b32.xlu0 %v1490, 24
        %v1560 = vpop.permute.xlu0 %1559
        %1561 = vrot.lane.b32.xlu0 %v1491, 24
        %v1562 = vpop.permute.xlu0 %1561
        %1563 = vrot.lane.b32.xlu0 %v1492, 24
        %v1564 = vpop.permute.xlu0 %1563
        %1565 = vrot.lane.b32.xlu0 %v1493, 24
        %v1566 = vpop.permute.xlu0 %1565
        %1567 = vrot.lane.b32.xlu0 %v1494, 24
        %v1568 = vpop.permute.xlu0 %1567
        %1569 = vrot.lane.b32.xlu0 %v1495, 24
        %v1570 = vpop.permute.xlu0 %1569
        %1571 = vrot.lane.b32.xlu0 %v1496, 24
        %v1572 = vpop.permute.xlu0 %1571
        %1573 = vrot.lane.b32.xlu0 %v1497, 24
        %v1574 = vpop.permute.xlu0 %1573
        %1575 = vrot.lane.b32.xlu0 %v1498, 24
        %v1576 = vpop.permute.xlu0 %1575
        %1577 = vrot.lane.b32.xlu0 %v1499, 24
        %v1578 = vpop.permute.xlu0 %1577
        %1579 = vrot.lane.b32.xlu0 %v1500, 24
        %v1580 = vpop.permute.xlu0 %1579
        %1581 = vrot.lane.b32.xlu0 %v1501, 24
        %v1582 = vpop.permute.xlu0 %1581
        %1583 = vrot.lane.b32.xlu0 %v1502, 24
        %v1584 = vpop.permute.xlu0 %1583
        %1585 = vrot.lane.b32.xlu0 %v1503, 24
        %v1586 = vpop.permute.xlu0 %1585
        %1587 = vrot.lane.b32.xlu0 %v1504, 24
        %v1588 = vpop.permute.xlu0 %1587
        %1589 = vrot.lane.b32.xlu0 %v1505, 24
        %v1590 = vpop.permute.xlu0 %1589
        %1591 = vrot.lane.b32.xlu0 %v1506, 24
        %v1592 = vpop.permute.xlu0 %1591
        %1593 = vrot.lane.b32.xlu0 %v1507, 24
        %v1594 = vpop.permute.xlu0 %1593
        %1595 = vrot.lane.b32.xlu0 %v1508, 24
        %v1596 = vpop.permute.xlu0 %1595
        %1597 = vrot.lane.b32.xlu0 %v1509, 24
        %v1598 = vpop.permute.xlu0 %1597
        %1599 = vrot.lane.b32.xlu0 %v1510, 24
        %v1600 = vpop.permute.xlu0 %1599
        %1601 = vrot.lane.b32.xlu0 %v1511, 24
        %v1602 = vpop.permute.xlu0 %1601
        %1603 = vrot.lane.b32.xlu0 %v1512, 24
        %v1604 = vpop.permute.xlu0 %1603
        %1605 = vrot.lane.b32.xlu0 %v1513, 24
        %v1606 = vpop.permute.xlu0 %1605
        %1607 = vrot.lane.b32.xlu0 %v1514, 24
        %v1608 = vpop.permute.xlu0 %1607
        %1609 = vrot.lane.b32.xlu0 %v1515, 24
        %v1610 = vpop.permute.xlu0 %1609
        %1611 = vrot.lane.b32.xlu0 %v1516, 24
        %v1612 = vpop.permute.xlu0 %1611
        %vm1645 = vcmask 261312
        %1646 = vst.msk [vmem:[#allocation5] sm:$0xff] %vm1645, %v1550
        %1647 = vst.msk [vmem:[#allocation5 + $0x8] sm:$0xff] %vm1645, %v1552
        %1648 = vst.msk [vmem:[#allocation5 + $0x10] sm:$0xff] %vm1645, %v1554
        %1649 = vst.msk [vmem:[#allocation5 + $0x18] sm:$0xff] %vm1645, %v1556
        %1650 = vst.msk [vmem:[#allocation5 + $0x20] sm:$0xff] %vm1645, %v1558
        %1651 = vst.msk [vmem:[#allocation5 + $0x28] sm:$0xff] %vm1645, %v1560
        %1652 = vst.msk [vmem:[#allocation5 + $0x30] sm:$0xff] %vm1645, %v1562
        %1653 = vst.msk [vmem:[#allocation5 + $0x38] sm:$0xff] %vm1645, %v1564
        %1654 = vst.msk [vmem:[#allocation5 + $0x40] sm:$0xff] %vm1645, %v1566
        %1655 = vst.msk [vmem:[#allocation5 + $0x48] sm:$0xff] %vm1645, %v1568
        %1656 = vst.msk [vmem:[#allocation5 + $0x50] sm:$0xff] %vm1645, %v1570
        %1657 = vst.msk [vmem:[#allocation5 + $0x58] sm:$0xff] %vm1645, %v1572
        %1658 = vst.msk [vmem:[#allocation5 + $0x60] sm:$0xff] %vm1645, %v1574
        %1659 = vst.msk [vmem:[#allocation5 + $0x68] sm:$0xff] %vm1645, %v1576
        %1660 = vst.msk [vmem:[#allocation5 + $0x70] sm:$0xff] %vm1645, %v1578
        %1661 = vst.msk [vmem:[#allocation5 + $0x78] sm:$0xff] %vm1645, %v1580
        %1662 = vst.msk [vmem:[#allocation5 + $0x80] sm:$0xff] %vm1645, %v1582
        %1663 = vst.msk [vmem:[#allocation5 + $0x88] sm:$0xff] %vm1645, %v1584
        %1664 = vst.msk [vmem:[#allocation5 + $0x90] sm:$0xff] %vm1645, %v1586
        %1665 = vst.msk [vmem:[#allocation5 + $0x98] sm:$0xff] %vm1645, %v1588
        %1666 = vst.msk [vmem:[#allocation5 + $0xa0] sm:$0xff] %vm1645, %v1590
        %1667 = vst.msk [vmem:[#allocation5 + $0xa8] sm:$0xff] %vm1645, %v1592
        %1668 = vst.msk [vmem:[#allocation5 + $0xb0] sm:$0xff] %vm1645, %v1594
        %1669 = vst.msk [vmem:[#allocation5 + $0xb8] sm:$0xff] %vm1645, %v1596
        %1670 = vst.msk [vmem:[#allocation5 + $0xc0] sm:$0xff] %vm1645, %v1598
        %1671 = vst.msk [vmem:[#allocation5 + $0xc8] sm:$0xff] %vm1645, %v1600
        %1672 = vst.msk [vmem:[#allocation5 + $0xd0] sm:$0xff] %vm1645, %v1602
        %1673 = vst.msk [vmem:[#allocation5 + $0xd8] sm:$0xff] %vm1645, %v1604
        %1674 = vst.msk [vmem:[#allocation5 + $0xe0] sm:$0xff] %vm1645, %v1606
        %1675 = vst.msk [vmem:[#allocation5 + $0xe8] sm:$0xff] %vm1645, %v1608
        %1676 = vst.msk [vmem:[#allocation5 + $0xf0] sm:$0xff] %vm1645, %v1610
        %1677 = vst.msk [vmem:[#allocation5 + $0xf8] sm:$0xff] %vm1645, %v1612
        %v1678 = vld [vmem:[%s1002 + $0x1] sm:$0xff]
        %v1679 = vld [vmem:[%s1002 + $0x9] sm:$0xff]
        %v1680 = vld [vmem:[%s1002 + $0x19] sm:$0xff]
        %v1681 = vld [vmem:[%s1002 + $0x21] sm:$0xff]
        %v1682 = vld [vmem:[%s1002 + $0x31] sm:$0xff]
        %v1683 = vld [vmem:[%s1002 + $0x39] sm:$0xff]
        %v1684 = vld [vmem:[%s1002 + $0x49] sm:$0xff]
        %v1685 = vld [vmem:[%s1002 + $0x51] sm:$0xff]
        %v1686 = vld [vmem:[%s1002 + $0x61] sm:$0xff]
        %v1687 = vld [vmem:[%s1002 + $0x69] sm:$0xff]
        %v1688 = vld [vmem:[%s1002 + $0x79] sm:$0xff]
        %v1689 = vld [vmem:[%s1002 + $0x81] sm:$0xff]
        %v1690 = vld [vmem:[%s1002 + $0x91] sm:$0xff]
        %v1691 = vld [vmem:[%s1002 + $0x99] sm:$0xff]
        %v1692 = vld [vmem:[%s1002 + $0xa9] sm:$0xff]
        %v1693 = vld [vmem:[%s1002 + $0xb1] sm:$0xff]
        %v1694 = vld [vmem:[%s1002 + $0xc1] sm:$0xff]
        %v1695 = vld [vmem:[%s1002 + $0xc9] sm:$0xff]
        %v1696 = vld [vmem:[%s1002 + $0xd9] sm:$0xff]
        %v1697 = vld [vmem:[%s1002 + $0xe1] sm:$0xff]
        %v1698 = vld [vmem:[%s1002 + $0xf1] sm:$0xff]
        %v1699 = vld [vmem:[%s1002 + $0xf9] sm:$0xff]
        %v1700 = vld [vmem:[%s1002 + $0x109] sm:$0xff]
        %v1701 = vld [vmem:[%s1002 + $0x111] sm:$0xff]
        %v1702 = vld [vmem:[%s1002 + $0x121] sm:$0xff]
        %v1703 = vld [vmem:[%s1002 + $0x129] sm:$0xff]
        %v1704 = vld [vmem:[%s1002 + $0x139] sm:$0xff]
        %v1705 = vld [vmem:[%s1002 + $0x141] sm:$0xff]
        %v1706 = vld [vmem:[%s1002 + $0x151] sm:$0xff]
        %v1707 = vld [vmem:[%s1002 + $0x159] sm:$0xff]
        %v1708 = vld [vmem:[%s1002 + $0x169] sm:$0xff]
        %v1709 = vld [vmem:[%s1002 + $0x171] sm:$0xff]
        %1742 = vrot.lane.b32.xlu0 %v1678, 32
        %v1743 = vpop.permute.xlu0 %1742
        %1744 = vrot.lane.b32.xlu0 %v1679, 32
        %v1745 = vpop.permute.xlu0 %1744
        %1746 = vrot.lane.b32.xlu0 %v1680, 32
        %v1747 = vpop.permute.xlu0 %1746
        %1748 = vrot.lane.b32.xlu0 %v1681, 32
        %v1749 = vpop.permute.xlu0 %1748
        %1750 = vrot.lane.b32.xlu0 %v1682, 32
        %v1751 = vpop.permute.xlu0 %1750
        %1752 = vrot.lane.b32.xlu0 %v1683, 32
        %v1753 = vpop.permute.xlu0 %1752
        %1754 = vrot.lane.b32.xlu0 %v1684, 32
        %v1755 = vpop.permute.xlu0 %1754
        %1756 = vrot.lane.b32.xlu0 %v1685, 32
        %v1757 = vpop.permute.xlu0 %1756
        %1758 = vrot.lane.b32.xlu0 %v1686, 32
        %v1759 = vpop.permute.xlu0 %1758
        %1760 = vrot.lane.b32.xlu0 %v1687, 32
        %v1761 = vpop.permute.xlu0 %1760
        %1762 = vrot.lane.b32.xlu0 %v1688, 32
        %v1763 = vpop.permute.xlu0 %1762
        %1764 = vrot.lane.b32.xlu0 %v1689, 32
        %v1765 = vpop.permute.xlu0 %1764
        %1766 = vrot.lane.b32.xlu0 %v1690, 32
        %v1767 = vpop.permute.xlu0 %1766
        %1768 = vrot.lane.b32.xlu0 %v1691, 32
        %v1769 = vpop.permute.xlu0 %1768
        %1770 = vrot.lane.b32.xlu0 %v1692, 32
        %v1771 = vpop.permute.xlu0 %1770
        %1772 = vrot.lane.b32.xlu0 %v1693, 32
        %v1773 = vpop.permute.xlu0 %1772
        %1774 = vrot.lane.b32.xlu0 %v1694, 32
        %v1775 = vpop.permute.xlu0 %1774
        %1776 = vrot.lane.b32.xlu0 %v1695, 32
        %v1777 = vpop.permute.xlu0 %1776
        %1778 = vrot.lane.b32.xlu0 %v1696, 32
        %v1779 = vpop.permute.xlu0 %1778
        %1780 = vrot.lane.b32.xlu0 %v1697, 32
        %v1781 = vpop.permute.xlu0 %1780
        %1782 = vrot.lane.b32.xlu0 %v1698, 32
        %v1783 = vpop.permute.xlu0 %1782
        %1784 = vrot.lane.b32.xlu0 %v1699, 32
        %v1785 = vpop.permute.xlu0 %1784
        %1786 = vrot.lane.b32.xlu0 %v1700, 32
        %v1787 = vpop.permute.xlu0 %1786
        %1788 = vrot.lane.b32.xlu0 %v1701, 32
        %v1789 = vpop.permute.xlu0 %1788
        %1790 = vrot.lane.b32.xlu0 %v1702, 32
        %v1791 = vpop.permute.xlu0 %1790
        %1792 = vrot.lane.b32.xlu0 %v1703, 32
        %v1793 = vpop.permute.xlu0 %1792
        %1794 = vrot.lane.b32.xlu0 %v1704, 32
        %v1795 = vpop.permute.xlu0 %1794
        %1796 = vrot.lane.b32.xlu0 %v1705, 32
        %v1797 = vpop.permute.xlu0 %1796
        %1798 = vrot.lane.b32.xlu0 %v1706, 32
        %v1799 = vpop.permute.xlu0 %1798
        %1800 = vrot.lane.b32.xlu0 %v1707, 32
        %v1801 = vpop.permute.xlu0 %1800
        %1802 = vrot.lane.b32.xlu0 %v1708, 32
        %v1803 = vpop.permute.xlu0 %1802
        %1804 = vrot.lane.b32.xlu0 %v1709, 32
        %v1805 = vpop.permute.xlu0 %1804
        %vm1838 = vcmask 326912
        %1839 = vst.msk [vmem:[#allocation5] sm:$0xff] %vm1838, %v1743
        %1840 = vst.msk [vmem:[#allocation5 + $0x8] sm:$0xff] %vm1838, %v1745
        %1841 = vst.msk [vmem:[#allocation5 + $0x10] sm:$0xff] %vm1838, %v1747
        %1842 = vst.msk [vmem:[#allocation5 + $0x18] sm:$0xff] %vm1838, %v1749
        %1843 = vst.msk [vmem:[#allocation5 + $0x20] sm:$0xff] %vm1838, %v1751
        %1844 = vst.msk [vmem:[#allocation5 + $0x28] sm:$0xff] %vm1838, %v1753
        %1845 = vst.msk [vmem:[#allocation5 + $0x30] sm:$0xff] %vm1838, %v1755
        %1846 = vst.msk [vmem:[#allocation5 + $0x38] sm:$0xff] %vm1838, %v1757
        %1847 = vst.msk [vmem:[#allocation5 + $0x40] sm:$0xff] %vm1838, %v1759
        %1848 = vst.msk [vmem:[#allocation5 + $0x48] sm:$0xff] %vm1838, %v1761
        %1849 = vst.msk [vmem:[#allocation5 + $0x50] sm:$0xff] %vm1838, %v1763
        %1850 = vst.msk [vmem:[#allocation5 + $0x58] sm:$0xff] %vm1838, %v1765
        %1851 = vst.msk [vmem:[#allocation5 + $0x60] sm:$0xff] %vm1838, %v1767
        %1852 = vst.msk [vmem:[#allocation5 + $0x68] sm:$0xff] %vm1838, %v1769
        %1853 = vst.msk [vmem:[#allocation5 + $0x70] sm:$0xff] %vm1838, %v1771
        %1854 = vst.msk [vmem:[#allocation5 + $0x78] sm:$0xff] %vm1838, %v1773
        %1855 = vst.msk [vmem:[#allocation5 + $0x80] sm:$0xff] %vm1838, %v1775
        %1856 = vst.msk [vmem:[#allocation5 + $0x88] sm:$0xff] %vm1838, %v1777
        %1857 = vst.msk [vmem:[#allocation5 + $0x90] sm:$0xff] %vm1838, %v1779
        %1858 = vst.msk [vmem:[#allocation5 + $0x98] sm:$0xff] %vm1838, %v1781
        %1859 = vst.msk [vmem:[#allocation5 + $0xa0] sm:$0xff] %vm1838, %v1783
        %1860 = vst.msk [vmem:[#allocation5 + $0xa8] sm:$0xff] %vm1838, %v1785
        %1861 = vst.msk [vmem:[#allocation5 + $0xb0] sm:$0xff] %vm1838, %v1787
        %1862 = vst.msk [vmem:[#allocation5 + $0xb8] sm:$0xff] %vm1838, %v1789
        %1863 = vst.msk [vmem:[#allocation5 + $0xc0] sm:$0xff] %vm1838, %v1791
        %1864 = vst.msk [vmem:[#allocation5 + $0xc8] sm:$0xff] %vm1838, %v1793
        %1865 = vst.msk [vmem:[#allocation5 + $0xd0] sm:$0xff] %vm1838, %v1795
        %1866 = vst.msk [vmem:[#allocation5 + $0xd8] sm:$0xff] %vm1838, %v1797
        %1867 = vst.msk [vmem:[#allocation5 + $0xe0] sm:$0xff] %vm1838, %v1799
        %1868 = vst.msk [vmem:[#allocation5 + $0xe8] sm:$0xff] %vm1838, %v1801
        %1869 = vst.msk [vmem:[#allocation5 + $0xf0] sm:$0xff] %vm1838, %v1803
        %1870 = vst.msk [vmem:[#allocation5 + $0xf8] sm:$0xff] %vm1838, %v1805
        %v1871 = vld [vmem:[%s1002 + $0x2] sm:$0xff]
        %v1872 = vld [vmem:[%s1002 + $0xa] sm:$0xff]
        %v1873 = vld [vmem:[%s1002 + $0x1a] sm:$0xff]
        %v1874 = vld [vmem:[%s1002 + $0x22] sm:$0xff]
        %v1875 = vld [vmem:[%s1002 + $0x32] sm:$0xff]
        %v1876 = vld [vmem:[%s1002 + $0x3a] sm:$0xff]
        %v1877 = vld [vmem:[%s1002 + $0x4a] sm:$0xff]
        %v1878 = vld [vmem:[%s1002 + $0x52] sm:$0xff]
        %v1879 = vld [vmem:[%s1002 + $0x62] sm:$0xff]
        %v1880 = vld [vmem:[%s1002 + $0x6a] sm:$0xff]
        %v1881 = vld [vmem:[%s1002 + $0x7a] sm:$0xff]
        %v1882 = vld [vmem:[%s1002 + $0x82] sm:$0xff]
        %v1883 = vld [vmem:[%s1002 + $0x92] sm:$0xff]
        %v1884 = vld [vmem:[%s1002 + $0x9a] sm:$0xff]
        %v1885 = vld [vmem:[%s1002 + $0xaa] sm:$0xff]
        %v1886 = vld [vmem:[%s1002 + $0xb2] sm:$0xff]
        %v1887 = vld [vmem:[%s1002 + $0xc2] sm:$0xff]
        %v1888 = vld [vmem:[%s1002 + $0xca] sm:$0xff]
        %v1889 = vld [vmem:[%s1002 + $0xda] sm:$0xff]
        %v1890 = vld [vmem:[%s1002 + $0xe2] sm:$0xff]
        %v1891 = vld [vmem:[%s1002 + $0xf2] sm:$0xff]
        %v1892 = vld [vmem:[%s1002 + $0xfa] sm:$0xff]
        %v1893 = vld [vmem:[%s1002 + $0x10a] sm:$0xff]
        %v1894 = vld [vmem:[%s1002 + $0x112] sm:$0xff]
        %v1895 = vld [vmem:[%s1002 + $0x122] sm:$0xff]
        %v1896 = vld [vmem:[%s1002 + $0x12a] sm:$0xff]
        %v1897 = vld [vmem:[%s1002 + $0x13a] sm:$0xff]
        %v1898 = vld [vmem:[%s1002 + $0x142] sm:$0xff]
        %v1899 = vld [vmem:[%s1002 + $0x152] sm:$0xff]
        %v1900 = vld [vmem:[%s1002 + $0x15a] sm:$0xff]
        %v1901 = vld [vmem:[%s1002 + $0x16a] sm:$0xff]
        %v1902 = vld [vmem:[%s1002 + $0x172] sm:$0xff]
        %1935 = vrot.lane.b32.xlu0 %v1871, 40
        %v1936 = vpop.permute.xlu0 %1935
        %1937 = vrot.lane.b32.xlu0 %v1872, 40
        %v1938 = vpop.permute.xlu0 %1937
        %1939 = vrot.lane.b32.xlu0 %v1873, 40
        %v1940 = vpop.permute.xlu0 %1939
        %1941 = vrot.lane.b32.xlu0 %v1874, 40
        %v1942 = vpop.permute.xlu0 %1941
        %1943 = vrot.lane.b32.xlu0 %v1875, 40
        %v1944 = vpop.permute.xlu0 %1943
        %1945 = vrot.lane.b32.xlu0 %v1876, 40
        %v1946 = vpop.permute.xlu0 %1945
        %1947 = vrot.lane.b32.xlu0 %v1877, 40
        %v1948 = vpop.permute.xlu0 %1947
        %1949 = vrot.lane.b32.xlu0 %v1878, 40
        %v1950 = vpop.permute.xlu0 %1949
        %1951 = vrot.lane.b32.xlu0 %v1879, 40
        %v1952 = vpop.permute.xlu0 %1951
        %1953 = vrot.lane.b32.xlu0 %v1880, 40
        %v1954 = vpop.permute.xlu0 %1953
        %1955 = vrot.lane.b32.xlu0 %v1881, 40
        %v1956 = vpop.permute.xlu0 %1955
        %1957 = vrot.lane.b32.xlu0 %v1882, 40
        %v1958 = vpop.permute.xlu0 %1957
        %1959 = vrot.lane.b32.xlu0 %v1883, 40
        %v1960 = vpop.permute.xlu0 %1959
        %1961 = vrot.lane.b32.xlu0 %v1884, 40
        %v1962 = vpop.permute.xlu0 %1961
        %1963 = vrot.lane.b32.xlu0 %v1885, 40
        %v1964 = vpop.permute.xlu0 %1963
        %1965 = vrot.lane.b32.xlu0 %v1886, 40
        %v1966 = vpop.permute.xlu0 %1965
        %1967 = vrot.lane.b32.xlu0 %v1887, 40
        %v1968 = vpop.permute.xlu0 %1967
        %1969 = vrot.lane.b32.xlu0 %v1888, 40
        %v1970 = vpop.permute.xlu0 %1969
        %1971 = vrot.lane.b32.xlu0 %v1889, 40
        %v1972 = vpop.permute.xlu0 %1971
        %1973 = vrot.lane.b32.xlu0 %v1890, 40
        %v1974 = vpop.permute.xlu0 %1973
        %1975 = vrot.lane.b32.xlu0 %v1891, 40
        %v1976 = vpop.permute.xlu0 %1975
        %1977 = vrot.lane.b32.xlu0 %v1892, 40
        %v1978 = vpop.permute.xlu0 %1977
        %1979 = vrot.lane.b32.xlu0 %v1893, 40
        %v1980 = vpop.permute.xlu0 %1979
        %1981 = vrot.lane.b32.xlu0 %v1894, 40
        %v1982 = vpop.permute.xlu0 %1981
        %1983 = vrot.lane.b32.xlu0 %v1895, 40
        %v1984 = vpop.permute.xlu0 %1983
        %1985 = vrot.lane.b32.xlu0 %v1896, 40
        %v1986 = vpop.permute.xlu0 %1985
        %1987 = vrot.lane.b32.xlu0 %v1897, 40
        %v1988 = vpop.permute.xlu0 %1987
        %1989 = vrot.lane.b32.xlu0 %v1898, 40
        %v1990 = vpop.permute.xlu0 %1989
        %1991 = vrot.lane.b32.xlu0 %v1899, 40
        %v1992 = vpop.permute.xlu0 %1991
        %1993 = vrot.lane.b32.xlu0 %v1900, 40
        %v1994 = vpop.permute.xlu0 %1993
        %1995 = vrot.lane.b32.xlu0 %v1901, 40
        %v1996 = vpop.permute.xlu0 %1995
        %1997 = vrot.lane.b32.xlu0 %v1902, 40
        %v1998 = vpop.permute.xlu0 %1997
        %vm2031 = vcmask 392512
        %2032 = vst.msk [vmem:[#allocation5] sm:$0xff] %vm2031, %v1936
        %2033 = vst.msk [vmem:[#allocation5 + $0x8] sm:$0xff] %vm2031, %v1938
        %2034 = vst.msk [vmem:[#allocation5 + $0x10] sm:$0xff] %vm2031, %v1940
        %2035 = vst.msk [vmem:[#allocation5 + $0x18] sm:$0xff] %vm2031, %v1942
        %2036 = vst.msk [vmem:[#allocation5 + $0x20] sm:$0xff] %vm2031, %v1944
        %2037 = vst.msk [vmem:[#allocation5 + $0x28] sm:$0xff] %vm2031, %v1946
        %2038 = vst.msk [vmem:[#allocation5 + $0x30] sm:$0xff] %vm2031, %v1948
        %2039 = vst.msk [vmem:[#allocation5 + $0x38] sm:$0xff] %vm2031, %v1950
        %2040 = vst.msk [vmem:[#allocation5 + $0x40] sm:$0xff] %vm2031, %v1952
        %2041 = vst.msk [vmem:[#allocation5 + $0x48] sm:$0xff] %vm2031, %v1954
        %2042 = vst.msk [vmem:[#allocation5 + $0x50] sm:$0xff] %vm2031, %v1956
        %2043 = vst.msk [vmem:[#allocation5 + $0x58] sm:$0xff] %vm2031, %v1958
        %2044 = vst.msk [vmem:[#allocation5 + $0x60] sm:$0xff] %vm2031, %v1960
        %2045 = vst.msk [vmem:[#allocation5 + $0x68] sm:$0xff] %vm2031, %v1962
        %2046 = vst.msk [vmem:[#allocation5 + $0x70] sm:$0xff] %vm2031, %v1964
        %2047 = vst.msk [vmem:[#allocation5 + $0x78] sm:$0xff] %vm2031, %v1966
        %2048 = vst.msk [vmem:[#allocation5 + $0x80] sm:$0xff] %vm2031, %v1968
        %2049 = vst.msk [vmem:[#allocation5 + $0x88] sm:$0xff] %vm2031, %v1970
        %2050 = vst.msk [vmem:[#allocation5 + $0x90] sm:$0xff] %vm2031, %v1972
        %2051 = vst.msk [vmem:[#allocation5 + $0x98] sm:$0xff] %vm2031, %v1974
        %2052 = vst.msk [vmem:[#allocation5 + $0xa0] sm:$0xff] %vm2031, %v1976
        %2053 = vst.msk [vmem:[#allocation5 + $0xa8] sm:$0xff] %vm2031, %v1978
        %2054 = vst.msk [vmem:[#allocation5 + $0xb0] sm:$0xff] %vm2031, %v1980
        %2055 = vst.msk [vmem:[#allocation5 + $0xb8] sm:$0xff] %vm2031, %v1982
        %2056 = vst.msk [vmem:[#allocation5 + $0xc0] sm:$0xff] %vm2031, %v1984
        %2057 = vst.msk [vmem:[#allocation5 + $0xc8] sm:$0xff] %vm2031, %v1986
        %2058 = vst.msk [vmem:[#allocation5 + $0xd0] sm:$0xff] %vm2031, %v1988
        %2059 = vst.msk [vmem:[#allocation5 + $0xd8] sm:$0xff] %vm2031, %v1990
        %2060 = vst.msk [vmem:[#allocation5 + $0xe0] sm:$0xff] %vm2031, %v1992
        %2061 = vst.msk [vmem:[#allocation5 + $0xe8] sm:$0xff] %vm2031, %v1994
        %2062 = vst.msk [vmem:[#allocation5 + $0xf0] sm:$0xff] %vm2031, %v1996
        %2063 = vst.msk [vmem:[#allocation5 + $0xf8] sm:$0xff] %vm2031, %v1998
        %s2064 = scalar_lea.vmem [#allocation2], 48
        %v2065 = vld [vmem:[%s2064] sm:$0xff]
        %v2066 = vld [vmem:[%s2064 + $0x8] sm:$0xff]
        %v2067 = vld [vmem:[%s2064 + $0x18] sm:$0xff]
        %v2068 = vld [vmem:[%s2064 + $0x20] sm:$0xff]
        %v2069 = vld [vmem:[%s2064 + $0x30] sm:$0xff]
        %v2070 = vld [vmem:[%s2064 + $0x38] sm:$0xff]
        %v2071 = vld [vmem:[%s2064 + $0x48] sm:$0xff]
        %v2072 = vld [vmem:[%s2064 + $0x50] sm:$0xff]
        %v2073 = vld [vmem:[%s2064 + $0x60] sm:$0xff]
        %v2074 = vld [vmem:[%s2064 + $0x68] sm:$0xff]
        %v2075 = vld [vmem:[%s2064 + $0x78] sm:$0xff]
        %v2076 = vld [vmem:[%s2064 + $0x80] sm:$0xff]
        %v2077 = vld [vmem:[%s2064 + $0x90] sm:$0xff]
        %v2078 = vld [vmem:[%s2064 + $0x98] sm:$0xff]
        %v2079 = vld [vmem:[%s2064 + $0xa8] sm:$0xff]
        %v2080 = vld [vmem:[%s2064 + $0xb0] sm:$0xff]
        %v2081 = vld [vmem:[%s2064 + $0xc0] sm:$0xff]
        %v2082 = vld [vmem:[%s2064 + $0xc8] sm:$0xff]
        %v2083 = vld [vmem:[%s2064 + $0xd8] sm:$0xff]
        %v2084 = vld [vmem:[%s2064 + $0xe0] sm:$0xff]
        %v2085 = vld [vmem:[%s2064 + $0xf0] sm:$0xff]
        %v2086 = vld [vmem:[%s2064 + $0xf8] sm:$0xff]
        %v2087 = vld [vmem:[%s2064 + $0x108] sm:$0xff]
        %v2088 = vld [vmem:[%s2064 + $0x110] sm:$0xff]
        %v2089 = vld [vmem:[%s2064 + $0x120] sm:$0xff]
        %v2090 = vld [vmem:[%s2064 + $0x128] sm:$0xff]
        %v2091 = vld [vmem:[%s2064 + $0x138] sm:$0xff]
        %v2092 = vld [vmem:[%s2064 + $0x140] sm:$0xff]
        %v2093 = vld [vmem:[%s2064 + $0x150] sm:$0xff]
        %v2094 = vld [vmem:[%s2064 + $0x158] sm:$0xff]
        %v2095 = vld [vmem:[%s2064 + $0x168] sm:$0xff]
        %v2096 = vld [vmem:[%s2064 + $0x170] sm:$0xff]
        %2129 = vrot.lane.b32.xlu0 %v2065, 48
        %v2130 = vpop.permute.xlu0 %2129
        %2131 = vrot.lane.b32.xlu0 %v2066, 48
        %v2132 = vpop.permute.xlu0 %2131
        %2133 = vrot.lane.b32.xlu0 %v2067, 48
        %v2134 = vpop.permute.xlu0 %2133
        %2135 = vrot.lane.b32.xlu0 %v2068, 48
        %v2136 = vpop.permute.xlu0 %2135
        %2137 = vrot.lane.b32.xlu0 %v2069, 48
        %v2138 = vpop.permute.xlu0 %2137
        %2139 = vrot.lane.b32.xlu0 %v2070, 48
        %v2140 = vpop.permute.xlu0 %2139
        %2141 = vrot.lane.b32.xlu0 %v2071, 48
        %v2142 = vpop.permute.xlu0 %2141
        %2143 = vrot.lane.b32.xlu0 %v2072, 48
        %v2144 = vpop.permute.xlu0 %2143
        %2145 = vrot.lane.b32.xlu0 %v2073, 48
        %v2146 = vpop.permute.xlu0 %2145
        %2147 = vrot.lane.b32.xlu0 %v2074, 48
        %v2148 = vpop.permute.xlu0 %2147
        %2149 = vrot.lane.b32.xlu0 %v2075, 48
        %v2150 = vpop.permute.xlu0 %2149
        %2151 = vrot.lane.b32.xlu0 %v2076, 48
        %v2152 = vpop.permute.xlu0 %2151
        %2153 = vrot.lane.b32.xlu0 %v2077, 48
        %v2154 = vpop.permute.xlu0 %2153
        %2155 = vrot.lane.b32.xlu0 %v2078, 48
        %v2156 = vpop.permute.xlu0 %2155
        %2157 = vrot.lane.b32.xlu0 %v2079, 48
        %v2158 = vpop.permute.xlu0 %2157
        %2159 = vrot.lane.b32.xlu0 %v2080, 48
        %v2160 = vpop.permute.xlu0 %2159
        %2161 = vrot.lane.b32.xlu0 %v2081, 48
        %v2162 = vpop.permute.xlu0 %2161
        %2163 = vrot.lane.b32.xlu0 %v2082, 48
        %v2164 = vpop.permute.xlu0 %2163
        %2165 = vrot.lane.b32.xlu0 %v2083, 48
        %v2166 = vpop.permute.xlu0 %2165
        %2167 = vrot.lane.b32.xlu0 %v2084, 48
        %v2168 = vpop.permute.xlu0 %2167
        %2169 = vrot.lane.b32.xlu0 %v2085, 48
        %v2170 = vpop.permute.xlu0 %2169
        %2171 = vrot.lane.b32.xlu0 %v2086, 48
        %v2172 = vpop.permute.xlu0 %2171
        %2173 = vrot.lane.b32.xlu0 %v2087, 48
        %v2174 = vpop.permute.xlu0 %2173
        %2175 = vrot.lane.b32.xlu0 %v2088, 48
        %v2176 = vpop.permute.xlu0 %2175
        %2177 = vrot.lane.b32.xlu0 %v2089, 48
        %v2178 = vpop.permute.xlu0 %2177
        %2179 = vrot.lane.b32.xlu0 %v2090, 48
        %v2180 = vpop.permute.xlu0 %2179
        %2181 = vrot.lane.b32.xlu0 %v2091, 48
        %v2182 = vpop.permute.xlu0 %2181
        %2183 = vrot.lane.b32.xlu0 %v2092, 48
        %v2184 = vpop.permute.xlu0 %2183
        %2185 = vrot.lane.b32.xlu0 %v2093, 48
        %v2186 = vpop.permute.xlu0 %2185
        %2187 = vrot.lane.b32.xlu0 %v2094, 48
        %v2188 = vpop.permute.xlu0 %2187
        %2189 = vrot.lane.b32.xlu0 %v2095, 48
        %v2190 = vpop.permute.xlu0 %2189
        %2191 = vrot.lane.b32.xlu0 %v2096, 48
        %v2192 = vpop.permute.xlu0 %2191
        %vm2225 = vcmask 458112
        %2226 = vst.msk [vmem:[#allocation5] sm:$0xff] %vm2225, %v2130
        %2227 = vst.msk [vmem:[#allocation5 + $0x8] sm:$0xff] %vm2225, %v2132
        %2228 = vst.msk [vmem:[#allocation5 + $0x10] sm:$0xff] %vm2225, %v2134
        %2229 = vst.msk [vmem:[#allocation5 + $0x18] sm:$0xff] %vm2225, %v2136
        %2230 = vst.msk [vmem:[#allocation5 + $0x20] sm:$0xff] %vm2225, %v2138
        %2231 = vst.msk [vmem:[#allocation5 + $0x28] sm:$0xff] %vm2225, %v2140
        %2232 = vst.msk [vmem:[#allocation5 + $0x30] sm:$0xff] %vm2225, %v2142
        %2233 = vst.msk [vmem:[#allocation5 + $0x38] sm:$0xff] %vm2225, %v2144
        %2234 = vst.msk [vmem:[#allocation5 + $0x40] sm:$0xff] %vm2225, %v2146
        %2235 = vst.msk [vmem:[#allocation5 + $0x48] sm:$0xff] %vm2225, %v2148
        %2236 = vst.msk [vmem:[#allocation5 + $0x50] sm:$0xff] %vm2225, %v2150
        %2237 = vst.msk [vmem:[#allocation5 + $0x58] sm:$0xff] %vm2225, %v2152
        %2238 = vst.msk [vmem:[#allocation5 + $0x60] sm:$0xff] %vm2225, %v2154
        %2239 = vst.msk [vmem:[#allocation5 + $0x68] sm:$0xff] %vm2225, %v2156
        %2240 = vst.msk [vmem:[#allocation5 + $0x70] sm:$0xff] %vm2225, %v2158
        %2241 = vst.msk [vmem:[#allocation5 + $0x78] sm:$0xff] %vm2225, %v2160
        %2242 = vst.msk [vmem:[#allocation5 + $0x80] sm:$0xff] %vm2225, %v2162
        %2243 = vst.msk [vmem:[#allocation5 + $0x88] sm:$0xff] %vm2225, %v2164
        %2244 = vst.msk [vmem:[#allocation5 + $0x90] sm:$0xff] %vm2225, %v2166
        %2245 = vst.msk [vmem:[#allocation5 + $0x98] sm:$0xff] %vm2225, %v2168
        %2246 = vst.msk [vmem:[#allocation5 + $0xa0] sm:$0xff] %vm2225, %v2170
        %2247 = vst.msk [vmem:[#allocation5 + $0xa8] sm:$0xff] %vm2225, %v2172
        %2248 = vst.msk [vmem:[#allocation5 + $0xb0] sm:$0xff] %vm2225, %v2174
        %2249 = vst.msk [vmem:[#allocation5 + $0xb8] sm:$0xff] %vm2225, %v2176
        %2250 = vst.msk [vmem:[#allocation5 + $0xc0] sm:$0xff] %vm2225, %v2178
        %2251 = vst.msk [vmem:[#allocation5 + $0xc8] sm:$0xff] %vm2225, %v2180
        %2252 = vst.msk [vmem:[#allocation5 + $0xd0] sm:$0xff] %vm2225, %v2182
        %2253 = vst.msk [vmem:[#allocation5 + $0xd8] sm:$0xff] %vm2225, %v2184
        %2254 = vst.msk [vmem:[#allocation5 + $0xe0] sm:$0xff] %vm2225, %v2186
        %2255 = vst.msk [vmem:[#allocation5 + $0xe8] sm:$0xff] %vm2225, %v2188
        %2256 = vst.msk [vmem:[#allocation5 + $0xf0] sm:$0xff] %vm2225, %v2190
        %2257 = vst.msk [vmem:[#allocation5 + $0xf8] sm:$0xff] %vm2225, %v2192
        %v2258 = vld [vmem:[%s2064 + $0x1] sm:$0xff]
        %v2259 = vld [vmem:[%s2064 + $0x9] sm:$0xff]
        %v2260 = vld [vmem:[%s2064 + $0x19] sm:$0xff]
        %v2261 = vld [vmem:[%s2064 + $0x21] sm:$0xff]
        %v2262 = vld [vmem:[%s2064 + $0x31] sm:$0xff]
        %v2263 = vld [vmem:[%s2064 + $0x39] sm:$0xff]
        %v2264 = vld [vmem:[%s2064 + $0x49] sm:$0xff]
        %v2265 = vld [vmem:[%s2064 + $0x51] sm:$0xff]
        %v2266 = vld [vmem:[%s2064 + $0x61] sm:$0xff]
        %v2267 = vld [vmem:[%s2064 + $0x69] sm:$0xff]
        %v2268 = vld [vmem:[%s2064 + $0x79] sm:$0xff]
        %v2269 = vld [vmem:[%s2064 + $0x81] sm:$0xff]
        %v2270 = vld [vmem:[%s2064 + $0x91] sm:$0xff]
        %v2271 = vld [vmem:[%s2064 + $0x99] sm:$0xff]
        %v2272 = vld [vmem:[%s2064 + $0xa9] sm:$0xff]
        %v2273 = vld [vmem:[%s2064 + $0xb1] sm:$0xff]
        %v2274 = vld [vmem:[%s2064 + $0xc1] sm:$0xff]
        %v2275 = vld [vmem:[%s2064 + $0xc9] sm:$0xff]
        %v2276 = vld [vmem:[%s2064 + $0xd9] sm:$0xff]
        %v2277 = vld [vmem:[%s2064 + $0xe1] sm:$0xff]
        %v2278 = vld [vmem:[%s2064 + $0xf1] sm:$0xff]
        %v2279 = vld [vmem:[%s2064 + $0xf9] sm:$0xff]
        %v2280 = vld [vmem:[%s2064 + $0x109] sm:$0xff]
        %v2281 = vld [vmem:[%s2064 + $0x111] sm:$0xff]
        %v2282 = vld [vmem:[%s2064 + $0x121] sm:$0xff]
        %v2283 = vld [vmem:[%s2064 + $0x129] sm:$0xff]
        %v2284 = vld [vmem:[%s2064 + $0x139] sm:$0xff]
        %v2285 = vld [vmem:[%s2064 + $0x141] sm:$0xff]
        %v2286 = vld [vmem:[%s2064 + $0x151] sm:$0xff]
        %v2287 = vld [vmem:[%s2064 + $0x159] sm:$0xff]
        %v2288 = vld [vmem:[%s2064 + $0x169] sm:$0xff]
        %v2289 = vld [vmem:[%s2064 + $0x171] sm:$0xff]
        %2322 = vrot.lane.b32.xlu0 %v2258, 56
        %v2323 = vpop.permute.xlu0 %2322
        %2324 = vrot.lane.b32.xlu0 %v2259, 56
        %v2325 = vpop.permute.xlu0 %2324
        %2326 = vrot.lane.b32.xlu0 %v2260, 56
        %v2327 = vpop.permute.xlu0 %2326
        %2328 = vrot.lane.b32.xlu0 %v2261, 56
        %v2329 = vpop.permute.xlu0 %2328
        %2330 = vrot.lane.b32.xlu0 %v2262, 56
        %v2331 = vpop.permute.xlu0 %2330
        %2332 = vrot.lane.b32.xlu0 %v2263, 56
        %v2333 = vpop.permute.xlu0 %2332
        %2334 = vrot.lane.b32.xlu0 %v2264, 56
        %v2335 = vpop.permute.xlu0 %2334
        %2336 = vrot.lane.b32.xlu0 %v2265, 56
        %v2337 = vpop.permute.xlu0 %2336
        %2338 = vrot.lane.b32.xlu0 %v2266, 56
        %v2339 = vpop.permute.xlu0 %2338
        %2340 = vrot.lane.b32.xlu0 %v2267, 56
        %v2341 = vpop.permute.xlu0 %2340
        %2342 = vrot.lane.b32.xlu0 %v2268, 56
        %v2343 = vpop.permute.xlu0 %2342
        %2344 = vrot.lane.b32.xlu0 %v2269, 56
        %v2345 = vpop.permute.xlu0 %2344
        %2346 = vrot.lane.b32.xlu0 %v2270, 56
        %v2347 = vpop.permute.xlu0 %2346
        %2348 = vrot.lane.b32.xlu0 %v2271, 56
        %v2349 = vpop.permute.xlu0 %2348
        %2350 = vrot.lane.b32.xlu0 %v2272, 56
        %v2351 = vpop.permute.xlu0 %2350
        %2352 = vrot.lane.b32.xlu0 %v2273, 56
        %v2353 = vpop.permute.xlu0 %2352
        %2354 = vrot.lane.b32.xlu0 %v2274, 56
        %v2355 = vpop.permute.xlu0 %2354
        %2356 = vrot.lane.b32.xlu0 %v2275, 56
        %v2357 = vpop.permute.xlu0 %2356
        %2358 = vrot.lane.b32.xlu0 %v2276, 56
        %v2359 = vpop.permute.xlu0 %2358
        %2360 = vrot.lane.b32.xlu0 %v2277, 56
        %v2361 = vpop.permute.xlu0 %2360
        %2362 = vrot.lane.b32.xlu0 %v2278, 56
        %v2363 = vpop.permute.xlu0 %2362
        %2364 = vrot.lane.b32.xlu0 %v2279, 56
        %v2365 = vpop.permute.xlu0 %2364
        %2366 = vrot.lane.b32.xlu0 %v2280, 56
        %v2367 = vpop.permute.xlu0 %2366
        %2368 = vrot.lane.b32.xlu0 %v2281, 56
        %v2369 = vpop.permute.xlu0 %2368
        %2370 = vrot.lane.b32.xlu0 %v2282, 56
        %v2371 = vpop.permute.xlu0 %2370
        %2372 = vrot.lane.b32.xlu0 %v2283, 56
        %v2373 = vpop.permute.xlu0 %2372
        %2374 = vrot.lane.b32.xlu0 %v2284, 56
        %v2375 = vpop.permute.xlu0 %2374
        %2376 = vrot.lane.b32.xlu0 %v2285, 56
        %v2377 = vpop.permute.xlu0 %2376
        %2378 = vrot.lane.b32.xlu0 %v2286, 56
        %v2379 = vpop.permute.xlu0 %2378
        %2380 = vrot.lane.b32.xlu0 %v2287, 56
        %v2381 = vpop.permute.xlu0 %2380
        %2382 = vrot.lane.b32.xlu0 %v2288, 56
        %v2383 = vpop.permute.xlu0 %2382
        %2384 = vrot.lane.b32.xlu0 %v2289, 56
        %v2385 = vpop.permute.xlu0 %2384
        %vm2418 = vcmask 523712
        %2419 = vst.msk [vmem:[#allocation5] sm:$0xff] %vm2418, %v2323
        %2420 = vst.msk [vmem:[#allocation5 + $0x8] sm:$0xff] %vm2418, %v2325
        %2421 = vst.msk [vmem:[#allocation5 + $0x10] sm:$0xff] %vm2418, %v2327
        %2422 = vst.msk [vmem:[#allocation5 + $0x18] sm:$0xff] %vm2418, %v2329
        %2423 = vst.msk [vmem:[#allocation5 + $0x20] sm:$0xff] %vm2418, %v2331
        %2424 = vst.msk [vmem:[#allocation5 + $0x28] sm:$0xff] %vm2418, %v2333
        %2425 = vst.msk [vmem:[#allocation5 + $0x30] sm:$0xff] %vm2418, %v2335
        %2426 = vst.msk [vmem:[#allocation5 + $0x38] sm:$0xff] %vm2418, %v2337
        %2427 = vst.msk [vmem:[#allocation5 + $0x40] sm:$0xff] %vm2418, %v2339
        %2428 = vst.msk [vmem:[#allocation5 + $0x48] sm:$0xff] %vm2418, %v2341
        %2429 = vst.msk [vmem:[#allocation5 + $0x50] sm:$0xff] %vm2418, %v2343
        %2430 = vst.msk [vmem:[#allocation5 + $0x58] sm:$0xff] %vm2418, %v2345
        %2431 = vst.msk [vmem:[#allocation5 + $0x60] sm:$0xff] %vm2418, %v2347
        %2432 = vst.msk [vmem:[#allocation5 + $0x68] sm:$0xff] %vm2418, %v2349
        %2433 = vst.msk [vmem:[#allocation5 + $0x70] sm:$0xff] %vm2418, %v2351
        %2434 = vst.msk [vmem:[#allocation5 + $0x78] sm:$0xff] %vm2418, %v2353
        %2435 = vst.msk [vmem:[#allocation5 + $0x80] sm:$0xff] %vm2418, %v2355
        %2436 = vst.msk [vmem:[#allocation5 + $0x88] sm:$0xff] %vm2418, %v2357
        %2437 = vst.msk [vmem:[#allocation5 + $0x90] sm:$0xff] %vm2418, %v2359
        %2438 = vst.msk [vmem:[#allocation5 + $0x98] sm:$0xff] %vm2418, %v2361
        %2439 = vst.msk [vmem:[#allocation5 + $0xa0] sm:$0xff] %vm2418, %v2363
        %2440 = vst.msk [vmem:[#allocation5 + $0xa8] sm:$0xff] %vm2418, %v2365
        %2441 = vst.msk [vmem:[#allocation5 + $0xb0] sm:$0xff] %vm2418, %v2367
        %2442 = vst.msk [vmem:[#allocation5 + $0xb8] sm:$0xff] %vm2418, %v2369
        %2443 = vst.msk [vmem:[#allocation5 + $0xc0] sm:$0xff] %vm2418, %v2371
        %2444 = vst.msk [vmem:[#allocation5 + $0xc8] sm:$0xff] %vm2418, %v2373
        %2445 = vst.msk [vmem:[#allocation5 + $0xd0] sm:$0xff] %vm2418, %v2375
        %2446 = vst.msk [vmem:[#allocation5 + $0xd8] sm:$0xff] %vm2418, %v2377
        %2447 = vst.msk [vmem:[#allocation5 + $0xe0] sm:$0xff] %vm2418, %v2379
        %2448 = vst.msk [vmem:[#allocation5 + $0xe8] sm:$0xff] %vm2418, %v2381
        %2449 = vst.msk [vmem:[#allocation5 + $0xf0] sm:$0xff] %vm2418, %v2383
        %2450 = vst.msk [vmem:[#allocation5 + $0xf8] sm:$0xff] %vm2418, %v2385
        %v2451 = vld [vmem:[%s2064 + $0x2] sm:$0xff]
        %v2452 = vld [vmem:[%s2064 + $0xa] sm:$0xff]
        %v2453 = vld [vmem:[%s2064 + $0x1a] sm:$0xff]
        %v2454 = vld [vmem:[%s2064 + $0x22] sm:$0xff]
        %v2455 = vld [vmem:[%s2064 + $0x32] sm:$0xff]
        %v2456 = vld [vmem:[%s2064 + $0x3a] sm:$0xff]
        %v2457 = vld [vmem:[%s2064 + $0x4a] sm:$0xff]
        %v2458 = vld [vmem:[%s2064 + $0x52] sm:$0xff]
        %v2459 = vld [vmem:[%s2064 + $0x62] sm:$0xff]
        %v2460 = vld [vmem:[%s2064 + $0x6a] sm:$0xff]
        %v2461 = vld [vmem:[%s2064 + $0x7a] sm:$0xff]
        %v2462 = vld [vmem:[%s2064 + $0x82] sm:$0xff]
        %v2463 = vld [vmem:[%s2064 + $0x92] sm:$0xff]
        %v2464 = vld [vmem:[%s2064 + $0x9a] sm:$0xff]
        %v2465 = vld [vmem:[%s2064 + $0xaa] sm:$0xff]
        %v2466 = vld [vmem:[%s2064 + $0xb2] sm:$0xff]
        %v2467 = vld [vmem:[%s2064 + $0xc2] sm:$0xff]
        %v2468 = vld [vmem:[%s2064 + $0xca] sm:$0xff]
        %v2469 = vld [vmem:[%s2064 + $0xda] sm:$0xff]
        %v2470 = vld [vmem:[%s2064 + $0xe2] sm:$0xff]
        %v2471 = vld [vmem:[%s2064 + $0xf2] sm:$0xff]
        %v2472 = vld [vmem:[%s2064 + $0xfa] sm:$0xff]
        %v2473 = vld [vmem:[%s2064 + $0x10a] sm:$0xff]
        %v2474 = vld [vmem:[%s2064 + $0x112] sm:$0xff]
        %v2475 = vld [vmem:[%s2064 + $0x122] sm:$0xff]
        %v2476 = vld [vmem:[%s2064 + $0x12a] sm:$0xff]
        %v2477 = vld [vmem:[%s2064 + $0x13a] sm:$0xff]
        %v2478 = vld [vmem:[%s2064 + $0x142] sm:$0xff]
        %v2479 = vld [vmem:[%s2064 + $0x152] sm:$0xff]
        %v2480 = vld [vmem:[%s2064 + $0x15a] sm:$0xff]
        %v2481 = vld [vmem:[%s2064 + $0x16a] sm:$0xff]
        %v2482 = vld [vmem:[%s2064 + $0x172] sm:$0xff]
        %2515 = vrot.lane.b32.xlu0 %v2451, 64
        %v2516 = vpop.permute.xlu0 %2515
        %2517 = vrot.lane.b32.xlu0 %v2452, 64
        %v2518 = vpop.permute.xlu0 %2517
        %2519 = vrot.lane.b32.xlu0 %v2453, 64
        %v2520 = vpop.permute.xlu0 %2519
        %2521 = vrot.lane.b32.xlu0 %v2454, 64
        %v2522 = vpop.permute.xlu0 %2521
        %2523 = vrot.lane.b32.xlu0 %v2455, 64
        %v2524 = vpop.permute.xlu0 %2523
        %2525 = vrot.lane.b32.xlu0 %v2456, 64
        %v2526 = vpop.permute.xlu0 %2525
        %2527 = vrot.lane.b32.xlu0 %v2457, 64
        %v2528 = vpop.permute.xlu0 %2527
        %2529 = vrot.lane.b32.xlu0 %v2458, 64
        %v2530 = vpop.permute.xlu0 %2529
        %2531 = vrot.lane.b32.xlu0 %v2459, 64
        %v2532 = vpop.permute.xlu0 %2531
        %2533 = vrot.lane.b32.xlu0 %v2460, 64
        %v2534 = vpop.permute.xlu0 %2533
        %2535 = vrot.lane.b32.xlu0 %v2461, 64
        %v2536 = vpop.permute.xlu0 %2535
        %2537 = vrot.lane.b32.xlu0 %v2462, 64
        %v2538 = vpop.permute.xlu0 %2537
        %2539 = vrot.lane.b32.xlu0 %v2463, 64
        %v2540 = vpop.permute.xlu0 %2539
        %2541 = vrot.lane.b32.xlu0 %v2464, 64
        %v2542 = vpop.permute.xlu0 %2541
        %2543 = vrot.lane.b32.xlu0 %v2465, 64
        %v2544 = vpop.permute.xlu0 %2543
        %2545 = vrot.lane.b32.xlu0 %v2466, 64
        %v2546 = vpop.permute.xlu0 %2545
        %2547 = vrot.lane.b32.xlu0 %v2467, 64
        %v2548 = vpop.permute.xlu0 %2547
        %2549 = vrot.lane.b32.xlu0 %v2468, 64
        %v2550 = vpop.permute.xlu0 %2549
        %2551 = vrot.lane.b32.xlu0 %v2469, 64
        %v2552 = vpop.permute.xlu0 %2551
        %2553 = vrot.lane.b32.xlu0 %v2470, 64
        %v2554 = vpop.permute.xlu0 %2553
        %2555 = vrot.lane.b32.xlu0 %v2471, 64
        %v2556 = vpop.permute.xlu0 %2555
        %2557 = vrot.lane.b32.xlu0 %v2472, 64
        %v2558 = vpop.permute.xlu0 %2557
        %2559 = vrot.lane.b32.xlu0 %v2473, 64
        %v2560 = vpop.permute.xlu0 %2559
        %2561 = vrot.lane.b32.xlu0 %v2474, 64
        %v2562 = vpop.permute.xlu0 %2561
        %2563 = vrot.lane.b32.xlu0 %v2475, 64
        %v2564 = vpop.permute.xlu0 %2563
        %2565 = vrot.lane.b32.xlu0 %v2476, 64
        %v2566 = vpop.permute.xlu0 %2565
        %2567 = vrot.lane.b32.xlu0 %v2477, 64
        %v2568 = vpop.permute.xlu0 %2567
        %2569 = vrot.lane.b32.xlu0 %v2478, 64
        %v2570 = vpop.permute.xlu0 %2569
        %2571 = vrot.lane.b32.xlu0 %v2479, 64
        %v2572 = vpop.permute.xlu0 %2571
        %2573 = vrot.lane.b32.xlu0 %v2480, 64
        %v2574 = vpop.permute.xlu0 %2573
        %2575 = vrot.lane.b32.xlu0 %v2481, 64
        %v2576 = vpop.permute.xlu0 %2575
        %2577 = vrot.lane.b32.xlu0 %v2482, 64
        %v2578 = vpop.permute.xlu0 %2577
        %vm2611 = vcmask 589312
        %2612 = vst.msk [vmem:[#allocation5] sm:$0xff] %vm2611, %v2516
        %2613 = vst.msk [vmem:[#allocation5 + $0x8] sm:$0xff] %vm2611, %v2518
        %2614 = vst.msk [vmem:[#allocation5 + $0x10] sm:$0xff] %vm2611, %v2520
        %2615 = vst.msk [vmem:[#allocation5 + $0x18] sm:$0xff] %vm2611, %v2522
        %2616 = vst.msk [vmem:[#allocation5 + $0x20] sm:$0xff] %vm2611, %v2524
        %2617 = vst.msk [vmem:[#allocation5 + $0x28] sm:$0xff] %vm2611, %v2526
        %2618 = vst.msk [vmem:[#allocation5 + $0x30] sm:$0xff] %vm2611, %v2528
        %2619 = vst.msk [vmem:[#allocation5 + $0x38] sm:$0xff] %vm2611, %v2530
        %2620 = vst.msk [vmem:[#allocation5 + $0x40] sm:$0xff] %vm2611, %v2532
        %2621 = vst.msk [vmem:[#allocation5 + $0x48] sm:$0xff] %vm2611, %v2534
        %2622 = vst.msk [vmem:[#allocation5 + $0x50] sm:$0xff] %vm2611, %v2536
        %2623 = vst.msk [vmem:[#allocation5 + $0x58] sm:$0xff] %vm2611, %v2538
        %2624 = vst.msk [vmem:[#allocation5 + $0x60] sm:$0xff] %vm2611, %v2540
        %2625 = vst.msk [vmem:[#allocation5 + $0x68] sm:$0xff] %vm2611, %v2542
        %2626 = vst.msk [vmem:[#allocation5 + $0x70] sm:$0xff] %vm2611, %v2544
        %2627 = vst.msk [vmem:[#allocation5 + $0x78] sm:$0xff] %vm2611, %v2546
        %2628 = vst.msk [vmem:[#allocation5 + $0x80] sm:$0xff] %vm2611, %v2548
        %2629 = vst.msk [vmem:[#allocation5 + $0x88] sm:$0xff] %vm2611, %v2550
        %2630 = vst.msk [vmem:[#allocation5 + $0x90] sm:$0xff] %vm2611, %v2552
        %2631 = vst.msk [vmem:[#allocation5 + $0x98] sm:$0xff] %vm2611, %v2554
        %2632 = vst.msk [vmem:[#allocation5 + $0xa0] sm:$0xff] %vm2611, %v2556
        %2633 = vst.msk [vmem:[#allocation5 + $0xa8] sm:$0xff] %vm2611, %v2558
        %2634 = vst.msk [vmem:[#allocation5 + $0xb0] sm:$0xff] %vm2611, %v2560
        %2635 = vst.msk [vmem:[#allocation5 + $0xb8] sm:$0xff] %vm2611, %v2562
        %2636 = vst.msk [vmem:[#allocation5 + $0xc0] sm:$0xff] %vm2611, %v2564
        %2637 = vst.msk [vmem:[#allocation5 + $0xc8] sm:$0xff] %vm2611, %v2566
        %2638 = vst.msk [vmem:[#allocation5 + $0xd0] sm:$0xff] %vm2611, %v2568
        %2639 = vst.msk [vmem:[#allocation5 + $0xd8] sm:$0xff] %vm2611, %v2570
        %2640 = vst.msk [vmem:[#allocation5 + $0xe0] sm:$0xff] %vm2611, %v2572
        %2641 = vst.msk [vmem:[#allocation5 + $0xe8] sm:$0xff] %vm2611, %v2574
        %2642 = vst.msk [vmem:[#allocation5 + $0xf0] sm:$0xff] %vm2611, %v2576
        %2643 = vst.msk [vmem:[#allocation5 + $0xf8] sm:$0xff] %vm2611, %v2578
        %v2644 = vld [vmem:[#allocation5] sm:$0xff]
        %v2645 = vld [vmem:[#allocation5 + $0x8] sm:$0xff]
        %v2646 = vld [vmem:[#allocation5 + $0x10] sm:$0xff]
        %v2647 = vld [vmem:[#allocation5 + $0x18] sm:$0xff]
        %v2648 = vld [vmem:[#allocation5 + $0x20] sm:$0xff]
        %v2649 = vld [vmem:[#allocation5 + $0x28] sm:$0xff]
        %v2650 = vld [vmem:[#allocation5 + $0x30] sm:$0xff]
        %v2651 = vld [vmem:[#allocation5 + $0x38] sm:$0xff]
        %v2652 = vld [vmem:[#allocation5 + $0x40] sm:$0xff]
        %v2653 = vld [vmem:[#allocation5 + $0x48] sm:$0xff]
        %v2654 = vld [vmem:[#allocation5 + $0x50] sm:$0xff]
        %v2655 = vld [vmem:[#allocation5 + $0x58] sm:$0xff]
        %v2656 = vld [vmem:[#allocation5 + $0x60] sm:$0xff]
        %v2657 = vld [vmem:[#allocation5 + $0x68] sm:$0xff]
        %v2658 = vld [vmem:[#allocation5 + $0x70] sm:$0xff]
        %v2659 = vld [vmem:[#allocation5 + $0x78] sm:$0xff]
        %v2660 = vld [vmem:[#allocation5 + $0x80] sm:$0xff]
        %v2661 = vld [vmem:[#allocation5 + $0x88] sm:$0xff]
        %v2662 = vld [vmem:[#allocation5 + $0x90] sm:$0xff]
        %v2663 = vld [vmem:[#allocation5 + $0x98] sm:$0xff]
        %v2664 = vld [vmem:[#allocation5 + $0xa0] sm:$0xff]
        %v2665 = vld [vmem:[#allocation5 + $0xa8] sm:$0xff]
        %v2666 = vld [vmem:[#allocation5 + $0xb0] sm:$0xff]
        %v2667 = vld [vmem:[#allocation5 + $0xb8] sm:$0xff]
        %v2668 = vld [vmem:[#allocation5 + $0xc0] sm:$0xff]
        %v2669 = vld [vmem:[#allocation5 + $0xc8] sm:$0xff]
        %v2670 = vld [vmem:[#allocation5 + $0xd0] sm:$0xff]
        %v2671 = vld [vmem:[#allocation5 + $0xd8] sm:$0xff]
        %v2672 = vld [vmem:[#allocation5 + $0xe0] sm:$0xff]
        %v2673 = vld [vmem:[#allocation5 + $0xe8] sm:$0xff]
        %v2674 = vld [vmem:[#allocation5 + $0xf0] sm:$0xff]
        %v2675 = vld [vmem:[#allocation5 + $0xf8] sm:$0xff]
        %v2676 = vpack.c.bf16 %v2645, %v2644
        %v2677 = vpack.c.bf16 %v2647, %v2646
        %v2678 = vpack.c.bf16 %v2649, %v2648
        %v2679 = vpack.c.bf16 %v2651, %v2650
        %v2680 = vpack.c.bf16 %v2653, %v2652
        %v2681 = vpack.c.bf16 %v2655, %v2654
        %v2682 = vpack.c.bf16 %v2657, %v2656
        %v2683 = vpack.c.bf16 %v2659, %v2658
        %v2684 = vpack.c.bf16 %v2661, %v2660
        %v2685 = vpack.c.bf16 %v2663, %v2662
        %v2686 = vpack.c.bf16 %v2665, %v2664
        %v2687 = vpack.c.bf16 %v2667, %v2666
        %v2688 = vpack.c.bf16 %v2669, %v2668
        %v2689 = vpack.c.bf16 %v2671, %v2670
        %v2690 = vpack.c.bf16 %v2673, %v2672
        %v2691 = vpack.c.bf16 %v2675, %v2674
        %v2692 = vld [vmem:[%s5] sm:$0xf]
        %v2693 = vld [vmem:[%s5 + $0x4] sm:$0xf]
        %v2694 = vld [vmem:[%s5 + $0x8] sm:$0xf]
        %v2695 = vld [vmem:[%s5 + $0xc] sm:$0xf]
        %v2696 = vld [vmem:[%s5 + $0x10] sm:$0xf]
        %v2697 = vld [vmem:[%s5 + $0x14] sm:$0xf]
        %v2698 = vld [vmem:[%s5 + $0x18] sm:$0xf]
        %v2699 = vld [vmem:[%s5 + $0x1c] sm:$0xf]
        %v2700 = vld [vmem:[%s5 + $0x20] sm:$0xf]
        %v2701 = vld [vmem:[%s6] sm:$0x1]
        %v2703 = vlaneseq
        %v2704 = vshrl.u32 %v2703, 7
        %v2705 = vsub.s32 0, %v2704
        %v2706 = vrot.slane %v2701, %v2705
        %v2717 = vunpack.c.l.b16 %v2692
        %v2718 = vunpack.c.l.b16 %v2693
        %v2719 = vunpack.c.l.b16 %v2694
        %v2720 = vunpack.c.l.b16 %v2695
        %v2721 = vunpack.c.l.b16 %v2696
        %v2722 = vunpack.c.l.b16 %v2697
        %v2723 = vunpack.c.l.b16 %v2698
        %v2724 = vunpack.c.l.b16 %v2699
        %v2725 = vunpack.c.l.b16 %v2700
        %v2726 = vpack.c.b16 %v2718, %v2717
        %v2727 = vpack.c.b16 %v2720, %v2719
        %v2728 = vpack.c.b16 %v2722, %v2721
        %v2729 = vpack.c.b16 %v2724, %v2723
        %v2730 = vpack.c.b16 %v2725, %v2725
        %vm2735 = vcmask 588800
        %v2737 = vsel %vm2735, %v2676, 0
        %v2740 = vsel %vm2735, %v2677, 0
        %v2743 = vsel %vm2735, %v2678, 0
        %v2746 = vsel %vm2735, %v2679, 0
        %v2749 = vsel %vm2735, %v2680, 0
        %v2752 = vsel %vm2735, %v2681, 0
        %v2755 = vsel %vm2735, %v2682, 0
        %v2758 = vsel %vm2735, %v2683, 0
        %v2761 = vsel %vm2735, %v2684, 0
        %v2764 = vsel %vm2735, %v2685, 0
        %v2767 = vsel %vm2735, %v2686, 0
        %v2770 = vsel %vm2735, %v2687, 0
        %v2773 = vsel %vm2735, %v2688, 0
        %v2776 = vsel %vm2735, %v2689, 0
        %v2779 = vsel %vm2735, %v2690, 0
        %v2782 = vsel %vm2735, %v2691, 0
        %vm2784 = vcmask 1043456
        %v2786 = vsel %vm2784, %v2730, 0
        %2788 = vmatprep.subr.bf16.mxu0 0
        %2789 = vmatpush1.bf16.msra.mxu0 %v2726
        %2790 = vmatprep.subr.bf16.mxu0 0
        %2791 = vmatpush1.bf16.msra.mxu0 %v2727
        %2792 = vmatprep.subr.bf16.mxu0 0
        %2793 = vmatpush1.bf16.msra.mxu0 %v2728
        %2794 = vmatprep.subr.bf16.mxu0 0
        %2795 = vmatpush1.bf16.msra.mxu0 %v2729
        %2796 = vmatprep.subr.bf16.mxu0 0
        %2797 = vmatpush1.bf16.msra.mxu0 %v2786
        %2798 = vmatprep.subr.bf16.mxu0 0
        %2799 = vmatpush1.bf16.msra.mxu0 0
        %2800 = vmatprep.subr.bf16.mxu0 0
        %2801 = vmatpush1.bf16.msra.mxu0 0
        %2802 = vmatprep.subr.bf16.mxu0 0
        %2803 = vmatpush1.bf16.msra.mxu0 0
        %2804 = vmatprep.subr.bf16.mxu0 0
        %2805 = vmatpush1.bf16.msra.mxu0 0
        %2806 = vmatprep.subr.bf16.mxu0 0
        %2807 = vmatpush1.bf16.msra.mxu0 0
        %2808 = vmatprep.subr.bf16.mxu0 0
        %2809 = vmatpush1.bf16.msra.mxu0 0
        %2810 = vmatprep.subr.bf16.mxu0 0
        %2811 = vmatpush1.bf16.msra.mxu0 0
        %2812 = vmatprep.subr.bf16.mxu0 0
        %2813 = vmatpush1.bf16.msra.mxu0 0
        %2814 = vmatprep.subr.bf16.mxu0 0
        %2815 = vmatpush1.bf16.msra.mxu0 0
        %2816 = vmatprep.subr.bf16.mxu0 0
        %2817 = vmatpush1.bf16.msra.mxu0 0
        %2818 = vmatprep.subr.bf16.mxu0 0
        %2819 = vmatpush1.bf16.msra.mxu0 0
        %2820 = vmatprep.mubr.bf16.mxu0 0
        %2821 = vmatmul.mubr.bf16.gmra.mrb[0].mxu0 %v2737
        %v2822 = vpop.f32.mrb[0].mxu0
        %v2823 = vadd.f32 %v2706, %v2822
        %v2824 = vpop.f32.mrb[0].mxu0
        %v2825 = vpop.f32.mrb[0].mxu0
        %v2826 = vadd.f32 %v2706, %v2825
        %v2827 = vpop.f32.mrb[0].mxu0
        %2828 = vmatprep.mubr.bf16.mxu0 0
        %2829 = vmatmul.mubr.bf16.gmra.mrb[0].mxu0 %v2740
        %v2830 = vpop.f32.mrb[0].mxu0
        %v2831 = vadd.f32 %v2706, %v2830
        %v2832 = vpop.f32.mrb[0].mxu0
        %v2833 = vpop.f32.mrb[0].mxu0
        %v2834 = vadd.f32 %v2706, %v2833
        %v2835 = vpop.f32.mrb[0].mxu0
        %2836 = vmatprep.mubr.bf16.mxu0 0
        %2837 = vmatmul.mubr.bf16.gmra.mrb[0].mxu0 %v2743
        %v2838 = vpop.f32.mrb[0].mxu0
        %v2839 = vadd.f32 %v2706, %v2838
        %v2840 = vpop.f32.mrb[0].mxu0
        %v2841 = vpop.f32.mrb[0].mxu0
        %v2842 = vadd.f32 %v2706, %v2841
        %v2843 = vpop.f32.mrb[0].mxu0
        %2844 = vmatprep.mubr.bf16.mxu0 0
        %2845 = vmatmul.mubr.bf16.gmra.mrb[0].mxu0 %v2746
        %v2846 = vpop.f32.mrb[0].mxu0
        %v2847 = vadd.f32 %v2706, %v2846
        %v2848 = vpop.f32.mrb[0].mxu0
        %v2849 = vpop.f32.mrb[0].mxu0
        %v2850 = vadd.f32 %v2706, %v2849
        %v2851 = vpop.f32.mrb[0].mxu0
        %2852 = vmatprep.mubr.bf16.mxu0 0
        %2853 = vmatmul.mubr.bf16.gmra.mrb[0].mxu0 %v2749
        %v2854 = vpop.f32.mrb[0].mxu0
        %v2855 = vadd.f32 %v2706, %v2854
        %v2856 = vpop.f32.mrb[0].mxu0
        %v2857 = vpop.f32.mrb[0].mxu0
        %v2858 = vadd.f32 %v2706, %v2857
        %v2859 = vpop.f32.mrb[0].mxu0
        %2860 = vmatprep.mubr.bf16.mxu0 0
        %2861 = vmatmul.mubr.bf16.gmra.mrb[0].mxu0 %v2752
        %v2862 = vpop.f32.mrb[0].mxu0
        %v2863 = vadd.f32 %v2706, %v2862
        %v2864 = vpop.f32.mrb[0].mxu0
        %v2865 = vpop.f32.mrb[0].mxu0
        %v2866 = vadd.f32 %v2706, %v2865
        %v2867 = vpop.f32.mrb[0].mxu0
        %2868 = vmatprep.mubr.bf16.mxu0 0
        %2869 = vmatmul.mubr.bf16.gmra.mrb[0].mxu0 %v2755
        %v2870 = vpop.f32.mrb[0].mxu0
        %v2871 = vadd.f32 %v2706, %v2870
        %v2872 = vpop.f32.mrb[0].mxu0
        %v2873 = vpop.f32.mrb[0].mxu0
        %v2874 = vadd.f32 %v2706, %v2873
        %v2875 = vpop.f32.mrb[0].mxu0
        %2876 = vmatprep.mubr.bf16.mxu0 0
        %2877 = vmatmul.mubr.bf16.gmra.mrb[0].mxu0 %v2758
        %v2878 = vpop.f32.mrb[0].mxu0
        %v2879 = vadd.f32 %v2706, %v2878
        %v2880 = vpop.f32.mrb[0].mxu0
        %v2881 = vpop.f32.mrb[0].mxu0
        %v2882 = vadd.f32 %v2706, %v2881
        %v2883 = vpop.f32.mrb[0].mxu0
        %2884 = vmatprep.mubr.bf16.mxu0 0
        %2885 = vmatmul.mubr.bf16.gmra.mrb[0].mxu0 %v2761
        %v2886 = vpop.f32.mrb[0].mxu0
        %v2887 = vadd.f32 %v2706, %v2886
        %v2888 = vpop.f32.mrb[0].mxu0
        %v2889 = vpop.f32.mrb[0].mxu0
        %v2890 = vadd.f32 %v2706, %v2889
        %v2891 = vpop.f32.mrb[0].mxu0
        %2892 = vmatprep.mubr.bf16.mxu0 0
        %2893 = vmatmul.mubr.bf16.gmra.mrb[0].mxu0 %v2764
        %v2894 = vpop.f32.mrb[0].mxu0
        %v2895 = vadd.f32 %v2706, %v2894
        %v2896 = vpop.f32.mrb[0].mxu0
        %v2897 = vpop.f32.mrb[0].mxu0
        %v2898 = vadd.f32 %v2706, %v2897
        %v2899 = vpop.f32.mrb[0].mxu0
        %2900 = vmatprep.mubr.bf16.mxu0 0
        %2901 = vmatmul.mubr.bf16.gmra.mrb[0].mxu0 %v2767
        %v2902 = vpop.f32.mrb[0].mxu0
        %v2903 = vadd.f32 %v2706, %v2902
        %v2904 = vpop.f32.mrb[0].mxu0
        %v2905 = vpop.f32.mrb[0].mxu0
        %v2906 = vadd.f32 %v2706, %v2905
        %v2907 = vpop.f32.mrb[0].mxu0
        %2908 = vmatprep.mubr.bf16.mxu0 0
        %2909 = vmatmul.mubr.bf16.gmra.mrb[0].mxu0 %v2770
        %v2910 = vpop.f32.mrb[0].mxu0
        %v2911 = vadd.f32 %v2706, %v2910
        %v2912 = vpop.f32.mrb[0].mxu0
        %v2913 = vpop.f32.mrb[0].mxu0
        %v2914 = vadd.f32 %v2706, %v2913
        %v2915 = vpop.f32.mrb[0].mxu0
        %2916 = vmatprep.mubr.bf16.mxu0 0
        %2917 = vmatmul.mubr.bf16.gmra.mrb[0].mxu0 %v2773
        %v2918 = vpop.f32.mrb[0].mxu0
        %v2919 = vadd.f32 %v2706, %v2918
        %v2920 = vpop.f32.mrb[0].mxu0
        %v2921 = vpop.f32.mrb[0].mxu0
        %v2922 = vadd.f32 %v2706, %v2921
        %v2923 = vpop.f32.mrb[0].mxu0
        %2924 = vmatprep.mubr.bf16.mxu0 0
        %2925 = vmatmul.mubr.bf16.gmra.mrb[0].mxu0 %v2776
        %v2926 = vpop.f32.mrb[0].mxu0
        %v2927 = vadd.f32 %v2706, %v2926
        %v2928 = vpop.f32.mrb[0].mxu0
        %v2929 = vpop.f32.mrb[0].mxu0
        %v2930 = vadd.f32 %v2706, %v2929
        %v2931 = vpop.f32.mrb[0].mxu0
        %2932 = vmatprep.mubr.bf16.mxu0 0
        %2933 = vmatmul.mubr.bf16.gmra.mrb[0].mxu0 %v2779
        %v2934 = vpop.f32.mrb[0].mxu0
        %v2935 = vadd.f32 %v2706, %v2934
        %v2936 = vpop.f32.mrb[0].mxu0
        %v2937 = vpop.f32.mrb[0].mxu0
        %v2938 = vadd.f32 %v2706, %v2937
        %v2939 = vpop.f32.mrb[0].mxu0
        %2940 = vmatprep.mubr.bf16.mxu0 0
        %2941 = vmatmul.mubr.bf16.gmra.mrb[0].mxu0 %v2782
        %v2942 = vpop.f32.mrb[0].mxu0
        %v2943 = vadd.f32 %v2706, %v2942
        %v2944 = vpop.f32.mrb[0].mxu0
        %v2945 = vpop.f32.mrb[0].mxu0
        %v2946 = vadd.f32 %v2706, %v2945
        %v2947 = vpop.f32.mrb[0].mxu0
        %2948 = vdwg.mxu0
        %v2949 = vmax.f32 %v2823, 0.0
        %v2950 = vmax.f32 %v2826, 0.0
        %v2951 = vmax.f32 %v2831, 0.0
        %v2952 = vmax.f32 %v2834, 0.0
        %v2953 = vmax.f32 %v2839, 0.0
        %v2954 = vmax.f32 %v2842, 0.0
        %v2955 = vmax.f32 %v2847, 0.0
        %v2956 = vmax.f32 %v2850, 0.0
        %v2957 = vmax.f32 %v2855, 0.0
        %v2958 = vmax.f32 %v2858, 0.0
        %v2959 = vmax.f32 %v2863, 0.0
        %v2960 = vmax.f32 %v2866, 0.0
        %v2961 = vmax.f32 %v2871, 0.0
        %v2962 = vmax.f32 %v2874, 0.0
        %v2963 = vmax.f32 %v2879, 0.0
        %v2964 = vmax.f32 %v2882, 0.0
        %v2965 = vmax.f32 %v2887, 0.0
        %v2966 = vmax.f32 %v2890, 0.0
        %v2967 = vmax.f32 %v2895, 0.0
        %v2968 = vmax.f32 %v2898, 0.0
        %v2969 = vmax.f32 %v2903, 0.0
        %v2970 = vmax.f32 %v2906, 0.0
        %v2971 = vmax.f32 %v2911, 0.0
        %v2972 = vmax.f32 %v2914, 0.0
        %v2973 = vmax.f32 %v2919, 0.0
        %v2974 = vmax.f32 %v2922, 0.0
        %v2975 = vmax.f32 %v2927, 0.0
        %v2976 = vmax.f32 %v2930, 0.0
        %v2977 = vmax.f32 %v2935, 0.0
        %v2978 = vmax.f32 %v2938, 0.0
        %v2979 = vmax.f32 %v2943, 0.0
        %v2980 = vmax.f32 %v2946, 0.0
        %v2981 = vld [vmem:[%s7] sm:$0x3]
        %v2982 = vld [vmem:[%s8] sm:$0x1]
        %v2984 = vlaneseq
        %v2985 = vshrl.u32 %v2984, 7
        %v2986 = vsub.s32 0, %v2985
        %v2987 = vrot.slane %v2982, %v2986
        %v2990 = vsel %vm545, %v2981, 0
        %2992 = vmatprep.subr.bf16.mxu0 0
        %2993 = vmatpush1.bf16.msra.mxu0 %v2990
        %2994 = vmatprep.subr.bf16.mxu0 0
        %2995 = vmatpush1.bf16.msra.mxu0 0
        %2996 = vmatprep.subr.bf16.mxu0 0
        %2997 = vmatpush1.bf16.msra.mxu0 0
        %2998 = vmatprep.subr.bf16.mxu0 0
        %2999 = vmatpush1.bf16.msra.mxu0 0
        %3000 = vmatprep.subr.bf16.mxu0 0
        %3001 = vmatpush1.bf16.msra.mxu0 0
        %3002 = vmatprep.subr.bf16.mxu0 0
        %3003 = vmatpush1.bf16.msra.mxu0 0
        %3004 = vmatprep.subr.bf16.mxu0 0
        %3005 = vmatpush1.bf16.msra.mxu0 0
        %3006 = vmatprep.subr.bf16.mxu0 0
        %3007 = vmatpush1.bf16.msra.mxu0 0
        %3008 = vmatprep.subr.bf16.mxu0 0
        %3009 = vmatpush1.bf16.msra.mxu0 0
        %3010 = vmatprep.subr.bf16.mxu0 0
        %3011 = vmatpush1.bf16.msra.mxu0 0
        %3012 = vmatprep.subr.bf16.mxu0 0
        %3013 = vmatpush1.bf16.msra.mxu0 0
        %3014 = vmatprep.subr.bf16.mxu0 0
        %3015 = vmatpush1.bf16.msra.mxu0 0
        %3016 = vmatprep.subr.bf16.mxu0 0
        %3017 = vmatpush1.bf16.msra.mxu0 0
        %3018 = vmatprep.subr.bf16.mxu0 0
        %3019 = vmatpush1.bf16.msra.mxu0 0
        %3020 = vmatprep.subr.bf16.mxu0 0
        %3021 = vmatpush1.bf16.msra.mxu0 0
        %3022 = vmatprep.subr.bf16.mxu0 0
        %3023 = vmatpush1.bf16.msra.mxu0 0
        %3024 = vmatprep.mubr.bf16.mxu0 0
        %3025 = vmatmul.mubr.bf16.gmra.mrb[0].mxu0 %v498
        %v3026 = vpop.f32.mrb[0].mxu0
        %v3027 = vadd.f32 %v2987, %v3026
        %v3028 = vpop.f32.mrb[0].mxu0
        %v3029 = vpop.f32.mrb[0].mxu0
        %v3030 = vadd.f32 %v2987, %v3029
        %v3031 = vpop.f32.mrb[0].mxu0
        %3032 = vmatprep.mubr.bf16.mxu0 0
        %3033 = vmatmul.mubr.bf16.gmra.mrb[0].mxu0 %v501
        %v3034 = vpop.f32.mrb[0].mxu0
        %v3035 = vadd.f32 %v2987, %v3034
        %v3036 = vpop.f32.mrb[0].mxu0
        %v3037 = vpop.f32.mrb[0].mxu0
        %v3038 = vadd.f32 %v2987, %v3037
        %v3039 = vpop.f32.mrb[0].mxu0
        %3040 = vmatprep.mubr.bf16.mxu0 0
        %3041 = vmatmul.mubr.bf16.gmra.mrb[0].mxu0 %v504
        %v3042 = vpop.f32.mrb[0].mxu0
        %v3043 = vadd.f32 %v2987, %v3042
        %v3044 = vpop.f32.mrb[0].mxu0
        %v3045 = vpop.f32.mrb[0].mxu0
        %v3046 = vadd.f32 %v2987, %v3045
        %v3047 = vpop.f32.mrb[0].mxu0
        %3048 = vmatprep.mubr.bf16.mxu0 0
        %3049 = vmatmul.mubr.bf16.gmra.mrb[0].mxu0 %v507
        %v3050 = vpop.f32.mrb[0].mxu0
        %v3051 = vadd.f32 %v2987, %v3050
        %v3052 = vpop.f32.mrb[0].mxu0
        %v3053 = vpop.f32.mrb[0].mxu0
        %v3054 = vadd.f32 %v2987, %v3053
        %v3055 = vpop.f32.mrb[0].mxu0
        %3056 = vmatprep.mubr.bf16.mxu0 0
        %3057 = vmatmul.mubr.bf16.gmra.mrb[0].mxu0 %v510
        %v3058 = vpop.f32.mrb[0].mxu0
        %v3059 = vadd.f32 %v2987, %v3058
        %v3060 = vpop.f32.mrb[0].mxu0
        %v3061 = vpop.f32.mrb[0].mxu0
        %v3062 = vadd.f32 %v2987, %v3061
        %v3063 = vpop.f32.mrb[0].mxu0
        %3064 = vmatprep.mubr.bf16.mxu0 0
        %3065 = vmatmul.mubr.bf16.gmra.mrb[0].mxu0 %v513
        %v3066 = vpop.f32.mrb[0].mxu0
        %v3067 = vadd.f32 %v2987, %v3066
        %v3068 = vpop.f32.mrb[0].mxu0
        %v3069 = vpop.f32.mrb[0].mxu0
        %v3070 = vadd.f32 %v2987, %v3069
        %v3071 = vpop.f32.mrb[0].mxu0
        %3072 = vmatprep.mubr.bf16.mxu0 0
        %3073 = vmatmul.mubr.bf16.gmra.mrb[0].mxu0 %v516
        %v3074 = vpop.f32.mrb[0].mxu0
        %v3075 = vadd.f32 %v2987, %v3074
        %v3076 = vpop.f32.mrb[0].mxu0
        %v3077 = vpop.f32.mrb[0].mxu0
        %v3078 = vadd.f32 %v2987, %v3077
        %v3079 = vpop.f32.mrb[0].mxu0
        %3080 = vmatprep.mubr.bf16.mxu0 0
        %3081 = vmatmul.mubr.bf16.gmra.mrb[0].mxu0 %v519
        %v3082 = vpop.f32.mrb[0].mxu0
        %v3083 = vadd.f32 %v2987, %v3082
        %v3084 = vpop.f32.mrb[0].mxu0
        %v3085 = vpop.f32.mrb[0].mxu0
        %v3086 = vadd.f32 %v2987, %v3085
        %v3087 = vpop.f32.mrb[0].mxu0
        %3088 = vmatprep.mubr.bf16.mxu0 0
        %3089 = vmatmul.mubr.bf16.gmra.mrb[0].mxu0 %v522
        %v3090 = vpop.f32.mrb[0].mxu0
        %v3091 = vadd.f32 %v2987, %v3090
        %v3092 = vpop.f32.mrb[0].mxu0
        %v3093 = vpop.f32.mrb[0].mxu0
        %v3094 = vadd.f32 %v2987, %v3093
        %v3095 = vpop.f32.mrb[0].mxu0
        %3096 = vmatprep.mubr.bf16.mxu0 0
        %3097 = vmatmul.mubr.bf16.gmra.mrb[0].mxu0 %v525
        %v3098 = vpop.f32.mrb[0].mxu0
        %v3099 = vadd.f32 %v2987, %v3098
        %v3100 = vpop.f32.mrb[0].mxu0
        %v3101 = vpop.f32.mrb[0].mxu0
        %v3102 = vadd.f32 %v2987, %v3101
        %v3103 = vpop.f32.mrb[0].mxu0
        %3104 = vmatprep.mubr.bf16.mxu0 0
        %3105 = vmatmul.mubr.bf16.gmra.mrb[0].mxu0 %v528
        %v3106 = vpop.f32.mrb[0].mxu0
        %v3107 = vadd.f32 %v2987, %v3106
        %v3108 = vpop.f32.mrb[0].mxu0
        %v3109 = vpop.f32.mrb[0].mxu0
        %v3110 = vadd.f32 %v2987, %v3109
        %v3111 = vpop.f32.mrb[0].mxu0
        %3112 = vmatprep.mubr.bf16.mxu0 0
        %3113 = vmatmul.mubr.bf16.gmra.mrb[0].mxu0 %v531
        %v3114 = vpop.f32.mrb[0].mxu0
        %v3115 = vadd.f32 %v2987, %v3114
        %v3116 = vpop.f32.mrb[0].mxu0
        %v3117 = vpop.f32.mrb[0].mxu0
        %v3118 = vadd.f32 %v2987, %v3117
        %v3119 = vpop.f32.mrb[0].mxu0
        %3120 = vmatprep.mubr.bf16.mxu0 0
        %3121 = vmatmul.mubr.bf16.gmra.mrb[0].mxu0 %v534
        %v3122 = vpop.f32.mrb[0].mxu0
        %v3123 = vadd.f32 %v2987, %v3122
        %v3124 = vpop.f32.mrb[0].mxu0
        %v3125 = vpop.f32.mrb[0].mxu0
        %v3126 = vadd.f32 %v2987, %v3125
        %v3127 = vpop.f32.mrb[0].mxu0
        %3128 = vmatprep.mubr.bf16.mxu0 0
        %3129 = vmatmul.mubr.bf16.gmra.mrb[0].mxu0 %v537
        %v3130 = vpop.f32.mrb[0].mxu0
        %v3131 = vadd.f32 %v2987, %v3130
        %v3132 = vpop.f32.mrb[0].mxu0
        %v3133 = vpop.f32.mrb[0].mxu0
        %v3134 = vadd.f32 %v2987, %v3133
        %v3135 = vpop.f32.mrb[0].mxu0
        %3136 = vmatprep.mubr.bf16.mxu0 0
        %3137 = vmatmul.mubr.bf16.gmra.mrb[0].mxu0 %v540
        %v3138 = vpop.f32.mrb[0].mxu0
        %v3139 = vadd.f32 %v2987, %v3138
        %v3140 = vpop.f32.mrb[0].mxu0
        %v3141 = vpop.f32.mrb[0].mxu0
        %v3142 = vadd.f32 %v2987, %v3141
        %v3143 = vpop.f32.mrb[0].mxu0
        %3144 = vmatprep.mubr.bf16.mxu0 0
        %3145 = vmatmul.mubr.bf16.gmra.mrb[0].mxu0 %v543
        %v3146 = vpop.f32.mrb[0].mxu0
        %v3147 = vadd.f32 %v2987, %v3146
        %v3148 = vpop.f32.mrb[0].mxu0
        %v3149 = vpop.f32.mrb[0].mxu0
        %v3150 = vadd.f32 %v2987, %v3149
        %v3151 = vpop.f32.mrb[0].mxu0
        %3152 = vdwg.mxu0
        %v3153 = vmax.f32 %v3027, 0.0
        %v3154 = vmax.f32 %v3030, 0.0
        %v3155 = vmax.f32 %v3035, 0.0
        %v3156 = vmax.f32 %v3038, 0.0
        %v3157 = vmax.f32 %v3043, 0.0
        %v3158 = vmax.f32 %v3046, 0.0
        %v3159 = vmax.f32 %v3051, 0.0
        %v3160 = vmax.f32 %v3054, 0.0
        %v3161 = vmax.f32 %v3059, 0.0
        %v3162 = vmax.f32 %v3062, 0.0
        %v3163 = vmax.f32 %v3067, 0.0
        %v3164 = vmax.f32 %v3070, 0.0
        %v3165 = vmax.f32 %v3075, 0.0
        %v3166 = vmax.f32 %v3078, 0.0
        %v3167 = vmax.f32 %v3083, 0.0
        %v3168 = vmax.f32 %v3086, 0.0
        %v3169 = vmax.f32 %v3091, 0.0
        %v3170 = vmax.f32 %v3094, 0.0
        %v3171 = vmax.f32 %v3099, 0.0
        %v3172 = vmax.f32 %v3102, 0.0
        %v3173 = vmax.f32 %v3107, 0.0
        %v3174 = vmax.f32 %v3110, 0.0
        %v3175 = vmax.f32 %v3115, 0.0
        %v3176 = vmax.f32 %v3118, 0.0
        %v3177 = vmax.f32 %v3123, 0.0
        %v3178 = vmax.f32 %v3126, 0.0
        %v3179 = vmax.f32 %v3131, 0.0
        %v3180 = vmax.f32 %v3134, 0.0
        %v3181 = vmax.f32 %v3139, 0.0
        %v3182 = vmax.f32 %v3142, 0.0
        %v3183 = vmax.f32 %v3147, 0.0
        %v3184 = vmax.f32 %v3150, 0.0
        %3185 = vst.msk [vmem:[#allocation3] sm:$0xff] %vm946, 0.0
        %3186 = vst.msk [vmem:[#allocation3 + $0x8] sm:$0xff] %vm946, 0.0
        %vm3187 = vcmask 60416
        %3188 = vst.msk [vmem:[#allocation3 + $0x10] sm:$0xf] %vm3187, 0.0
        %3189 = vst.msk [vmem:[#allocation3 + $0x18] sm:$0xff] %vm946, 0.0
        %3190 = vst.msk [vmem:[#allocation3 + $0x20] sm:$0xff] %vm946, 0.0
        %3191 = vst.msk [vmem:[#allocation3 + $0x28] sm:$0xf] %vm3187, 0.0
        %3192 = vst.msk [vmem:[#allocation3 + $0x30] sm:$0xff] %vm946, 0.0
        %3193 = vst.msk [vmem:[#allocation3 + $0x38] sm:$0xff] %vm946, 0.0
        %3194 = vst.msk [vmem:[#allocation3 + $0x40] sm:$0xf] %vm3187, 0.0
        %3195 = vst.msk [vmem:[#allocation3 + $0x48] sm:$0xff] %vm946, 0.0
        %3196 = vst.msk [vmem:[#allocation3 + $0x50] sm:$0xff] %vm946, 0.0
        %3197 = vst.msk [vmem:[#allocation3 + $0x58] sm:$0xf] %vm3187, 0.0
        %3198 = vst.msk [vmem:[#allocation3 + $0x60] sm:$0xff] %vm946, 0.0
        %3199 = vst.msk [vmem:[#allocation3 + $0x68] sm:$0xff] %vm946, 0.0
        %3200 = vst.msk [vmem:[#allocation3 + $0x70] sm:$0xf] %vm3187, 0.0
        %3201 = vst.msk [vmem:[#allocation3 + $0x78] sm:$0xff] %vm946, 0.0
        %3202 = vst.msk [vmem:[#allocation3 + $0x80] sm:$0xff] %vm946, 0.0
        %3203 = vst.msk [vmem:[#allocation3 + $0x88] sm:$0xf] %vm3187, 0.0
        %3204 = vst.msk [vmem:[#allocation3 + $0x90] sm:$0xff] %vm946, 0.0
        %3205 = vst.msk [vmem:[#allocation3 + $0x98] sm:$0xff] %vm946, 0.0
        %3206 = vst.msk [vmem:[#allocation3 + $0xa0] sm:$0xf] %vm3187, 0.0
        %3207 = vst.msk [vmem:[#allocation3 + $0xa8] sm:$0xff] %vm946, 0.0
        %3208 = vst.msk [vmem:[#allocation3 + $0xb0] sm:$0xff] %vm946, 0.0
        %3209 = vst.msk [vmem:[#allocation3 + $0xb8] sm:$0xf] %vm3187, 0.0
        %3210 = vst.msk [vmem:[#allocation3 + $0xc0] sm:$0xff] %vm946, 0.0
        %3211 = vst.msk [vmem:[#allocation3 + $0xc8] sm:$0xff] %vm946, 0.0
        %3212 = vst.msk [vmem:[#allocation3 + $0xd0] sm:$0xf] %vm3187, 0.0
        %3213 = vst.msk [vmem:[#allocation3 + $0xd8] sm:$0xff] %vm946, 0.0
        %3214 = vst.msk [vmem:[#allocation3 + $0xe0] sm:$0xff] %vm946, 0.0
        %3215 = vst.msk [vmem:[#allocation3 + $0xe8] sm:$0xf] %vm3187, 0.0
        %3216 = vst.msk [vmem:[#allocation3 + $0xf0] sm:$0xff] %vm946, 0.0
        %3217 = vst.msk [vmem:[#allocation3 + $0xf8] sm:$0xff] %vm946, 0.0
        %3218 = vst.msk [vmem:[#allocation3 + $0x100] sm:$0xf] %vm3187, 0.0
        %3219 = vst.msk [vmem:[#allocation3 + $0x108] sm:$0xff] %vm946, 0.0
        %3220 = vst.msk [vmem:[#allocation3 + $0x110] sm:$0xff] %vm946, 0.0
        %3221 = vst.msk [vmem:[#allocation3 + $0x118] sm:$0xf] %vm3187, 0.0
        %3222 = vst.msk [vmem:[#allocation3 + $0x120] sm:$0xff] %vm946, 0.0
        %3223 = vst.msk [vmem:[#allocation3 + $0x128] sm:$0xff] %vm946, 0.0
        %3224 = vst.msk [vmem:[#allocation3 + $0x130] sm:$0xf] %vm3187, 0.0
        %3225 = vst.msk [vmem:[#allocation3 + $0x138] sm:$0xff] %vm946, 0.0
        %3226 = vst.msk [vmem:[#allocation3 + $0x140] sm:$0xff] %vm946, 0.0
        %3227 = vst.msk [vmem:[#allocation3 + $0x148] sm:$0xf] %vm3187, 0.0
        %3228 = vst.msk [vmem:[#allocation3 + $0x150] sm:$0xff] %vm946, 0.0
        %3229 = vst.msk [vmem:[#allocation3 + $0x158] sm:$0xff] %vm946, 0.0
        %3230 = vst.msk [vmem:[#allocation3 + $0x160] sm:$0xf] %vm3187, 0.0
        %3231 = vst.msk [vmem:[#allocation3 + $0x168] sm:$0xff] %vm946, 0.0
        %3232 = vst.msk [vmem:[#allocation3 + $0x170] sm:$0xff] %vm946, 0.0
        %3233 = vst.msk [vmem:[#allocation3 + $0x178] sm:$0xf] %vm3187, 0.0
        %3234 = vst.msk [vmem:[#allocation3 + $0x180] sm:$0xff] %vm946, 0.0
        %3235 = vst.msk [vmem:[#allocation3 + $0x188] sm:$0xff] %vm946, 0.0
        %3236 = vst.msk [vmem:[#allocation3 + $0x190] sm:$0xf] %vm3187, 0.0
        %3237 = vst.msk [vmem:[#allocation3 + $0x198] sm:$0xff] %vm946, 0.0
        %3238 = vst.msk [vmem:[#allocation3 + $0x1a0] sm:$0xff] %vm946, 0.0
        %3239 = vst.msk [vmem:[#allocation3 + $0x1a8] sm:$0xf] %vm3187, 0.0
        %3240 = vst.msk [vmem:[#allocation3 + $0x1b0] sm:$0xff] %vm946, 0.0
        %3241 = vst.msk [vmem:[#allocation3 + $0x1b8] sm:$0xff] %vm946, 0.0
        %3242 = vst.msk [vmem:[#allocation3 + $0x1c0] sm:$0xf] %vm3187, 0.0
        %3243 = vst.msk [vmem:[#allocation3 + $0x1c8] sm:$0xff] %vm946, 0.0
        %3244 = vst.msk [vmem:[#allocation3 + $0x1d0] sm:$0xff] %vm946, 0.0
        %3245 = vst.msk [vmem:[#allocation3 + $0x1d8] sm:$0xf] %vm3187, 0.0
        %s3246 = scalar_lea.vmem [#allocation3], 48
        %3247 = vst.msk [vmem:[%s3246 + $0x2] sm:$0xff] %vm946, %v3153
        %3248 = vst.msk [vmem:[%s3246 + $0xa] sm:$0xff] %vm946, %v3154
        %3249 = vst.msk [vmem:[%s3246 + $0x1a] sm:$0xff] %vm946, %v3155
        %3250 = vst.msk [vmem:[%s3246 + $0x22] sm:$0xff] %vm946, %v3156
        %3251 = vst.msk [vmem:[%s3246 + $0x32] sm:$0xff] %vm946, %v3157
        %3252 = vst.msk [vmem:[%s3246 + $0x3a] sm:$0xff] %vm946, %v3158
        %3253 = vst.msk [vmem:[%s3246 + $0x4a] sm:$0xff] %vm946, %v3159
        %3254 = vst.msk [vmem:[%s3246 + $0x52] sm:$0xff] %vm946, %v3160
        %3255 = vst.msk [vmem:[%s3246 + $0x62] sm:$0xff] %vm946, %v3161
        %3256 = vst.msk [vmem:[%s3246 + $0x6a] sm:$0xff] %vm946, %v3162
        %3257 = vst.msk [vmem:[%s3246 + $0x7a] sm:$0xff] %vm946, %v3163
        %3258 = vst.msk [vmem:[%s3246 + $0x82] sm:$0xff] %vm946, %v3164
        %3259 = vst.msk [vmem:[%s3246 + $0x92] sm:$0xff] %vm946, %v3165
        %3260 = vst.msk [vmem:[%s3246 + $0x9a] sm:$0xff] %vm946, %v3166
        %3261 = vst.msk [vmem:[%s3246 + $0xaa] sm:$0xff] %vm946, %v3167
        %3262 = vst.msk [vmem:[%s3246 + $0xb2] sm:$0xff] %vm946, %v3168
        %3263 = vst.msk [vmem:[%s3246 + $0xc2] sm:$0xff] %vm946, %v3169
        %3264 = vst.msk [vmem:[%s3246 + $0xca] sm:$0xff] %vm946, %v3170
        %3265 = vst.msk [vmem:[%s3246 + $0xda] sm:$0xff] %vm946, %v3171
        %3266 = vst.msk [vmem:[%s3246 + $0xe2] sm:$0xff] %vm946, %v3172
        %3267 = vst.msk [vmem:[%s3246 + $0xf2] sm:$0xff] %vm946, %v3173
        %3268 = vst.msk [vmem:[%s3246 + $0xfa] sm:$0xff] %vm946, %v3174
        %3269 = vst.msk [vmem:[%s3246 + $0x10a] sm:$0xff] %vm946, %v3175
        %3270 = vst.msk [vmem:[%s3246 + $0x112] sm:$0xff] %vm946, %v3176
        %3271 = vst.msk [vmem:[%s3246 + $0x122] sm:$0xff] %vm946, %v3177
        %3272 = vst.msk [vmem:[%s3246 + $0x12a] sm:$0xff] %vm946, %v3178
        %3273 = vst.msk [vmem:[%s3246 + $0x13a] sm:$0xff] %vm946, %v3179
        %3274 = vst.msk [vmem:[%s3246 + $0x142] sm:$0xff] %vm946, %v3180
        %3275 = vst.msk [vmem:[%s3246 + $0x152] sm:$0xff] %vm946, %v3181
        %3276 = vst.msk [vmem:[%s3246 + $0x15a] sm:$0xff] %vm946, %v3182
        %3277 = vst.msk [vmem:[%s3246 + $0x16a] sm:$0xff] %vm946, %v3183
        %3278 = vst.msk [vmem:[%s3246 + $0x172] sm:$0xff] %vm946, %v3184
        %v3279 = vld [vmem:[#allocation3] sm:$0xff]
        %v3280 = vld [vmem:[#allocation3 + $0x8] sm:$0xff]
        %v3281 = vld [vmem:[#allocation3 + $0x18] sm:$0xff]
        %v3282 = vld [vmem:[#allocation3 + $0x20] sm:$0xff]
        %v3283 = vld [vmem:[#allocation3 + $0x30] sm:$0xff]
        %v3284 = vld [vmem:[#allocation3 + $0x38] sm:$0xff]
        %v3285 = vld [vmem:[#allocation3 + $0x48] sm:$0xff]
        %v3286 = vld [vmem:[#allocation3 + $0x50] sm:$0xff]
        %v3287 = vld [vmem:[#allocation3 + $0x60] sm:$0xff]
        %v3288 = vld [vmem:[#allocation3 + $0x68] sm:$0xff]
        %v3289 = vld [vmem:[#allocation3 + $0x78] sm:$0xff]
        %v3290 = vld [vmem:[#allocation3 + $0x80] sm:$0xff]
        %v3291 = vld [vmem:[#allocation3 + $0x90] sm:$0xff]
        %v3292 = vld [vmem:[#allocation3 + $0x98] sm:$0xff]
        %v3293 = vld [vmem:[#allocation3 + $0xa8] sm:$0xff]
        %v3294 = vld [vmem:[#allocation3 + $0xb0] sm:$0xff]
        %v3295 = vld [vmem:[#allocation3 + $0xc0] sm:$0xff]
        %v3296 = vld [vmem:[#allocation3 + $0xc8] sm:$0xff]
        %v3297 = vld [vmem:[#allocation3 + $0xd8] sm:$0xff]
        %v3298 = vld [vmem:[#allocation3 + $0xe0] sm:$0xff]
        %v3299 = vld [vmem:[#allocation3 + $0xf0] sm:$0xff]
        %v3300 = vld [vmem:[#allocation3 + $0xf8] sm:$0xff]
        %v3301 = vld [vmem:[#allocation3 + $0x108] sm:$0xff]
        %v3302 = vld [vmem:[#allocation3 + $0x110] sm:$0xff]
        %v3303 = vld [vmem:[#allocation3 + $0x120] sm:$0xff]
        %v3304 = vld [vmem:[#allocation3 + $0x128] sm:$0xff]
        %v3305 = vld [vmem:[#allocation3 + $0x138] sm:$0xff]
        %v3306 = vld [vmem:[#allocation3 + $0x140] sm:$0xff]
        %v3307 = vld [vmem:[#allocation3 + $0x150] sm:$0xff]
        %v3308 = vld [vmem:[#allocation3 + $0x158] sm:$0xff]
        %v3309 = vld [vmem:[#allocation3 + $0x168] sm:$0xff]
        %v3310 = vld [vmem:[#allocation3 + $0x170] sm:$0xff]
        %3311 = vst.msk [vmem:[#allocation6] sm:$0xff] %vm946, %v3279
        %3312 = vst.msk [vmem:[#allocation6 + $0x10] sm:$0xff] %vm946, %v3280
        %3313 = vst.msk [vmem:[#allocation6 + $0x20] sm:$0xff] %vm946, %v3281
        %3314 = vst.msk [vmem:[#allocation6 + $0x30] sm:$0xff] %vm946, %v3282
        %3315 = vst.msk [vmem:[#allocation6 + $0x40] sm:$0xff] %vm946, %v3283
        %3316 = vst.msk [vmem:[#allocation6 + $0x50] sm:$0xff] %vm946, %v3284
        %3317 = vst.msk [vmem:[#allocation6 + $0x60] sm:$0xff] %vm946, %v3285
        %3318 = vst.msk [vmem:[#allocation6 + $0x70] sm:$0xff] %vm946, %v3286
        %3319 = vst.msk [vmem:[#allocation6 + $0x80] sm:$0xff] %vm946, %v3287
        %3320 = vst.msk [vmem:[#allocation6 + $0x90] sm:$0xff] %vm946, %v3288
        %3321 = vst.msk [vmem:[#allocation6 + $0xa0] sm:$0xff] %vm946, %v3289
        %3322 = vst.msk [vmem:[#allocation6 + $0xb0] sm:$0xff] %vm946, %v3290
        %3323 = vst.msk [vmem:[#allocation6 + $0xc0] sm:$0xff] %vm946, %v3291
        %3324 = vst.msk [vmem:[#allocation6 + $0xd0] sm:$0xff] %vm946, %v3292
        %3325 = vst.msk [vmem:[#allocation6 + $0xe0] sm:$0xff] %vm946, %v3293
        %3326 = vst.msk [vmem:[#allocation6 + $0xf0] sm:$0xff] %vm946, %v3294
        %3327 = vst.msk [vmem:[#allocation6 + $0x100] sm:$0xff] %vm946, %v3295
        %3328 = vst.msk [vmem:[#allocation6 + $0x110] sm:$0xff] %vm946, %v3296
        %3329 = vst.msk [vmem:[#allocation6 + $0x120] sm:$0xff] %vm946, %v3297
        %3330 = vst.msk [vmem:[#allocation6 + $0x130] sm:$0xff] %vm946, %v3298
        %3331 = vst.msk [vmem:[#allocation6 + $0x140] sm:$0xff] %vm946, %v3299
        %3332 = vst.msk [vmem:[#allocation6 + $0x150] sm:$0xff] %vm946, %v3300
        %3333 = vst.msk [vmem:[#allocation6 + $0x160] sm:$0xff] %vm946, %v3301
        %3334 = vst.msk [vmem:[#allocation6 + $0x170] sm:$0xff] %vm946, %v3302
        %3335 = vst.msk [vmem:[#allocation6 + $0x180] sm:$0xff] %vm946, %v3303
        %3336 = vst.msk [vmem:[#allocation6 + $0x190] sm:$0xff] %vm946, %v3304
        %3337 = vst.msk [vmem:[#allocation6 + $0x1a0] sm:$0xff] %vm946, %v3305
        %3338 = vst.msk [vmem:[#allocation6 + $0x1b0] sm:$0xff] %vm946, %v3306
        %3339 = vst.msk [vmem:[#allocation6 + $0x1c0] sm:$0xff] %vm946, %v3307
        %3340 = vst.msk [vmem:[#allocation6 + $0x1d0] sm:$0xff] %vm946, %v3308
        %3341 = vst.msk [vmem:[#allocation6 + $0x1e0] sm:$0xff] %vm946, %v3309
        %3342 = vst.msk [vmem:[#allocation6 + $0x1f0] sm:$0xff] %vm946, %v3310
        %v3343 = vld [vmem:[#allocation3 + $0x1] sm:$0xff]
        %v3344 = vld [vmem:[#allocation3 + $0x9] sm:$0xff]
        %v3345 = vld [vmem:[#allocation3 + $0x19] sm:$0xff]
        %v3346 = vld [vmem:[#allocation3 + $0x21] sm:$0xff]
        %v3347 = vld [vmem:[#allocation3 + $0x31] sm:$0xff]
        %v3348 = vld [vmem:[#allocation3 + $0x39] sm:$0xff]
        %v3349 = vld [vmem:[#allocation3 + $0x49] sm:$0xff]
        %v3350 = vld [vmem:[#allocation3 + $0x51] sm:$0xff]
        %v3351 = vld [vmem:[#allocation3 + $0x61] sm:$0xff]
        %v3352 = vld [vmem:[#allocation3 + $0x69] sm:$0xff]
        %v3353 = vld [vmem:[#allocation3 + $0x79] sm:$0xff]
        %v3354 = vld [vmem:[#allocation3 + $0x81] sm:$0xff]
        %v3355 = vld [vmem:[#allocation3 + $0x91] sm:$0xff]
        %v3356 = vld [vmem:[#allocation3 + $0x99] sm:$0xff]
        %v3357 = vld [vmem:[#allocation3 + $0xa9] sm:$0xff]
        %v3358 = vld [vmem:[#allocation3 + $0xb1] sm:$0xff]
        %v3359 = vld [vmem:[#allocation3 + $0xc1] sm:$0xff]
        %v3360 = vld [vmem:[#allocation3 + $0xc9] sm:$0xff]
        %v3361 = vld [vmem:[#allocation3 + $0xd9] sm:$0xff]
        %v3362 = vld [vmem:[#allocation3 + $0xe1] sm:$0xff]
        %v3363 = vld [vmem:[#allocation3 + $0xf1] sm:$0xff]
        %v3364 = vld [vmem:[#allocation3 + $0xf9] sm:$0xff]
        %v3365 = vld [vmem:[#allocation3 + $0x109] sm:$0xff]
        %v3366 = vld [vmem:[#allocation3 + $0x111] sm:$0xff]
        %v3367 = vld [vmem:[#allocation3 + $0x121] sm:$0xff]
        %v3368 = vld [vmem:[#allocation3 + $0x129] sm:$0xff]
        %v3369 = vld [vmem:[#allocation3 + $0x139] sm:$0xff]
        %v3370 = vld [vmem:[#allocation3 + $0x141] sm:$0xff]
        %v3371 = vld [vmem:[#allocation3 + $0x151] sm:$0xff]
        %v3372 = vld [vmem:[#allocation3 + $0x159] sm:$0xff]
        %v3373 = vld [vmem:[#allocation3 + $0x169] sm:$0xff]
        %v3374 = vld [vmem:[#allocation3 + $0x171] sm:$0xff]
        %3407 = vrot.lane.b32.xlu0 %v3343, 8
        %v3408 = vpop.permute.xlu0 %3407
        %3409 = vrot.lane.b32.xlu0 %v3344, 8
        %v3410 = vpop.permute.xlu0 %3409
        %3411 = vrot.lane.b32.xlu0 %v3345, 8
        %v3412 = vpop.permute.xlu0 %3411
        %3413 = vrot.lane.b32.xlu0 %v3346, 8
        %v3414 = vpop.permute.xlu0 %3413
        %3415 = vrot.lane.b32.xlu0 %v3347, 8
        %v3416 = vpop.permute.xlu0 %3415
        %3417 = vrot.lane.b32.xlu0 %v3348, 8
        %v3418 = vpop.permute.xlu0 %3417
        %3419 = vrot.lane.b32.xlu0 %v3349, 8
        %v3420 = vpop.permute.xlu0 %3419
        %3421 = vrot.lane.b32.xlu0 %v3350, 8
        %v3422 = vpop.permute.xlu0 %3421
        %3423 = vrot.lane.b32.xlu0 %v3351, 8
        %v3424 = vpop.permute.xlu0 %3423
        %3425 = vrot.lane.b32.xlu0 %v3352, 8
        %v3426 = vpop.permute.xlu0 %3425
        %3427 = vrot.lane.b32.xlu0 %v3353, 8
        %v3428 = vpop.permute.xlu0 %3427
        %3429 = vrot.lane.b32.xlu0 %v3354, 8
        %v3430 = vpop.permute.xlu0 %3429
        %3431 = vrot.lane.b32.xlu0 %v3355, 8
        %v3432 = vpop.permute.xlu0 %3431
        %3433 = vrot.lane.b32.xlu0 %v3356, 8
        %v3434 = vpop.permute.xlu0 %3433
        %3435 = vrot.lane.b32.xlu0 %v3357, 8
        %v3436 = vpop.permute.xlu0 %3435
        %3437 = vrot.lane.b32.xlu0 %v3358, 8
        %v3438 = vpop.permute.xlu0 %3437
        %3439 = vrot.lane.b32.xlu0 %v3359, 8
        %v3440 = vpop.permute.xlu0 %3439
        %3441 = vrot.lane.b32.xlu0 %v3360, 8
        %v3442 = vpop.permute.xlu0 %3441
        %3443 = vrot.lane.b32.xlu0 %v3361, 8
        %v3444 = vpop.permute.xlu0 %3443
        %3445 = vrot.lane.b32.xlu0 %v3362, 8
        %v3446 = vpop.permute.xlu0 %3445
        %3447 = vrot.lane.b32.xlu0 %v3363, 8
        %v3448 = vpop.permute.xlu0 %3447
        %3449 = vrot.lane.b32.xlu0 %v3364, 8
        %v3450 = vpop.permute.xlu0 %3449
        %3451 = vrot.lane.b32.xlu0 %v3365, 8
        %v3452 = vpop.permute.xlu0 %3451
        %3453 = vrot.lane.b32.xlu0 %v3366, 8
        %v3454 = vpop.permute.xlu0 %3453
        %3455 = vrot.lane.b32.xlu0 %v3367, 8
        %v3456 = vpop.permute.xlu0 %3455
        %3457 = vrot.lane.b32.xlu0 %v3368, 8
        %v3458 = vpop.permute.xlu0 %3457
        %3459 = vrot.lane.b32.xlu0 %v3369, 8
        %v3460 = vpop.permute.xlu0 %3459
        %3461 = vrot.lane.b32.xlu0 %v3370, 8
        %v3462 = vpop.permute.xlu0 %3461
        %3463 = vrot.lane.b32.xlu0 %v3371, 8
        %v3464 = vpop.permute.xlu0 %3463
        %3465 = vrot.lane.b32.xlu0 %v3372, 8
        %v3466 = vpop.permute.xlu0 %3465
        %3467 = vrot.lane.b32.xlu0 %v3373, 8
        %v3468 = vpop.permute.xlu0 %3467
        %3469 = vrot.lane.b32.xlu0 %v3374, 8
        %v3470 = vpop.permute.xlu0 %3469
        %3503 = vst.msk [vmem:[#allocation6] sm:$0xff] %vm1259, %v3408
        %3504 = vst.msk [vmem:[#allocation6 + $0x10] sm:$0xff] %vm1259, %v3410
        %3505 = vst.msk [vmem:[#allocation6 + $0x20] sm:$0xff] %vm1259, %v3412
        %3506 = vst.msk [vmem:[#allocation6 + $0x30] sm:$0xff] %vm1259, %v3414
        %3507 = vst.msk [vmem:[#allocation6 + $0x40] sm:$0xff] %vm1259, %v3416
        %3508 = vst.msk [vmem:[#allocation6 + $0x50] sm:$0xff] %vm1259, %v3418
        %3509 = vst.msk [vmem:[#allocation6 + $0x60] sm:$0xff] %vm1259, %v3420
        %3510 = vst.msk [vmem:[#allocation6 + $0x70] sm:$0xff] %vm1259, %v3422
        %3511 = vst.msk [vmem:[#allocation6 + $0x80] sm:$0xff] %vm1259, %v3424
        %3512 = vst.msk [vmem:[#allocation6 + $0x90] sm:$0xff] %vm1259, %v3426
        %3513 = vst.msk [vmem:[#allocation6 + $0xa0] sm:$0xff] %vm1259, %v3428
        %3514 = vst.msk [vmem:[#allocation6 + $0xb0] sm:$0xff] %vm1259, %v3430
        %3515 = vst.msk [vmem:[#allocation6 + $0xc0] sm:$0xff] %vm1259, %v3432
        %3516 = vst.msk [vmem:[#allocation6 + $0xd0] sm:$0xff] %vm1259, %v3434
        %3517 = vst.msk [vmem:[#allocation6 + $0xe0] sm:$0xff] %vm1259, %v3436
        %3518 = vst.msk [vmem:[#allocation6 + $0xf0] sm:$0xff] %vm1259, %v3438
        %3519 = vst.msk [vmem:[#allocation6 + $0x100] sm:$0xff] %vm1259, %v3440
        %3520 = vst.msk [vmem:[#allocation6 + $0x110] sm:$0xff] %vm1259, %v3442
        %3521 = vst.msk [vmem:[#allocation6 + $0x120] sm:$0xff] %vm1259, %v3444
        %3522 = vst.msk [vmem:[#allocation6 + $0x130] sm:$0xff] %vm1259, %v3446
        %3523 = vst.msk [vmem:[#allocation6 + $0x140] sm:$0xff] %vm1259, %v3448
        %3524 = vst.msk [vmem:[#allocation6 + $0x150] sm:$0xff] %vm1259, %v3450
        %3525 = vst.msk [vmem:[#allocation6 + $0x160] sm:$0xff] %vm1259, %v3452
        %3526 = vst.msk [vmem:[#allocation6 + $0x170] sm:$0xff] %vm1259, %v3454
        %3527 = vst.msk [vmem:[#allocation6 + $0x180] sm:$0xff] %vm1259, %v3456
        %3528 = vst.msk [vmem:[#allocation6 + $0x190] sm:$0xff] %vm1259, %v3458
        %3529 = vst.msk [vmem:[#allocation6 + $0x1a0] sm:$0xff] %vm1259, %v3460
        %3530 = vst.msk [vmem:[#allocation6 + $0x1b0] sm:$0xff] %vm1259, %v3462
        %3531 = vst.msk [vmem:[#allocation6 + $0x1c0] sm:$0xff] %vm1259, %v3464
        %3532 = vst.msk [vmem:[#allocation6 + $0x1d0] sm:$0xff] %vm1259, %v3466
        %3533 = vst.msk [vmem:[#allocation6 + $0x1e0] sm:$0xff] %vm1259, %v3468
        %3534 = vst.msk [vmem:[#allocation6 + $0x1f0] sm:$0xff] %vm1259, %v3470
        %v3535 = vld [vmem:[#allocation3 + $0x2] sm:$0xff]
        %v3536 = vld [vmem:[#allocation3 + $0xa] sm:$0xff]
        %v3537 = vld [vmem:[#allocation3 + $0x1a] sm:$0xff]
        %v3538 = vld [vmem:[#allocation3 + $0x22] sm:$0xff]
        %v3539 = vld [vmem:[#allocation3 + $0x32] sm:$0xff]
        %v3540 = vld [vmem:[#allocation3 + $0x3a] sm:$0xff]
        %v3541 = vld [vmem:[#allocation3 + $0x4a] sm:$0xff]
        %v3542 = vld [vmem:[#allocation3 + $0x52] sm:$0xff]
        %v3543 = vld [vmem:[#allocation3 + $0x62] sm:$0xff]
        %v3544 = vld [vmem:[#allocation3 + $0x6a] sm:$0xff]
        %v3545 = vld [vmem:[#allocation3 + $0x7a] sm:$0xff]
        %v3546 = vld [vmem:[#allocation3 + $0x82] sm:$0xff]
        %v3547 = vld [vmem:[#allocation3 + $0x92] sm:$0xff]
        %v3548 = vld [vmem:[#allocation3 + $0x9a] sm:$0xff]
        %v3549 = vld [vmem:[#allocation3 + $0xaa] sm:$0xff]
        %v3550 = vld [vmem:[#allocation3 + $0xb2] sm:$0xff]
        %v3551 = vld [vmem:[#allocation3 + $0xc2] sm:$0xff]
        %v3552 = vld [vmem:[#allocation3 + $0xca] sm:$0xff]
        %v3553 = vld [vmem:[#allocation3 + $0xda] sm:$0xff]
        %v3554 = vld [vmem:[#allocation3 + $0xe2] sm:$0xff]
        %v3555 = vld [vmem:[#allocation3 + $0xf2] sm:$0xff]
        %v3556 = vld [vmem:[#allocation3 + $0xfa] sm:$0xff]
        %v3557 = vld [vmem:[#allocation3 + $0x10a] sm:$0xff]
        %v3558 = vld [vmem:[#allocation3 + $0x112] sm:$0xff]
        %v3559 = vld [vmem:[#allocation3 + $0x122] sm:$0xff]
        %v3560 = vld [vmem:[#allocation3 + $0x12a] sm:$0xff]
        %v3561 = vld [vmem:[#allocation3 + $0x13a] sm:$0xff]
        %v3562 = vld [vmem:[#allocation3 + $0x142] sm:$0xff]
        %v3563 = vld [vmem:[#allocation3 + $0x152] sm:$0xff]
        %v3564 = vld [vmem:[#allocation3 + $0x15a] sm:$0xff]
        %v3565 = vld [vmem:[#allocation3 + $0x16a] sm:$0xff]
        %v3566 = vld [vmem:[#allocation3 + $0x172] sm:$0xff]
        %3599 = vrot.lane.b32.xlu0 %v3535, 16
        %v3600 = vpop.permute.xlu0 %3599
        %3601 = vrot.lane.b32.xlu0 %v3536, 16
        %v3602 = vpop.permute.xlu0 %3601
        %3603 = vrot.lane.b32.xlu0 %v3537, 16
        %v3604 = vpop.permute.xlu0 %3603
        %3605 = vrot.lane.b32.xlu0 %v3538, 16
        %v3606 = vpop.permute.xlu0 %3605
        %3607 = vrot.lane.b32.xlu0 %v3539, 16
        %v3608 = vpop.permute.xlu0 %3607
        %3609 = vrot.lane.b32.xlu0 %v3540, 16
        %v3610 = vpop.permute.xlu0 %3609
        %3611 = vrot.lane.b32.xlu0 %v3541, 16
        %v3612 = vpop.permute.xlu0 %3611
        %3613 = vrot.lane.b32.xlu0 %v3542, 16
        %v3614 = vpop.permute.xlu0 %3613
        %3615 = vrot.lane.b32.xlu0 %v3543, 16
        %v3616 = vpop.permute.xlu0 %3615
        %3617 = vrot.lane.b32.xlu0 %v3544, 16
        %v3618 = vpop.permute.xlu0 %3617
        %3619 = vrot.lane.b32.xlu0 %v3545, 16
        %v3620 = vpop.permute.xlu0 %3619
        %3621 = vrot.lane.b32.xlu0 %v3546, 16
        %v3622 = vpop.permute.xlu0 %3621
        %3623 = vrot.lane.b32.xlu0 %v3547, 16
        %v3624 = vpop.permute.xlu0 %3623
        %3625 = vrot.lane.b32.xlu0 %v3548, 16
        %v3626 = vpop.permute.xlu0 %3625
        %3627 = vrot.lane.b32.xlu0 %v3549, 16
        %v3628 = vpop.permute.xlu0 %3627
        %3629 = vrot.lane.b32.xlu0 %v3550, 16
        %v3630 = vpop.permute.xlu0 %3629
        %3631 = vrot.lane.b32.xlu0 %v3551, 16
        %v3632 = vpop.permute.xlu0 %3631
        %3633 = vrot.lane.b32.xlu0 %v3552, 16
        %v3634 = vpop.permute.xlu0 %3633
        %3635 = vrot.lane.b32.xlu0 %v3553, 16
        %v3636 = vpop.permute.xlu0 %3635
        %3637 = vrot.lane.b32.xlu0 %v3554, 16
        %v3638 = vpop.permute.xlu0 %3637
        %3639 = vrot.lane.b32.xlu0 %v3555, 16
        %v3640 = vpop.permute.xlu0 %3639
        %3641 = vrot.lane.b32.xlu0 %v3556, 16
        %v3642 = vpop.permute.xlu0 %3641
        %3643 = vrot.lane.b32.xlu0 %v3557, 16
        %v3644 = vpop.permute.xlu0 %3643
        %3645 = vrot.lane.b32.xlu0 %v3558, 16
        %v3646 = vpop.permute.xlu0 %3645
        %3647 = vrot.lane.b32.xlu0 %v3559, 16
        %v3648 = vpop.permute.xlu0 %3647
        %3649 = vrot.lane.b32.xlu0 %v3560, 16
        %v3650 = vpop.permute.xlu0 %3649
        %3651 = vrot.lane.b32.xlu0 %v3561, 16
        %v3652 = vpop.permute.xlu0 %3651
        %3653 = vrot.lane.b32.xlu0 %v3562, 16
        %v3654 = vpop.permute.xlu0 %3653
        %3655 = vrot.lane.b32.xlu0 %v3563, 16
        %v3656 = vpop.permute.xlu0 %3655
        %3657 = vrot.lane.b32.xlu0 %v3564, 16
        %v3658 = vpop.permute.xlu0 %3657
        %3659 = vrot.lane.b32.xlu0 %v3565, 16
        %v3660 = vpop.permute.xlu0 %3659
        %3661 = vrot.lane.b32.xlu0 %v3566, 16
        %v3662 = vpop.permute.xlu0 %3661
        %3695 = vst.msk [vmem:[#allocation6] sm:$0xff] %vm1452, %v3600
        %3696 = vst.msk [vmem:[#allocation6 + $0x10] sm:$0xff] %vm1452, %v3602
        %3697 = vst.msk [vmem:[#allocation6 + $0x20] sm:$0xff] %vm1452, %v3604
        %3698 = vst.msk [vmem:[#allocation6 + $0x30] sm:$0xff] %vm1452, %v3606
        %3699 = vst.msk [vmem:[#allocation6 + $0x40] sm:$0xff] %vm1452, %v3608
        %3700 = vst.msk [vmem:[#allocation6 + $0x50] sm:$0xff] %vm1452, %v3610
        %3701 = vst.msk [vmem:[#allocation6 + $0x60] sm:$0xff] %vm1452, %v3612
        %3702 = vst.msk [vmem:[#allocation6 + $0x70] sm:$0xff] %vm1452, %v3614
        %3703 = vst.msk [vmem:[#allocation6 + $0x80] sm:$0xff] %vm1452, %v3616
        %3704 = vst.msk [vmem:[#allocation6 + $0x90] sm:$0xff] %vm1452, %v3618
        %3705 = vst.msk [vmem:[#allocation6 + $0xa0] sm:$0xff] %vm1452, %v3620
        %3706 = vst.msk [vmem:[#allocation6 + $0xb0] sm:$0xff] %vm1452, %v3622
        %3707 = vst.msk [vmem:[#allocation6 + $0xc0] sm:$0xff] %vm1452, %v3624
        %3708 = vst.msk [vmem:[#allocation6 + $0xd0] sm:$0xff] %vm1452, %v3626
        %3709 = vst.msk [vmem:[#allocation6 + $0xe0] sm:$0xff] %vm1452, %v3628
        %3710 = vst.msk [vmem:[#allocation6 + $0xf0] sm:$0xff] %vm1452, %v3630
        %3711 = vst.msk [vmem:[#allocation6 + $0x100] sm:$0xff] %vm1452, %v3632
        %3712 = vst.msk [vmem:[#allocation6 + $0x110] sm:$0xff] %vm1452, %v3634
        %3713 = vst.msk [vmem:[#allocation6 + $0x120] sm:$0xff] %vm1452, %v3636
        %3714 = vst.msk [vmem:[#allocation6 + $0x130] sm:$0xff] %vm1452, %v3638
        %3715 = vst.msk [vmem:[#allocation6 + $0x140] sm:$0xff] %vm1452, %v3640
        %3716 = vst.msk [vmem:[#allocation6 + $0x150] sm:$0xff] %vm1452, %v3642
        %3717 = vst.msk [vmem:[#allocation6 + $0x160] sm:$0xff] %vm1452, %v3644
        %3718 = vst.msk [vmem:[#allocation6 + $0x170] sm:$0xff] %vm1452, %v3646
        %3719 = vst.msk [vmem:[#allocation6 + $0x180] sm:$0xff] %vm1452, %v3648
        %3720 = vst.msk [vmem:[#allocation6 + $0x190] sm:$0xff] %vm1452, %v3650
        %3721 = vst.msk [vmem:[#allocation6 + $0x1a0] sm:$0xff] %vm1452, %v3652
        %3722 = vst.msk [vmem:[#allocation6 + $0x1b0] sm:$0xff] %vm1452, %v3654
        %3723 = vst.msk [vmem:[#allocation6 + $0x1c0] sm:$0xff] %vm1452, %v3656
        %3724 = vst.msk [vmem:[#allocation6 + $0x1d0] sm:$0xff] %vm1452, %v3658
        %3725 = vst.msk [vmem:[#allocation6 + $0x1e0] sm:$0xff] %vm1452, %v3660
        %3726 = vst.msk [vmem:[#allocation6 + $0x1f0] sm:$0xff] %vm1452, %v3662
        %v3727 = vld [vmem:[#allocation3 + $0x3] sm:$0xff]
        %v3728 = vld [vmem:[#allocation3 + $0xb] sm:$0xff]
        %v3729 = vld [vmem:[#allocation3 + $0x1b] sm:$0xff]
        %v3730 = vld [vmem:[#allocation3 + $0x23] sm:$0xff]
        %v3731 = vld [vmem:[#allocation3 + $0x33] sm:$0xff]
        %v3732 = vld [vmem:[#allocation3 + $0x3b] sm:$0xff]
        %v3733 = vld [vmem:[#allocation3 + $0x4b] sm:$0xff]
        %v3734 = vld [vmem:[#allocation3 + $0x53] sm:$0xff]
        %v3735 = vld [vmem:[#allocation3 + $0x63] sm:$0xff]
        %v3736 = vld [vmem:[#allocation3 + $0x6b] sm:$0xff]
        %v3737 = vld [vmem:[#allocation3 + $0x7b] sm:$0xff]
        %v3738 = vld [vmem:[#allocation3 + $0x83] sm:$0xff]
        %v3739 = vld [vmem:[#allocation3 + $0x93] sm:$0xff]
        %v3740 = vld [vmem:[#allocation3 + $0x9b] sm:$0xff]
        %v3741 = vld [vmem:[#allocation3 + $0xab] sm:$0xff]
        %v3742 = vld [vmem:[#allocation3 + $0xb3] sm:$0xff]
        %v3743 = vld [vmem:[#allocation3 + $0xc3] sm:$0xff]
        %v3744 = vld [vmem:[#allocation3 + $0xcb] sm:$0xff]
        %v3745 = vld [vmem:[#allocation3 + $0xdb] sm:$0xff]
        %v3746 = vld [vmem:[#allocation3 + $0xe3] sm:$0xff]
        %v3747 = vld [vmem:[#allocation3 + $0xf3] sm:$0xff]
        %v3748 = vld [vmem:[#allocation3 + $0xfb] sm:$0xff]
        %v3749 = vld [vmem:[#allocation3 + $0x10b] sm:$0xff]
        %v3750 = vld [vmem:[#allocation3 + $0x113] sm:$0xff]
        %v3751 = vld [vmem:[#allocation3 + $0x123] sm:$0xff]
        %v3752 = vld [vmem:[#allocation3 + $0x12b] sm:$0xff]
        %v3753 = vld [vmem:[#allocation3 + $0x13b] sm:$0xff]
        %v3754 = vld [vmem:[#allocation3 + $0x143] sm:$0xff]
        %v3755 = vld [vmem:[#allocation3 + $0x153] sm:$0xff]
        %v3756 = vld [vmem:[#allocation3 + $0x15b] sm:$0xff]
        %v3757 = vld [vmem:[#allocation3 + $0x16b] sm:$0xff]
        %v3758 = vld [vmem:[#allocation3 + $0x173] sm:$0xff]
        %3791 = vrot.lane.b32.xlu0 %v3727, 24
        %v3792 = vpop.permute.xlu0 %3791
        %3793 = vrot.lane.b32.xlu0 %v3728, 24
        %v3794 = vpop.permute.xlu0 %3793
        %3795 = vrot.lane.b32.xlu0 %v3729, 24
        %v3796 = vpop.permute.xlu0 %3795
        %3797 = vrot.lane.b32.xlu0 %v3730, 24
        %v3798 = vpop.permute.xlu0 %3797
        %3799 = vrot.lane.b32.xlu0 %v3731, 24
        %v3800 = vpop.permute.xlu0 %3799
        %3801 = vrot.lane.b32.xlu0 %v3732, 24
        %v3802 = vpop.permute.xlu0 %3801
        %3803 = vrot.lane.b32.xlu0 %v3733, 24
        %v3804 = vpop.permute.xlu0 %3803
        %3805 = vrot.lane.b32.xlu0 %v3734, 24
        %v3806 = vpop.permute.xlu0 %3805
        %3807 = vrot.lane.b32.xlu0 %v3735, 24
        %v3808 = vpop.permute.xlu0 %3807
        %3809 = vrot.lane.b32.xlu0 %v3736, 24
        %v3810 = vpop.permute.xlu0 %3809
        %3811 = vrot.lane.b32.xlu0 %v3737, 24
        %v3812 = vpop.permute.xlu0 %3811
        %3813 = vrot.lane.b32.xlu0 %v3738, 24
        %v3814 = vpop.permute.xlu0 %3813
        %3815 = vrot.lane.b32.xlu0 %v3739, 24
        %v3816 = vpop.permute.xlu0 %3815
        %3817 = vrot.lane.b32.xlu0 %v3740, 24
        %v3818 = vpop.permute.xlu0 %3817
        %3819 = vrot.lane.b32.xlu0 %v3741, 24
        %v3820 = vpop.permute.xlu0 %3819
        %3821 = vrot.lane.b32.xlu0 %v3742, 24
        %v3822 = vpop.permute.xlu0 %3821
        %3823 = vrot.lane.b32.xlu0 %v3743, 24
        %v3824 = vpop.permute.xlu0 %3823
        %3825 = vrot.lane.b32.xlu0 %v3744, 24
        %v3826 = vpop.permute.xlu0 %3825
        %3827 = vrot.lane.b32.xlu0 %v3745, 24
        %v3828 = vpop.permute.xlu0 %3827
        %3829 = vrot.lane.b32.xlu0 %v3746, 24
        %v3830 = vpop.permute.xlu0 %3829
        %3831 = vrot.lane.b32.xlu0 %v3747, 24
        %v3832 = vpop.permute.xlu0 %3831
        %3833 = vrot.lane.b32.xlu0 %v3748, 24
        %v3834 = vpop.permute.xlu0 %3833
        %3835 = vrot.lane.b32.xlu0 %v3749, 24
        %v3836 = vpop.permute.xlu0 %3835
        %3837 = vrot.lane.b32.xlu0 %v3750, 24
        %v3838 = vpop.permute.xlu0 %3837
        %3839 = vrot.lane.b32.xlu0 %v3751, 24
        %v3840 = vpop.permute.xlu0 %3839
        %3841 = vrot.lane.b32.xlu0 %v3752, 24
        %v3842 = vpop.permute.xlu0 %3841
        %3843 = vrot.lane.b32.xlu0 %v3753, 24
        %v3844 = vpop.permute.xlu0 %3843
        %3845 = vrot.lane.b32.xlu0 %v3754, 24
        %v3846 = vpop.permute.xlu0 %3845
        %3847 = vrot.lane.b32.xlu0 %v3755, 24
        %v3848 = vpop.permute.xlu0 %3847
        %3849 = vrot.lane.b32.xlu0 %v3756, 24
        %v3850 = vpop.permute.xlu0 %3849
        %3851 = vrot.lane.b32.xlu0 %v3757, 24
        %v3852 = vpop.permute.xlu0 %3851
        %3853 = vrot.lane.b32.xlu0 %v3758, 24
        %v3854 = vpop.permute.xlu0 %3853
        %3887 = vst.msk [vmem:[#allocation6] sm:$0xff] %vm1645, %v3792
        %3888 = vst.msk [vmem:[#allocation6 + $0x10] sm:$0xff] %vm1645, %v3794
        %3889 = vst.msk [vmem:[#allocation6 + $0x20] sm:$0xff] %vm1645, %v3796
        %3890 = vst.msk [vmem:[#allocation6 + $0x30] sm:$0xff] %vm1645, %v3798
        %3891 = vst.msk [vmem:[#allocation6 + $0x40] sm:$0xff] %vm1645, %v3800
        %3892 = vst.msk [vmem:[#allocation6 + $0x50] sm:$0xff] %vm1645, %v3802
        %3893 = vst.msk [vmem:[#allocation6 + $0x60] sm:$0xff] %vm1645, %v3804
        %3894 = vst.msk [vmem:[#allocation6 + $0x70] sm:$0xff] %vm1645, %v3806
        %3895 = vst.msk [vmem:[#allocation6 + $0x80] sm:$0xff] %vm1645, %v3808
        %3896 = vst.msk [vmem:[#allocation6 + $0x90] sm:$0xff] %vm1645, %v3810
        %3897 = vst.msk [vmem:[#allocation6 + $0xa0] sm:$0xff] %vm1645, %v3812
        %3898 = vst.msk [vmem:[#allocation6 + $0xb0] sm:$0xff] %vm1645, %v3814
        %3899 = vst.msk [vmem:[#allocation6 + $0xc0] sm:$0xff] %vm1645, %v3816
        %3900 = vst.msk [vmem:[#allocation6 + $0xd0] sm:$0xff] %vm1645, %v3818
        %3901 = vst.msk [vmem:[#allocation6 + $0xe0] sm:$0xff] %vm1645, %v3820
        %3902 = vst.msk [vmem:[#allocation6 + $0xf0] sm:$0xff] %vm1645, %v3822
        %3903 = vst.msk [vmem:[#allocation6 + $0x100] sm:$0xff] %vm1645, %v3824
        %3904 = vst.msk [vmem:[#allocation6 + $0x110] sm:$0xff] %vm1645, %v3826
        %3905 = vst.msk [vmem:[#allocation6 + $0x120] sm:$0xff] %vm1645, %v3828
        %3906 = vst.msk [vmem:[#allocation6 + $0x130] sm:$0xff] %vm1645, %v3830
        %3907 = vst.msk [vmem:[#allocation6 + $0x140] sm:$0xff] %vm1645, %v3832
        %3908 = vst.msk [vmem:[#allocation6 + $0x150] sm:$0xff] %vm1645, %v3834
        %3909 = vst.msk [vmem:[#allocation6 + $0x160] sm:$0xff] %vm1645, %v3836
        %3910 = vst.msk [vmem:[#allocation6 + $0x170] sm:$0xff] %vm1645, %v3838
        %3911 = vst.msk [vmem:[#allocation6 + $0x180] sm:$0xff] %vm1645, %v3840
        %3912 = vst.msk [vmem:[#allocation6 + $0x190] sm:$0xff] %vm1645, %v3842
        %3913 = vst.msk [vmem:[#allocation6 + $0x1a0] sm:$0xff] %vm1645, %v3844
        %3914 = vst.msk [vmem:[#allocation6 + $0x1b0] sm:$0xff] %vm1645, %v3846
        %3915 = vst.msk [vmem:[#allocation6 + $0x1c0] sm:$0xff] %vm1645, %v3848
        %3916 = vst.msk [vmem:[#allocation6 + $0x1d0] sm:$0xff] %vm1645, %v3850
        %3917 = vst.msk [vmem:[#allocation6 + $0x1e0] sm:$0xff] %vm1645, %v3852
        %3918 = vst.msk [vmem:[#allocation6 + $0x1f0] sm:$0xff] %vm1645, %v3854
        %v3919 = vld [vmem:[#allocation3 + $0x4] sm:$0xff]
        %v3920 = vld [vmem:[#allocation3 + $0xc] sm:$0xff]
        %v3921 = vld [vmem:[#allocation3 + $0x1c] sm:$0xff]
        %v3922 = vld [vmem:[#allocation3 + $0x24] sm:$0xff]
        %v3923 = vld [vmem:[#allocation3 + $0x34] sm:$0xff]
        %v3924 = vld [vmem:[#allocation3 + $0x3c] sm:$0xff]
        %v3925 = vld [vmem:[#allocation3 + $0x4c] sm:$0xff]
        %v3926 = vld [vmem:[#allocation3 + $0x54] sm:$0xff]
        %v3927 = vld [vmem:[#allocation3 + $0x64] sm:$0xff]
        %v3928 = vld [vmem:[#allocation3 + $0x6c] sm:$0xff]
        %v3929 = vld [vmem:[#allocation3 + $0x7c] sm:$0xff]
        %v3930 = vld [vmem:[#allocation3 + $0x84] sm:$0xff]
        %v3931 = vld [vmem:[#allocation3 + $0x94] sm:$0xff]
        %v3932 = vld [vmem:[#allocation3 + $0x9c] sm:$0xff]
        %v3933 = vld [vmem:[#allocation3 + $0xac] sm:$0xff]
        %v3934 = vld [vmem:[#allocation3 + $0xb4] sm:$0xff]
        %v3935 = vld [vmem:[#allocation3 + $0xc4] sm:$0xff]
        %v3936 = vld [vmem:[#allocation3 + $0xcc] sm:$0xff]
        %v3937 = vld [vmem:[#allocation3 + $0xdc] sm:$0xff]
        %v3938 = vld [vmem:[#allocation3 + $0xe4] sm:$0xff]
        %v3939 = vld [vmem:[#allocation3 + $0xf4] sm:$0xff]
        %v3940 = vld [vmem:[#allocation3 + $0xfc] sm:$0xff]
        %v3941 = vld [vmem:[#allocation3 + $0x10c] sm:$0xff]
        %v3942 = vld [vmem:[#allocation3 + $0x114] sm:$0xff]
        %v3943 = vld [vmem:[#allocation3 + $0x124] sm:$0xff]
        %v3944 = vld [vmem:[#allocation3 + $0x12c] sm:$0xff]
        %v3945 = vld [vmem:[#allocation3 + $0x13c] sm:$0xff]
        %v3946 = vld [vmem:[#allocation3 + $0x144] sm:$0xff]
        %v3947 = vld [vmem:[#allocation3 + $0x154] sm:$0xff]
        %v3948 = vld [vmem:[#allocation3 + $0x15c] sm:$0xff]
        %v3949 = vld [vmem:[#allocation3 + $0x16c] sm:$0xff]
        %v3950 = vld [vmem:[#allocation3 + $0x174] sm:$0xff]
        %3983 = vrot.lane.b32.xlu0 %v3919, 32
        %v3984 = vpop.permute.xlu0 %3983
        %3985 = vrot.lane.b32.xlu0 %v3920, 32
        %v3986 = vpop.permute.xlu0 %3985
        %3987 = vrot.lane.b32.xlu0 %v3921, 32
        %v3988 = vpop.permute.xlu0 %3987
        %3989 = vrot.lane.b32.xlu0 %v3922, 32
        %v3990 = vpop.permute.xlu0 %3989
        %3991 = vrot.lane.b32.xlu0 %v3923, 32
        %v3992 = vpop.permute.xlu0 %3991
        %3993 = vrot.lane.b32.xlu0 %v3924, 32
        %v3994 = vpop.permute.xlu0 %3993
        %3995 = vrot.lane.b32.xlu0 %v3925, 32
        %v3996 = vpop.permute.xlu0 %3995
        %3997 = vrot.lane.b32.xlu0 %v3926, 32
        %v3998 = vpop.permute.xlu0 %3997
        %3999 = vrot.lane.b32.xlu0 %v3927, 32
        %v4000 = vpop.permute.xlu0 %3999
        %4001 = vrot.lane.b32.xlu0 %v3928, 32
        %v4002 = vpop.permute.xlu0 %4001
        %4003 = vrot.lane.b32.xlu0 %v3929, 32
        %v4004 = vpop.permute.xlu0 %4003
        %4005 = vrot.lane.b32.xlu0 %v3930, 32
        %v4006 = vpop.permute.xlu0 %4005
        %4007 = vrot.lane.b32.xlu0 %v3931, 32
        %v4008 = vpop.permute.xlu0 %4007
        %4009 = vrot.lane.b32.xlu0 %v3932, 32
        %v4010 = vpop.permute.xlu0 %4009
        %4011 = vrot.lane.b32.xlu0 %v3933, 32
        %v4012 = vpop.permute.xlu0 %4011
        %4013 = vrot.lane.b32.xlu0 %v3934, 32
        %v4014 = vpop.permute.xlu0 %4013
        %4015 = vrot.lane.b32.xlu0 %v3935, 32
        %v4016 = vpop.permute.xlu0 %4015
        %4017 = vrot.lane.b32.xlu0 %v3936, 32
        %v4018 = vpop.permute.xlu0 %4017
        %4019 = vrot.lane.b32.xlu0 %v3937, 32
        %v4020 = vpop.permute.xlu0 %4019
        %4021 = vrot.lane.b32.xlu0 %v3938, 32
        %v4022 = vpop.permute.xlu0 %4021
        %4023 = vrot.lane.b32.xlu0 %v3939, 32
        %v4024 = vpop.permute.xlu0 %4023
        %4025 = vrot.lane.b32.xlu0 %v3940, 32
        %v4026 = vpop.permute.xlu0 %4025
        %4027 = vrot.lane.b32.xlu0 %v3941, 32
        %v4028 = vpop.permute.xlu0 %4027
        %4029 = vrot.lane.b32.xlu0 %v3942, 32
        %v4030 = vpop.permute.xlu0 %4029
        %4031 = vrot.lane.b32.xlu0 %v3943, 32
        %v4032 = vpop.permute.xlu0 %4031
        %4033 = vrot.lane.b32.xlu0 %v3944, 32
        %v4034 = vpop.permute.xlu0 %4033
        %4035 = vrot.lane.b32.xlu0 %v3945, 32
        %v4036 = vpop.permute.xlu0 %4035
        %4037 = vrot.lane.b32.xlu0 %v3946, 32
        %v4038 = vpop.permute.xlu0 %4037
        %4039 = vrot.lane.b32.xlu0 %v3947, 32
        %v4040 = vpop.permute.xlu0 %4039
        %4041 = vrot.lane.b32.xlu0 %v3948, 32
        %v4042 = vpop.permute.xlu0 %4041
        %4043 = vrot.lane.b32.xlu0 %v3949, 32
        %v4044 = vpop.permute.xlu0 %4043
        %4045 = vrot.lane.b32.xlu0 %v3950, 32
        %v4046 = vpop.permute.xlu0 %4045
        %4079 = vst.msk [vmem:[#allocation6] sm:$0xff] %vm1838, %v3984
        %4080 = vst.msk [vmem:[#allocation6 + $0x10] sm:$0xff] %vm1838, %v3986
        %4081 = vst.msk [vmem:[#allocation6 + $0x20] sm:$0xff] %vm1838, %v3988
        %4082 = vst.msk [vmem:[#allocation6 + $0x30] sm:$0xff] %vm1838, %v3990
        %4083 = vst.msk [vmem:[#allocation6 + $0x40] sm:$0xff] %vm1838, %v3992
        %4084 = vst.msk [vmem:[#allocation6 + $0x50] sm:$0xff] %vm1838, %v3994
        %4085 = vst.msk [vmem:[#allocation6 + $0x60] sm:$0xff] %vm1838, %v3996
        %4086 = vst.msk [vmem:[#allocation6 + $0x70] sm:$0xff] %vm1838, %v3998
        %4087 = vst.msk [vmem:[#allocation6 + $0x80] sm:$0xff] %vm1838, %v4000
        %4088 = vst.msk [vmem:[#allocation6 + $0x90] sm:$0xff] %vm1838, %v4002
        %4089 = vst.msk [vmem:[#allocation6 + $0xa0] sm:$0xff] %vm1838, %v4004
        %4090 = vst.msk [vmem:[#allocation6 + $0xb0] sm:$0xff] %vm1838, %v4006
        %4091 = vst.msk [vmem:[#allocation6 + $0xc0] sm:$0xff] %vm1838, %v4008
        %4092 = vst.msk [vmem:[#allocation6 + $0xd0] sm:$0xff] %vm1838, %v4010
        %4093 = vst.msk [vmem:[#allocation6 + $0xe0] sm:$0xff] %vm1838, %v4012
        %4094 = vst.msk [vmem:[#allocation6 + $0xf0] sm:$0xff] %vm1838, %v4014
        %4095 = vst.msk [vmem:[#allocation6 + $0x100] sm:$0xff] %vm1838, %v4016
        %4096 = vst.msk [vmem:[#allocation6 + $0x110] sm:$0xff] %vm1838, %v4018
        %4097 = vst.msk [vmem:[#allocation6 + $0x120] sm:$0xff] %vm1838, %v4020
        %4098 = vst.msk [vmem:[#allocation6 + $0x130] sm:$0xff] %vm1838, %v4022
        %4099 = vst.msk [vmem:[#allocation6 + $0x140] sm:$0xff] %vm1838, %v4024
        %4100 = vst.msk [vmem:[#allocation6 + $0x150] sm:$0xff] %vm1838, %v4026
        %4101 = vst.msk [vmem:[#allocation6 + $0x160] sm:$0xff] %vm1838, %v4028
        %4102 = vst.msk [vmem:[#allocation6 + $0x170] sm:$0xff] %vm1838, %v4030
        %4103 = vst.msk [vmem:[#allocation6 + $0x180] sm:$0xff] %vm1838, %v4032
        %4104 = vst.msk [vmem:[#allocation6 + $0x190] sm:$0xff] %vm1838, %v4034
        %4105 = vst.msk [vmem:[#allocation6 + $0x1a0] sm:$0xff] %vm1838, %v4036
        %4106 = vst.msk [vmem:[#allocation6 + $0x1b0] sm:$0xff] %vm1838, %v4038
        %4107 = vst.msk [vmem:[#allocation6 + $0x1c0] sm:$0xff] %vm1838, %v4040
        %4108 = vst.msk [vmem:[#allocation6 + $0x1d0] sm:$0xff] %vm1838, %v4042
        %4109 = vst.msk [vmem:[#allocation6 + $0x1e0] sm:$0xff] %vm1838, %v4044
        %4110 = vst.msk [vmem:[#allocation6 + $0x1f0] sm:$0xff] %vm1838, %v4046
        %s4111 = scalar_lea.vmem [#allocation3], 24
        %v4112 = vld [vmem:[%s4111] sm:$0xff]
        %v4113 = vld [vmem:[%s4111 + $0x8] sm:$0xff]
        %v4114 = vld [vmem:[%s4111 + $0x18] sm:$0xff]
        %v4115 = vld [vmem:[%s4111 + $0x20] sm:$0xff]
        %v4116 = vld [vmem:[%s4111 + $0x30] sm:$0xff]
        %v4117 = vld [vmem:[%s4111 + $0x38] sm:$0xff]
        %v4118 = vld [vmem:[%s4111 + $0x48] sm:$0xff]
        %v4119 = vld [vmem:[%s4111 + $0x50] sm:$0xff]
        %v4120 = vld [vmem:[%s4111 + $0x60] sm:$0xff]
        %v4121 = vld [vmem:[%s4111 + $0x68] sm:$0xff]
        %v4122 = vld [vmem:[%s4111 + $0x78] sm:$0xff]
        %v4123 = vld [vmem:[%s4111 + $0x80] sm:$0xff]
        %v4124 = vld [vmem:[%s4111 + $0x90] sm:$0xff]
        %v4125 = vld [vmem:[%s4111 + $0x98] sm:$0xff]
        %v4126 = vld [vmem:[%s4111 + $0xa8] sm:$0xff]
        %v4127 = vld [vmem:[%s4111 + $0xb0] sm:$0xff]
        %v4128 = vld [vmem:[%s4111 + $0xc0] sm:$0xff]
        %v4129 = vld [vmem:[%s4111 + $0xc8] sm:$0xff]
        %v4130 = vld [vmem:[%s4111 + $0xd8] sm:$0xff]
        %v4131 = vld [vmem:[%s4111 + $0xe0] sm:$0xff]
        %v4132 = vld [vmem:[%s4111 + $0xf0] sm:$0xff]
        %v4133 = vld [vmem:[%s4111 + $0xf8] sm:$0xff]
        %v4134 = vld [vmem:[%s4111 + $0x108] sm:$0xff]
        %v4135 = vld [vmem:[%s4111 + $0x110] sm:$0xff]
        %v4136 = vld [vmem:[%s4111 + $0x120] sm:$0xff]
        %v4137 = vld [vmem:[%s4111 + $0x128] sm:$0xff]
        %v4138 = vld [vmem:[%s4111 + $0x138] sm:$0xff]
        %v4139 = vld [vmem:[%s4111 + $0x140] sm:$0xff]
        %v4140 = vld [vmem:[%s4111 + $0x150] sm:$0xff]
        %v4141 = vld [vmem:[%s4111 + $0x158] sm:$0xff]
        %v4142 = vld [vmem:[%s4111 + $0x168] sm:$0xff]
        %v4143 = vld [vmem:[%s4111 + $0x170] sm:$0xff]
        %4176 = vrot.lane.b32.xlu0 %v4112, 40
        %v4177 = vpop.permute.xlu0 %4176
        %4178 = vrot.lane.b32.xlu0 %v4113, 40
        %v4179 = vpop.permute.xlu0 %4178
        %4180 = vrot.lane.b32.xlu0 %v4114, 40
        %v4181 = vpop.permute.xlu0 %4180
        %4182 = vrot.lane.b32.xlu0 %v4115, 40
        %v4183 = vpop.permute.xlu0 %4182
        %4184 = vrot.lane.b32.xlu0 %v4116, 40
        %v4185 = vpop.permute.xlu0 %4184
        %4186 = vrot.lane.b32.xlu0 %v4117, 40
        %v4187 = vpop.permute.xlu0 %4186
        %4188 = vrot.lane.b32.xlu0 %v4118, 40
        %v4189 = vpop.permute.xlu0 %4188
        %4190 = vrot.lane.b32.xlu0 %v4119, 40
        %v4191 = vpop.permute.xlu0 %4190
        %4192 = vrot.lane.b32.xlu0 %v4120, 40
        %v4193 = vpop.permute.xlu0 %4192
        %4194 = vrot.lane.b32.xlu0 %v4121, 40
        %v4195 = vpop.permute.xlu0 %4194
        %4196 = vrot.lane.b32.xlu0 %v4122, 40
        %v4197 = vpop.permute.xlu0 %4196
        %4198 = vrot.lane.b32.xlu0 %v4123, 40
        %v4199 = vpop.permute.xlu0 %4198
        %4200 = vrot.lane.b32.xlu0 %v4124, 40
        %v4201 = vpop.permute.xlu0 %4200
        %4202 = vrot.lane.b32.xlu0 %v4125, 40
        %v4203 = vpop.permute.xlu0 %4202
        %4204 = vrot.lane.b32.xlu0 %v4126, 40
        %v4205 = vpop.permute.xlu0 %4204
        %4206 = vrot.lane.b32.xlu0 %v4127, 40
        %v4207 = vpop.permute.xlu0 %4206
        %4208 = vrot.lane.b32.xlu0 %v4128, 40
        %v4209 = vpop.permute.xlu0 %4208
        %4210 = vrot.lane.b32.xlu0 %v4129, 40
        %v4211 = vpop.permute.xlu0 %4210
        %4212 = vrot.lane.b32.xlu0 %v4130, 40
        %v4213 = vpop.permute.xlu0 %4212
        %4214 = vrot.lane.b32.xlu0 %v4131, 40
        %v4215 = vpop.permute.xlu0 %4214
        %4216 = vrot.lane.b32.xlu0 %v4132, 40
        %v4217 = vpop.permute.xlu0 %4216
        %4218 = vrot.lane.b32.xlu0 %v4133, 40
        %v4219 = vpop.permute.xlu0 %4218
        %4220 = vrot.lane.b32.xlu0 %v4134, 40
        %v4221 = vpop.permute.xlu0 %4220
        %4222 = vrot.lane.b32.xlu0 %v4135, 40
        %v4223 = vpop.permute.xlu0 %4222
        %4224 = vrot.lane.b32.xlu0 %v4136, 40
        %v4225 = vpop.permute.xlu0 %4224
        %4226 = vrot.lane.b32.xlu0 %v4137, 40
        %v4227 = vpop.permute.xlu0 %4226
        %4228 = vrot.lane.b32.xlu0 %v4138, 40
        %v4229 = vpop.permute.xlu0 %4228
        %4230 = vrot.lane.b32.xlu0 %v4139, 40
        %v4231 = vpop.permute.xlu0 %4230
        %4232 = vrot.lane.b32.xlu0 %v4140, 40
        %v4233 = vpop.permute.xlu0 %4232
        %4234 = vrot.lane.b32.xlu0 %v4141, 40
        %v4235 = vpop.permute.xlu0 %4234
        %4236 = vrot.lane.b32.xlu0 %v4142, 40
        %v4237 = vpop.permute.xlu0 %4236
        %4238 = vrot.lane.b32.xlu0 %v4143, 40
        %v4239 = vpop.permute.xlu0 %4238
        %4272 = vst.msk [vmem:[#allocation6] sm:$0xff] %vm2031, %v4177
        %4273 = vst.msk [vmem:[#allocation6 + $0x10] sm:$0xff] %vm2031, %v4179
        %4274 = vst.msk [vmem:[#allocation6 + $0x20] sm:$0xff] %vm2031, %v4181
        %4275 = vst.msk [vmem:[#allocation6 + $0x30] sm:$0xff] %vm2031, %v4183
        %4276 = vst.msk [vmem:[#allocation6 + $0x40] sm:$0xff] %vm2031, %v4185
        %4277 = vst.msk [vmem:[#allocation6 + $0x50] sm:$0xff] %vm2031, %v4187
        %4278 = vst.msk [vmem:[#allocation6 + $0x60] sm:$0xff] %vm2031, %v4189
        %4279 = vst.msk [vmem:[#allocation6 + $0x70] sm:$0xff] %vm2031, %v4191
        %4280 = vst.msk [vmem:[#allocation6 + $0x80] sm:$0xff] %vm2031, %v4193
        %4281 = vst.msk [vmem:[#allocation6 + $0x90] sm:$0xff] %vm2031, %v4195
        %4282 = vst.msk [vmem:[#allocation6 + $0xa0] sm:$0xff] %vm2031, %v4197
        %4283 = vst.msk [vmem:[#allocation6 + $0xb0] sm:$0xff] %vm2031, %v4199
        %4284 = vst.msk [vmem:[#allocation6 + $0xc0] sm:$0xff] %vm2031, %v4201
        %4285 = vst.msk [vmem:[#allocation6 + $0xd0] sm:$0xff] %vm2031, %v4203
        %4286 = vst.msk [vmem:[#allocation6 + $0xe0] sm:$0xff] %vm2031, %v4205
        %4287 = vst.msk [vmem:[#allocation6 + $0xf0] sm:$0xff] %vm2031, %v4207
        %4288 = vst.msk [vmem:[#allocation6 + $0x100] sm:$0xff] %vm2031, %v4209
        %4289 = vst.msk [vmem:[#allocation6 + $0x110] sm:$0xff] %vm2031, %v4211
        %4290 = vst.msk [vmem:[#allocation6 + $0x120] sm:$0xff] %vm2031, %v4213
        %4291 = vst.msk [vmem:[#allocation6 + $0x130] sm:$0xff] %vm2031, %v4215
        %4292 = vst.msk [vmem:[#allocation6 + $0x140] sm:$0xff] %vm2031, %v4217
        %4293 = vst.msk [vmem:[#allocation6 + $0x150] sm:$0xff] %vm2031, %v4219
        %4294 = vst.msk [vmem:[#allocation6 + $0x160] sm:$0xff] %vm2031, %v4221
        %4295 = vst.msk [vmem:[#allocation6 + $0x170] sm:$0xff] %vm2031, %v4223
        %4296 = vst.msk [vmem:[#allocation6 + $0x180] sm:$0xff] %vm2031, %v4225
        %4297 = vst.msk [vmem:[#allocation6 + $0x190] sm:$0xff] %vm2031, %v4227
        %4298 = vst.msk [vmem:[#allocation6 + $0x1a0] sm:$0xff] %vm2031, %v4229
        %4299 = vst.msk [vmem:[#allocation6 + $0x1b0] sm:$0xff] %vm2031, %v4231
        %4300 = vst.msk [vmem:[#allocation6 + $0x1c0] sm:$0xff] %vm2031, %v4233
        %4301 = vst.msk [vmem:[#allocation6 + $0x1d0] sm:$0xff] %vm2031, %v4235
        %4302 = vst.msk [vmem:[#allocation6 + $0x1e0] sm:$0xff] %vm2031, %v4237
        %4303 = vst.msk [vmem:[#allocation6 + $0x1f0] sm:$0xff] %vm2031, %v4239
        %v4304 = vld [vmem:[%s4111 + $0x1] sm:$0xff]
        %v4305 = vld [vmem:[%s4111 + $0x9] sm:$0xff]
        %v4306 = vld [vmem:[%s4111 + $0x19] sm:$0xff]
        %v4307 = vld [vmem:[%s4111 + $0x21] sm:$0xff]
        %v4308 = vld [vmem:[%s4111 + $0x31] sm:$0xff]
        %v4309 = vld [vmem:[%s4111 + $0x39] sm:$0xff]
        %v4310 = vld [vmem:[%s4111 + $0x49] sm:$0xff]
        %v4311 = vld [vmem:[%s4111 + $0x51] sm:$0xff]
        %v4312 = vld [vmem:[%s4111 + $0x61] sm:$0xff]
        %v4313 = vld [vmem:[%s4111 + $0x69] sm:$0xff]
        %v4314 = vld [vmem:[%s4111 + $0x79] sm:$0xff]
        %v4315 = vld [vmem:[%s4111 + $0x81] sm:$0xff]
        %v4316 = vld [vmem:[%s4111 + $0x91] sm:$0xff]
        %v4317 = vld [vmem:[%s4111 + $0x99] sm:$0xff]
        %v4318 = vld [vmem:[%s4111 + $0xa9] sm:$0xff]
        %v4319 = vld [vmem:[%s4111 + $0xb1] sm:$0xff]
        %v4320 = vld [vmem:[%s4111 + $0xc1] sm:$0xff]
        %v4321 = vld [vmem:[%s4111 + $0xc9] sm:$0xff]
        %v4322 = vld [vmem:[%s4111 + $0xd9] sm:$0xff]
        %v4323 = vld [vmem:[%s4111 + $0xe1] sm:$0xff]
        %v4324 = vld [vmem:[%s4111 + $0xf1] sm:$0xff]
        %v4325 = vld [vmem:[%s4111 + $0xf9] sm:$0xff]
        %v4326 = vld [vmem:[%s4111 + $0x109] sm:$0xff]
        %v4327 = vld [vmem:[%s4111 + $0x111] sm:$0xff]
        %v4328 = vld [vmem:[%s4111 + $0x121] sm:$0xff]
        %v4329 = vld [vmem:[%s4111 + $0x129] sm:$0xff]
        %v4330 = vld [vmem:[%s4111 + $0x139] sm:$0xff]
        %v4331 = vld [vmem:[%s4111 + $0x141] sm:$0xff]
        %v4332 = vld [vmem:[%s4111 + $0x151] sm:$0xff]
        %v4333 = vld [vmem:[%s4111 + $0x159] sm:$0xff]
        %v4334 = vld [vmem:[%s4111 + $0x169] sm:$0xff]
        %v4335 = vld [vmem:[%s4111 + $0x171] sm:$0xff]
        %4368 = vrot.lane.b32.xlu0 %v4304, 48
        %v4369 = vpop.permute.xlu0 %4368
        %4370 = vrot.lane.b32.xlu0 %v4305, 48
        %v4371 = vpop.permute.xlu0 %4370
        %4372 = vrot.lane.b32.xlu0 %v4306, 48
        %v4373 = vpop.permute.xlu0 %4372
        %4374 = vrot.lane.b32.xlu0 %v4307, 48
        %v4375 = vpop.permute.xlu0 %4374
        %4376 = vrot.lane.b32.xlu0 %v4308, 48
        %v4377 = vpop.permute.xlu0 %4376
        %4378 = vrot.lane.b32.xlu0 %v4309, 48
        %v4379 = vpop.permute.xlu0 %4378
        %4380 = vrot.lane.b32.xlu0 %v4310, 48
        %v4381 = vpop.permute.xlu0 %4380
        %4382 = vrot.lane.b32.xlu0 %v4311, 48
        %v4383 = vpop.permute.xlu0 %4382
        %4384 = vrot.lane.b32.xlu0 %v4312, 48
        %v4385 = vpop.permute.xlu0 %4384
        %4386 = vrot.lane.b32.xlu0 %v4313, 48
        %v4387 = vpop.permute.xlu0 %4386
        %4388 = vrot.lane.b32.xlu0 %v4314, 48
        %v4389 = vpop.permute.xlu0 %4388
        %4390 = vrot.lane.b32.xlu0 %v4315, 48
        %v4391 = vpop.permute.xlu0 %4390
        %4392 = vrot.lane.b32.xlu0 %v4316, 48
        %v4393 = vpop.permute.xlu0 %4392
        %4394 = vrot.lane.b32.xlu0 %v4317, 48
        %v4395 = vpop.permute.xlu0 %4394
        %4396 = vrot.lane.b32.xlu0 %v4318, 48
        %v4397 = vpop.permute.xlu0 %4396
        %4398 = vrot.lane.b32.xlu0 %v4319, 48
        %v4399 = vpop.permute.xlu0 %4398
        %4400 = vrot.lane.b32.xlu0 %v4320, 48
        %v4401 = vpop.permute.xlu0 %4400
        %4402 = vrot.lane.b32.xlu0 %v4321, 48
        %v4403 = vpop.permute.xlu0 %4402
        %4404 = vrot.lane.b32.xlu0 %v4322, 48
        %v4405 = vpop.permute.xlu0 %4404
        %4406 = vrot.lane.b32.xlu0 %v4323, 48
        %v4407 = vpop.permute.xlu0 %4406
        %4408 = vrot.lane.b32.xlu0 %v4324, 48
        %v4409 = vpop.permute.xlu0 %4408
        %4410 = vrot.lane.b32.xlu0 %v4325, 48
        %v4411 = vpop.permute.xlu0 %4410
        %4412 = vrot.lane.b32.xlu0 %v4326, 48
        %v4413 = vpop.permute.xlu0 %4412
        %4414 = vrot.lane.b32.xlu0 %v4327, 48
        %v4415 = vpop.permute.xlu0 %4414
        %4416 = vrot.lane.b32.xlu0 %v4328, 48
        %v4417 = vpop.permute.xlu0 %4416
        %4418 = vrot.lane.b32.xlu0 %v4329, 48
        %v4419 = vpop.permute.xlu0 %4418
        %4420 = vrot.lane.b32.xlu0 %v4330, 48
        %v4421 = vpop.permute.xlu0 %4420
        %4422 = vrot.lane.b32.xlu0 %v4331, 48
        %v4423 = vpop.permute.xlu0 %4422
        %4424 = vrot.lane.b32.xlu0 %v4332, 48
        %v4425 = vpop.permute.xlu0 %4424
        %4426 = vrot.lane.b32.xlu0 %v4333, 48
        %v4427 = vpop.permute.xlu0 %4426
        %4428 = vrot.lane.b32.xlu0 %v4334, 48
        %v4429 = vpop.permute.xlu0 %4428
        %4430 = vrot.lane.b32.xlu0 %v4335, 48
        %v4431 = vpop.permute.xlu0 %4430
        %4464 = vst.msk [vmem:[#allocation6] sm:$0xff] %vm2225, %v4369
        %4465 = vst.msk [vmem:[#allocation6 + $0x10] sm:$0xff] %vm2225, %v4371
        %4466 = vst.msk [vmem:[#allocation6 + $0x20] sm:$0xff] %vm2225, %v4373
        %4467 = vst.msk [vmem:[#allocation6 + $0x30] sm:$0xff] %vm2225, %v4375
        %4468 = vst.msk [vmem:[#allocation6 + $0x40] sm:$0xff] %vm2225, %v4377
        %4469 = vst.msk [vmem:[#allocation6 + $0x50] sm:$0xff] %vm2225, %v4379
        %4470 = vst.msk [vmem:[#allocation6 + $0x60] sm:$0xff] %vm2225, %v4381
        %4471 = vst.msk [vmem:[#allocation6 + $0x70] sm:$0xff] %vm2225, %v4383
        %4472 = vst.msk [vmem:[#allocation6 + $0x80] sm:$0xff] %vm2225, %v4385
        %4473 = vst.msk [vmem:[#allocation6 + $0x90] sm:$0xff] %vm2225, %v4387
        %4474 = vst.msk [vmem:[#allocation6 + $0xa0] sm:$0xff] %vm2225, %v4389
        %4475 = vst.msk [vmem:[#allocation6 + $0xb0] sm:$0xff] %vm2225, %v4391
        %4476 = vst.msk [vmem:[#allocation6 + $0xc0] sm:$0xff] %vm2225, %v4393
        %4477 = vst.msk [vmem:[#allocation6 + $0xd0] sm:$0xff] %vm2225, %v4395
        %4478 = vst.msk [vmem:[#allocation6 + $0xe0] sm:$0xff] %vm2225, %v4397
        %4479 = vst.msk [vmem:[#allocation6 + $0xf0] sm:$0xff] %vm2225, %v4399
        %4480 = vst.msk [vmem:[#allocation6 + $0x100] sm:$0xff] %vm2225, %v4401
        %4481 = vst.msk [vmem:[#allocation6 + $0x110] sm:$0xff] %vm2225, %v4403
        %4482 = vst.msk [vmem:[#allocation6 + $0x120] sm:$0xff] %vm2225, %v4405
        %4483 = vst.msk [vmem:[#allocation6 + $0x130] sm:$0xff] %vm2225, %v4407
        %4484 = vst.msk [vmem:[#allocation6 + $0x140] sm:$0xff] %vm2225, %v4409
        %4485 = vst.msk [vmem:[#allocation6 + $0x150] sm:$0xff] %vm2225, %v4411
        %4486 = vst.msk [vmem:[#allocation6 + $0x160] sm:$0xff] %vm2225, %v4413
        %4487 = vst.msk [vmem:[#allocation6 + $0x170] sm:$0xff] %vm2225, %v4415
        %4488 = vst.msk [vmem:[#allocation6 + $0x180] sm:$0xff] %vm2225, %v4417
        %4489 = vst.msk [vmem:[#allocation6 + $0x190] sm:$0xff] %vm2225, %v4419
        %4490 = vst.msk [vmem:[#allocation6 + $0x1a0] sm:$0xff] %vm2225, %v4421
        %4491 = vst.msk [vmem:[#allocation6 + $0x1b0] sm:$0xff] %vm2225, %v4423
        %4492 = vst.msk [vmem:[#allocation6 + $0x1c0] sm:$0xff] %vm2225, %v4425
        %4493 = vst.msk [vmem:[#allocation6 + $0x1d0] sm:$0xff] %vm2225, %v4427
        %4494 = vst.msk [vmem:[#allocation6 + $0x1e0] sm:$0xff] %vm2225, %v4429
        %4495 = vst.msk [vmem:[#allocation6 + $0x1f0] sm:$0xff] %vm2225, %v4431
        %v4496 = vld [vmem:[%s4111 + $0x2] sm:$0xff]
        %v4497 = vld [vmem:[%s4111 + $0xa] sm:$0xff]
        %v4498 = vld [vmem:[%s4111 + $0x1a] sm:$0xff]
        %v4499 = vld [vmem:[%s4111 + $0x22] sm:$0xff]
        %v4500 = vld [vmem:[%s4111 + $0x32] sm:$0xff]
        %v4501 = vld [vmem:[%s4111 + $0x3a] sm:$0xff]
        %v4502 = vld [vmem:[%s4111 + $0x4a] sm:$0xff]
        %v4503 = vld [vmem:[%s4111 + $0x52] sm:$0xff]
        %v4504 = vld [vmem:[%s4111 + $0x62] sm:$0xff]
        %v4505 = vld [vmem:[%s4111 + $0x6a] sm:$0xff]
        %v4506 = vld [vmem:[%s4111 + $0x7a] sm:$0xff]
        %v4507 = vld [vmem:[%s4111 + $0x82] sm:$0xff]
        %v4508 = vld [vmem:[%s4111 + $0x92] sm:$0xff]
        %v4509 = vld [vmem:[%s4111 + $0x9a] sm:$0xff]
        %v4510 = vld [vmem:[%s4111 + $0xaa] sm:$0xff]
        %v4511 = vld [vmem:[%s4111 + $0xb2] sm:$0xff]
        %v4512 = vld [vmem:[%s4111 + $0xc2] sm:$0xff]
        %v4513 = vld [vmem:[%s4111 + $0xca] sm:$0xff]
        %v4514 = vld [vmem:[%s4111 + $0xda] sm:$0xff]
        %v4515 = vld [vmem:[%s4111 + $0xe2] sm:$0xff]
        %v4516 = vld [vmem:[%s4111 + $0xf2] sm:$0xff]
        %v4517 = vld [vmem:[%s4111 + $0xfa] sm:$0xff]
        %v4518 = vld [vmem:[%s4111 + $0x10a] sm:$0xff]
        %v4519 = vld [vmem:[%s4111 + $0x112] sm:$0xff]
        %v4520 = vld [vmem:[%s4111 + $0x122] sm:$0xff]
        %v4521 = vld [vmem:[%s4111 + $0x12a] sm:$0xff]
        %v4522 = vld [vmem:[%s4111 + $0x13a] sm:$0xff]
        %v4523 = vld [vmem:[%s4111 + $0x142] sm:$0xff]
        %v4524 = vld [vmem:[%s4111 + $0x152] sm:$0xff]
        %v4525 = vld [vmem:[%s4111 + $0x15a] sm:$0xff]
        %v4526 = vld [vmem:[%s4111 + $0x16a] sm:$0xff]
        %v4527 = vld [vmem:[%s4111 + $0x172] sm:$0xff]
        %4560 = vrot.lane.b32.xlu0 %v4496, 56
        %v4561 = vpop.permute.xlu0 %4560
        %4562 = vrot.lane.b32.xlu0 %v4497, 56
        %v4563 = vpop.permute.xlu0 %4562
        %4564 = vrot.lane.b32.xlu0 %v4498, 56
        %v4565 = vpop.permute.xlu0 %4564
        %4566 = vrot.lane.b32.xlu0 %v4499, 56
        %v4567 = vpop.permute.xlu0 %4566
        %4568 = vrot.lane.b32.xlu0 %v4500, 56
        %v4569 = vpop.permute.xlu0 %4568
        %4570 = vrot.lane.b32.xlu0 %v4501, 56
        %v4571 = vpop.permute.xlu0 %4570
        %4572 = vrot.lane.b32.xlu0 %v4502, 56
        %v4573 = vpop.permute.xlu0 %4572
        %4574 = vrot.lane.b32.xlu0 %v4503, 56
        %v4575 = vpop.permute.xlu0 %4574
        %4576 = vrot.lane.b32.xlu0 %v4504, 56
        %v4577 = vpop.permute.xlu0 %4576
        %4578 = vrot.lane.b32.xlu0 %v4505, 56
        %v4579 = vpop.permute.xlu0 %4578
        %4580 = vrot.lane.b32.xlu0 %v4506, 56
        %v4581 = vpop.permute.xlu0 %4580
        %4582 = vrot.lane.b32.xlu0 %v4507, 56
        %v4583 = vpop.permute.xlu0 %4582
        %4584 = vrot.lane.b32.xlu0 %v4508, 56
        %v4585 = vpop.permute.xlu0 %4584
        %4586 = vrot.lane.b32.xlu0 %v4509, 56
        %v4587 = vpop.permute.xlu0 %4586
        %4588 = vrot.lane.b32.xlu0 %v4510, 56
        %v4589 = vpop.permute.xlu0 %4588
        %4590 = vrot.lane.b32.xlu0 %v4511, 56
        %v4591 = vpop.permute.xlu0 %4590
        %4592 = vrot.lane.b32.xlu0 %v4512, 56
        %v4593 = vpop.permute.xlu0 %4592
        %4594 = vrot.lane.b32.xlu0 %v4513, 56
        %v4595 = vpop.permute.xlu0 %4594
        %4596 = vrot.lane.b32.xlu0 %v4514, 56
        %v4597 = vpop.permute.xlu0 %4596
        %4598 = vrot.lane.b32.xlu0 %v4515, 56
        %v4599 = vpop.permute.xlu0 %4598
        %4600 = vrot.lane.b32.xlu0 %v4516, 56
        %v4601 = vpop.permute.xlu0 %4600
        %4602 = vrot.lane.b32.xlu0 %v4517, 56
        %v4603 = vpop.permute.xlu0 %4602
        %4604 = vrot.lane.b32.xlu0 %v4518, 56
        %v4605 = vpop.permute.xlu0 %4604
        %4606 = vrot.lane.b32.xlu0 %v4519, 56
        %v4607 = vpop.permute.xlu0 %4606
        %4608 = vrot.lane.b32.xlu0 %v4520, 56
        %v4609 = vpop.permute.xlu0 %4608
        %4610 = vrot.lane.b32.xlu0 %v4521, 56
        %v4611 = vpop.permute.xlu0 %4610
        %4612 = vrot.lane.b32.xlu0 %v4522, 56
        %v4613 = vpop.permute.xlu0 %4612
        %4614 = vrot.lane.b32.xlu0 %v4523, 56
        %v4615 = vpop.permute.xlu0 %4614
        %4616 = vrot.lane.b32.xlu0 %v4524, 56
        %v4617 = vpop.permute.xlu0 %4616
        %4618 = vrot.lane.b32.xlu0 %v4525, 56
        %v4619 = vpop.permute.xlu0 %4618
        %4620 = vrot.lane.b32.xlu0 %v4526, 56
        %v4621 = vpop.permute.xlu0 %4620
        %4622 = vrot.lane.b32.xlu0 %v4527, 56
        %v4623 = vpop.permute.xlu0 %4622
        %4656 = vst.msk [vmem:[#allocation6] sm:$0xff] %vm2418, %v4561
        %4657 = vst.msk [vmem:[#allocation6 + $0x10] sm:$0xff] %vm2418, %v4563
        %4658 = vst.msk [vmem:[#allocation6 + $0x20] sm:$0xff] %vm2418, %v4565
        %4659 = vst.msk [vmem:[#allocation6 + $0x30] sm:$0xff] %vm2418, %v4567
        %4660 = vst.msk [vmem:[#allocation6 + $0x40] sm:$0xff] %vm2418, %v4569
        %4661 = vst.msk [vmem:[#allocation6 + $0x50] sm:$0xff] %vm2418, %v4571
        %4662 = vst.msk [vmem:[#allocation6 + $0x60] sm:$0xff] %vm2418, %v4573
        %4663 = vst.msk [vmem:[#allocation6 + $0x70] sm:$0xff] %vm2418, %v4575
        %4664 = vst.msk [vmem:[#allocation6 + $0x80] sm:$0xff] %vm2418, %v4577
        %4665 = vst.msk [vmem:[#allocation6 + $0x90] sm:$0xff] %vm2418, %v4579
        %4666 = vst.msk [vmem:[#allocation6 + $0xa0] sm:$0xff] %vm2418, %v4581
        %4667 = vst.msk [vmem:[#allocation6 + $0xb0] sm:$0xff] %vm2418, %v4583
        %4668 = vst.msk [vmem:[#allocation6 + $0xc0] sm:$0xff] %vm2418, %v4585
        %4669 = vst.msk [vmem:[#allocation6 + $0xd0] sm:$0xff] %vm2418, %v4587
        %4670 = vst.msk [vmem:[#allocation6 + $0xe0] sm:$0xff] %vm2418, %v4589
        %4671 = vst.msk [vmem:[#allocation6 + $0xf0] sm:$0xff] %vm2418, %v4591
        %4672 = vst.msk [vmem:[#allocation6 + $0x100] sm:$0xff] %vm2418, %v4593
        %4673 = vst.msk [vmem:[#allocation6 + $0x110] sm:$0xff] %vm2418, %v4595
        %4674 = vst.msk [vmem:[#allocation6 + $0x120] sm:$0xff] %vm2418, %v4597
        %4675 = vst.msk [vmem:[#allocation6 + $0x130] sm:$0xff] %vm2418, %v4599
        %4676 = vst.msk [vmem:[#allocation6 + $0x140] sm:$0xff] %vm2418, %v4601
        %4677 = vst.msk [vmem:[#allocation6 + $0x150] sm:$0xff] %vm2418, %v4603
        %4678 = vst.msk [vmem:[#allocation6 + $0x160] sm:$0xff] %vm2418, %v4605
        %4679 = vst.msk [vmem:[#allocation6 + $0x170] sm:$0xff] %vm2418, %v4607
        %4680 = vst.msk [vmem:[#allocation6 + $0x180] sm:$0xff] %vm2418, %v4609
        %4681 = vst.msk [vmem:[#allocation6 + $0x190] sm:$0xff] %vm2418, %v4611
        %4682 = vst.msk [vmem:[#allocation6 + $0x1a0] sm:$0xff] %vm2418, %v4613
        %4683 = vst.msk [vmem:[#allocation6 + $0x1b0] sm:$0xff] %vm2418, %v4615
        %4684 = vst.msk [vmem:[#allocation6 + $0x1c0] sm:$0xff] %vm2418, %v4617
        %4685 = vst.msk [vmem:[#allocation6 + $0x1d0] sm:$0xff] %vm2418, %v4619
        %4686 = vst.msk [vmem:[#allocation6 + $0x1e0] sm:$0xff] %vm2418, %v4621
        %4687 = vst.msk [vmem:[#allocation6 + $0x1f0] sm:$0xff] %vm2418, %v4623
        %v4688 = vld [vmem:[%s4111 + $0x3] sm:$0xff]
        %v4689 = vld [vmem:[%s4111 + $0xb] sm:$0xff]
        %v4690 = vld [vmem:[%s4111 + $0x1b] sm:$0xff]
        %v4691 = vld [vmem:[%s4111 + $0x23] sm:$0xff]
        %v4692 = vld [vmem:[%s4111 + $0x33] sm:$0xff]
        %v4693 = vld [vmem:[%s4111 + $0x3b] sm:$0xff]
        %v4694 = vld [vmem:[%s4111 + $0x4b] sm:$0xff]
        %v4695 = vld [vmem:[%s4111 + $0x53] sm:$0xff]
        %v4696 = vld [vmem:[%s4111 + $0x63] sm:$0xff]
        %v4697 = vld [vmem:[%s4111 + $0x6b] sm:$0xff]
        %v4698 = vld [vmem:[%s4111 + $0x7b] sm:$0xff]
        %v4699 = vld [vmem:[%s4111 + $0x83] sm:$0xff]
        %v4700 = vld [vmem:[%s4111 + $0x93] sm:$0xff]
        %v4701 = vld [vmem:[%s4111 + $0x9b] sm:$0xff]
        %v4702 = vld [vmem:[%s4111 + $0xab] sm:$0xff]
        %v4703 = vld [vmem:[%s4111 + $0xb3] sm:$0xff]
        %v4704 = vld [vmem:[%s4111 + $0xc3] sm:$0xff]
        %v4705 = vld [vmem:[%s4111 + $0xcb] sm:$0xff]
        %v4706 = vld [vmem:[%s4111 + $0xdb] sm:$0xff]
        %v4707 = vld [vmem:[%s4111 + $0xe3] sm:$0xff]
        %v4708 = vld [vmem:[%s4111 + $0xf3] sm:$0xff]
        %v4709 = vld [vmem:[%s4111 + $0xfb] sm:$0xff]
        %v4710 = vld [vmem:[%s4111 + $0x10b] sm:$0xff]
        %v4711 = vld [vmem:[%s4111 + $0x113] sm:$0xff]
        %v4712 = vld [vmem:[%s4111 + $0x123] sm:$0xff]
        %v4713 = vld [vmem:[%s4111 + $0x12b] sm:$0xff]
        %v4714 = vld [vmem:[%s4111 + $0x13b] sm:$0xff]
        %v4715 = vld [vmem:[%s4111 + $0x143] sm:$0xff]
        %v4716 = vld [vmem:[%s4111 + $0x153] sm:$0xff]
        %v4717 = vld [vmem:[%s4111 + $0x15b] sm:$0xff]
        %v4718 = vld [vmem:[%s4111 + $0x16b] sm:$0xff]
        %v4719 = vld [vmem:[%s4111 + $0x173] sm:$0xff]
        %4752 = vrot.lane.b32.xlu0 %v4688, 64
        %v4753 = vpop.permute.xlu0 %4752
        %4754 = vrot.lane.b32.xlu0 %v4689, 64
        %v4755 = vpop.permute.xlu0 %4754
        %4756 = vrot.lane.b32.xlu0 %v4690, 64
        %v4757 = vpop.permute.xlu0 %4756
        %4758 = vrot.lane.b32.xlu0 %v4691, 64
        %v4759 = vpop.permute.xlu0 %4758
        %4760 = vrot.lane.b32.xlu0 %v4692, 64
        %v4761 = vpop.permute.xlu0 %4760
        %4762 = vrot.lane.b32.xlu0 %v4693, 64
        %v4763 = vpop.permute.xlu0 %4762
        %4764 = vrot.lane.b32.xlu0 %v4694, 64
        %v4765 = vpop.permute.xlu0 %4764
        %4766 = vrot.lane.b32.xlu0 %v4695, 64
        %v4767 = vpop.permute.xlu0 %4766
        %4768 = vrot.lane.b32.xlu0 %v4696, 64
        %v4769 = vpop.permute.xlu0 %4768
        %4770 = vrot.lane.b32.xlu0 %v4697, 64
        %v4771 = vpop.permute.xlu0 %4770
        %4772 = vrot.lane.b32.xlu0 %v4698, 64
        %v4773 = vpop.permute.xlu0 %4772
        %4774 = vrot.lane.b32.xlu0 %v4699, 64
        %v4775 = vpop.permute.xlu0 %4774
        %4776 = vrot.lane.b32.xlu0 %v4700, 64
        %v4777 = vpop.permute.xlu0 %4776
        %4778 = vrot.lane.b32.xlu0 %v4701, 64
        %v4779 = vpop.permute.xlu0 %4778
        %4780 = vrot.lane.b32.xlu0 %v4702, 64
        %v4781 = vpop.permute.xlu0 %4780
        %4782 = vrot.lane.b32.xlu0 %v4703, 64
        %v4783 = vpop.permute.xlu0 %4782
        %4784 = vrot.lane.b32.xlu0 %v4704, 64
        %v4785 = vpop.permute.xlu0 %4784
        %4786 = vrot.lane.b32.xlu0 %v4705, 64
        %v4787 = vpop.permute.xlu0 %4786
        %4788 = vrot.lane.b32.xlu0 %v4706, 64
        %v4789 = vpop.permute.xlu0 %4788
        %4790 = vrot.lane.b32.xlu0 %v4707, 64
        %v4791 = vpop.permute.xlu0 %4790
        %4792 = vrot.lane.b32.xlu0 %v4708, 64
        %v4793 = vpop.permute.xlu0 %4792
        %4794 = vrot.lane.b32.xlu0 %v4709, 64
        %v4795 = vpop.permute.xlu0 %4794
        %4796 = vrot.lane.b32.xlu0 %v4710, 64
        %v4797 = vpop.permute.xlu0 %4796
        %4798 = vrot.lane.b32.xlu0 %v4711, 64
        %v4799 = vpop.permute.xlu0 %4798
        %4800 = vrot.lane.b32.xlu0 %v4712, 64
        %v4801 = vpop.permute.xlu0 %4800
        %4802 = vrot.lane.b32.xlu0 %v4713, 64
        %v4803 = vpop.permute.xlu0 %4802
        %4804 = vrot.lane.b32.xlu0 %v4714, 64
        %v4805 = vpop.permute.xlu0 %4804
        %4806 = vrot.lane.b32.xlu0 %v4715, 64
        %v4807 = vpop.permute.xlu0 %4806
        %4808 = vrot.lane.b32.xlu0 %v4716, 64
        %v4809 = vpop.permute.xlu0 %4808
        %4810 = vrot.lane.b32.xlu0 %v4717, 64
        %v4811 = vpop.permute.xlu0 %4810
        %4812 = vrot.lane.b32.xlu0 %v4718, 64
        %v4813 = vpop.permute.xlu0 %4812
        %4814 = vrot.lane.b32.xlu0 %v4719, 64
        %v4815 = vpop.permute.xlu0 %4814
        %4848 = vst.msk [vmem:[#allocation6] sm:$0xff] %vm2611, %v4753
        %4849 = vst.msk [vmem:[#allocation6 + $0x10] sm:$0xff] %vm2611, %v4755
        %4850 = vst.msk [vmem:[#allocation6 + $0x20] sm:$0xff] %vm2611, %v4757
        %4851 = vst.msk [vmem:[#allocation6 + $0x30] sm:$0xff] %vm2611, %v4759
        %4852 = vst.msk [vmem:[#allocation6 + $0x40] sm:$0xff] %vm2611, %v4761
        %4853 = vst.msk [vmem:[#allocation6 + $0x50] sm:$0xff] %vm2611, %v4763
        %4854 = vst.msk [vmem:[#allocation6 + $0x60] sm:$0xff] %vm2611, %v4765
        %4855 = vst.msk [vmem:[#allocation6 + $0x70] sm:$0xff] %vm2611, %v4767
        %4856 = vst.msk [vmem:[#allocation6 + $0x80] sm:$0xff] %vm2611, %v4769
        %4857 = vst.msk [vmem:[#allocation6 + $0x90] sm:$0xff] %vm2611, %v4771
        %4858 = vst.msk [vmem:[#allocation6 + $0xa0] sm:$0xff] %vm2611, %v4773
        %4859 = vst.msk [vmem:[#allocation6 + $0xb0] sm:$0xff] %vm2611, %v4775
        %4860 = vst.msk [vmem:[#allocation6 + $0xc0] sm:$0xff] %vm2611, %v4777
        %4861 = vst.msk [vmem:[#allocation6 + $0xd0] sm:$0xff] %vm2611, %v4779
        %4862 = vst.msk [vmem:[#allocation6 + $0xe0] sm:$0xff] %vm2611, %v4781
        %4863 = vst.msk [vmem:[#allocation6 + $0xf0] sm:$0xff] %vm2611, %v4783
        %4864 = vst.msk [vmem:[#allocation6 + $0x100] sm:$0xff] %vm2611, %v4785
        %4865 = vst.msk [vmem:[#allocation6 + $0x110] sm:$0xff] %vm2611, %v4787
        %4866 = vst.msk [vmem:[#allocation6 + $0x120] sm:$0xff] %vm2611, %v4789
        %4867 = vst.msk [vmem:[#allocation6 + $0x130] sm:$0xff] %vm2611, %v4791
        %4868 = vst.msk [vmem:[#allocation6 + $0x140] sm:$0xff] %vm2611, %v4793
        %4869 = vst.msk [vmem:[#allocation6 + $0x150] sm:$0xff] %vm2611, %v4795
        %4870 = vst.msk [vmem:[#allocation6 + $0x160] sm:$0xff] %vm2611, %v4797
        %4871 = vst.msk [vmem:[#allocation6 + $0x170] sm:$0xff] %vm2611, %v4799
        %4872 = vst.msk [vmem:[#allocation6 + $0x180] sm:$0xff] %vm2611, %v4801
        %4873 = vst.msk [vmem:[#allocation6 + $0x190] sm:$0xff] %vm2611, %v4803
        %4874 = vst.msk [vmem:[#allocation6 + $0x1a0] sm:$0xff] %vm2611, %v4805
        %4875 = vst.msk [vmem:[#allocation6 + $0x1b0] sm:$0xff] %vm2611, %v4807
        %4876 = vst.msk [vmem:[#allocation6 + $0x1c0] sm:$0xff] %vm2611, %v4809
        %4877 = vst.msk [vmem:[#allocation6 + $0x1d0] sm:$0xff] %vm2611, %v4811
        %4878 = vst.msk [vmem:[#allocation6 + $0x1e0] sm:$0xff] %vm2611, %v4813
        %4879 = vst.msk [vmem:[#allocation6 + $0x1f0] sm:$0xff] %vm2611, %v4815
        %v4880 = vld [vmem:[%s4111 + $0x4] sm:$0xff]
        %v4881 = vld [vmem:[%s4111 + $0xc] sm:$0xff]
        %v4882 = vld [vmem:[%s4111 + $0x1c] sm:$0xff]
        %v4883 = vld [vmem:[%s4111 + $0x24] sm:$0xff]
        %v4884 = vld [vmem:[%s4111 + $0x34] sm:$0xff]
        %v4885 = vld [vmem:[%s4111 + $0x3c] sm:$0xff]
        %v4886 = vld [vmem:[%s4111 + $0x4c] sm:$0xff]
        %v4887 = vld [vmem:[%s4111 + $0x54] sm:$0xff]
        %v4888 = vld [vmem:[%s4111 + $0x64] sm:$0xff]
        %v4889 = vld [vmem:[%s4111 + $0x6c] sm:$0xff]
        %v4890 = vld [vmem:[%s4111 + $0x7c] sm:$0xff]
        %v4891 = vld [vmem:[%s4111 + $0x84] sm:$0xff]
        %v4892 = vld [vmem:[%s4111 + $0x94] sm:$0xff]
        %v4893 = vld [vmem:[%s4111 + $0x9c] sm:$0xff]
        %v4894 = vld [vmem:[%s4111 + $0xac] sm:$0xff]
        %v4895 = vld [vmem:[%s4111 + $0xb4] sm:$0xff]
        %v4896 = vld [vmem:[%s4111 + $0xc4] sm:$0xff]
        %v4897 = vld [vmem:[%s4111 + $0xcc] sm:$0xff]
        %v4898 = vld [vmem:[%s4111 + $0xdc] sm:$0xff]
        %v4899 = vld [vmem:[%s4111 + $0xe4] sm:$0xff]
        %v4900 = vld [vmem:[%s4111 + $0xf4] sm:$0xff]
        %v4901 = vld [vmem:[%s4111 + $0xfc] sm:$0xff]
        %v4902 = vld [vmem:[%s4111 + $0x10c] sm:$0xff]
        %v4903 = vld [vmem:[%s4111 + $0x114] sm:$0xff]
        %v4904 = vld [vmem:[%s4111 + $0x124] sm:$0xff]
        %v4905 = vld [vmem:[%s4111 + $0x12c] sm:$0xff]
        %v4906 = vld [vmem:[%s4111 + $0x13c] sm:$0xff]
        %v4907 = vld [vmem:[%s4111 + $0x144] sm:$0xff]
        %v4908 = vld [vmem:[%s4111 + $0x154] sm:$0xff]
        %v4909 = vld [vmem:[%s4111 + $0x15c] sm:$0xff]
        %v4910 = vld [vmem:[%s4111 + $0x16c] sm:$0xff]
        %v4911 = vld [vmem:[%s4111 + $0x174] sm:$0xff]
        %4944 = vrot.lane.b32.xlu0 %v4880, 72
        %v4945 = vpop.permute.xlu0 %4944
        %4946 = vrot.lane.b32.xlu0 %v4881, 72
        %v4947 = vpop.permute.xlu0 %4946
        %4948 = vrot.lane.b32.xlu0 %v4882, 72
        %v4949 = vpop.permute.xlu0 %4948
        %4950 = vrot.lane.b32.xlu0 %v4883, 72
        %v4951 = vpop.permute.xlu0 %4950
        %4952 = vrot.lane.b32.xlu0 %v4884, 72
        %v4953 = vpop.permute.xlu0 %4952
        %4954 = vrot.lane.b32.xlu0 %v4885, 72
        %v4955 = vpop.permute.xlu0 %4954
        %4956 = vrot.lane.b32.xlu0 %v4886, 72
        %v4957 = vpop.permute.xlu0 %4956
        %4958 = vrot.lane.b32.xlu0 %v4887, 72
        %v4959 = vpop.permute.xlu0 %4958
        %4960 = vrot.lane.b32.xlu0 %v4888, 72
        %v4961 = vpop.permute.xlu0 %4960
        %4962 = vrot.lane.b32.xlu0 %v4889, 72
        %v4963 = vpop.permute.xlu0 %4962
        %4964 = vrot.lane.b32.xlu0 %v4890, 72
        %v4965 = vpop.permute.xlu0 %4964
        %4966 = vrot.lane.b32.xlu0 %v4891, 72
        %v4967 = vpop.permute.xlu0 %4966
        %4968 = vrot.lane.b32.xlu0 %v4892, 72
        %v4969 = vpop.permute.xlu0 %4968
        %4970 = vrot.lane.b32.xlu0 %v4893, 72
        %v4971 = vpop.permute.xlu0 %4970
        %4972 = vrot.lane.b32.xlu0 %v4894, 72
        %v4973 = vpop.permute.xlu0 %4972
        %4974 = vrot.lane.b32.xlu0 %v4895, 72
        %v4975 = vpop.permute.xlu0 %4974
        %4976 = vrot.lane.b32.xlu0 %v4896, 72
        %v4977 = vpop.permute.xlu0 %4976
        %4978 = vrot.lane.b32.xlu0 %v4897, 72
        %v4979 = vpop.permute.xlu0 %4978
        %4980 = vrot.lane.b32.xlu0 %v4898, 72
        %v4981 = vpop.permute.xlu0 %4980
        %4982 = vrot.lane.b32.xlu0 %v4899, 72
        %v4983 = vpop.permute.xlu0 %4982
        %4984 = vrot.lane.b32.xlu0 %v4900, 72
        %v4985 = vpop.permute.xlu0 %4984
        %4986 = vrot.lane.b32.xlu0 %v4901, 72
        %v4987 = vpop.permute.xlu0 %4986
        %4988 = vrot.lane.b32.xlu0 %v4902, 72
        %v4989 = vpop.permute.xlu0 %4988
        %4990 = vrot.lane.b32.xlu0 %v4903, 72
        %v4991 = vpop.permute.xlu0 %4990
        %4992 = vrot.lane.b32.xlu0 %v4904, 72
        %v4993 = vpop.permute.xlu0 %4992
        %4994 = vrot.lane.b32.xlu0 %v4905, 72
        %v4995 = vpop.permute.xlu0 %4994
        %4996 = vrot.lane.b32.xlu0 %v4906, 72
        %v4997 = vpop.permute.xlu0 %4996
        %4998 = vrot.lane.b32.xlu0 %v4907, 72
        %v4999 = vpop.permute.xlu0 %4998
        %5000 = vrot.lane.b32.xlu0 %v4908, 72
        %v5001 = vpop.permute.xlu0 %5000
        %5002 = vrot.lane.b32.xlu0 %v4909, 72
        %v5003 = vpop.permute.xlu0 %5002
        %5004 = vrot.lane.b32.xlu0 %v4910, 72
        %v5005 = vpop.permute.xlu0 %5004
        %5006 = vrot.lane.b32.xlu0 %v4911, 72
        %v5007 = vpop.permute.xlu0 %5006
        %vm5040 = vcmask 654912
        %5041 = vst.msk [vmem:[#allocation6] sm:$0xff] %vm5040, %v4945
        %5042 = vst.msk [vmem:[#allocation6 + $0x10] sm:$0xff] %vm5040, %v4947
        %5043 = vst.msk [vmem:[#allocation6 + $0x20] sm:$0xff] %vm5040, %v4949
        %5044 = vst.msk [vmem:[#allocation6 + $0x30] sm:$0xff] %vm5040, %v4951
        %5045 = vst.msk [vmem:[#allocation6 + $0x40] sm:$0xff] %vm5040, %v4953
        %5046 = vst.msk [vmem:[#allocation6 + $0x50] sm:$0xff] %vm5040, %v4955
        %5047 = vst.msk [vmem:[#allocation6 + $0x60] sm:$0xff] %vm5040, %v4957
        %5048 = vst.msk [vmem:[#allocation6 + $0x70] sm:$0xff] %vm5040, %v4959
        %5049 = vst.msk [vmem:[#allocation6 + $0x80] sm:$0xff] %vm5040, %v4961
        %5050 = vst.msk [vmem:[#allocation6 + $0x90] sm:$0xff] %vm5040, %v4963
        %5051 = vst.msk [vmem:[#allocation6 + $0xa0] sm:$0xff] %vm5040, %v4965
        %5052 = vst.msk [vmem:[#allocation6 + $0xb0] sm:$0xff] %vm5040, %v4967
        %5053 = vst.msk [vmem:[#allocation6 + $0xc0] sm:$0xff] %vm5040, %v4969
        %5054 = vst.msk [vmem:[#allocation6 + $0xd0] sm:$0xff] %vm5040, %v4971
        %5055 = vst.msk [vmem:[#allocation6 + $0xe0] sm:$0xff] %vm5040, %v4973
        %5056 = vst.msk [vmem:[#allocation6 + $0xf0] sm:$0xff] %vm5040, %v4975
        %5057 = vst.msk [vmem:[#allocation6 + $0x100] sm:$0xff] %vm5040, %v4977
        %5058 = vst.msk [vmem:[#allocation6 + $0x110] sm:$0xff] %vm5040, %v4979
        %5059 = vst.msk [vmem:[#allocation6 + $0x120] sm:$0xff] %vm5040, %v4981
        %5060 = vst.msk [vmem:[#allocation6 + $0x130] sm:$0xff] %vm5040, %v4983
        %5061 = vst.msk [vmem:[#allocation6 + $0x140] sm:$0xff] %vm5040, %v4985
        %5062 = vst.msk [vmem:[#allocation6 + $0x150] sm:$0xff] %vm5040, %v4987
        %5063 = vst.msk [vmem:[#allocation6 + $0x160] sm:$0xff] %vm5040, %v4989
        %5064 = vst.msk [vmem:[#allocation6 + $0x170] sm:$0xff] %vm5040, %v4991
        %5065 = vst.msk [vmem:[#allocation6 + $0x180] sm:$0xff] %vm5040, %v4993
        %5066 = vst.msk [vmem:[#allocation6 + $0x190] sm:$0xff] %vm5040, %v4995
        %5067 = vst.msk [vmem:[#allocation6 + $0x1a0] sm:$0xff] %vm5040, %v4997
        %5068 = vst.msk [vmem:[#allocation6 + $0x1b0] sm:$0xff] %vm5040, %v4999
        %5069 = vst.msk [vmem:[#allocation6 + $0x1c0] sm:$0xff] %vm5040, %v5001
        %5070 = vst.msk [vmem:[#allocation6 + $0x1d0] sm:$0xff] %vm5040, %v5003
        %5071 = vst.msk [vmem:[#allocation6 + $0x1e0] sm:$0xff] %vm5040, %v5005
        %5072 = vst.msk [vmem:[#allocation6 + $0x1f0] sm:$0xff] %vm5040, %v5007
        %v5073 = vld [vmem:[%s3246] sm:$0xff]
        %v5074 = vld [vmem:[%s3246 + $0x8] sm:$0xff]
        %v5075 = vld [vmem:[%s3246 + $0x18] sm:$0xff]
        %v5076 = vld [vmem:[%s3246 + $0x20] sm:$0xff]
        %v5077 = vld [vmem:[%s3246 + $0x30] sm:$0xff]
        %v5078 = vld [vmem:[%s3246 + $0x38] sm:$0xff]
        %v5079 = vld [vmem:[%s3246 + $0x48] sm:$0xff]
        %v5080 = vld [vmem:[%s3246 + $0x50] sm:$0xff]
        %v5081 = vld [vmem:[%s3246 + $0x60] sm:$0xff]
        %v5082 = vld [vmem:[%s3246 + $0x68] sm:$0xff]
        %v5083 = vld [vmem:[%s3246 + $0x78] sm:$0xff]
        %v5084 = vld [vmem:[%s3246 + $0x80] sm:$0xff]
        %v5085 = vld [vmem:[%s3246 + $0x90] sm:$0xff]
        %v5086 = vld [vmem:[%s3246 + $0x98] sm:$0xff]
        %v5087 = vld [vmem:[%s3246 + $0xa8] sm:$0xff]
        %v5088 = vld [vmem:[%s3246 + $0xb0] sm:$0xff]
        %v5089 = vld [vmem:[%s3246 + $0xc0] sm:$0xff]
        %v5090 = vld [vmem:[%s3246 + $0xc8] sm:$0xff]
        %v5091 = vld [vmem:[%s3246 + $0xd8] sm:$0xff]
        %v5092 = vld [vmem:[%s3246 + $0xe0] sm:$0xff]
        %v5093 = vld [vmem:[%s3246 + $0xf0] sm:$0xff]
        %v5094 = vld [vmem:[%s3246 + $0xf8] sm:$0xff]
        %v5095 = vld [vmem:[%s3246 + $0x108] sm:$0xff]
        %v5096 = vld [vmem:[%s3246 + $0x110] sm:$0xff]
        %v5097 = vld [vmem:[%s3246 + $0x120] sm:$0xff]
        %v5098 = vld [vmem:[%s3246 + $0x128] sm:$0xff]
        %v5099 = vld [vmem:[%s3246 + $0x138] sm:$0xff]
        %v5100 = vld [vmem:[%s3246 + $0x140] sm:$0xff]
        %v5101 = vld [vmem:[%s3246 + $0x150] sm:$0xff]
        %v5102 = vld [vmem:[%s3246 + $0x158] sm:$0xff]
        %v5103 = vld [vmem:[%s3246 + $0x168] sm:$0xff]
        %v5104 = vld [vmem:[%s3246 + $0x170] sm:$0xff]
        %5137 = vrot.lane.b32.xlu0 %v5073, 80
        %v5138 = vpop.permute.xlu0 %5137
        %5139 = vrot.lane.b32.xlu0 %v5074, 80
        %v5140 = vpop.permute.xlu0 %5139
        %5141 = vrot.lane.b32.xlu0 %v5075, 80
        %v5142 = vpop.permute.xlu0 %5141
        %5143 = vrot.lane.b32.xlu0 %v5076, 80
        %v5144 = vpop.permute.xlu0 %5143
        %5145 = vrot.lane.b32.xlu0 %v5077, 80
        %v5146 = vpop.permute.xlu0 %5145
        %5147 = vrot.lane.b32.xlu0 %v5078, 80
        %v5148 = vpop.permute.xlu0 %5147
        %5149 = vrot.lane.b32.xlu0 %v5079, 80
        %v5150 = vpop.permute.xlu0 %5149
        %5151 = vrot.lane.b32.xlu0 %v5080, 80
        %v5152 = vpop.permute.xlu0 %5151
        %5153 = vrot.lane.b32.xlu0 %v5081, 80
        %v5154 = vpop.permute.xlu0 %5153
        %5155 = vrot.lane.b32.xlu0 %v5082, 80
        %v5156 = vpop.permute.xlu0 %5155
        %5157 = vrot.lane.b32.xlu0 %v5083, 80
        %v5158 = vpop.permute.xlu0 %5157
        %5159 = vrot.lane.b32.xlu0 %v5084, 80
        %v5160 = vpop.permute.xlu0 %5159
        %5161 = vrot.lane.b32.xlu0 %v5085, 80
        %v5162 = vpop.permute.xlu0 %5161
        %5163 = vrot.lane.b32.xlu0 %v5086, 80
        %v5164 = vpop.permute.xlu0 %5163
        %5165 = vrot.lane.b32.xlu0 %v5087, 80
        %v5166 = vpop.permute.xlu0 %5165
        %5167 = vrot.lane.b32.xlu0 %v5088, 80
        %v5168 = vpop.permute.xlu0 %5167
        %5169 = vrot.lane.b32.xlu0 %v5089, 80
        %v5170 = vpop.permute.xlu0 %5169
        %5171 = vrot.lane.b32.xlu0 %v5090, 80
        %v5172 = vpop.permute.xlu0 %5171
        %5173 = vrot.lane.b32.xlu0 %v5091, 80
        %v5174 = vpop.permute.xlu0 %5173
        %5175 = vrot.lane.b32.xlu0 %v5092, 80
        %v5176 = vpop.permute.xlu0 %5175
        %5177 = vrot.lane.b32.xlu0 %v5093, 80
        %v5178 = vpop.permute.xlu0 %5177
        %5179 = vrot.lane.b32.xlu0 %v5094, 80
        %v5180 = vpop.permute.xlu0 %5179
        %5181 = vrot.lane.b32.xlu0 %v5095, 80
        %v5182 = vpop.permute.xlu0 %5181
        %5183 = vrot.lane.b32.xlu0 %v5096, 80
        %v5184 = vpop.permute.xlu0 %5183
        %5185 = vrot.lane.b32.xlu0 %v5097, 80
        %v5186 = vpop.permute.xlu0 %5185
        %5187 = vrot.lane.b32.xlu0 %v5098, 80
        %v5188 = vpop.permute.xlu0 %5187
        %5189 = vrot.lane.b32.xlu0 %v5099, 80
        %v5190 = vpop.permute.xlu0 %5189
        %5191 = vrot.lane.b32.xlu0 %v5100, 80
        %v5192 = vpop.permute.xlu0 %5191
        %5193 = vrot.lane.b32.xlu0 %v5101, 80
        %v5194 = vpop.permute.xlu0 %5193
        %5195 = vrot.lane.b32.xlu0 %v5102, 80
        %v5196 = vpop.permute.xlu0 %5195
        %5197 = vrot.lane.b32.xlu0 %v5103, 80
        %v5198 = vpop.permute.xlu0 %5197
        %5199 = vrot.lane.b32.xlu0 %v5104, 80
        %v5200 = vpop.permute.xlu0 %5199
        %vm5233 = vcmask 720512
        %5234 = vst.msk [vmem:[#allocation6] sm:$0xff] %vm5233, %v5138
        %5235 = vst.msk [vmem:[#allocation6 + $0x10] sm:$0xff] %vm5233, %v5140
        %5236 = vst.msk [vmem:[#allocation6 + $0x20] sm:$0xff] %vm5233, %v5142
        %5237 = vst.msk [vmem:[#allocation6 + $0x30] sm:$0xff] %vm5233, %v5144
        %5238 = vst.msk [vmem:[#allocation6 + $0x40] sm:$0xff] %vm5233, %v5146
        %5239 = vst.msk [vmem:[#allocation6 + $0x50] sm:$0xff] %vm5233, %v5148
        %5240 = vst.msk [vmem:[#allocation6 + $0x60] sm:$0xff] %vm5233, %v5150
        %5241 = vst.msk [vmem:[#allocation6 + $0x70] sm:$0xff] %vm5233, %v5152
        %5242 = vst.msk [vmem:[#allocation6 + $0x80] sm:$0xff] %vm5233, %v5154
        %5243 = vst.msk [vmem:[#allocation6 + $0x90] sm:$0xff] %vm5233, %v5156
        %5244 = vst.msk [vmem:[#allocation6 + $0xa0] sm:$0xff] %vm5233, %v5158
        %5245 = vst.msk [vmem:[#allocation6 + $0xb0] sm:$0xff] %vm5233, %v5160
        %5246 = vst.msk [vmem:[#allocation6 + $0xc0] sm:$0xff] %vm5233, %v5162
        %5247 = vst.msk [vmem:[#allocation6 + $0xd0] sm:$0xff] %vm5233, %v5164
        %5248 = vst.msk [vmem:[#allocation6 + $0xe0] sm:$0xff] %vm5233, %v5166
        %5249 = vst.msk [vmem:[#allocation6 + $0xf0] sm:$0xff] %vm5233, %v5168
        %5250 = vst.msk [vmem:[#allocation6 + $0x100] sm:$0xff] %vm5233, %v5170
        %5251 = vst.msk [vmem:[#allocation6 + $0x110] sm:$0xff] %vm5233, %v5172
        %5252 = vst.msk [vmem:[#allocation6 + $0x120] sm:$0xff] %vm5233, %v5174
        %5253 = vst.msk [vmem:[#allocation6 + $0x130] sm:$0xff] %vm5233, %v5176
        %5254 = vst.msk [vmem:[#allocation6 + $0x140] sm:$0xff] %vm5233, %v5178
        %5255 = vst.msk [vmem:[#allocation6 + $0x150] sm:$0xff] %vm5233, %v5180
        %5256 = vst.msk [vmem:[#allocation6 + $0x160] sm:$0xff] %vm5233, %v5182
        %5257 = vst.msk [vmem:[#allocation6 + $0x170] sm:$0xff] %vm5233, %v5184
        %5258 = vst.msk [vmem:[#allocation6 + $0x180] sm:$0xff] %vm5233, %v5186
        %5259 = vst.msk [vmem:[#allocation6 + $0x190] sm:$0xff] %vm5233, %v5188
        %5260 = vst.msk [vmem:[#allocation6 + $0x1a0] sm:$0xff] %vm5233, %v5190
        %5261 = vst.msk [vmem:[#allocation6 + $0x1b0] sm:$0xff] %vm5233, %v5192
        %5262 = vst.msk [vmem:[#allocation6 + $0x1c0] sm:$0xff] %vm5233, %v5194
        %5263 = vst.msk [vmem:[#allocation6 + $0x1d0] sm:$0xff] %vm5233, %v5196
        %5264 = vst.msk [vmem:[#allocation6 + $0x1e0] sm:$0xff] %vm5233, %v5198
        %5265 = vst.msk [vmem:[#allocation6 + $0x1f0] sm:$0xff] %vm5233, %v5200
        %v5266 = vld [vmem:[%s3246 + $0x1] sm:$0xff]
        %v5267 = vld [vmem:[%s3246 + $0x9] sm:$0xff]
        %v5268 = vld [vmem:[%s3246 + $0x19] sm:$0xff]
        %v5269 = vld [vmem:[%s3246 + $0x21] sm:$0xff]
        %v5270 = vld [vmem:[%s3246 + $0x31] sm:$0xff]
        %v5271 = vld [vmem:[%s3246 + $0x39] sm:$0xff]
        %v5272 = vld [vmem:[%s3246 + $0x49] sm:$0xff]
        %v5273 = vld [vmem:[%s3246 + $0x51] sm:$0xff]
        %v5274 = vld [vmem:[%s3246 + $0x61] sm:$0xff]
        %v5275 = vld [vmem:[%s3246 + $0x69] sm:$0xff]
        %v5276 = vld [vmem:[%s3246 + $0x79] sm:$0xff]
        %v5277 = vld [vmem:[%s3246 + $0x81] sm:$0xff]
        %v5278 = vld [vmem:[%s3246 + $0x91] sm:$0xff]
        %v5279 = vld [vmem:[%s3246 + $0x99] sm:$0xff]
        %v5280 = vld [vmem:[%s3246 + $0xa9] sm:$0xff]
        %v5281 = vld [vmem:[%s3246 + $0xb1] sm:$0xff]
        %v5282 = vld [vmem:[%s3246 + $0xc1] sm:$0xff]
        %v5283 = vld [vmem:[%s3246 + $0xc9] sm:$0xff]
        %v5284 = vld [vmem:[%s3246 + $0xd9] sm:$0xff]
        %v5285 = vld [vmem:[%s3246 + $0xe1] sm:$0xff]
        %v5286 = vld [vmem:[%s3246 + $0xf1] sm:$0xff]
        %v5287 = vld [vmem:[%s3246 + $0xf9] sm:$0xff]
        %v5288 = vld [vmem:[%s3246 + $0x109] sm:$0xff]
        %v5289 = vld [vmem:[%s3246 + $0x111] sm:$0xff]
        %v5290 = vld [vmem:[%s3246 + $0x121] sm:$0xff]
        %v5291 = vld [vmem:[%s3246 + $0x129] sm:$0xff]
        %v5292 = vld [vmem:[%s3246 + $0x139] sm:$0xff]
        %v5293 = vld [vmem:[%s3246 + $0x141] sm:$0xff]
        %v5294 = vld [vmem:[%s3246 + $0x151] sm:$0xff]
        %v5295 = vld [vmem:[%s3246 + $0x159] sm:$0xff]
        %v5296 = vld [vmem:[%s3246 + $0x169] sm:$0xff]
        %v5297 = vld [vmem:[%s3246 + $0x171] sm:$0xff]
        %5330 = vrot.lane.b32.xlu0 %v5266, 88
        %v5331 = vpop.permute.xlu0 %5330
        %5332 = vrot.lane.b32.xlu0 %v5267, 88
        %v5333 = vpop.permute.xlu0 %5332
        %5334 = vrot.lane.b32.xlu0 %v5268, 88
        %v5335 = vpop.permute.xlu0 %5334
        %5336 = vrot.lane.b32.xlu0 %v5269, 88
        %v5337 = vpop.permute.xlu0 %5336
        %5338 = vrot.lane.b32.xlu0 %v5270, 88
        %v5339 = vpop.permute.xlu0 %5338
        %5340 = vrot.lane.b32.xlu0 %v5271, 88
        %v5341 = vpop.permute.xlu0 %5340
        %5342 = vrot.lane.b32.xlu0 %v5272, 88
        %v5343 = vpop.permute.xlu0 %5342
        %5344 = vrot.lane.b32.xlu0 %v5273, 88
        %v5345 = vpop.permute.xlu0 %5344
        %5346 = vrot.lane.b32.xlu0 %v5274, 88
        %v5347 = vpop.permute.xlu0 %5346
        %5348 = vrot.lane.b32.xlu0 %v5275, 88
        %v5349 = vpop.permute.xlu0 %5348
        %5350 = vrot.lane.b32.xlu0 %v5276, 88
        %v5351 = vpop.permute.xlu0 %5350
        %5352 = vrot.lane.b32.xlu0 %v5277, 88
        %v5353 = vpop.permute.xlu0 %5352
        %5354 = vrot.lane.b32.xlu0 %v5278, 88
        %v5355 = vpop.permute.xlu0 %5354
        %5356 = vrot.lane.b32.xlu0 %v5279, 88
        %v5357 = vpop.permute.xlu0 %5356
        %5358 = vrot.lane.b32.xlu0 %v5280, 88
        %v5359 = vpop.permute.xlu0 %5358
        %5360 = vrot.lane.b32.xlu0 %v5281, 88
        %v5361 = vpop.permute.xlu0 %5360
        %5362 = vrot.lane.b32.xlu0 %v5282, 88
        %v5363 = vpop.permute.xlu0 %5362
        %5364 = vrot.lane.b32.xlu0 %v5283, 88
        %v5365 = vpop.permute.xlu0 %5364
        %5366 = vrot.lane.b32.xlu0 %v5284, 88
        %v5367 = vpop.permute.xlu0 %5366
        %5368 = vrot.lane.b32.xlu0 %v5285, 88
        %v5369 = vpop.permute.xlu0 %5368
        %5370 = vrot.lane.b32.xlu0 %v5286, 88
        %v5371 = vpop.permute.xlu0 %5370
        %5372 = vrot.lane.b32.xlu0 %v5287, 88
        %v5373 = vpop.permute.xlu0 %5372
        %5374 = vrot.lane.b32.xlu0 %v5288, 88
        %v5375 = vpop.permute.xlu0 %5374
        %5376 = vrot.lane.b32.xlu0 %v5289, 88
        %v5377 = vpop.permute.xlu0 %5376
        %5378 = vrot.lane.b32.xlu0 %v5290, 88
        %v5379 = vpop.permute.xlu0 %5378
        %5380 = vrot.lane.b32.xlu0 %v5291, 88
        %v5381 = vpop.permute.xlu0 %5380
        %5382 = vrot.lane.b32.xlu0 %v5292, 88
        %v5383 = vpop.permute.xlu0 %5382
        %5384 = vrot.lane.b32.xlu0 %v5293, 88
        %v5385 = vpop.permute.xlu0 %5384
        %5386 = vrot.lane.b32.xlu0 %v5294, 88
        %v5387 = vpop.permute.xlu0 %5386
        %5388 = vrot.lane.b32.xlu0 %v5295, 88
        %v5389 = vpop.permute.xlu0 %5388
        %5390 = vrot.lane.b32.xlu0 %v5296, 88
        %v5391 = vpop.permute.xlu0 %5390
        %5392 = vrot.lane.b32.xlu0 %v5297, 88
        %v5393 = vpop.permute.xlu0 %5392
        %vm5426 = vcmask 786112
        %5427 = vst.msk [vmem:[#allocation6] sm:$0xff] %vm5426, %v5331
        %5428 = vst.msk [vmem:[#allocation6 + $0x10] sm:$0xff] %vm5426, %v5333
        %5429 = vst.msk [vmem:[#allocation6 + $0x20] sm:$0xff] %vm5426, %v5335
        %5430 = vst.msk [vmem:[#allocation6 + $0x30] sm:$0xff] %vm5426, %v5337
        %5431 = vst.msk [vmem:[#allocation6 + $0x40] sm:$0xff] %vm5426, %v5339
        %5432 = vst.msk [vmem:[#allocation6 + $0x50] sm:$0xff] %vm5426, %v5341
        %5433 = vst.msk [vmem:[#allocation6 + $0x60] sm:$0xff] %vm5426, %v5343
        %5434 = vst.msk [vmem:[#allocation6 + $0x70] sm:$0xff] %vm5426, %v5345
        %5435 = vst.msk [vmem:[#allocation6 + $0x80] sm:$0xff] %vm5426, %v5347
        %5436 = vst.msk [vmem:[#allocation6 + $0x90] sm:$0xff] %vm5426, %v5349
        %5437 = vst.msk [vmem:[#allocation6 + $0xa0] sm:$0xff] %vm5426, %v5351
        %5438 = vst.msk [vmem:[#allocation6 + $0xb0] sm:$0xff] %vm5426, %v5353
        %5439 = vst.msk [vmem:[#allocation6 + $0xc0] sm:$0xff] %vm5426, %v5355
        %5440 = vst.msk [vmem:[#allocation6 + $0xd0] sm:$0xff] %vm5426, %v5357
        %5441 = vst.msk [vmem:[#allocation6 + $0xe0] sm:$0xff] %vm5426, %v5359
        %5442 = vst.msk [vmem:[#allocation6 + $0xf0] sm:$0xff] %vm5426, %v5361
        %5443 = vst.msk [vmem:[#allocation6 + $0x100] sm:$0xff] %vm5426, %v5363
        %5444 = vst.msk [vmem:[#allocation6 + $0x110] sm:$0xff] %vm5426, %v5365
        %5445 = vst.msk [vmem:[#allocation6 + $0x120] sm:$0xff] %vm5426, %v5367
        %5446 = vst.msk [vmem:[#allocation6 + $0x130] sm:$0xff] %vm5426, %v5369
        %5447 = vst.msk [vmem:[#allocation6 + $0x140] sm:$0xff] %vm5426, %v5371
        %5448 = vst.msk [vmem:[#allocation6 + $0x150] sm:$0xff] %vm5426, %v5373
        %5449 = vst.msk [vmem:[#allocation6 + $0x160] sm:$0xff] %vm5426, %v5375
        %5450 = vst.msk [vmem:[#allocation6 + $0x170] sm:$0xff] %vm5426, %v5377
        %5451 = vst.msk [vmem:[#allocation6 + $0x180] sm:$0xff] %vm5426, %v5379
        %5452 = vst.msk [vmem:[#allocation6 + $0x190] sm:$0xff] %vm5426, %v5381
        %5453 = vst.msk [vmem:[#allocation6 + $0x1a0] sm:$0xff] %vm5426, %v5383
        %5454 = vst.msk [vmem:[#allocation6 + $0x1b0] sm:$0xff] %vm5426, %v5385
        %5455 = vst.msk [vmem:[#allocation6 + $0x1c0] sm:$0xff] %vm5426, %v5387
        %5456 = vst.msk [vmem:[#allocation6 + $0x1d0] sm:$0xff] %vm5426, %v5389
        %5457 = vst.msk [vmem:[#allocation6 + $0x1e0] sm:$0xff] %vm5426, %v5391
        %5458 = vst.msk [vmem:[#allocation6 + $0x1f0] sm:$0xff] %vm5426, %v5393
        %v5459 = vld [vmem:[%s3246 + $0x2] sm:$0xff]
        %v5460 = vld [vmem:[%s3246 + $0xa] sm:$0xff]
        %v5461 = vld [vmem:[%s3246 + $0x1a] sm:$0xff]
        %v5462 = vld [vmem:[%s3246 + $0x22] sm:$0xff]
        %v5463 = vld [vmem:[%s3246 + $0x32] sm:$0xff]
        %v5464 = vld [vmem:[%s3246 + $0x3a] sm:$0xff]
        %v5465 = vld [vmem:[%s3246 + $0x4a] sm:$0xff]
        %v5466 = vld [vmem:[%s3246 + $0x52] sm:$0xff]
        %v5467 = vld [vmem:[%s3246 + $0x62] sm:$0xff]
        %v5468 = vld [vmem:[%s3246 + $0x6a] sm:$0xff]
        %v5469 = vld [vmem:[%s3246 + $0x7a] sm:$0xff]
        %v5470 = vld [vmem:[%s3246 + $0x82] sm:$0xff]
        %v5471 = vld [vmem:[%s3246 + $0x92] sm:$0xff]
        %v5472 = vld [vmem:[%s3246 + $0x9a] sm:$0xff]
        %v5473 = vld [vmem:[%s3246 + $0xaa] sm:$0xff]
        %v5474 = vld [vmem:[%s3246 + $0xb2] sm:$0xff]
        %v5475 = vld [vmem:[%s3246 + $0xc2] sm:$0xff]
        %v5476 = vld [vmem:[%s3246 + $0xca] sm:$0xff]
        %v5477 = vld [vmem:[%s3246 + $0xda] sm:$0xff]
        %v5478 = vld [vmem:[%s3246 + $0xe2] sm:$0xff]
        %v5479 = vld [vmem:[%s3246 + $0xf2] sm:$0xff]
        %v5480 = vld [vmem:[%s3246 + $0xfa] sm:$0xff]
        %v5481 = vld [vmem:[%s3246 + $0x10a] sm:$0xff]
        %v5482 = vld [vmem:[%s3246 + $0x112] sm:$0xff]
        %v5483 = vld [vmem:[%s3246 + $0x122] sm:$0xff]
        %v5484 = vld [vmem:[%s3246 + $0x12a] sm:$0xff]
        %v5485 = vld [vmem:[%s3246 + $0x13a] sm:$0xff]
        %v5486 = vld [vmem:[%s3246 + $0x142] sm:$0xff]
        %v5487 = vld [vmem:[%s3246 + $0x152] sm:$0xff]
        %v5488 = vld [vmem:[%s3246 + $0x15a] sm:$0xff]
        %v5489 = vld [vmem:[%s3246 + $0x16a] sm:$0xff]
        %v5490 = vld [vmem:[%s3246 + $0x172] sm:$0xff]
        %5523 = vrot.lane.b32.xlu0 %v5459, 96
        %v5524 = vpop.permute.xlu0 %5523
        %5525 = vrot.lane.b32.xlu0 %v5460, 96
        %v5526 = vpop.permute.xlu0 %5525
        %5527 = vrot.lane.b32.xlu0 %v5461, 96
        %v5528 = vpop.permute.xlu0 %5527
        %5529 = vrot.lane.b32.xlu0 %v5462, 96
        %v5530 = vpop.permute.xlu0 %5529
        %5531 = vrot.lane.b32.xlu0 %v5463, 96
        %v5532 = vpop.permute.xlu0 %5531
        %5533 = vrot.lane.b32.xlu0 %v5464, 96
        %v5534 = vpop.permute.xlu0 %5533
        %5535 = vrot.lane.b32.xlu0 %v5465, 96
        %v5536 = vpop.permute.xlu0 %5535
        %5537 = vrot.lane.b32.xlu0 %v5466, 96
        %v5538 = vpop.permute.xlu0 %5537
        %5539 = vrot.lane.b32.xlu0 %v5467, 96
        %v5540 = vpop.permute.xlu0 %5539
        %5541 = vrot.lane.b32.xlu0 %v5468, 96
        %v5542 = vpop.permute.xlu0 %5541
        %5543 = vrot.lane.b32.xlu0 %v5469, 96
        %v5544 = vpop.permute.xlu0 %5543
        %5545 = vrot.lane.b32.xlu0 %v5470, 96
        %v5546 = vpop.permute.xlu0 %5545
        %5547 = vrot.lane.b32.xlu0 %v5471, 96
        %v5548 = vpop.permute.xlu0 %5547
        %5549 = vrot.lane.b32.xlu0 %v5472, 96
        %v5550 = vpop.permute.xlu0 %5549
        %5551 = vrot.lane.b32.xlu0 %v5473, 96
        %v5552 = vpop.permute.xlu0 %5551
        %5553 = vrot.lane.b32.xlu0 %v5474, 96
        %v5554 = vpop.permute.xlu0 %5553
        %5555 = vrot.lane.b32.xlu0 %v5475, 96
        %v5556 = vpop.permute.xlu0 %5555
        %5557 = vrot.lane.b32.xlu0 %v5476, 96
        %v5558 = vpop.permute.xlu0 %5557
        %5559 = vrot.lane.b32.xlu0 %v5477, 96
        %v5560 = vpop.permute.xlu0 %5559
        %5561 = vrot.lane.b32.xlu0 %v5478, 96
        %v5562 = vpop.permute.xlu0 %5561
        %5563 = vrot.lane.b32.xlu0 %v5479, 96
        %v5564 = vpop.permute.xlu0 %5563
        %5565 = vrot.lane.b32.xlu0 %v5480, 96
        %v5566 = vpop.permute.xlu0 %5565
        %5567 = vrot.lane.b32.xlu0 %v5481, 96
        %v5568 = vpop.permute.xlu0 %5567
        %5569 = vrot.lane.b32.xlu0 %v5482, 96
        %v5570 = vpop.permute.xlu0 %5569
        %5571 = vrot.lane.b32.xlu0 %v5483, 96
        %v5572 = vpop.permute.xlu0 %5571
        %5573 = vrot.lane.b32.xlu0 %v5484, 96
        %v5574 = vpop.permute.xlu0 %5573
        %5575 = vrot.lane.b32.xlu0 %v5485, 96
        %v5576 = vpop.permute.xlu0 %5575
        %5577 = vrot.lane.b32.xlu0 %v5486, 96
        %v5578 = vpop.permute.xlu0 %5577
        %5579 = vrot.lane.b32.xlu0 %v5487, 96
        %v5580 = vpop.permute.xlu0 %5579
        %5581 = vrot.lane.b32.xlu0 %v5488, 96
        %v5582 = vpop.permute.xlu0 %5581
        %5583 = vrot.lane.b32.xlu0 %v5489, 96
        %v5584 = vpop.permute.xlu0 %5583
        %5585 = vrot.lane.b32.xlu0 %v5490, 96
        %v5586 = vpop.permute.xlu0 %5585
        %vm5619 = vcmask 851712
        %5620 = vst.msk [vmem:[#allocation6] sm:$0xff] %vm5619, %v5524
        %5621 = vst.msk [vmem:[#allocation6 + $0x10] sm:$0xff] %vm5619, %v5526
        %5622 = vst.msk [vmem:[#allocation6 + $0x20] sm:$0xff] %vm5619, %v5528
        %5623 = vst.msk [vmem:[#allocation6 + $0x30] sm:$0xff] %vm5619, %v5530
        %5624 = vst.msk [vmem:[#allocation6 + $0x40] sm:$0xff] %vm5619, %v5532
        %5625 = vst.msk [vmem:[#allocation6 + $0x50] sm:$0xff] %vm5619, %v5534
        %5626 = vst.msk [vmem:[#allocation6 + $0x60] sm:$0xff] %vm5619, %v5536
        %5627 = vst.msk [vmem:[#allocation6 + $0x70] sm:$0xff] %vm5619, %v5538
        %5628 = vst.msk [vmem:[#allocation6 + $0x80] sm:$0xff] %vm5619, %v5540
        %5629 = vst.msk [vmem:[#allocation6 + $0x90] sm:$0xff] %vm5619, %v5542
        %5630 = vst.msk [vmem:[#allocation6 + $0xa0] sm:$0xff] %vm5619, %v5544
        %5631 = vst.msk [vmem:[#allocation6 + $0xb0] sm:$0xff] %vm5619, %v5546
        %5632 = vst.msk [vmem:[#allocation6 + $0xc0] sm:$0xff] %vm5619, %v5548
        %5633 = vst.msk [vmem:[#allocation6 + $0xd0] sm:$0xff] %vm5619, %v5550
        %5634 = vst.msk [vmem:[#allocation6 + $0xe0] sm:$0xff] %vm5619, %v5552
        %5635 = vst.msk [vmem:[#allocation6 + $0xf0] sm:$0xff] %vm5619, %v5554
        %5636 = vst.msk [vmem:[#allocation6 + $0x100] sm:$0xff] %vm5619, %v5556
        %5637 = vst.msk [vmem:[#allocation6 + $0x110] sm:$0xff] %vm5619, %v5558
        %5638 = vst.msk [vmem:[#allocation6 + $0x120] sm:$0xff] %vm5619, %v5560
        %5639 = vst.msk [vmem:[#allocation6 + $0x130] sm:$0xff] %vm5619, %v5562
        %5640 = vst.msk [vmem:[#allocation6 + $0x140] sm:$0xff] %vm5619, %v5564
        %5641 = vst.msk [vmem:[#allocation6 + $0x150] sm:$0xff] %vm5619, %v5566
        %5642 = vst.msk [vmem:[#allocation6 + $0x160] sm:$0xff] %vm5619, %v5568
        %5643 = vst.msk [vmem:[#allocation6 + $0x170] sm:$0xff] %vm5619, %v5570
        %5644 = vst.msk [vmem:[#allocation6 + $0x180] sm:$0xff] %vm5619, %v5572
        %5645 = vst.msk [vmem:[#allocation6 + $0x190] sm:$0xff] %vm5619, %v5574
        %5646 = vst.msk [vmem:[#allocation6 + $0x1a0] sm:$0xff] %vm5619, %v5576
        %5647 = vst.msk [vmem:[#allocation6 + $0x1b0] sm:$0xff] %vm5619, %v5578
        %5648 = vst.msk [vmem:[#allocation6 + $0x1c0] sm:$0xff] %vm5619, %v5580
        %5649 = vst.msk [vmem:[#allocation6 + $0x1d0] sm:$0xff] %vm5619, %v5582
        %5650 = vst.msk [vmem:[#allocation6 + $0x1e0] sm:$0xff] %vm5619, %v5584
        %5651 = vst.msk [vmem:[#allocation6 + $0x1f0] sm:$0xff] %vm5619, %v5586
        %v5652 = vld [vmem:[%s3246 + $0x3] sm:$0xff]
        %v5653 = vld [vmem:[%s3246 + $0xb] sm:$0xff]
        %v5654 = vld [vmem:[%s3246 + $0x1b] sm:$0xff]
        %v5655 = vld [vmem:[%s3246 + $0x23] sm:$0xff]
        %v5656 = vld [vmem:[%s3246 + $0x33] sm:$0xff]
        %v5657 = vld [vmem:[%s3246 + $0x3b] sm:$0xff]
        %v5658 = vld [vmem:[%s3246 + $0x4b] sm:$0xff]
        %v5659 = vld [vmem:[%s3246 + $0x53] sm:$0xff]
        %v5660 = vld [vmem:[%s3246 + $0x63] sm:$0xff]
        %v5661 = vld [vmem:[%s3246 + $0x6b] sm:$0xff]
        %v5662 = vld [vmem:[%s3246 + $0x7b] sm:$0xff]
        %v5663 = vld [vmem:[%s3246 + $0x83] sm:$0xff]
        %v5664 = vld [vmem:[%s3246 + $0x93] sm:$0xff]
        %v5665 = vld [vmem:[%s3246 + $0x9b] sm:$0xff]
        %v5666 = vld [vmem:[%s3246 + $0xab] sm:$0xff]
        %v5667 = vld [vmem:[%s3246 + $0xb3] sm:$0xff]
        %v5668 = vld [vmem:[%s3246 + $0xc3] sm:$0xff]
        %v5669 = vld [vmem:[%s3246 + $0xcb] sm:$0xff]
        %v5670 = vld [vmem:[%s3246 + $0xdb] sm:$0xff]
        %v5671 = vld [vmem:[%s3246 + $0xe3] sm:$0xff]
        %v5672 = vld [vmem:[%s3246 + $0xf3] sm:$0xff]
        %v5673 = vld [vmem:[%s3246 + $0xfb] sm:$0xff]
        %v5674 = vld [vmem:[%s3246 + $0x10b] sm:$0xff]
        %v5675 = vld [vmem:[%s3246 + $0x113] sm:$0xff]
        %v5676 = vld [vmem:[%s3246 + $0x123] sm:$0xff]
        %v5677 = vld [vmem:[%s3246 + $0x12b] sm:$0xff]
        %v5678 = vld [vmem:[%s3246 + $0x13b] sm:$0xff]
        %v5679 = vld [vmem:[%s3246 + $0x143] sm:$0xff]
        %v5680 = vld [vmem:[%s3246 + $0x153] sm:$0xff]
        %v5681 = vld [vmem:[%s3246 + $0x15b] sm:$0xff]
        %v5682 = vld [vmem:[%s3246 + $0x16b] sm:$0xff]
        %v5683 = vld [vmem:[%s3246 + $0x173] sm:$0xff]
        %5716 = vrot.lane.b32.xlu0 %v5652, 104
        %v5717 = vpop.permute.xlu0 %5716
        %5718 = vrot.lane.b32.xlu0 %v5653, 104
        %v5719 = vpop.permute.xlu0 %5718
        %5720 = vrot.lane.b32.xlu0 %v5654, 104
        %v5721 = vpop.permute.xlu0 %5720
        %5722 = vrot.lane.b32.xlu0 %v5655, 104
        %v5723 = vpop.permute.xlu0 %5722
        %5724 = vrot.lane.b32.xlu0 %v5656, 104
        %v5725 = vpop.permute.xlu0 %5724
        %5726 = vrot.lane.b32.xlu0 %v5657, 104
        %v5727 = vpop.permute.xlu0 %5726
        %5728 = vrot.lane.b32.xlu0 %v5658, 104
        %v5729 = vpop.permute.xlu0 %5728
        %5730 = vrot.lane.b32.xlu0 %v5659, 104
        %v5731 = vpop.permute.xlu0 %5730
        %5732 = vrot.lane.b32.xlu0 %v5660, 104
        %v5733 = vpop.permute.xlu0 %5732
        %5734 = vrot.lane.b32.xlu0 %v5661, 104
        %v5735 = vpop.permute.xlu0 %5734
        %5736 = vrot.lane.b32.xlu0 %v5662, 104
        %v5737 = vpop.permute.xlu0 %5736
        %5738 = vrot.lane.b32.xlu0 %v5663, 104
        %v5739 = vpop.permute.xlu0 %5738
        %5740 = vrot.lane.b32.xlu0 %v5664, 104
        %v5741 = vpop.permute.xlu0 %5740
        %5742 = vrot.lane.b32.xlu0 %v5665, 104
        %v5743 = vpop.permute.xlu0 %5742
        %5744 = vrot.lane.b32.xlu0 %v5666, 104
        %v5745 = vpop.permute.xlu0 %5744
        %5746 = vrot.lane.b32.xlu0 %v5667, 104
        %v5747 = vpop.permute.xlu0 %5746
        %5748 = vrot.lane.b32.xlu0 %v5668, 104
        %v5749 = vpop.permute.xlu0 %5748
        %5750 = vrot.lane.b32.xlu0 %v5669, 104
        %v5751 = vpop.permute.xlu0 %5750
        %5752 = vrot.lane.b32.xlu0 %v5670, 104
        %v5753 = vpop.permute.xlu0 %5752
        %5754 = vrot.lane.b32.xlu0 %v5671, 104
        %v5755 = vpop.permute.xlu0 %5754
        %5756 = vrot.lane.b32.xlu0 %v5672, 104
        %v5757 = vpop.permute.xlu0 %5756
        %5758 = vrot.lane.b32.xlu0 %v5673, 104
        %v5759 = vpop.permute.xlu0 %5758
        %5760 = vrot.lane.b32.xlu0 %v5674, 104
        %v5761 = vpop.permute.xlu0 %5760
        %5762 = vrot.lane.b32.xlu0 %v5675, 104
        %v5763 = vpop.permute.xlu0 %5762
        %5764 = vrot.lane.b32.xlu0 %v5676, 104
        %v5765 = vpop.permute.xlu0 %5764
        %5766 = vrot.lane.b32.xlu0 %v5677, 104
        %v5767 = vpop.permute.xlu0 %5766
        %5768 = vrot.lane.b32.xlu0 %v5678, 104
        %v5769 = vpop.permute.xlu0 %5768
        %5770 = vrot.lane.b32.xlu0 %v5679, 104
        %v5771 = vpop.permute.xlu0 %5770
        %5772 = vrot.lane.b32.xlu0 %v5680, 104
        %v5773 = vpop.permute.xlu0 %5772
        %5774 = vrot.lane.b32.xlu0 %v5681, 104
        %v5775 = vpop.permute.xlu0 %5774
        %5776 = vrot.lane.b32.xlu0 %v5682, 104
        %v5777 = vpop.permute.xlu0 %5776
        %5778 = vrot.lane.b32.xlu0 %v5683, 104
        %v5779 = vpop.permute.xlu0 %5778
        %vm5812 = vcmask 917312
        %5813 = vst.msk [vmem:[#allocation6] sm:$0xff] %vm5812, %v5717
        %5814 = vst.msk [vmem:[#allocation6 + $0x10] sm:$0xff] %vm5812, %v5719
        %5815 = vst.msk [vmem:[#allocation6 + $0x20] sm:$0xff] %vm5812, %v5721
        %5816 = vst.msk [vmem:[#allocation6 + $0x30] sm:$0xff] %vm5812, %v5723
        %5817 = vst.msk [vmem:[#allocation6 + $0x40] sm:$0xff] %vm5812, %v5725
        %5818 = vst.msk [vmem:[#allocation6 + $0x50] sm:$0xff] %vm5812, %v5727
        %5819 = vst.msk [vmem:[#allocation6 + $0x60] sm:$0xff] %vm5812, %v5729
        %5820 = vst.msk [vmem:[#allocation6 + $0x70] sm:$0xff] %vm5812, %v5731
        %5821 = vst.msk [vmem:[#allocation6 + $0x80] sm:$0xff] %vm5812, %v5733
        %5822 = vst.msk [vmem:[#allocation6 + $0x90] sm:$0xff] %vm5812, %v5735
        %5823 = vst.msk [vmem:[#allocation6 + $0xa0] sm:$0xff] %vm5812, %v5737
        %5824 = vst.msk [vmem:[#allocation6 + $0xb0] sm:$0xff] %vm5812, %v5739
        %5825 = vst.msk [vmem:[#allocation6 + $0xc0] sm:$0xff] %vm5812, %v5741
        %5826 = vst.msk [vmem:[#allocation6 + $0xd0] sm:$0xff] %vm5812, %v5743
        %5827 = vst.msk [vmem:[#allocation6 + $0xe0] sm:$0xff] %vm5812, %v5745
        %5828 = vst.msk [vmem:[#allocation6 + $0xf0] sm:$0xff] %vm5812, %v5747
        %5829 = vst.msk [vmem:[#allocation6 + $0x100] sm:$0xff] %vm5812, %v5749
        %5830 = vst.msk [vmem:[#allocation6 + $0x110] sm:$0xff] %vm5812, %v5751
        %5831 = vst.msk [vmem:[#allocation6 + $0x120] sm:$0xff] %vm5812, %v5753
        %5832 = vst.msk [vmem:[#allocation6 + $0x130] sm:$0xff] %vm5812, %v5755
        %5833 = vst.msk [vmem:[#allocation6 + $0x140] sm:$0xff] %vm5812, %v5757
        %5834 = vst.msk [vmem:[#allocation6 + $0x150] sm:$0xff] %vm5812, %v5759
        %5835 = vst.msk [vmem:[#allocation6 + $0x160] sm:$0xff] %vm5812, %v5761
        %5836 = vst.msk [vmem:[#allocation6 + $0x170] sm:$0xff] %vm5812, %v5763
        %5837 = vst.msk [vmem:[#allocation6 + $0x180] sm:$0xff] %vm5812, %v5765
        %5838 = vst.msk [vmem:[#allocation6 + $0x190] sm:$0xff] %vm5812, %v5767
        %5839 = vst.msk [vmem:[#allocation6 + $0x1a0] sm:$0xff] %vm5812, %v5769
        %5840 = vst.msk [vmem:[#allocation6 + $0x1b0] sm:$0xff] %vm5812, %v5771
        %5841 = vst.msk [vmem:[#allocation6 + $0x1c0] sm:$0xff] %vm5812, %v5773
        %5842 = vst.msk [vmem:[#allocation6 + $0x1d0] sm:$0xff] %vm5812, %v5775
        %5843 = vst.msk [vmem:[#allocation6 + $0x1e0] sm:$0xff] %vm5812, %v5777
        %5844 = vst.msk [vmem:[#allocation6 + $0x1f0] sm:$0xff] %vm5812, %v5779
        %v5845 = vld [vmem:[%s3246 + $0x4] sm:$0xff]
        %v5846 = vld [vmem:[%s3246 + $0xc] sm:$0xff]
        %v5847 = vld [vmem:[%s3246 + $0x1c] sm:$0xff]
        %v5848 = vld [vmem:[%s3246 + $0x24] sm:$0xff]
        %v5849 = vld [vmem:[%s3246 + $0x34] sm:$0xff]
        %v5850 = vld [vmem:[%s3246 + $0x3c] sm:$0xff]
        %v5851 = vld [vmem:[%s3246 + $0x4c] sm:$0xff]
        %v5852 = vld [vmem:[%s3246 + $0x54] sm:$0xff]
        %v5853 = vld [vmem:[%s3246 + $0x64] sm:$0xff]
        %v5854 = vld [vmem:[%s3246 + $0x6c] sm:$0xff]
        %v5855 = vld [vmem:[%s3246 + $0x7c] sm:$0xff]
        %v5856 = vld [vmem:[%s3246 + $0x84] sm:$0xff]
        %v5857 = vld [vmem:[%s3246 + $0x94] sm:$0xff]
        %v5858 = vld [vmem:[%s3246 + $0x9c] sm:$0xff]
        %v5859 = vld [vmem:[%s3246 + $0xac] sm:$0xff]
        %v5860 = vld [vmem:[%s3246 + $0xb4] sm:$0xff]
        %v5861 = vld [vmem:[%s3246 + $0xc4] sm:$0xff]
        %v5862 = vld [vmem:[%s3246 + $0xcc] sm:$0xff]
        %v5863 = vld [vmem:[%s3246 + $0xdc] sm:$0xff]
        %v5864 = vld [vmem:[%s3246 + $0xe4] sm:$0xff]
        %v5865 = vld [vmem:[%s3246 + $0xf4] sm:$0xff]
        %v5866 = vld [vmem:[%s3246 + $0xfc] sm:$0xff]
        %v5867 = vld [vmem:[%s3246 + $0x10c] sm:$0xff]
        %v5868 = vld [vmem:[%s3246 + $0x114] sm:$0xff]
        %v5869 = vld [vmem:[%s3246 + $0x124] sm:$0xff]
        %v5870 = vld [vmem:[%s3246 + $0x12c] sm:$0xff]
        %v5871 = vld [vmem:[%s3246 + $0x13c] sm:$0xff]
        %v5872 = vld [vmem:[%s3246 + $0x144] sm:$0xff]
        %v5873 = vld [vmem:[%s3246 + $0x154] sm:$0xff]
        %v5874 = vld [vmem:[%s3246 + $0x15c] sm:$0xff]
        %v5875 = vld [vmem:[%s3246 + $0x16c] sm:$0xff]
        %v5876 = vld [vmem:[%s3246 + $0x174] sm:$0xff]
        %5909 = vrot.lane.b32.xlu0 %v5845, 112
        %v5910 = vpop.permute.xlu0 %5909
        %5911 = vrot.lane.b32.xlu0 %v5846, 112
        %v5912 = vpop.permute.xlu0 %5911
        %5913 = vrot.lane.b32.xlu0 %v5847, 112
        %v5914 = vpop.permute.xlu0 %5913
        %5915 = vrot.lane.b32.xlu0 %v5848, 112
        %v5916 = vpop.permute.xlu0 %5915
        %5917 = vrot.lane.b32.xlu0 %v5849, 112
        %v5918 = vpop.permute.xlu0 %5917
        %5919 = vrot.lane.b32.xlu0 %v5850, 112
        %v5920 = vpop.permute.xlu0 %5919
        %5921 = vrot.lane.b32.xlu0 %v5851, 112
        %v5922 = vpop.permute.xlu0 %5921
        %5923 = vrot.lane.b32.xlu0 %v5852, 112
        %v5924 = vpop.permute.xlu0 %5923
        %5925 = vrot.lane.b32.xlu0 %v5853, 112
        %v5926 = vpop.permute.xlu0 %5925
        %5927 = vrot.lane.b32.xlu0 %v5854, 112
        %v5928 = vpop.permute.xlu0 %5927
        %5929 = vrot.lane.b32.xlu0 %v5855, 112
        %v5930 = vpop.permute.xlu0 %5929
        %5931 = vrot.lane.b32.xlu0 %v5856, 112
        %v5932 = vpop.permute.xlu0 %5931
        %5933 = vrot.lane.b32.xlu0 %v5857, 112
        %v5934 = vpop.permute.xlu0 %5933
        %5935 = vrot.lane.b32.xlu0 %v5858, 112
        %v5936 = vpop.permute.xlu0 %5935
        %5937 = vrot.lane.b32.xlu0 %v5859, 112
        %v5938 = vpop.permute.xlu0 %5937
        %5939 = vrot.lane.b32.xlu0 %v5860, 112
        %v5940 = vpop.permute.xlu0 %5939
        %5941 = vrot.lane.b32.xlu0 %v5861, 112
        %v5942 = vpop.permute.xlu0 %5941
        %5943 = vrot.lane.b32.xlu0 %v5862, 112
        %v5944 = vpop.permute.xlu0 %5943
        %5945 = vrot.lane.b32.xlu0 %v5863, 112
        %v5946 = vpop.permute.xlu0 %5945
        %5947 = vrot.lane.b32.xlu0 %v5864, 112
        %v5948 = vpop.permute.xlu0 %5947
        %5949 = vrot.lane.b32.xlu0 %v5865, 112
        %v5950 = vpop.permute.xlu0 %5949
        %5951 = vrot.lane.b32.xlu0 %v5866, 112
        %v5952 = vpop.permute.xlu0 %5951
        %5953 = vrot.lane.b32.xlu0 %v5867, 112
        %v5954 = vpop.permute.xlu0 %5953
        %5955 = vrot.lane.b32.xlu0 %v5868, 112
        %v5956 = vpop.permute.xlu0 %5955
        %5957 = vrot.lane.b32.xlu0 %v5869, 112
        %v5958 = vpop.permute.xlu0 %5957
        %5959 = vrot.lane.b32.xlu0 %v5870, 112
        %v5960 = vpop.permute.xlu0 %5959
        %5961 = vrot.lane.b32.xlu0 %v5871, 112
        %v5962 = vpop.permute.xlu0 %5961
        %5963 = vrot.lane.b32.xlu0 %v5872, 112
        %v5964 = vpop.permute.xlu0 %5963
        %5965 = vrot.lane.b32.xlu0 %v5873, 112
        %v5966 = vpop.permute.xlu0 %5965
        %5967 = vrot.lane.b32.xlu0 %v5874, 112
        %v5968 = vpop.permute.xlu0 %5967
        %5969 = vrot.lane.b32.xlu0 %v5875, 112
        %v5970 = vpop.permute.xlu0 %5969
        %5971 = vrot.lane.b32.xlu0 %v5876, 112
        %v5972 = vpop.permute.xlu0 %5971
        %vm6005 = vcmask 982912
        %6006 = vst.msk [vmem:[#allocation6] sm:$0xff] %vm6005, %v5910
        %6007 = vst.msk [vmem:[#allocation6 + $0x10] sm:$0xff] %vm6005, %v5912
        %6008 = vst.msk [vmem:[#allocation6 + $0x20] sm:$0xff] %vm6005, %v5914
        %6009 = vst.msk [vmem:[#allocation6 + $0x30] sm:$0xff] %vm6005, %v5916
        %6010 = vst.msk [vmem:[#allocation6 + $0x40] sm:$0xff] %vm6005, %v5918
        %6011 = vst.msk [vmem:[#allocation6 + $0x50] sm:$0xff] %vm6005, %v5920
        %6012 = vst.msk [vmem:[#allocation6 + $0x60] sm:$0xff] %vm6005, %v5922
        %6013 = vst.msk [vmem:[#allocation6 + $0x70] sm:$0xff] %vm6005, %v5924
        %6014 = vst.msk [vmem:[#allocation6 + $0x80] sm:$0xff] %vm6005, %v5926
        %6015 = vst.msk [vmem:[#allocation6 + $0x90] sm:$0xff] %vm6005, %v5928
        %6016 = vst.msk [vmem:[#allocation6 + $0xa0] sm:$0xff] %vm6005, %v5930
        %6017 = vst.msk [vmem:[#allocation6 + $0xb0] sm:$0xff] %vm6005, %v5932
        %6018 = vst.msk [vmem:[#allocation6 + $0xc0] sm:$0xff] %vm6005, %v5934
        %6019 = vst.msk [vmem:[#allocation6 + $0xd0] sm:$0xff] %vm6005, %v5936
        %6020 = vst.msk [vmem:[#allocation6 + $0xe0] sm:$0xff] %vm6005, %v5938
        %6021 = vst.msk [vmem:[#allocation6 + $0xf0] sm:$0xff] %vm6005, %v5940
        %6022 = vst.msk [vmem:[#allocation6 + $0x100] sm:$0xff] %vm6005, %v5942
        %6023 = vst.msk [vmem:[#allocation6 + $0x110] sm:$0xff] %vm6005, %v5944
        %6024 = vst.msk [vmem:[#allocation6 + $0x120] sm:$0xff] %vm6005, %v5946
        %6025 = vst.msk [vmem:[#allocation6 + $0x130] sm:$0xff] %vm6005, %v5948
        %6026 = vst.msk [vmem:[#allocation6 + $0x140] sm:$0xff] %vm6005, %v5950
        %6027 = vst.msk [vmem:[#allocation6 + $0x150] sm:$0xff] %vm6005, %v5952
        %6028 = vst.msk [vmem:[#allocation6 + $0x160] sm:$0xff] %vm6005, %v5954
        %6029 = vst.msk [vmem:[#allocation6 + $0x170] sm:$0xff] %vm6005, %v5956
        %6030 = vst.msk [vmem:[#allocation6 + $0x180] sm:$0xff] %vm6005, %v5958
        %6031 = vst.msk [vmem:[#allocation6 + $0x190] sm:$0xff] %vm6005, %v5960
        %6032 = vst.msk [vmem:[#allocation6 + $0x1a0] sm:$0xff] %vm6005, %v5962
        %6033 = vst.msk [vmem:[#allocation6 + $0x1b0] sm:$0xff] %vm6005, %v5964
        %6034 = vst.msk [vmem:[#allocation6 + $0x1c0] sm:$0xff] %vm6005, %v5966
        %6035 = vst.msk [vmem:[#allocation6 + $0x1d0] sm:$0xff] %vm6005, %v5968
        %6036 = vst.msk [vmem:[#allocation6 + $0x1e0] sm:$0xff] %vm6005, %v5970
        %6037 = vst.msk [vmem:[#allocation6 + $0x1f0] sm:$0xff] %vm6005, %v5972
        %s6038 = scalar_lea.vmem [#allocation3], 72
        %v6039 = vld [vmem:[%s6038] sm:$0xff]
        %v6040 = vld [vmem:[%s6038 + $0x8] sm:$0xff]
        %v6041 = vld [vmem:[%s6038 + $0x18] sm:$0xff]
        %v6042 = vld [vmem:[%s6038 + $0x20] sm:$0xff]
        %v6043 = vld [vmem:[%s6038 + $0x30] sm:$0xff]
        %v6044 = vld [vmem:[%s6038 + $0x38] sm:$0xff]
        %v6045 = vld [vmem:[%s6038 + $0x48] sm:$0xff]
        %v6046 = vld [vmem:[%s6038 + $0x50] sm:$0xff]
        %v6047 = vld [vmem:[%s6038 + $0x60] sm:$0xff]
        %v6048 = vld [vmem:[%s6038 + $0x68] sm:$0xff]
        %v6049 = vld [vmem:[%s6038 + $0x78] sm:$0xff]
        %v6050 = vld [vmem:[%s6038 + $0x80] sm:$0xff]
        %v6051 = vld [vmem:[%s6038 + $0x90] sm:$0xff]
        %v6052 = vld [vmem:[%s6038 + $0x98] sm:$0xff]
        %v6053 = vld [vmem:[%s6038 + $0xa8] sm:$0xff]
        %v6054 = vld [vmem:[%s6038 + $0xb0] sm:$0xff]
        %v6055 = vld [vmem:[%s6038 + $0xc0] sm:$0xff]
        %v6056 = vld [vmem:[%s6038 + $0xc8] sm:$0xff]
        %v6057 = vld [vmem:[%s6038 + $0xd8] sm:$0xff]
        %v6058 = vld [vmem:[%s6038 + $0xe0] sm:$0xff]
        %v6059 = vld [vmem:[%s6038 + $0xf0] sm:$0xff]
        %v6060 = vld [vmem:[%s6038 + $0xf8] sm:$0xff]
        %v6061 = vld [vmem:[%s6038 + $0x108] sm:$0xff]
        %v6062 = vld [vmem:[%s6038 + $0x110] sm:$0xff]
        %v6063 = vld [vmem:[%s6038 + $0x120] sm:$0xff]
        %v6064 = vld [vmem:[%s6038 + $0x128] sm:$0xff]
        %v6065 = vld [vmem:[%s6038 + $0x138] sm:$0xff]
        %v6066 = vld [vmem:[%s6038 + $0x140] sm:$0xff]
        %v6067 = vld [vmem:[%s6038 + $0x150] sm:$0xff]
        %v6068 = vld [vmem:[%s6038 + $0x158] sm:$0xff]
        %v6069 = vld [vmem:[%s6038 + $0x168] sm:$0xff]
        %v6070 = vld [vmem:[%s6038 + $0x170] sm:$0xff]
        %6103 = vrot.lane.b32.xlu0 %v6039, 120
        %v6104 = vpop.permute.xlu0 %6103
        %6105 = vrot.lane.b32.xlu0 %v6040, 120
        %v6106 = vpop.permute.xlu0 %6105
        %6107 = vrot.lane.b32.xlu0 %v6041, 120
        %v6108 = vpop.permute.xlu0 %6107
        %6109 = vrot.lane.b32.xlu0 %v6042, 120
        %v6110 = vpop.permute.xlu0 %6109
        %6111 = vrot.lane.b32.xlu0 %v6043, 120
        %v6112 = vpop.permute.xlu0 %6111
        %6113 = vrot.lane.b32.xlu0 %v6044, 120
        %v6114 = vpop.permute.xlu0 %6113
        %6115 = vrot.lane.b32.xlu0 %v6045, 120
        %v6116 = vpop.permute.xlu0 %6115
        %6117 = vrot.lane.b32.xlu0 %v6046, 120
        %v6118 = vpop.permute.xlu0 %6117
        %6119 = vrot.lane.b32.xlu0 %v6047, 120
        %v6120 = vpop.permute.xlu0 %6119
        %6121 = vrot.lane.b32.xlu0 %v6048, 120
        %v6122 = vpop.permute.xlu0 %6121
        %6123 = vrot.lane.b32.xlu0 %v6049, 120
        %v6124 = vpop.permute.xlu0 %6123
        %6125 = vrot.lane.b32.xlu0 %v6050, 120
        %v6126 = vpop.permute.xlu0 %6125
        %6127 = vrot.lane.b32.xlu0 %v6051, 120
        %v6128 = vpop.permute.xlu0 %6127
        %6129 = vrot.lane.b32.xlu0 %v6052, 120
        %v6130 = vpop.permute.xlu0 %6129
        %6131 = vrot.lane.b32.xlu0 %v6053, 120
        %v6132 = vpop.permute.xlu0 %6131
        %6133 = vrot.lane.b32.xlu0 %v6054, 120
        %v6134 = vpop.permute.xlu0 %6133
        %6135 = vrot.lane.b32.xlu0 %v6055, 120
        %v6136 = vpop.permute.xlu0 %6135
        %6137 = vrot.lane.b32.xlu0 %v6056, 120
        %v6138 = vpop.permute.xlu0 %6137
        %6139 = vrot.lane.b32.xlu0 %v6057, 120
        %v6140 = vpop.permute.xlu0 %6139
        %6141 = vrot.lane.b32.xlu0 %v6058, 120
        %v6142 = vpop.permute.xlu0 %6141
        %6143 = vrot.lane.b32.xlu0 %v6059, 120
        %v6144 = vpop.permute.xlu0 %6143
        %6145 = vrot.lane.b32.xlu0 %v6060, 120
        %v6146 = vpop.permute.xlu0 %6145
        %6147 = vrot.lane.b32.xlu0 %v6061, 120
        %v6148 = vpop.permute.xlu0 %6147
        %6149 = vrot.lane.b32.xlu0 %v6062, 120
        %v6150 = vpop.permute.xlu0 %6149
        %6151 = vrot.lane.b32.xlu0 %v6063, 120
        %v6152 = vpop.permute.xlu0 %6151
        %6153 = vrot.lane.b32.xlu0 %v6064, 120
        %v6154 = vpop.permute.xlu0 %6153
        %6155 = vrot.lane.b32.xlu0 %v6065, 120
        %v6156 = vpop.permute.xlu0 %6155
        %6157 = vrot.lane.b32.xlu0 %v6066, 120
        %v6158 = vpop.permute.xlu0 %6157
        %6159 = vrot.lane.b32.xlu0 %v6067, 120
        %v6160 = vpop.permute.xlu0 %6159
        %6161 = vrot.lane.b32.xlu0 %v6068, 120
        %v6162 = vpop.permute.xlu0 %6161
        %6163 = vrot.lane.b32.xlu0 %v6069, 120
        %v6164 = vpop.permute.xlu0 %6163
        %6165 = vrot.lane.b32.xlu0 %v6070, 120
        %v6166 = vpop.permute.xlu0 %6165
        %vm6199 = vcmask 1048512
        %6200 = vst.msk [vmem:[#allocation6] sm:$0xff] %vm6199, %v6104
        %6201 = vst.msk [vmem:[#allocation6 + $0x10] sm:$0xff] %vm6199, %v6106
        %6202 = vst.msk [vmem:[#allocation6 + $0x20] sm:$0xff] %vm6199, %v6108
        %6203 = vst.msk [vmem:[#allocation6 + $0x30] sm:$0xff] %vm6199, %v6110
        %6204 = vst.msk [vmem:[#allocation6 + $0x40] sm:$0xff] %vm6199, %v6112
        %6205 = vst.msk [vmem:[#allocation6 + $0x50] sm:$0xff] %vm6199, %v6114
        %6206 = vst.msk [vmem:[#allocation6 + $0x60] sm:$0xff] %vm6199, %v6116
        %6207 = vst.msk [vmem:[#allocation6 + $0x70] sm:$0xff] %vm6199, %v6118
        %6208 = vst.msk [vmem:[#allocation6 + $0x80] sm:$0xff] %vm6199, %v6120
        %6209 = vst.msk [vmem:[#allocation6 + $0x90] sm:$0xff] %vm6199, %v6122
        %6210 = vst.msk [vmem:[#allocation6 + $0xa0] sm:$0xff] %vm6199, %v6124
        %6211 = vst.msk [vmem:[#allocation6 + $0xb0] sm:$0xff] %vm6199, %v6126
        %6212 = vst.msk [vmem:[#allocation6 + $0xc0] sm:$0xff] %vm6199, %v6128
        %6213 = vst.msk [vmem:[#allocation6 + $0xd0] sm:$0xff] %vm6199, %v6130
        %6214 = vst.msk [vmem:[#allocation6 + $0xe0] sm:$0xff] %vm6199, %v6132
        %6215 = vst.msk [vmem:[#allocation6 + $0xf0] sm:$0xff] %vm6199, %v6134
        %6216 = vst.msk [vmem:[#allocation6 + $0x100] sm:$0xff] %vm6199, %v6136
        %6217 = vst.msk [vmem:[#allocation6 + $0x110] sm:$0xff] %vm6199, %v6138
        %6218 = vst.msk [vmem:[#allocation6 + $0x120] sm:$0xff] %vm6199, %v6140
        %6219 = vst.msk [vmem:[#allocation6 + $0x130] sm:$0xff] %vm6199, %v6142
        %6220 = vst.msk [vmem:[#allocation6 + $0x140] sm:$0xff] %vm6199, %v6144
        %6221 = vst.msk [vmem:[#allocation6 + $0x150] sm:$0xff] %vm6199, %v6146
        %6222 = vst.msk [vmem:[#allocation6 + $0x160] sm:$0xff] %vm6199, %v6148
        %6223 = vst.msk [vmem:[#allocation6 + $0x170] sm:$0xff] %vm6199, %v6150
        %6224 = vst.msk [vmem:[#allocation6 + $0x180] sm:$0xff] %vm6199, %v6152
        %6225 = vst.msk [vmem:[#allocation6 + $0x190] sm:$0xff] %vm6199, %v6154
        %6226 = vst.msk [vmem:[#allocation6 + $0x1a0] sm:$0xff] %vm6199, %v6156
        %6227 = vst.msk [vmem:[#allocation6 + $0x1b0] sm:$0xff] %vm6199, %v6158
        %6228 = vst.msk [vmem:[#allocation6 + $0x1c0] sm:$0xff] %vm6199, %v6160
        %6229 = vst.msk [vmem:[#allocation6 + $0x1d0] sm:$0xff] %vm6199, %v6162
        %6230 = vst.msk [vmem:[#allocation6 + $0x1e0] sm:$0xff] %vm6199, %v6164
        %6231 = vst.msk [vmem:[#allocation6 + $0x1f0] sm:$0xff] %vm6199, %v6166
        %v6232 = vld [vmem:[%s6038 + $0x1] sm:$0xff]
        %v6233 = vld [vmem:[%s6038 + $0x9] sm:$0xff]
        %v6234 = vld [vmem:[%s6038 + $0x19] sm:$0xff]
        %v6235 = vld [vmem:[%s6038 + $0x21] sm:$0xff]
        %v6236 = vld [vmem:[%s6038 + $0x31] sm:$0xff]
        %v6237 = vld [vmem:[%s6038 + $0x39] sm:$0xff]
        %v6238 = vld [vmem:[%s6038 + $0x49] sm:$0xff]
        %v6239 = vld [vmem:[%s6038 + $0x51] sm:$0xff]
        %v6240 = vld [vmem:[%s6038 + $0x61] sm:$0xff]
        %v6241 = vld [vmem:[%s6038 + $0x69] sm:$0xff]
        %v6242 = vld [vmem:[%s6038 + $0x79] sm:$0xff]
        %v6243 = vld [vmem:[%s6038 + $0x81] sm:$0xff]
        %v6244 = vld [vmem:[%s6038 + $0x91] sm:$0xff]
        %v6245 = vld [vmem:[%s6038 + $0x99] sm:$0xff]
        %v6246 = vld [vmem:[%s6038 + $0xa9] sm:$0xff]
        %v6247 = vld [vmem:[%s6038 + $0xb1] sm:$0xff]
        %v6248 = vld [vmem:[%s6038 + $0xc1] sm:$0xff]
        %v6249 = vld [vmem:[%s6038 + $0xc9] sm:$0xff]
        %v6250 = vld [vmem:[%s6038 + $0xd9] sm:$0xff]
        %v6251 = vld [vmem:[%s6038 + $0xe1] sm:$0xff]
        %v6252 = vld [vmem:[%s6038 + $0xf1] sm:$0xff]
        %v6253 = vld [vmem:[%s6038 + $0xf9] sm:$0xff]
        %v6254 = vld [vmem:[%s6038 + $0x109] sm:$0xff]
        %v6255 = vld [vmem:[%s6038 + $0x111] sm:$0xff]
        %v6256 = vld [vmem:[%s6038 + $0x121] sm:$0xff]
        %v6257 = vld [vmem:[%s6038 + $0x129] sm:$0xff]
        %v6258 = vld [vmem:[%s6038 + $0x139] sm:$0xff]
        %v6259 = vld [vmem:[%s6038 + $0x141] sm:$0xff]
        %v6260 = vld [vmem:[%s6038 + $0x151] sm:$0xff]
        %v6261 = vld [vmem:[%s6038 + $0x159] sm:$0xff]
        %v6262 = vld [vmem:[%s6038 + $0x169] sm:$0xff]
        %v6263 = vld [vmem:[%s6038 + $0x171] sm:$0xff]
        %6264 = vst.msk [vmem:[#allocation6 + $0x8] sm:$0xff] %vm946, %v6232
        %6265 = vst.msk [vmem:[#allocation6 + $0x18] sm:$0xff] %vm946, %v6233
        %6266 = vst.msk [vmem:[#allocation6 + $0x28] sm:$0xff] %vm946, %v6234
        %6267 = vst.msk [vmem:[#allocation6 + $0x38] sm:$0xff] %vm946, %v6235
        %6268 = vst.msk [vmem:[#allocation6 + $0x48] sm:$0xff] %vm946, %v6236
        %6269 = vst.msk [vmem:[#allocation6 + $0x58] sm:$0xff] %vm946, %v6237
        %6270 = vst.msk [vmem:[#allocation6 + $0x68] sm:$0xff] %vm946, %v6238
        %6271 = vst.msk [vmem:[#allocation6 + $0x78] sm:$0xff] %vm946, %v6239
        %6272 = vst.msk [vmem:[#allocation6 + $0x88] sm:$0xff] %vm946, %v6240
        %6273 = vst.msk [vmem:[#allocation6 + $0x98] sm:$0xff] %vm946, %v6241
        %6274 = vst.msk [vmem:[#allocation6 + $0xa8] sm:$0xff] %vm946, %v6242
        %6275 = vst.msk [vmem:[#allocation6 + $0xb8] sm:$0xff] %vm946, %v6243
        %6276 = vst.msk [vmem:[#allocation6 + $0xc8] sm:$0xff] %vm946, %v6244
        %6277 = vst.msk [vmem:[#allocation6 + $0xd8] sm:$0xff] %vm946, %v6245
        %6278 = vst.msk [vmem:[#allocation6 + $0xe8] sm:$0xff] %vm946, %v6246
        %6279 = vst.msk [vmem:[#allocation6 + $0xf8] sm:$0xff] %vm946, %v6247
        %6280 = vst.msk [vmem:[#allocation6 + $0x108] sm:$0xff] %vm946, %v6248
        %6281 = vst.msk [vmem:[#allocation6 + $0x118] sm:$0xff] %vm946, %v6249
        %6282 = vst.msk [vmem:[#allocation6 + $0x128] sm:$0xff] %vm946, %v6250
        %6283 = vst.msk [vmem:[#allocation6 + $0x138] sm:$0xff] %vm946, %v6251
        %6284 = vst.msk [vmem:[#allocation6 + $0x148] sm:$0xff] %vm946, %v6252
        %6285 = vst.msk [vmem:[#allocation6 + $0x158] sm:$0xff] %vm946, %v6253
        %6286 = vst.msk [vmem:[#allocation6 + $0x168] sm:$0xff] %vm946, %v6254
        %6287 = vst.msk [vmem:[#allocation6 + $0x178] sm:$0xff] %vm946, %v6255
        %6288 = vst.msk [vmem:[#allocation6 + $0x188] sm:$0xff] %vm946, %v6256
        %6289 = vst.msk [vmem:[#allocation6 + $0x198] sm:$0xff] %vm946, %v6257
        %6290 = vst.msk [vmem:[#allocation6 + $0x1a8] sm:$0xff] %vm946, %v6258
        %6291 = vst.msk [vmem:[#allocation6 + $0x1b8] sm:$0xff] %vm946, %v6259
        %6292 = vst.msk [vmem:[#allocation6 + $0x1c8] sm:$0xff] %vm946, %v6260
        %6293 = vst.msk [vmem:[#allocation6 + $0x1d8] sm:$0xff] %vm946, %v6261
        %6294 = vst.msk [vmem:[#allocation6 + $0x1e8] sm:$0xff] %vm946, %v6262
        %6295 = vst.msk [vmem:[#allocation6 + $0x1f8] sm:$0xff] %vm946, %v6263
        %v6296 = vld [vmem:[%s6038 + $0x2] sm:$0xff]
        %v6297 = vld [vmem:[%s6038 + $0xa] sm:$0xff]
        %v6298 = vld [vmem:[%s6038 + $0x1a] sm:$0xff]
        %v6299 = vld [vmem:[%s6038 + $0x22] sm:$0xff]
        %v6300 = vld [vmem:[%s6038 + $0x32] sm:$0xff]
        %v6301 = vld [vmem:[%s6038 + $0x3a] sm:$0xff]
        %v6302 = vld [vmem:[%s6038 + $0x4a] sm:$0xff]
        %v6303 = vld [vmem:[%s6038 + $0x52] sm:$0xff]
        %v6304 = vld [vmem:[%s6038 + $0x62] sm:$0xff]
        %v6305 = vld [vmem:[%s6038 + $0x6a] sm:$0xff]
        %v6306 = vld [vmem:[%s6038 + $0x7a] sm:$0xff]
        %v6307 = vld [vmem:[%s6038 + $0x82] sm:$0xff]
        %v6308 = vld [vmem:[%s6038 + $0x92] sm:$0xff]
        %v6309 = vld [vmem:[%s6038 + $0x9a] sm:$0xff]
        %v6310 = vld [vmem:[%s6038 + $0xaa] sm:$0xff]
        %v6311 = vld [vmem:[%s6038 + $0xb2] sm:$0xff]
        %v6312 = vld [vmem:[%s6038 + $0xc2] sm:$0xff]
        %v6313 = vld [vmem:[%s6038 + $0xca] sm:$0xff]
        %v6314 = vld [vmem:[%s6038 + $0xda] sm:$0xff]
        %v6315 = vld [vmem:[%s6038 + $0xe2] sm:$0xff]
        %v6316 = vld [vmem:[%s6038 + $0xf2] sm:$0xff]
        %v6317 = vld [vmem:[%s6038 + $0xfa] sm:$0xff]
        %v6318 = vld [vmem:[%s6038 + $0x10a] sm:$0xff]
        %v6319 = vld [vmem:[%s6038 + $0x112] sm:$0xff]
        %v6320 = vld [vmem:[%s6038 + $0x122] sm:$0xff]
        %v6321 = vld [vmem:[%s6038 + $0x12a] sm:$0xff]
        %v6322 = vld [vmem:[%s6038 + $0x13a] sm:$0xff]
        %v6323 = vld [vmem:[%s6038 + $0x142] sm:$0xff]
        %v6324 = vld [vmem:[%s6038 + $0x152] sm:$0xff]
        %v6325 = vld [vmem:[%s6038 + $0x15a] sm:$0xff]
        %v6326 = vld [vmem:[%s6038 + $0x16a] sm:$0xff]
        %v6327 = vld [vmem:[%s6038 + $0x172] sm:$0xff]
        %6360 = vrot.lane.b32.xlu0 %v6296, 8
        %v6361 = vpop.permute.xlu0 %6360
        %6362 = vrot.lane.b32.xlu0 %v6297, 8
        %v6363 = vpop.permute.xlu0 %6362
        %6364 = vrot.lane.b32.xlu0 %v6298, 8
        %v6365 = vpop.permute.xlu0 %6364
        %6366 = vrot.lane.b32.xlu0 %v6299, 8
        %v6367 = vpop.permute.xlu0 %6366
        %6368 = vrot.lane.b32.xlu0 %v6300, 8
        %v6369 = vpop.permute.xlu0 %6368
        %6370 = vrot.lane.b32.xlu0 %v6301, 8
        %v6371 = vpop.permute.xlu0 %6370
        %6372 = vrot.lane.b32.xlu0 %v6302, 8
        %v6373 = vpop.permute.xlu0 %6372
        %6374 = vrot.lane.b32.xlu0 %v6303, 8
        %v6375 = vpop.permute.xlu0 %6374
        %6376 = vrot.lane.b32.xlu0 %v6304, 8
        %v6377 = vpop.permute.xlu0 %6376
        %6378 = vrot.lane.b32.xlu0 %v6305, 8
        %v6379 = vpop.permute.xlu0 %6378
        %6380 = vrot.lane.b32.xlu0 %v6306, 8
        %v6381 = vpop.permute.xlu0 %6380
        %6382 = vrot.lane.b32.xlu0 %v6307, 8
        %v6383 = vpop.permute.xlu0 %6382
        %6384 = vrot.lane.b32.xlu0 %v6308, 8
        %v6385 = vpop.permute.xlu0 %6384
        %6386 = vrot.lane.b32.xlu0 %v6309, 8
        %v6387 = vpop.permute.xlu0 %6386
        %6388 = vrot.lane.b32.xlu0 %v6310, 8
        %v6389 = vpop.permute.xlu0 %6388
        %6390 = vrot.lane.b32.xlu0 %v6311, 8
        %v6391 = vpop.permute.xlu0 %6390
        %6392 = vrot.lane.b32.xlu0 %v6312, 8
        %v6393 = vpop.permute.xlu0 %6392
        %6394 = vrot.lane.b32.xlu0 %v6313, 8
        %v6395 = vpop.permute.xlu0 %6394
        %6396 = vrot.lane.b32.xlu0 %v6314, 8
        %v6397 = vpop.permute.xlu0 %6396
        %6398 = vrot.lane.b32.xlu0 %v6315, 8
        %v6399 = vpop.permute.xlu0 %6398
        %6400 = vrot.lane.b32.xlu0 %v6316, 8
        %v6401 = vpop.permute.xlu0 %6400
        %6402 = vrot.lane.b32.xlu0 %v6317, 8
        %v6403 = vpop.permute.xlu0 %6402
        %6404 = vrot.lane.b32.xlu0 %v6318, 8
        %v6405 = vpop.permute.xlu0 %6404
        %6406 = vrot.lane.b32.xlu0 %v6319, 8
        %v6407 = vpop.permute.xlu0 %6406
        %6408 = vrot.lane.b32.xlu0 %v6320, 8
        %v6409 = vpop.permute.xlu0 %6408
        %6410 = vrot.lane.b32.xlu0 %v6321, 8
        %v6411 = vpop.permute.xlu0 %6410
        %6412 = vrot.lane.b32.xlu0 %v6322, 8
        %v6413 = vpop.permute.xlu0 %6412
        %6414 = vrot.lane.b32.xlu0 %v6323, 8
        %v6415 = vpop.permute.xlu0 %6414
        %6416 = vrot.lane.b32.xlu0 %v6324, 8
        %v6417 = vpop.permute.xlu0 %6416
        %6418 = vrot.lane.b32.xlu0 %v6325, 8
        %v6419 = vpop.permute.xlu0 %6418
        %6420 = vrot.lane.b32.xlu0 %v6326, 8
        %v6421 = vpop.permute.xlu0 %6420
        %6422 = vrot.lane.b32.xlu0 %v6327, 8
        %v6423 = vpop.permute.xlu0 %6422
        %6456 = vst.msk [vmem:[#allocation6 + $0x8] sm:$0xff] %vm1259, %v6361
        %6457 = vst.msk [vmem:[#allocation6 + $0x18] sm:$0xff] %vm1259, %v6363
        %6458 = vst.msk [vmem:[#allocation6 + $0x28] sm:$0xff] %vm1259, %v6365
        %6459 = vst.msk [vmem:[#allocation6 + $0x38] sm:$0xff] %vm1259, %v6367
        %6460 = vst.msk [vmem:[#allocation6 + $0x48] sm:$0xff] %vm1259, %v6369
        %6461 = vst.msk [vmem:[#allocation6 + $0x58] sm:$0xff] %vm1259, %v6371
        %6462 = vst.msk [vmem:[#allocation6 + $0x68] sm:$0xff] %vm1259, %v6373
        %6463 = vst.msk [vmem:[#allocation6 + $0x78] sm:$0xff] %vm1259, %v6375
        %6464 = vst.msk [vmem:[#allocation6 + $0x88] sm:$0xff] %vm1259, %v6377
        %6465 = vst.msk [vmem:[#allocation6 + $0x98] sm:$0xff] %vm1259, %v6379
        %6466 = vst.msk [vmem:[#allocation6 + $0xa8] sm:$0xff] %vm1259, %v6381
        %6467 = vst.msk [vmem:[#allocation6 + $0xb8] sm:$0xff] %vm1259, %v6383
        %6468 = vst.msk [vmem:[#allocation6 + $0xc8] sm:$0xff] %vm1259, %v6385
        %6469 = vst.msk [vmem:[#allocation6 + $0xd8] sm:$0xff] %vm1259, %v6387
        %6470 = vst.msk [vmem:[#allocation6 + $0xe8] sm:$0xff] %vm1259, %v6389
        %6471 = vst.msk [vmem:[#allocation6 + $0xf8] sm:$0xff] %vm1259, %v6391
        %6472 = vst.msk [vmem:[#allocation6 + $0x108] sm:$0xff] %vm1259, %v6393
        %6473 = vst.msk [vmem:[#allocation6 + $0x118] sm:$0xff] %vm1259, %v6395
        %6474 = vst.msk [vmem:[#allocation6 + $0x128] sm:$0xff] %vm1259, %v6397
        %6475 = vst.msk [vmem:[#allocation6 + $0x138] sm:$0xff] %vm1259, %v6399
        %6476 = vst.msk [vmem:[#allocation6 + $0x148] sm:$0xff] %vm1259, %v6401
        %6477 = vst.msk [vmem:[#allocation6 + $0x158] sm:$0xff] %vm1259, %v6403
        %6478 = vst.msk [vmem:[#allocation6 + $0x168] sm:$0xff] %vm1259, %v6405
        %6479 = vst.msk [vmem:[#allocation6 + $0x178] sm:$0xff] %vm1259, %v6407
        %6480 = vst.msk [vmem:[#allocation6 + $0x188] sm:$0xff] %vm1259, %v6409
        %6481 = vst.msk [vmem:[#allocation6 + $0x198] sm:$0xff] %vm1259, %v6411
        %6482 = vst.msk [vmem:[#allocation6 + $0x1a8] sm:$0xff] %vm1259, %v6413
        %6483 = vst.msk [vmem:[#allocation6 + $0x1b8] sm:$0xff] %vm1259, %v6415
        %6484 = vst.msk [vmem:[#allocation6 + $0x1c8] sm:$0xff] %vm1259, %v6417
        %6485 = vst.msk [vmem:[#allocation6 + $0x1d8] sm:$0xff] %vm1259, %v6419
        %6486 = vst.msk [vmem:[#allocation6 + $0x1e8] sm:$0xff] %vm1259, %v6421
        %6487 = vst.msk [vmem:[#allocation6 + $0x1f8] sm:$0xff] %vm1259, %v6423
        %v6488 = vld [vmem:[%s6038 + $0x3] sm:$0xff]
        %v6489 = vld [vmem:[%s6038 + $0xb] sm:$0xff]
        %v6490 = vld [vmem:[%s6038 + $0x1b] sm:$0xff]
        %v6491 = vld [vmem:[%s6038 + $0x23] sm:$0xff]
        %v6492 = vld [vmem:[%s6038 + $0x33] sm:$0xff]
        %v6493 = vld [vmem:[%s6038 + $0x3b] sm:$0xff]
        %v6494 = vld [vmem:[%s6038 + $0x4b] sm:$0xff]
        %v6495 = vld [vmem:[%s6038 + $0x53] sm:$0xff]
        %v6496 = vld [vmem:[%s6038 + $0x63] sm:$0xff]
        %v6497 = vld [vmem:[%s6038 + $0x6b] sm:$0xff]
        %v6498 = vld [vmem:[%s6038 + $0x7b] sm:$0xff]
        %v6499 = vld [vmem:[%s6038 + $0x83] sm:$0xff]
        %v6500 = vld [vmem:[%s6038 + $0x93] sm:$0xff]
        %v6501 = vld [vmem:[%s6038 + $0x9b] sm:$0xff]
        %v6502 = vld [vmem:[%s6038 + $0xab] sm:$0xff]
        %v6503 = vld [vmem:[%s6038 + $0xb3] sm:$0xff]
        %v6504 = vld [vmem:[%s6038 + $0xc3] sm:$0xff]
        %v6505 = vld [vmem:[%s6038 + $0xcb] sm:$0xff]
        %v6506 = vld [vmem:[%s6038 + $0xdb] sm:$0xff]
        %v6507 = vld [vmem:[%s6038 + $0xe3] sm:$0xff]
        %v6508 = vld [vmem:[%s6038 + $0xf3] sm:$0xff]
        %v6509 = vld [vmem:[%s6038 + $0xfb] sm:$0xff]
        %v6510 = vld [vmem:[%s6038 + $0x10b] sm:$0xff]
        %v6511 = vld [vmem:[%s6038 + $0x113] sm:$0xff]
        %v6512 = vld [vmem:[%s6038 + $0x123] sm:$0xff]
        %v6513 = vld [vmem:[%s6038 + $0x12b] sm:$0xff]
        %v6514 = vld [vmem:[%s6038 + $0x13b] sm:$0xff]
        %v6515 = vld [vmem:[%s6038 + $0x143] sm:$0xff]
        %v6516 = vld [vmem:[%s6038 + $0x153] sm:$0xff]
        %v6517 = vld [vmem:[%s6038 + $0x15b] sm:$0xff]
        %v6518 = vld [vmem:[%s6038 + $0x16b] sm:$0xff]
        %v6519 = vld [vmem:[%s6038 + $0x173] sm:$0xff]
        %6552 = vrot.lane.b32.xlu0 %v6488, 16
        %v6553 = vpop.permute.xlu0 %6552
        %6554 = vrot.lane.b32.xlu0 %v6489, 16
        %v6555 = vpop.permute.xlu0 %6554
        %6556 = vrot.lane.b32.xlu0 %v6490, 16
        %v6557 = vpop.permute.xlu0 %6556
        %6558 = vrot.lane.b32.xlu0 %v6491, 16
        %v6559 = vpop.permute.xlu0 %6558
        %6560 = vrot.lane.b32.xlu0 %v6492, 16
        %v6561 = vpop.permute.xlu0 %6560
        %6562 = vrot.lane.b32.xlu0 %v6493, 16
        %v6563 = vpop.permute.xlu0 %6562
        %6564 = vrot.lane.b32.xlu0 %v6494, 16
        %v6565 = vpop.permute.xlu0 %6564
        %6566 = vrot.lane.b32.xlu0 %v6495, 16
        %v6567 = vpop.permute.xlu0 %6566
        %6568 = vrot.lane.b32.xlu0 %v6496, 16
        %v6569 = vpop.permute.xlu0 %6568
        %6570 = vrot.lane.b32.xlu0 %v6497, 16
        %v6571 = vpop.permute.xlu0 %6570
        %6572 = vrot.lane.b32.xlu0 %v6498, 16
        %v6573 = vpop.permute.xlu0 %6572
        %6574 = vrot.lane.b32.xlu0 %v6499, 16
        %v6575 = vpop.permute.xlu0 %6574
        %6576 = vrot.lane.b32.xlu0 %v6500, 16
        %v6577 = vpop.permute.xlu0 %6576
        %6578 = vrot.lane.b32.xlu0 %v6501, 16
        %v6579 = vpop.permute.xlu0 %6578
        %6580 = vrot.lane.b32.xlu0 %v6502, 16
        %v6581 = vpop.permute.xlu0 %6580
        %6582 = vrot.lane.b32.xlu0 %v6503, 16
        %v6583 = vpop.permute.xlu0 %6582
        %6584 = vrot.lane.b32.xlu0 %v6504, 16
        %v6585 = vpop.permute.xlu0 %6584
        %6586 = vrot.lane.b32.xlu0 %v6505, 16
        %v6587 = vpop.permute.xlu0 %6586
        %6588 = vrot.lane.b32.xlu0 %v6506, 16
        %v6589 = vpop.permute.xlu0 %6588
        %6590 = vrot.lane.b32.xlu0 %v6507, 16
        %v6591 = vpop.permute.xlu0 %6590
        %6592 = vrot.lane.b32.xlu0 %v6508, 16
        %v6593 = vpop.permute.xlu0 %6592
        %6594 = vrot.lane.b32.xlu0 %v6509, 16
        %v6595 = vpop.permute.xlu0 %6594
        %6596 = vrot.lane.b32.xlu0 %v6510, 16
        %v6597 = vpop.permute.xlu0 %6596
        %6598 = vrot.lane.b32.xlu0 %v6511, 16
        %v6599 = vpop.permute.xlu0 %6598
        %6600 = vrot.lane.b32.xlu0 %v6512, 16
        %v6601 = vpop.permute.xlu0 %6600
        %6602 = vrot.lane.b32.xlu0 %v6513, 16
        %v6603 = vpop.permute.xlu0 %6602
        %6604 = vrot.lane.b32.xlu0 %v6514, 16
        %v6605 = vpop.permute.xlu0 %6604
        %6606 = vrot.lane.b32.xlu0 %v6515, 16
        %v6607 = vpop.permute.xlu0 %6606
        %6608 = vrot.lane.b32.xlu0 %v6516, 16
        %v6609 = vpop.permute.xlu0 %6608
        %6610 = vrot.lane.b32.xlu0 %v6517, 16
        %v6611 = vpop.permute.xlu0 %6610
        %6612 = vrot.lane.b32.xlu0 %v6518, 16
        %v6613 = vpop.permute.xlu0 %6612
        %6614 = vrot.lane.b32.xlu0 %v6519, 16
        %v6615 = vpop.permute.xlu0 %6614
        %6648 = vst.msk [vmem:[#allocation6 + $0x8] sm:$0xff] %vm1452, %v6553
        %6649 = vst.msk [vmem:[#allocation6 + $0x18] sm:$0xff] %vm1452, %v6555
        %6650 = vst.msk [vmem:[#allocation6 + $0x28] sm:$0xff] %vm1452, %v6557
        %6651 = vst.msk [vmem:[#allocation6 + $0x38] sm:$0xff] %vm1452, %v6559
        %6652 = vst.msk [vmem:[#allocation6 + $0x48] sm:$0xff] %vm1452, %v6561
        %6653 = vst.msk [vmem:[#allocation6 + $0x58] sm:$0xff] %vm1452, %v6563
        %6654 = vst.msk [vmem:[#allocation6 + $0x68] sm:$0xff] %vm1452, %v6565
        %6655 = vst.msk [vmem:[#allocation6 + $0x78] sm:$0xff] %vm1452, %v6567
        %6656 = vst.msk [vmem:[#allocation6 + $0x88] sm:$0xff] %vm1452, %v6569
        %6657 = vst.msk [vmem:[#allocation6 + $0x98] sm:$0xff] %vm1452, %v6571
        %6658 = vst.msk [vmem:[#allocation6 + $0xa8] sm:$0xff] %vm1452, %v6573
        %6659 = vst.msk [vmem:[#allocation6 + $0xb8] sm:$0xff] %vm1452, %v6575
        %6660 = vst.msk [vmem:[#allocation6 + $0xc8] sm:$0xff] %vm1452, %v6577
        %6661 = vst.msk [vmem:[#allocation6 + $0xd8] sm:$0xff] %vm1452, %v6579
        %6662 = vst.msk [vmem:[#allocation6 + $0xe8] sm:$0xff] %vm1452, %v6581
        %6663 = vst.msk [vmem:[#allocation6 + $0xf8] sm:$0xff] %vm1452, %v6583
        %6664 = vst.msk [vmem:[#allocation6 + $0x108] sm:$0xff] %vm1452, %v6585
        %6665 = vst.msk [vmem:[#allocation6 + $0x118] sm:$0xff] %vm1452, %v6587
        %6666 = vst.msk [vmem:[#allocation6 + $0x128] sm:$0xff] %vm1452, %v6589
        %6667 = vst.msk [vmem:[#allocation6 + $0x138] sm:$0xff] %vm1452, %v6591
        %6668 = vst.msk [vmem:[#allocation6 + $0x148] sm:$0xff] %vm1452, %v6593
        %6669 = vst.msk [vmem:[#allocation6 + $0x158] sm:$0xff] %vm1452, %v6595
        %6670 = vst.msk [vmem:[#allocation6 + $0x168] sm:$0xff] %vm1452, %v6597
        %6671 = vst.msk [vmem:[#allocation6 + $0x178] sm:$0xff] %vm1452, %v6599
        %6672 = vst.msk [vmem:[#allocation6 + $0x188] sm:$0xff] %vm1452, %v6601
        %6673 = vst.msk [vmem:[#allocation6 + $0x198] sm:$0xff] %vm1452, %v6603
        %6674 = vst.msk [vmem:[#allocation6 + $0x1a8] sm:$0xff] %vm1452, %v6605
        %6675 = vst.msk [vmem:[#allocation6 + $0x1b8] sm:$0xff] %vm1452, %v6607
        %6676 = vst.msk [vmem:[#allocation6 + $0x1c8] sm:$0xff] %vm1452, %v6609
        %6677 = vst.msk [vmem:[#allocation6 + $0x1d8] sm:$0xff] %vm1452, %v6611
        %6678 = vst.msk [vmem:[#allocation6 + $0x1e8] sm:$0xff] %vm1452, %v6613
        %6679 = vst.msk [vmem:[#allocation6 + $0x1f8] sm:$0xff] %vm1452, %v6615
        %v6680 = vld [vmem:[%s6038 + $0x4] sm:$0xff]
        %v6681 = vld [vmem:[%s6038 + $0xc] sm:$0xff]
        %v6682 = vld [vmem:[%s6038 + $0x1c] sm:$0xff]
        %v6683 = vld [vmem:[%s6038 + $0x24] sm:$0xff]
        %v6684 = vld [vmem:[%s6038 + $0x34] sm:$0xff]
        %v6685 = vld [vmem:[%s6038 + $0x3c] sm:$0xff]
        %v6686 = vld [vmem:[%s6038 + $0x4c] sm:$0xff]
        %v6687 = vld [vmem:[%s6038 + $0x54] sm:$0xff]
        %v6688 = vld [vmem:[%s6038 + $0x64] sm:$0xff]
        %v6689 = vld [vmem:[%s6038 + $0x6c] sm:$0xff]
        %v6690 = vld [vmem:[%s6038 + $0x7c] sm:$0xff]
        %v6691 = vld [vmem:[%s6038 + $0x84] sm:$0xff]
        %v6692 = vld [vmem:[%s6038 + $0x94] sm:$0xff]
        %v6693 = vld [vmem:[%s6038 + $0x9c] sm:$0xff]
        %v6694 = vld [vmem:[%s6038 + $0xac] sm:$0xff]
        %v6695 = vld [vmem:[%s6038 + $0xb4] sm:$0xff]
        %v6696 = vld [vmem:[%s6038 + $0xc4] sm:$0xff]
        %v6697 = vld [vmem:[%s6038 + $0xcc] sm:$0xff]
        %v6698 = vld [vmem:[%s6038 + $0xdc] sm:$0xff]
        %v6699 = vld [vmem:[%s6038 + $0xe4] sm:$0xff]
        %v6700 = vld [vmem:[%s6038 + $0xf4] sm:$0xff]
        %v6701 = vld [vmem:[%s6038 + $0xfc] sm:$0xff]
        %v6702 = vld [vmem:[%s6038 + $0x10c] sm:$0xff]
        %v6703 = vld [vmem:[%s6038 + $0x114] sm:$0xff]
        %v6704 = vld [vmem:[%s6038 + $0x124] sm:$0xff]
        %v6705 = vld [vmem:[%s6038 + $0x12c] sm:$0xff]
        %v6706 = vld [vmem:[%s6038 + $0x13c] sm:$0xff]
        %v6707 = vld [vmem:[%s6038 + $0x144] sm:$0xff]
        %v6708 = vld [vmem:[%s6038 + $0x154] sm:$0xff]
        %v6709 = vld [vmem:[%s6038 + $0x15c] sm:$0xff]
        %v6710 = vld [vmem:[%s6038 + $0x16c] sm:$0xff]
        %v6711 = vld [vmem:[%s6038 + $0x174] sm:$0xff]
        %6744 = vrot.lane.b32.xlu0 %v6680, 24
        %v6745 = vpop.permute.xlu0 %6744
        %6746 = vrot.lane.b32.xlu0 %v6681, 24
        %v6747 = vpop.permute.xlu0 %6746
        %6748 = vrot.lane.b32.xlu0 %v6682, 24
        %v6749 = vpop.permute.xlu0 %6748
        %6750 = vrot.lane.b32.xlu0 %v6683, 24
        %v6751 = vpop.permute.xlu0 %6750
        %6752 = vrot.lane.b32.xlu0 %v6684, 24
        %v6753 = vpop.permute.xlu0 %6752
        %6754 = vrot.lane.b32.xlu0 %v6685, 24
        %v6755 = vpop.permute.xlu0 %6754
        %6756 = vrot.lane.b32.xlu0 %v6686, 24
        %v6757 = vpop.permute.xlu0 %6756
        %6758 = vrot.lane.b32.xlu0 %v6687, 24
        %v6759 = vpop.permute.xlu0 %6758
        %6760 = vrot.lane.b32.xlu0 %v6688, 24
        %v6761 = vpop.permute.xlu0 %6760
        %6762 = vrot.lane.b32.xlu0 %v6689, 24
        %v6763 = vpop.permute.xlu0 %6762
        %6764 = vrot.lane.b32.xlu0 %v6690, 24
        %v6765 = vpop.permute.xlu0 %6764
        %6766 = vrot.lane.b32.xlu0 %v6691, 24
        %v6767 = vpop.permute.xlu0 %6766
        %6768 = vrot.lane.b32.xlu0 %v6692, 24
        %v6769 = vpop.permute.xlu0 %6768
        %6770 = vrot.lane.b32.xlu0 %v6693, 24
        %v6771 = vpop.permute.xlu0 %6770
        %6772 = vrot.lane.b32.xlu0 %v6694, 24
        %v6773 = vpop.permute.xlu0 %6772
        %6774 = vrot.lane.b32.xlu0 %v6695, 24
        %v6775 = vpop.permute.xlu0 %6774
        %6776 = vrot.lane.b32.xlu0 %v6696, 24
        %v6777 = vpop.permute.xlu0 %6776
        %6778 = vrot.lane.b32.xlu0 %v6697, 24
        %v6779 = vpop.permute.xlu0 %6778
        %6780 = vrot.lane.b32.xlu0 %v6698, 24
        %v6781 = vpop.permute.xlu0 %6780
        %6782 = vrot.lane.b32.xlu0 %v6699, 24
        %v6783 = vpop.permute.xlu0 %6782
        %6784 = vrot.lane.b32.xlu0 %v6700, 24
        %v6785 = vpop.permute.xlu0 %6784
        %6786 = vrot.lane.b32.xlu0 %v6701, 24
        %v6787 = vpop.permute.xlu0 %6786
        %6788 = vrot.lane.b32.xlu0 %v6702, 24
        %v6789 = vpop.permute.xlu0 %6788
        %6790 = vrot.lane.b32.xlu0 %v6703, 24
        %v6791 = vpop.permute.xlu0 %6790
        %6792 = vrot.lane.b32.xlu0 %v6704, 24
        %v6793 = vpop.permute.xlu0 %6792
        %6794 = vrot.lane.b32.xlu0 %v6705, 24
        %v6795 = vpop.permute.xlu0 %6794
        %6796 = vrot.lane.b32.xlu0 %v6706, 24
        %v6797 = vpop.permute.xlu0 %6796
        %6798 = vrot.lane.b32.xlu0 %v6707, 24
        %v6799 = vpop.permute.xlu0 %6798
        %6800 = vrot.lane.b32.xlu0 %v6708, 24
        %v6801 = vpop.permute.xlu0 %6800
        %6802 = vrot.lane.b32.xlu0 %v6709, 24
        %v6803 = vpop.permute.xlu0 %6802
        %6804 = vrot.lane.b32.xlu0 %v6710, 24
        %v6805 = vpop.permute.xlu0 %6804
        %6806 = vrot.lane.b32.xlu0 %v6711, 24
        %v6807 = vpop.permute.xlu0 %6806
        %6840 = vst.msk [vmem:[#allocation6 + $0x8] sm:$0xff] %vm1645, %v6745
        %6841 = vst.msk [vmem:[#allocation6 + $0x18] sm:$0xff] %vm1645, %v6747
        %6842 = vst.msk [vmem:[#allocation6 + $0x28] sm:$0xff] %vm1645, %v6749
        %6843 = vst.msk [vmem:[#allocation6 + $0x38] sm:$0xff] %vm1645, %v6751
        %6844 = vst.msk [vmem:[#allocation6 + $0x48] sm:$0xff] %vm1645, %v6753
        %6845 = vst.msk [vmem:[#allocation6 + $0x58] sm:$0xff] %vm1645, %v6755
        %6846 = vst.msk [vmem:[#allocation6 + $0x68] sm:$0xff] %vm1645, %v6757
        %6847 = vst.msk [vmem:[#allocation6 + $0x78] sm:$0xff] %vm1645, %v6759
        %6848 = vst.msk [vmem:[#allocation6 + $0x88] sm:$0xff] %vm1645, %v6761
        %6849 = vst.msk [vmem:[#allocation6 + $0x98] sm:$0xff] %vm1645, %v6763
        %6850 = vst.msk [vmem:[#allocation6 + $0xa8] sm:$0xff] %vm1645, %v6765
        %6851 = vst.msk [vmem:[#allocation6 + $0xb8] sm:$0xff] %vm1645, %v6767
        %6852 = vst.msk [vmem:[#allocation6 + $0xc8] sm:$0xff] %vm1645, %v6769
        %6853 = vst.msk [vmem:[#allocation6 + $0xd8] sm:$0xff] %vm1645, %v6771
        %6854 = vst.msk [vmem:[#allocation6 + $0xe8] sm:$0xff] %vm1645, %v6773
        %6855 = vst.msk [vmem:[#allocation6 + $0xf8] sm:$0xff] %vm1645, %v6775
        %6856 = vst.msk [vmem:[#allocation6 + $0x108] sm:$0xff] %vm1645, %v6777
        %6857 = vst.msk [vmem:[#allocation6 + $0x118] sm:$0xff] %vm1645, %v6779
        %6858 = vst.msk [vmem:[#allocation6 + $0x128] sm:$0xff] %vm1645, %v6781
        %6859 = vst.msk [vmem:[#allocation6 + $0x138] sm:$0xff] %vm1645, %v6783
        %6860 = vst.msk [vmem:[#allocation6 + $0x148] sm:$0xff] %vm1645, %v6785
        %6861 = vst.msk [vmem:[#allocation6 + $0x158] sm:$0xff] %vm1645, %v6787
        %6862 = vst.msk [vmem:[#allocation6 + $0x168] sm:$0xff] %vm1645, %v6789
        %6863 = vst.msk [vmem:[#allocation6 + $0x178] sm:$0xff] %vm1645, %v6791
        %6864 = vst.msk [vmem:[#allocation6 + $0x188] sm:$0xff] %vm1645, %v6793
        %6865 = vst.msk [vmem:[#allocation6 + $0x198] sm:$0xff] %vm1645, %v6795
        %6866 = vst.msk [vmem:[#allocation6 + $0x1a8] sm:$0xff] %vm1645, %v6797
        %6867 = vst.msk [vmem:[#allocation6 + $0x1b8] sm:$0xff] %vm1645, %v6799
        %6868 = vst.msk [vmem:[#allocation6 + $0x1c8] sm:$0xff] %vm1645, %v6801
        %6869 = vst.msk [vmem:[#allocation6 + $0x1d8] sm:$0xff] %vm1645, %v6803
        %6870 = vst.msk [vmem:[#allocation6 + $0x1e8] sm:$0xff] %vm1645, %v6805
        %6871 = vst.msk [vmem:[#allocation6 + $0x1f8] sm:$0xff] %vm1645, %v6807
        %s6872 = scalar_lea.vmem [#allocation3], 96
        %v6873 = vld [vmem:[%s6872] sm:$0xff]
        %v6874 = vld [vmem:[%s6872 + $0x8] sm:$0xff]
        %v6875 = vld [vmem:[%s6872 + $0x18] sm:$0xff]
        %v6876 = vld [vmem:[%s6872 + $0x20] sm:$0xff]
        %v6877 = vld [vmem:[%s6872 + $0x30] sm:$0xff]
        %v6878 = vld [vmem:[%s6872 + $0x38] sm:$0xff]
        %v6879 = vld [vmem:[%s6872 + $0x48] sm:$0xff]
        %v6880 = vld [vmem:[%s6872 + $0x50] sm:$0xff]
        %v6881 = vld [vmem:[%s6872 + $0x60] sm:$0xff]
        %v6882 = vld [vmem:[%s6872 + $0x68] sm:$0xff]
        %v6883 = vld [vmem:[%s6872 + $0x78] sm:$0xff]
        %v6884 = vld [vmem:[%s6872 + $0x80] sm:$0xff]
        %v6885 = vld [vmem:[%s6872 + $0x90] sm:$0xff]
        %v6886 = vld [vmem:[%s6872 + $0x98] sm:$0xff]
        %v6887 = vld [vmem:[%s6872 + $0xa8] sm:$0xff]
        %v6888 = vld [vmem:[%s6872 + $0xb0] sm:$0xff]
        %v6889 = vld [vmem:[%s6872 + $0xc0] sm:$0xff]
        %v6890 = vld [vmem:[%s6872 + $0xc8] sm:$0xff]
        %v6891 = vld [vmem:[%s6872 + $0xd8] sm:$0xff]
        %v6892 = vld [vmem:[%s6872 + $0xe0] sm:$0xff]
        %v6893 = vld [vmem:[%s6872 + $0xf0] sm:$0xff]
        %v6894 = vld [vmem:[%s6872 + $0xf8] sm:$0xff]
        %v6895 = vld [vmem:[%s6872 + $0x108] sm:$0xff]
        %v6896 = vld [vmem:[%s6872 + $0x110] sm:$0xff]
        %v6897 = vld [vmem:[%s6872 + $0x120] sm:$0xff]
        %v6898 = vld [vmem:[%s6872 + $0x128] sm:$0xff]
        %v6899 = vld [vmem:[%s6872 + $0x138] sm:$0xff]
        %v6900 = vld [vmem:[%s6872 + $0x140] sm:$0xff]
        %v6901 = vld [vmem:[%s6872 + $0x150] sm:$0xff]
        %v6902 = vld [vmem:[%s6872 + $0x158] sm:$0xff]
        %v6903 = vld [vmem:[%s6872 + $0x168] sm:$0xff]
        %v6904 = vld [vmem:[%s6872 + $0x170] sm:$0xff]
        %6937 = vrot.lane.b32.xlu0 %v6873, 32
        %v6938 = vpop.permute.xlu0 %6937
        %6939 = vrot.lane.b32.xlu0 %v6874, 32
        %v6940 = vpop.permute.xlu0 %6939
        %6941 = vrot.lane.b32.xlu0 %v6875, 32
        %v6942 = vpop.permute.xlu0 %6941
        %6943 = vrot.lane.b32.xlu0 %v6876, 32
        %v6944 = vpop.permute.xlu0 %6943
        %6945 = vrot.lane.b32.xlu0 %v6877, 32
        %v6946 = vpop.permute.xlu0 %6945
        %6947 = vrot.lane.b32.xlu0 %v6878, 32
        %v6948 = vpop.permute.xlu0 %6947
        %6949 = vrot.lane.b32.xlu0 %v6879, 32
        %v6950 = vpop.permute.xlu0 %6949
        %6951 = vrot.lane.b32.xlu0 %v6880, 32
        %v6952 = vpop.permute.xlu0 %6951
        %6953 = vrot.lane.b32.xlu0 %v6881, 32
        %v6954 = vpop.permute.xlu0 %6953
        %6955 = vrot.lane.b32.xlu0 %v6882, 32
        %v6956 = vpop.permute.xlu0 %6955
        %6957 = vrot.lane.b32.xlu0 %v6883, 32
        %v6958 = vpop.permute.xlu0 %6957
        %6959 = vrot.lane.b32.xlu0 %v6884, 32
        %v6960 = vpop.permute.xlu0 %6959
        %6961 = vrot.lane.b32.xlu0 %v6885, 32
        %v6962 = vpop.permute.xlu0 %6961
        %6963 = vrot.lane.b32.xlu0 %v6886, 32
        %v6964 = vpop.permute.xlu0 %6963
        %6965 = vrot.lane.b32.xlu0 %v6887, 32
        %v6966 = vpop.permute.xlu0 %6965
        %6967 = vrot.lane.b32.xlu0 %v6888, 32
        %v6968 = vpop.permute.xlu0 %6967
        %6969 = vrot.lane.b32.xlu0 %v6889, 32
        %v6970 = vpop.permute.xlu0 %6969
        %6971 = vrot.lane.b32.xlu0 %v6890, 32
        %v6972 = vpop.permute.xlu0 %6971
        %6973 = vrot.lane.b32.xlu0 %v6891, 32
        %v6974 = vpop.permute.xlu0 %6973
        %6975 = vrot.lane.b32.xlu0 %v6892, 32
        %v6976 = vpop.permute.xlu0 %6975
        %6977 = vrot.lane.b32.xlu0 %v6893, 32
        %v6978 = vpop.permute.xlu0 %6977
        %6979 = vrot.lane.b32.xlu0 %v6894, 32
        %v6980 = vpop.permute.xlu0 %6979
        %6981 = vrot.lane.b32.xlu0 %v6895, 32
        %v6982 = vpop.permute.xlu0 %6981
        %6983 = vrot.lane.b32.xlu0 %v6896, 32
        %v6984 = vpop.permute.xlu0 %6983
        %6985 = vrot.lane.b32.xlu0 %v6897, 32
        %v6986 = vpop.permute.xlu0 %6985
        %6987 = vrot.lane.b32.xlu0 %v6898, 32
        %v6988 = vpop.permute.xlu0 %6987
        %6989 = vrot.lane.b32.xlu0 %v6899, 32
        %v6990 = vpop.permute.xlu0 %6989
        %6991 = vrot.lane.b32.xlu0 %v6900, 32
        %v6992 = vpop.permute.xlu0 %6991
        %6993 = vrot.lane.b32.xlu0 %v6901, 32
        %v6994 = vpop.permute.xlu0 %6993
        %6995 = vrot.lane.b32.xlu0 %v6902, 32
        %v6996 = vpop.permute.xlu0 %6995
        %6997 = vrot.lane.b32.xlu0 %v6903, 32
        %v6998 = vpop.permute.xlu0 %6997
        %6999 = vrot.lane.b32.xlu0 %v6904, 32
        %v7000 = vpop.permute.xlu0 %6999
        %7033 = vst.msk [vmem:[#allocation6 + $0x8] sm:$0xff] %vm1838, %v6938
        %7034 = vst.msk [vmem:[#allocation6 + $0x18] sm:$0xff] %vm1838, %v6940
        %7035 = vst.msk [vmem:[#allocation6 + $0x28] sm:$0xff] %vm1838, %v6942
        %7036 = vst.msk [vmem:[#allocation6 + $0x38] sm:$0xff] %vm1838, %v6944
        %7037 = vst.msk [vmem:[#allocation6 + $0x48] sm:$0xff] %vm1838, %v6946
        %7038 = vst.msk [vmem:[#allocation6 + $0x58] sm:$0xff] %vm1838, %v6948
        %7039 = vst.msk [vmem:[#allocation6 + $0x68] sm:$0xff] %vm1838, %v6950
        %7040 = vst.msk [vmem:[#allocation6 + $0x78] sm:$0xff] %vm1838, %v6952
        %7041 = vst.msk [vmem:[#allocation6 + $0x88] sm:$0xff] %vm1838, %v6954
        %7042 = vst.msk [vmem:[#allocation6 + $0x98] sm:$0xff] %vm1838, %v6956
        %7043 = vst.msk [vmem:[#allocation6 + $0xa8] sm:$0xff] %vm1838, %v6958
        %7044 = vst.msk [vmem:[#allocation6 + $0xb8] sm:$0xff] %vm1838, %v6960
        %7045 = vst.msk [vmem:[#allocation6 + $0xc8] sm:$0xff] %vm1838, %v6962
        %7046 = vst.msk [vmem:[#allocation6 + $0xd8] sm:$0xff] %vm1838, %v6964
        %7047 = vst.msk [vmem:[#allocation6 + $0xe8] sm:$0xff] %vm1838, %v6966
        %7048 = vst.msk [vmem:[#allocation6 + $0xf8] sm:$0xff] %vm1838, %v6968
        %7049 = vst.msk [vmem:[#allocation6 + $0x108] sm:$0xff] %vm1838, %v6970
        %7050 = vst.msk [vmem:[#allocation6 + $0x118] sm:$0xff] %vm1838, %v6972
        %7051 = vst.msk [vmem:[#allocation6 + $0x128] sm:$0xff] %vm1838, %v6974
        %7052 = vst.msk [vmem:[#allocation6 + $0x138] sm:$0xff] %vm1838, %v6976
        %7053 = vst.msk [vmem:[#allocation6 + $0x148] sm:$0xff] %vm1838, %v6978
        %7054 = vst.msk [vmem:[#allocation6 + $0x158] sm:$0xff] %vm1838, %v6980
        %7055 = vst.msk [vmem:[#allocation6 + $0x168] sm:$0xff] %vm1838, %v6982
        %7056 = vst.msk [vmem:[#allocation6 + $0x178] sm:$0xff] %vm1838, %v6984
        %7057 = vst.msk [vmem:[#allocation6 + $0x188] sm:$0xff] %vm1838, %v6986
        %7058 = vst.msk [vmem:[#allocation6 + $0x198] sm:$0xff] %vm1838, %v6988
        %7059 = vst.msk [vmem:[#allocation6 + $0x1a8] sm:$0xff] %vm1838, %v6990
        %7060 = vst.msk [vmem:[#allocation6 + $0x1b8] sm:$0xff] %vm1838, %v6992
        %7061 = vst.msk [vmem:[#allocation6 + $0x1c8] sm:$0xff] %vm1838, %v6994
        %7062 = vst.msk [vmem:[#allocation6 + $0x1d8] sm:$0xff] %vm1838, %v6996
        %7063 = vst.msk [vmem:[#allocation6 + $0x1e8] sm:$0xff] %vm1838, %v6998
        %7064 = vst.msk [vmem:[#allocation6 + $0x1f8] sm:$0xff] %vm1838, %v7000
        %v7065 = vld [vmem:[%s6872 + $0x1] sm:$0xff]
        %v7066 = vld [vmem:[%s6872 + $0x9] sm:$0xff]
        %v7067 = vld [vmem:[%s6872 + $0x19] sm:$0xff]
        %v7068 = vld [vmem:[%s6872 + $0x21] sm:$0xff]
        %v7069 = vld [vmem:[%s6872 + $0x31] sm:$0xff]
        %v7070 = vld [vmem:[%s6872 + $0x39] sm:$0xff]
        %v7071 = vld [vmem:[%s6872 + $0x49] sm:$0xff]
        %v7072 = vld [vmem:[%s6872 + $0x51] sm:$0xff]
        %v7073 = vld [vmem:[%s6872 + $0x61] sm:$0xff]
        %v7074 = vld [vmem:[%s6872 + $0x69] sm:$0xff]
        %v7075 = vld [vmem:[%s6872 + $0x79] sm:$0xff]
        %v7076 = vld [vmem:[%s6872 + $0x81] sm:$0xff]
        %v7077 = vld [vmem:[%s6872 + $0x91] sm:$0xff]
        %v7078 = vld [vmem:[%s6872 + $0x99] sm:$0xff]
        %v7079 = vld [vmem:[%s6872 + $0xa9] sm:$0xff]
        %v7080 = vld [vmem:[%s6872 + $0xb1] sm:$0xff]
        %v7081 = vld [vmem:[%s6872 + $0xc1] sm:$0xff]
        %v7082 = vld [vmem:[%s6872 + $0xc9] sm:$0xff]
        %v7083 = vld [vmem:[%s6872 + $0xd9] sm:$0xff]
        %v7084 = vld [vmem:[%s6872 + $0xe1] sm:$0xff]
        %v7085 = vld [vmem:[%s6872 + $0xf1] sm:$0xff]
        %v7086 = vld [vmem:[%s6872 + $0xf9] sm:$0xff]
        %v7087 = vld [vmem:[%s6872 + $0x109] sm:$0xff]
        %v7088 = vld [vmem:[%s6872 + $0x111] sm:$0xff]
        %v7089 = vld [vmem:[%s6872 + $0x121] sm:$0xff]
        %v7090 = vld [vmem:[%s6872 + $0x129] sm:$0xff]
        %v7091 = vld [vmem:[%s6872 + $0x139] sm:$0xff]
        %v7092 = vld [vmem:[%s6872 + $0x141] sm:$0xff]
        %v7093 = vld [vmem:[%s6872 + $0x151] sm:$0xff]
        %v7094 = vld [vmem:[%s6872 + $0x159] sm:$0xff]
        %v7095 = vld [vmem:[%s6872 + $0x169] sm:$0xff]
        %v7096 = vld [vmem:[%s6872 + $0x171] sm:$0xff]
        %7129 = vrot.lane.b32.xlu0 %v7065, 40
        %v7130 = vpop.permute.xlu0 %7129
        %7131 = vrot.lane.b32.xlu0 %v7066, 40
        %v7132 = vpop.permute.xlu0 %7131
        %7133 = vrot.lane.b32.xlu0 %v7067, 40
        %v7134 = vpop.permute.xlu0 %7133
        %7135 = vrot.lane.b32.xlu0 %v7068, 40
        %v7136 = vpop.permute.xlu0 %7135
        %7137 = vrot.lane.b32.xlu0 %v7069, 40
        %v7138 = vpop.permute.xlu0 %7137
        %7139 = vrot.lane.b32.xlu0 %v7070, 40
        %v7140 = vpop.permute.xlu0 %7139
        %7141 = vrot.lane.b32.xlu0 %v7071, 40
        %v7142 = vpop.permute.xlu0 %7141
        %7143 = vrot.lane.b32.xlu0 %v7072, 40
        %v7144 = vpop.permute.xlu0 %7143
        %7145 = vrot.lane.b32.xlu0 %v7073, 40
        %v7146 = vpop.permute.xlu0 %7145
        %7147 = vrot.lane.b32.xlu0 %v7074, 40
        %v7148 = vpop.permute.xlu0 %7147
        %7149 = vrot.lane.b32.xlu0 %v7075, 40
        %v7150 = vpop.permute.xlu0 %7149
        %7151 = vrot.lane.b32.xlu0 %v7076, 40
        %v7152 = vpop.permute.xlu0 %7151
        %7153 = vrot.lane.b32.xlu0 %v7077, 40
        %v7154 = vpop.permute.xlu0 %7153
        %7155 = vrot.lane.b32.xlu0 %v7078, 40
        %v7156 = vpop.permute.xlu0 %7155
        %7157 = vrot.lane.b32.xlu0 %v7079, 40
        %v7158 = vpop.permute.xlu0 %7157
        %7159 = vrot.lane.b32.xlu0 %v7080, 40
        %v7160 = vpop.permute.xlu0 %7159
        %7161 = vrot.lane.b32.xlu0 %v7081, 40
        %v7162 = vpop.permute.xlu0 %7161
        %7163 = vrot.lane.b32.xlu0 %v7082, 40
        %v7164 = vpop.permute.xlu0 %7163
        %7165 = vrot.lane.b32.xlu0 %v7083, 40
        %v7166 = vpop.permute.xlu0 %7165
        %7167 = vrot.lane.b32.xlu0 %v7084, 40
        %v7168 = vpop.permute.xlu0 %7167
        %7169 = vrot.lane.b32.xlu0 %v7085, 40
        %v7170 = vpop.permute.xlu0 %7169
        %7171 = vrot.lane.b32.xlu0 %v7086, 40
        %v7172 = vpop.permute.xlu0 %7171
        %7173 = vrot.lane.b32.xlu0 %v7087, 40
        %v7174 = vpop.permute.xlu0 %7173
        %7175 = vrot.lane.b32.xlu0 %v7088, 40
        %v7176 = vpop.permute.xlu0 %7175
        %7177 = vrot.lane.b32.xlu0 %v7089, 40
        %v7178 = vpop.permute.xlu0 %7177
        %7179 = vrot.lane.b32.xlu0 %v7090, 40
        %v7180 = vpop.permute.xlu0 %7179
        %7181 = vrot.lane.b32.xlu0 %v7091, 40
        %v7182 = vpop.permute.xlu0 %7181
        %7183 = vrot.lane.b32.xlu0 %v7092, 40
        %v7184 = vpop.permute.xlu0 %7183
        %7185 = vrot.lane.b32.xlu0 %v7093, 40
        %v7186 = vpop.permute.xlu0 %7185
        %7187 = vrot.lane.b32.xlu0 %v7094, 40
        %v7188 = vpop.permute.xlu0 %7187
        %7189 = vrot.lane.b32.xlu0 %v7095, 40
        %v7190 = vpop.permute.xlu0 %7189
        %7191 = vrot.lane.b32.xlu0 %v7096, 40
        %v7192 = vpop.permute.xlu0 %7191
        %7225 = vst.msk [vmem:[#allocation6 + $0x8] sm:$0xff] %vm2031, %v7130
        %7226 = vst.msk [vmem:[#allocation6 + $0x18] sm:$0xff] %vm2031, %v7132
        %7227 = vst.msk [vmem:[#allocation6 + $0x28] sm:$0xff] %vm2031, %v7134
        %7228 = vst.msk [vmem:[#allocation6 + $0x38] sm:$0xff] %vm2031, %v7136
        %7229 = vst.msk [vmem:[#allocation6 + $0x48] sm:$0xff] %vm2031, %v7138
        %7230 = vst.msk [vmem:[#allocation6 + $0x58] sm:$0xff] %vm2031, %v7140
        %7231 = vst.msk [vmem:[#allocation6 + $0x68] sm:$0xff] %vm2031, %v7142
        %7232 = vst.msk [vmem:[#allocation6 + $0x78] sm:$0xff] %vm2031, %v7144
        %7233 = vst.msk [vmem:[#allocation6 + $0x88] sm:$0xff] %vm2031, %v7146
        %7234 = vst.msk [vmem:[#allocation6 + $0x98] sm:$0xff] %vm2031, %v7148
        %7235 = vst.msk [vmem:[#allocation6 + $0xa8] sm:$0xff] %vm2031, %v7150
        %7236 = vst.msk [vmem:[#allocation6 + $0xb8] sm:$0xff] %vm2031, %v7152
        %7237 = vst.msk [vmem:[#allocation6 + $0xc8] sm:$0xff] %vm2031, %v7154
        %7238 = vst.msk [vmem:[#allocation6 + $0xd8] sm:$0xff] %vm2031, %v7156
        %7239 = vst.msk [vmem:[#allocation6 + $0xe8] sm:$0xff] %vm2031, %v7158
        %7240 = vst.msk [vmem:[#allocation6 + $0xf8] sm:$0xff] %vm2031, %v7160
        %7241 = vst.msk [vmem:[#allocation6 + $0x108] sm:$0xff] %vm2031, %v7162
        %7242 = vst.msk [vmem:[#allocation6 + $0x118] sm:$0xff] %vm2031, %v7164
        %7243 = vst.msk [vmem:[#allocation6 + $0x128] sm:$0xff] %vm2031, %v7166
        %7244 = vst.msk [vmem:[#allocation6 + $0x138] sm:$0xff] %vm2031, %v7168
        %7245 = vst.msk [vmem:[#allocation6 + $0x148] sm:$0xff] %vm2031, %v7170
        %7246 = vst.msk [vmem:[#allocation6 + $0x158] sm:$0xff] %vm2031, %v7172
        %7247 = vst.msk [vmem:[#allocation6 + $0x168] sm:$0xff] %vm2031, %v7174
        %7248 = vst.msk [vmem:[#allocation6 + $0x178] sm:$0xff] %vm2031, %v7176
        %7249 = vst.msk [vmem:[#allocation6 + $0x188] sm:$0xff] %vm2031, %v7178
        %7250 = vst.msk [vmem:[#allocation6 + $0x198] sm:$0xff] %vm2031, %v7180
        %7251 = vst.msk [vmem:[#allocation6 + $0x1a8] sm:$0xff] %vm2031, %v7182
        %7252 = vst.msk [vmem:[#allocation6 + $0x1b8] sm:$0xff] %vm2031, %v7184
        %7253 = vst.msk [vmem:[#allocation6 + $0x1c8] sm:$0xff] %vm2031, %v7186
        %7254 = vst.msk [vmem:[#allocation6 + $0x1d8] sm:$0xff] %vm2031, %v7188
        %7255 = vst.msk [vmem:[#allocation6 + $0x1e8] sm:$0xff] %vm2031, %v7190
        %7256 = vst.msk [vmem:[#allocation6 + $0x1f8] sm:$0xff] %vm2031, %v7192
        %v7257 = vld [vmem:[%s6872 + $0x2] sm:$0xff]
        %v7258 = vld [vmem:[%s6872 + $0xa] sm:$0xff]
        %v7259 = vld [vmem:[%s6872 + $0x1a] sm:$0xff]
        %v7260 = vld [vmem:[%s6872 + $0x22] sm:$0xff]
        %v7261 = vld [vmem:[%s6872 + $0x32] sm:$0xff]
        %v7262 = vld [vmem:[%s6872 + $0x3a] sm:$0xff]
        %v7263 = vld [vmem:[%s6872 + $0x4a] sm:$0xff]
        %v7264 = vld [vmem:[%s6872 + $0x52] sm:$0xff]
        %v7265 = vld [vmem:[%s6872 + $0x62] sm:$0xff]
        %v7266 = vld [vmem:[%s6872 + $0x6a] sm:$0xff]
        %v7267 = vld [vmem:[%s6872 + $0x7a] sm:$0xff]
        %v7268 = vld [vmem:[%s6872 + $0x82] sm:$0xff]
        %v7269 = vld [vmem:[%s6872 + $0x92] sm:$0xff]
        %v7270 = vld [vmem:[%s6872 + $0x9a] sm:$0xff]
        %v7271 = vld [vmem:[%s6872 + $0xaa] sm:$0xff]
        %v7272 = vld [vmem:[%s6872 + $0xb2] sm:$0xff]
        %v7273 = vld [vmem:[%s6872 + $0xc2] sm:$0xff]
        %v7274 = vld [vmem:[%s6872 + $0xca] sm:$0xff]
        %v7275 = vld [vmem:[%s6872 + $0xda] sm:$0xff]
        %v7276 = vld [vmem:[%s6872 + $0xe2] sm:$0xff]
        %v7277 = vld [vmem:[%s6872 + $0xf2] sm:$0xff]
        %v7278 = vld [vmem:[%s6872 + $0xfa] sm:$0xff]
        %v7279 = vld [vmem:[%s6872 + $0x10a] sm:$0xff]
        %v7280 = vld [vmem:[%s6872 + $0x112] sm:$0xff]
        %v7281 = vld [vmem:[%s6872 + $0x122] sm:$0xff]
        %v7282 = vld [vmem:[%s6872 + $0x12a] sm:$0xff]
        %v7283 = vld [vmem:[%s6872 + $0x13a] sm:$0xff]
        %v7284 = vld [vmem:[%s6872 + $0x142] sm:$0xff]
        %v7285 = vld [vmem:[%s6872 + $0x152] sm:$0xff]
        %v7286 = vld [vmem:[%s6872 + $0x15a] sm:$0xff]
        %v7287 = vld [vmem:[%s6872 + $0x16a] sm:$0xff]
        %v7288 = vld [vmem:[%s6872 + $0x172] sm:$0xff]
        %7321 = vrot.lane.b32.xlu0 %v7257, 48
        %v7322 = vpop.permute.xlu0 %7321
        %7323 = vrot.lane.b32.xlu0 %v7258, 48
        %v7324 = vpop.permute.xlu0 %7323
        %7325 = vrot.lane.b32.xlu0 %v7259, 48
        %v7326 = vpop.permute.xlu0 %7325
        %7327 = vrot.lane.b32.xlu0 %v7260, 48
        %v7328 = vpop.permute.xlu0 %7327
        %7329 = vrot.lane.b32.xlu0 %v7261, 48
        %v7330 = vpop.permute.xlu0 %7329
        %7331 = vrot.lane.b32.xlu0 %v7262, 48
        %v7332 = vpop.permute.xlu0 %7331
        %7333 = vrot.lane.b32.xlu0 %v7263, 48
        %v7334 = vpop.permute.xlu0 %7333
        %7335 = vrot.lane.b32.xlu0 %v7264, 48
        %v7336 = vpop.permute.xlu0 %7335
        %7337 = vrot.lane.b32.xlu0 %v7265, 48
        %v7338 = vpop.permute.xlu0 %7337
        %7339 = vrot.lane.b32.xlu0 %v7266, 48
        %v7340 = vpop.permute.xlu0 %7339
        %7341 = vrot.lane.b32.xlu0 %v7267, 48
        %v7342 = vpop.permute.xlu0 %7341
        %7343 = vrot.lane.b32.xlu0 %v7268, 48
        %v7344 = vpop.permute.xlu0 %7343
        %7345 = vrot.lane.b32.xlu0 %v7269, 48
        %v7346 = vpop.permute.xlu0 %7345
        %7347 = vrot.lane.b32.xlu0 %v7270, 48
        %v7348 = vpop.permute.xlu0 %7347
        %7349 = vrot.lane.b32.xlu0 %v7271, 48
        %v7350 = vpop.permute.xlu0 %7349
        %7351 = vrot.lane.b32.xlu0 %v7272, 48
        %v7352 = vpop.permute.xlu0 %7351
        %7353 = vrot.lane.b32.xlu0 %v7273, 48
        %v7354 = vpop.permute.xlu0 %7353
        %7355 = vrot.lane.b32.xlu0 %v7274, 48
        %v7356 = vpop.permute.xlu0 %7355
        %7357 = vrot.lane.b32.xlu0 %v7275, 48
        %v7358 = vpop.permute.xlu0 %7357
        %7359 = vrot.lane.b32.xlu0 %v7276, 48
        %v7360 = vpop.permute.xlu0 %7359
        %7361 = vrot.lane.b32.xlu0 %v7277, 48
        %v7362 = vpop.permute.xlu0 %7361
        %7363 = vrot.lane.b32.xlu0 %v7278, 48
        %v7364 = vpop.permute.xlu0 %7363
        %7365 = vrot.lane.b32.xlu0 %v7279, 48
        %v7366 = vpop.permute.xlu0 %7365
        %7367 = vrot.lane.b32.xlu0 %v7280, 48
        %v7368 = vpop.permute.xlu0 %7367
        %7369 = vrot.lane.b32.xlu0 %v7281, 48
        %v7370 = vpop.permute.xlu0 %7369
        %7371 = vrot.lane.b32.xlu0 %v7282, 48
        %v7372 = vpop.permute.xlu0 %7371
        %7373 = vrot.lane.b32.xlu0 %v7283, 48
        %v7374 = vpop.permute.xlu0 %7373
        %7375 = vrot.lane.b32.xlu0 %v7284, 48
        %v7376 = vpop.permute.xlu0 %7375
        %7377 = vrot.lane.b32.xlu0 %v7285, 48
        %v7378 = vpop.permute.xlu0 %7377
        %7379 = vrot.lane.b32.xlu0 %v7286, 48
        %v7380 = vpop.permute.xlu0 %7379
        %7381 = vrot.lane.b32.xlu0 %v7287, 48
        %v7382 = vpop.permute.xlu0 %7381
        %7383 = vrot.lane.b32.xlu0 %v7288, 48
        %v7384 = vpop.permute.xlu0 %7383
        %7417 = vst.msk [vmem:[#allocation6 + $0x8] sm:$0xff] %vm2225, %v7322
        %7418 = vst.msk [vmem:[#allocation6 + $0x18] sm:$0xff] %vm2225, %v7324
        %7419 = vst.msk [vmem:[#allocation6 + $0x28] sm:$0xff] %vm2225, %v7326
        %7420 = vst.msk [vmem:[#allocation6 + $0x38] sm:$0xff] %vm2225, %v7328
        %7421 = vst.msk [vmem:[#allocation6 + $0x48] sm:$0xff] %vm2225, %v7330
        %7422 = vst.msk [vmem:[#allocation6 + $0x58] sm:$0xff] %vm2225, %v7332
        %7423 = vst.msk [vmem:[#allocation6 + $0x68] sm:$0xff] %vm2225, %v7334
        %7424 = vst.msk [vmem:[#allocation6 + $0x78] sm:$0xff] %vm2225, %v7336
        %7425 = vst.msk [vmem:[#allocation6 + $0x88] sm:$0xff] %vm2225, %v7338
        %7426 = vst.msk [vmem:[#allocation6 + $0x98] sm:$0xff] %vm2225, %v7340
        %7427 = vst.msk [vmem:[#allocation6 + $0xa8] sm:$0xff] %vm2225, %v7342
        %7428 = vst.msk [vmem:[#allocation6 + $0xb8] sm:$0xff] %vm2225, %v7344
        %7429 = vst.msk [vmem:[#allocation6 + $0xc8] sm:$0xff] %vm2225, %v7346
        %7430 = vst.msk [vmem:[#allocation6 + $0xd8] sm:$0xff] %vm2225, %v7348
        %7431 = vst.msk [vmem:[#allocation6 + $0xe8] sm:$0xff] %vm2225, %v7350
        %7432 = vst.msk [vmem:[#allocation6 + $0xf8] sm:$0xff] %vm2225, %v7352
        %7433 = vst.msk [vmem:[#allocation6 + $0x108] sm:$0xff] %vm2225, %v7354
        %7434 = vst.msk [vmem:[#allocation6 + $0x118] sm:$0xff] %vm2225, %v7356
        %7435 = vst.msk [vmem:[#allocation6 + $0x128] sm:$0xff] %vm2225, %v7358
        %7436 = vst.msk [vmem:[#allocation6 + $0x138] sm:$0xff] %vm2225, %v7360
        %7437 = vst.msk [vmem:[#allocation6 + $0x148] sm:$0xff] %vm2225, %v7362
        %7438 = vst.msk [vmem:[#allocation6 + $0x158] sm:$0xff] %vm2225, %v7364
        %7439 = vst.msk [vmem:[#allocation6 + $0x168] sm:$0xff] %vm2225, %v7366
        %7440 = vst.msk [vmem:[#allocation6 + $0x178] sm:$0xff] %vm2225, %v7368
        %7441 = vst.msk [vmem:[#allocation6 + $0x188] sm:$0xff] %vm2225, %v7370
        %7442 = vst.msk [vmem:[#allocation6 + $0x198] sm:$0xff] %vm2225, %v7372
        %7443 = vst.msk [vmem:[#allocation6 + $0x1a8] sm:$0xff] %vm2225, %v7374
        %7444 = vst.msk [vmem:[#allocation6 + $0x1b8] sm:$0xff] %vm2225, %v7376
        %7445 = vst.msk [vmem:[#allocation6 + $0x1c8] sm:$0xff] %vm2225, %v7378
        %7446 = vst.msk [vmem:[#allocation6 + $0x1d8] sm:$0xff] %vm2225, %v7380
        %7447 = vst.msk [vmem:[#allocation6 + $0x1e8] sm:$0xff] %vm2225, %v7382
        %7448 = vst.msk [vmem:[#allocation6 + $0x1f8] sm:$0xff] %vm2225, %v7384
        %v7449 = vld [vmem:[%s6872 + $0x3] sm:$0xff]
        %v7450 = vld [vmem:[%s6872 + $0xb] sm:$0xff]
        %v7451 = vld [vmem:[%s6872 + $0x1b] sm:$0xff]
        %v7452 = vld [vmem:[%s6872 + $0x23] sm:$0xff]
        %v7453 = vld [vmem:[%s6872 + $0x33] sm:$0xff]
        %v7454 = vld [vmem:[%s6872 + $0x3b] sm:$0xff]
        %v7455 = vld [vmem:[%s6872 + $0x4b] sm:$0xff]
        %v7456 = vld [vmem:[%s6872 + $0x53] sm:$0xff]
        %v7457 = vld [vmem:[%s6872 + $0x63] sm:$0xff]
        %v7458 = vld [vmem:[%s6872 + $0x6b] sm:$0xff]
        %v7459 = vld [vmem:[%s6872 + $0x7b] sm:$0xff]
        %v7460 = vld [vmem:[%s6872 + $0x83] sm:$0xff]
        %v7461 = vld [vmem:[%s6872 + $0x93] sm:$0xff]
        %v7462 = vld [vmem:[%s6872 + $0x9b] sm:$0xff]
        %v7463 = vld [vmem:[%s6872 + $0xab] sm:$0xff]
        %v7464 = vld [vmem:[%s6872 + $0xb3] sm:$0xff]
        %v7465 = vld [vmem:[%s6872 + $0xc3] sm:$0xff]
        %v7466 = vld [vmem:[%s6872 + $0xcb] sm:$0xff]
        %v7467 = vld [vmem:[%s6872 + $0xdb] sm:$0xff]
        %v7468 = vld [vmem:[%s6872 + $0xe3] sm:$0xff]
        %v7469 = vld [vmem:[%s6872 + $0xf3] sm:$0xff]
        %v7470 = vld [vmem:[%s6872 + $0xfb] sm:$0xff]
        %v7471 = vld [vmem:[%s6872 + $0x10b] sm:$0xff]
        %v7472 = vld [vmem:[%s6872 + $0x113] sm:$0xff]
        %v7473 = vld [vmem:[%s6872 + $0x123] sm:$0xff]
        %v7474 = vld [vmem:[%s6872 + $0x12b] sm:$0xff]
        %v7475 = vld [vmem:[%s6872 + $0x13b] sm:$0xff]
        %v7476 = vld [vmem:[%s6872 + $0x143] sm:$0xff]
        %v7477 = vld [vmem:[%s6872 + $0x153] sm:$0xff]
        %v7478 = vld [vmem:[%s6872 + $0x15b] sm:$0xff]
        %v7479 = vld [vmem:[%s6872 + $0x16b] sm:$0xff]
        %v7480 = vld [vmem:[%s6872 + $0x173] sm:$0xff]
        %7513 = vrot.lane.b32.xlu0 %v7449, 56
        %v7514 = vpop.permute.xlu0 %7513
        %7515 = vrot.lane.b32.xlu0 %v7450, 56
        %v7516 = vpop.permute.xlu0 %7515
        %7517 = vrot.lane.b32.xlu0 %v7451, 56
        %v7518 = vpop.permute.xlu0 %7517
        %7519 = vrot.lane.b32.xlu0 %v7452, 56
        %v7520 = vpop.permute.xlu0 %7519
        %7521 = vrot.lane.b32.xlu0 %v7453, 56
        %v7522 = vpop.permute.xlu0 %7521
        %7523 = vrot.lane.b32.xlu0 %v7454, 56
        %v7524 = vpop.permute.xlu0 %7523
        %7525 = vrot.lane.b32.xlu0 %v7455, 56
        %v7526 = vpop.permute.xlu0 %7525
        %7527 = vrot.lane.b32.xlu0 %v7456, 56
        %v7528 = vpop.permute.xlu0 %7527
        %7529 = vrot.lane.b32.xlu0 %v7457, 56
        %v7530 = vpop.permute.xlu0 %7529
        %7531 = vrot.lane.b32.xlu0 %v7458, 56
        %v7532 = vpop.permute.xlu0 %7531
        %7533 = vrot.lane.b32.xlu0 %v7459, 56
        %v7534 = vpop.permute.xlu0 %7533
        %7535 = vrot.lane.b32.xlu0 %v7460, 56
        %v7536 = vpop.permute.xlu0 %7535
        %7537 = vrot.lane.b32.xlu0 %v7461, 56
        %v7538 = vpop.permute.xlu0 %7537
        %7539 = vrot.lane.b32.xlu0 %v7462, 56
        %v7540 = vpop.permute.xlu0 %7539
        %7541 = vrot.lane.b32.xlu0 %v7463, 56
        %v7542 = vpop.permute.xlu0 %7541
        %7543 = vrot.lane.b32.xlu0 %v7464, 56
        %v7544 = vpop.permute.xlu0 %7543
        %7545 = vrot.lane.b32.xlu0 %v7465, 56
        %v7546 = vpop.permute.xlu0 %7545
        %7547 = vrot.lane.b32.xlu0 %v7466, 56
        %v7548 = vpop.permute.xlu0 %7547
        %7549 = vrot.lane.b32.xlu0 %v7467, 56
        %v7550 = vpop.permute.xlu0 %7549
        %7551 = vrot.lane.b32.xlu0 %v7468, 56
        %v7552 = vpop.permute.xlu0 %7551
        %7553 = vrot.lane.b32.xlu0 %v7469, 56
        %v7554 = vpop.permute.xlu0 %7553
        %7555 = vrot.lane.b32.xlu0 %v7470, 56
        %v7556 = vpop.permute.xlu0 %7555
        %7557 = vrot.lane.b32.xlu0 %v7471, 56
        %v7558 = vpop.permute.xlu0 %7557
        %7559 = vrot.lane.b32.xlu0 %v7472, 56
        %v7560 = vpop.permute.xlu0 %7559
        %7561 = vrot.lane.b32.xlu0 %v7473, 56
        %v7562 = vpop.permute.xlu0 %7561
        %7563 = vrot.lane.b32.xlu0 %v7474, 56
        %v7564 = vpop.permute.xlu0 %7563
        %7565 = vrot.lane.b32.xlu0 %v7475, 56
        %v7566 = vpop.permute.xlu0 %7565
        %7567 = vrot.lane.b32.xlu0 %v7476, 56
        %v7568 = vpop.permute.xlu0 %7567
        %7569 = vrot.lane.b32.xlu0 %v7477, 56
        %v7570 = vpop.permute.xlu0 %7569
        %7571 = vrot.lane.b32.xlu0 %v7478, 56
        %v7572 = vpop.permute.xlu0 %7571
        %7573 = vrot.lane.b32.xlu0 %v7479, 56
        %v7574 = vpop.permute.xlu0 %7573
        %7575 = vrot.lane.b32.xlu0 %v7480, 56
        %v7576 = vpop.permute.xlu0 %7575
        %7609 = vst.msk [vmem:[#allocation6 + $0x8] sm:$0xff] %vm2418, %v7514
        %7610 = vst.msk [vmem:[#allocation6 + $0x18] sm:$0xff] %vm2418, %v7516
        %7611 = vst.msk [vmem:[#allocation6 + $0x28] sm:$0xff] %vm2418, %v7518
        %7612 = vst.msk [vmem:[#allocation6 + $0x38] sm:$0xff] %vm2418, %v7520
        %7613 = vst.msk [vmem:[#allocation6 + $0x48] sm:$0xff] %vm2418, %v7522
        %7614 = vst.msk [vmem:[#allocation6 + $0x58] sm:$0xff] %vm2418, %v7524
        %7615 = vst.msk [vmem:[#allocation6 + $0x68] sm:$0xff] %vm2418, %v7526
        %7616 = vst.msk [vmem:[#allocation6 + $0x78] sm:$0xff] %vm2418, %v7528
        %7617 = vst.msk [vmem:[#allocation6 + $0x88] sm:$0xff] %vm2418, %v7530
        %7618 = vst.msk [vmem:[#allocation6 + $0x98] sm:$0xff] %vm2418, %v7532
        %7619 = vst.msk [vmem:[#allocation6 + $0xa8] sm:$0xff] %vm2418, %v7534
        %7620 = vst.msk [vmem:[#allocation6 + $0xb8] sm:$0xff] %vm2418, %v7536
        %7621 = vst.msk [vmem:[#allocation6 + $0xc8] sm:$0xff] %vm2418, %v7538
        %7622 = vst.msk [vmem:[#allocation6 + $0xd8] sm:$0xff] %vm2418, %v7540
        %7623 = vst.msk [vmem:[#allocation6 + $0xe8] sm:$0xff] %vm2418, %v7542
        %7624 = vst.msk [vmem:[#allocation6 + $0xf8] sm:$0xff] %vm2418, %v7544
        %7625 = vst.msk [vmem:[#allocation6 + $0x108] sm:$0xff] %vm2418, %v7546
        %7626 = vst.msk [vmem:[#allocation6 + $0x118] sm:$0xff] %vm2418, %v7548
        %7627 = vst.msk [vmem:[#allocation6 + $0x128] sm:$0xff] %vm2418, %v7550
        %7628 = vst.msk [vmem:[#allocation6 + $0x138] sm:$0xff] %vm2418, %v7552
        %7629 = vst.msk [vmem:[#allocation6 + $0x148] sm:$0xff] %vm2418, %v7554
        %7630 = vst.msk [vmem:[#allocation6 + $0x158] sm:$0xff] %vm2418, %v7556
        %7631 = vst.msk [vmem:[#allocation6 + $0x168] sm:$0xff] %vm2418, %v7558
        %7632 = vst.msk [vmem:[#allocation6 + $0x178] sm:$0xff] %vm2418, %v7560
        %7633 = vst.msk [vmem:[#allocation6 + $0x188] sm:$0xff] %vm2418, %v7562
        %7634 = vst.msk [vmem:[#allocation6 + $0x198] sm:$0xff] %vm2418, %v7564
        %7635 = vst.msk [vmem:[#allocation6 + $0x1a8] sm:$0xff] %vm2418, %v7566
        %7636 = vst.msk [vmem:[#allocation6 + $0x1b8] sm:$0xff] %vm2418, %v7568
        %7637 = vst.msk [vmem:[#allocation6 + $0x1c8] sm:$0xff] %vm2418, %v7570
        %7638 = vst.msk [vmem:[#allocation6 + $0x1d8] sm:$0xff] %vm2418, %v7572
        %7639 = vst.msk [vmem:[#allocation6 + $0x1e8] sm:$0xff] %vm2418, %v7574
        %7640 = vst.msk [vmem:[#allocation6 + $0x1f8] sm:$0xff] %vm2418, %v7576
        %v7641 = vld [vmem:[%s6872 + $0x4] sm:$0xff]
        %v7642 = vld [vmem:[%s6872 + $0xc] sm:$0xff]
        %v7643 = vld [vmem:[%s6872 + $0x1c] sm:$0xff]
        %v7644 = vld [vmem:[%s6872 + $0x24] sm:$0xff]
        %v7645 = vld [vmem:[%s6872 + $0x34] sm:$0xff]
        %v7646 = vld [vmem:[%s6872 + $0x3c] sm:$0xff]
        %v7647 = vld [vmem:[%s6872 + $0x4c] sm:$0xff]
        %v7648 = vld [vmem:[%s6872 + $0x54] sm:$0xff]
        %v7649 = vld [vmem:[%s6872 + $0x64] sm:$0xff]
        %v7650 = vld [vmem:[%s6872 + $0x6c] sm:$0xff]
        %v7651 = vld [vmem:[%s6872 + $0x7c] sm:$0xff]
        %v7652 = vld [vmem:[%s6872 + $0x84] sm:$0xff]
        %v7653 = vld [vmem:[%s6872 + $0x94] sm:$0xff]
        %v7654 = vld [vmem:[%s6872 + $0x9c] sm:$0xff]
        %v7655 = vld [vmem:[%s6872 + $0xac] sm:$0xff]
        %v7656 = vld [vmem:[%s6872 + $0xb4] sm:$0xff]
        %v7657 = vld [vmem:[%s6872 + $0xc4] sm:$0xff]
        %v7658 = vld [vmem:[%s6872 + $0xcc] sm:$0xff]
        %v7659 = vld [vmem:[%s6872 + $0xdc] sm:$0xff]
        %v7660 = vld [vmem:[%s6872 + $0xe4] sm:$0xff]
        %v7661 = vld [vmem:[%s6872 + $0xf4] sm:$0xff]
        %v7662 = vld [vmem:[%s6872 + $0xfc] sm:$0xff]
        %v7663 = vld [vmem:[%s6872 + $0x10c] sm:$0xff]
        %v7664 = vld [vmem:[%s6872 + $0x114] sm:$0xff]
        %v7665 = vld [vmem:[%s6872 + $0x124] sm:$0xff]
        %v7666 = vld [vmem:[%s6872 + $0x12c] sm:$0xff]
        %v7667 = vld [vmem:[%s6872 + $0x13c] sm:$0xff]
        %v7668 = vld [vmem:[%s6872 + $0x144] sm:$0xff]
        %v7669 = vld [vmem:[%s6872 + $0x154] sm:$0xff]
        %v7670 = vld [vmem:[%s6872 + $0x15c] sm:$0xff]
        %v7671 = vld [vmem:[%s6872 + $0x16c] sm:$0xff]
        %v7672 = vld [vmem:[%s6872 + $0x174] sm:$0xff]
        %7705 = vrot.lane.b32.xlu0 %v7641, 64
        %v7706 = vpop.permute.xlu0 %7705
        %7707 = vrot.lane.b32.xlu0 %v7642, 64
        %v7708 = vpop.permute.xlu0 %7707
        %7709 = vrot.lane.b32.xlu0 %v7643, 64
        %v7710 = vpop.permute.xlu0 %7709
        %7711 = vrot.lane.b32.xlu0 %v7644, 64
        %v7712 = vpop.permute.xlu0 %7711
        %7713 = vrot.lane.b32.xlu0 %v7645, 64
        %v7714 = vpop.permute.xlu0 %7713
        %7715 = vrot.lane.b32.xlu0 %v7646, 64
        %v7716 = vpop.permute.xlu0 %7715
        %7717 = vrot.lane.b32.xlu0 %v7647, 64
        %v7718 = vpop.permute.xlu0 %7717
        %7719 = vrot.lane.b32.xlu0 %v7648, 64
        %v7720 = vpop.permute.xlu0 %7719
        %7721 = vrot.lane.b32.xlu0 %v7649, 64
        %v7722 = vpop.permute.xlu0 %7721
        %7723 = vrot.lane.b32.xlu0 %v7650, 64
        %v7724 = vpop.permute.xlu0 %7723
        %7725 = vrot.lane.b32.xlu0 %v7651, 64
        %v7726 = vpop.permute.xlu0 %7725
        %7727 = vrot.lane.b32.xlu0 %v7652, 64
        %v7728 = vpop.permute.xlu0 %7727
        %7729 = vrot.lane.b32.xlu0 %v7653, 64
        %v7730 = vpop.permute.xlu0 %7729
        %7731 = vrot.lane.b32.xlu0 %v7654, 64
        %v7732 = vpop.permute.xlu0 %7731
        %7733 = vrot.lane.b32.xlu0 %v7655, 64
        %v7734 = vpop.permute.xlu0 %7733
        %7735 = vrot.lane.b32.xlu0 %v7656, 64
        %v7736 = vpop.permute.xlu0 %7735
        %7737 = vrot.lane.b32.xlu0 %v7657, 64
        %v7738 = vpop.permute.xlu0 %7737
        %7739 = vrot.lane.b32.xlu0 %v7658, 64
        %v7740 = vpop.permute.xlu0 %7739
        %7741 = vrot.lane.b32.xlu0 %v7659, 64
        %v7742 = vpop.permute.xlu0 %7741
        %7743 = vrot.lane.b32.xlu0 %v7660, 64
        %v7744 = vpop.permute.xlu0 %7743
        %7745 = vrot.lane.b32.xlu0 %v7661, 64
        %v7746 = vpop.permute.xlu0 %7745
        %7747 = vrot.lane.b32.xlu0 %v7662, 64
        %v7748 = vpop.permute.xlu0 %7747
        %7749 = vrot.lane.b32.xlu0 %v7663, 64
        %v7750 = vpop.permute.xlu0 %7749
        %7751 = vrot.lane.b32.xlu0 %v7664, 64
        %v7752 = vpop.permute.xlu0 %7751
        %7753 = vrot.lane.b32.xlu0 %v7665, 64
        %v7754 = vpop.permute.xlu0 %7753
        %7755 = vrot.lane.b32.xlu0 %v7666, 64
        %v7756 = vpop.permute.xlu0 %7755
        %7757 = vrot.lane.b32.xlu0 %v7667, 64
        %v7758 = vpop.permute.xlu0 %7757
        %7759 = vrot.lane.b32.xlu0 %v7668, 64
        %v7760 = vpop.permute.xlu0 %7759
        %7761 = vrot.lane.b32.xlu0 %v7669, 64
        %v7762 = vpop.permute.xlu0 %7761
        %7763 = vrot.lane.b32.xlu0 %v7670, 64
        %v7764 = vpop.permute.xlu0 %7763
        %7765 = vrot.lane.b32.xlu0 %v7671, 64
        %v7766 = vpop.permute.xlu0 %7765
        %7767 = vrot.lane.b32.xlu0 %v7672, 64
        %v7768 = vpop.permute.xlu0 %7767
        %7801 = vst.msk [vmem:[#allocation6 + $0x8] sm:$0xff] %vm2611, %v7706
        %7802 = vst.msk [vmem:[#allocation6 + $0x18] sm:$0xff] %vm2611, %v7708
        %7803 = vst.msk [vmem:[#allocation6 + $0x28] sm:$0xff] %vm2611, %v7710
        %7804 = vst.msk [vmem:[#allocation6 + $0x38] sm:$0xff] %vm2611, %v7712
        %7805 = vst.msk [vmem:[#allocation6 + $0x48] sm:$0xff] %vm2611, %v7714
        %7806 = vst.msk [vmem:[#allocation6 + $0x58] sm:$0xff] %vm2611, %v7716
        %7807 = vst.msk [vmem:[#allocation6 + $0x68] sm:$0xff] %vm2611, %v7718
        %7808 = vst.msk [vmem:[#allocation6 + $0x78] sm:$0xff] %vm2611, %v7720
        %7809 = vst.msk [vmem:[#allocation6 + $0x88] sm:$0xff] %vm2611, %v7722
        %7810 = vst.msk [vmem:[#allocation6 + $0x98] sm:$0xff] %vm2611, %v7724
        %7811 = vst.msk [vmem:[#allocation6 + $0xa8] sm:$0xff] %vm2611, %v7726
        %7812 = vst.msk [vmem:[#allocation6 + $0xb8] sm:$0xff] %vm2611, %v7728
        %7813 = vst.msk [vmem:[#allocation6 + $0xc8] sm:$0xff] %vm2611, %v7730
        %7814 = vst.msk [vmem:[#allocation6 + $0xd8] sm:$0xff] %vm2611, %v7732
        %7815 = vst.msk [vmem:[#allocation6 + $0xe8] sm:$0xff] %vm2611, %v7734
        %7816 = vst.msk [vmem:[#allocation6 + $0xf8] sm:$0xff] %vm2611, %v7736
        %7817 = vst.msk [vmem:[#allocation6 + $0x108] sm:$0xff] %vm2611, %v7738
        %7818 = vst.msk [vmem:[#allocation6 + $0x118] sm:$0xff] %vm2611, %v7740
        %7819 = vst.msk [vmem:[#allocation6 + $0x128] sm:$0xff] %vm2611, %v7742
        %7820 = vst.msk [vmem:[#allocation6 + $0x138] sm:$0xff] %vm2611, %v7744
        %7821 = vst.msk [vmem:[#allocation6 + $0x148] sm:$0xff] %vm2611, %v7746
        %7822 = vst.msk [vmem:[#allocation6 + $0x158] sm:$0xff] %vm2611, %v7748
        %7823 = vst.msk [vmem:[#allocation6 + $0x168] sm:$0xff] %vm2611, %v7750
        %7824 = vst.msk [vmem:[#allocation6 + $0x178] sm:$0xff] %vm2611, %v7752
        %7825 = vst.msk [vmem:[#allocation6 + $0x188] sm:$0xff] %vm2611, %v7754
        %7826 = vst.msk [vmem:[#allocation6 + $0x198] sm:$0xff] %vm2611, %v7756
        %7827 = vst.msk [vmem:[#allocation6 + $0x1a8] sm:$0xff] %vm2611, %v7758
        %7828 = vst.msk [vmem:[#allocation6 + $0x1b8] sm:$0xff] %vm2611, %v7760
        %7829 = vst.msk [vmem:[#allocation6 + $0x1c8] sm:$0xff] %vm2611, %v7762
        %7830 = vst.msk [vmem:[#allocation6 + $0x1d8] sm:$0xff] %vm2611, %v7764
        %7831 = vst.msk [vmem:[#allocation6 + $0x1e8] sm:$0xff] %vm2611, %v7766
        %7832 = vst.msk [vmem:[#allocation6 + $0x1f8] sm:$0xff] %vm2611, %v7768
        %v7833 = vld [vmem:[#allocation6] sm:$0xff]
        %v7834 = vld [vmem:[#allocation6 + $0x8] sm:$0xff]
        %v7835 = vld [vmem:[#allocation6 + $0x10] sm:$0xff]
        %v7836 = vld [vmem:[#allocation6 + $0x18] sm:$0xff]
        %v7837 = vld [vmem:[#allocation6 + $0x20] sm:$0xff]
        %v7838 = vld [vmem:[#allocation6 + $0x28] sm:$0xff]
        %v7839 = vld [vmem:[#allocation6 + $0x30] sm:$0xff]
        %v7840 = vld [vmem:[#allocation6 + $0x38] sm:$0xff]
        %v7841 = vld [vmem:[#allocation6 + $0x40] sm:$0xff]
        %v7842 = vld [vmem:[#allocation6 + $0x48] sm:$0xff]
        %v7843 = vld [vmem:[#allocation6 + $0x50] sm:$0xff]
        %v7844 = vld [vmem:[#allocation6 + $0x58] sm:$0xff]
        %v7845 = vld [vmem:[#allocation6 + $0x60] sm:$0xff]
        %v7846 = vld [vmem:[#allocation6 + $0x68] sm:$0xff]
        %v7847 = vld [vmem:[#allocation6 + $0x70] sm:$0xff]
        %v7848 = vld [vmem:[#allocation6 + $0x78] sm:$0xff]
        %v7849 = vld [vmem:[#allocation6 + $0x80] sm:$0xff]
        %v7850 = vld [vmem:[#allocation6 + $0x88] sm:$0xff]
        %v7851 = vld [vmem:[#allocation6 + $0x90] sm:$0xff]
        %v7852 = vld [vmem:[#allocation6 + $0x98] sm:$0xff]
        %v7853 = vld [vmem:[#allocation6 + $0xa0] sm:$0xff]
        %v7854 = vld [vmem:[#allocation6 + $0xa8] sm:$0xff]
        %v7855 = vld [vmem:[#allocation6 + $0xb0] sm:$0xff]
        %v7856 = vld [vmem:[#allocation6 + $0xb8] sm:$0xff]
        %v7857 = vld [vmem:[#allocation6 + $0xc0] sm:$0xff]
        %v7858 = vld [vmem:[#allocation6 + $0xc8] sm:$0xff]
        %v7859 = vld [vmem:[#allocation6 + $0xd0] sm:$0xff]
        %v7860 = vld [vmem:[#allocation6 + $0xd8] sm:$0xff]
        %v7861 = vld [vmem:[#allocation6 + $0xe0] sm:$0xff]
        %v7862 = vld [vmem:[#allocation6 + $0xe8] sm:$0xff]
        %v7863 = vld [vmem:[#allocation6 + $0xf0] sm:$0xff]
        %v7864 = vld [vmem:[#allocation6 + $0xf8] sm:$0xff]
        %v7865 = vld [vmem:[#allocation6 + $0x100] sm:$0xff]
        %v7866 = vld [vmem:[#allocation6 + $0x108] sm:$0xff]
        %v7867 = vld [vmem:[#allocation6 + $0x110] sm:$0xff]
        %v7868 = vld [vmem:[#allocation6 + $0x118] sm:$0xff]
        %v7869 = vld [vmem:[#allocation6 + $0x120] sm:$0xff]
        %v7870 = vld [vmem:[#allocation6 + $0x128] sm:$0xff]
        %v7871 = vld [vmem:[#allocation6 + $0x130] sm:$0xff]
        %v7872 = vld [vmem:[#allocation6 + $0x138] sm:$0xff]
        %v7873 = vld [vmem:[#allocation6 + $0x140] sm:$0xff]
        %v7874 = vld [vmem:[#allocation6 + $0x148] sm:$0xff]
        %v7875 = vld [vmem:[#allocation6 + $0x150] sm:$0xff]
        %v7876 = vld [vmem:[#allocation6 + $0x158] sm:$0xff]
        %v7877 = vld [vmem:[#allocation6 + $0x160] sm:$0xff]
        %v7878 = vld [vmem:[#allocation6 + $0x168] sm:$0xff]
        %v7879 = vld [vmem:[#allocation6 + $0x170] sm:$0xff]
        %v7880 = vld [vmem:[#allocation6 + $0x178] sm:$0xff]
        %v7881 = vld [vmem:[#allocation6 + $0x180] sm:$0xff]
        %v7882 = vld [vmem:[#allocation6 + $0x188] sm:$0xff]
        %v7883 = vld [vmem:[#allocation6 + $0x190] sm:$0xff]
        %v7884 = vld [vmem:[#allocation6 + $0x198] sm:$0xff]
        %v7885 = vld [vmem:[#allocation6 + $0x1a0] sm:$0xff]
        %v7886 = vld [vmem:[#allocation6 + $0x1a8] sm:$0xff]
        %v7887 = vld [vmem:[#allocation6 + $0x1b0] sm:$0xff]
        %v7888 = vld [vmem:[#allocation6 + $0x1b8] sm:$0xff]
        %v7889 = vld [vmem:[#allocation6 + $0x1c0] sm:$0xff]
        %v7890 = vld [vmem:[#allocation6 + $0x1c8] sm:$0xff]
        %v7891 = vld [vmem:[#allocation6 + $0x1d0] sm:$0xff]
        %v7892 = vld [vmem:[#allocation6 + $0x1d8] sm:$0xff]
        %v7893 = vld [vmem:[#allocation6 + $0x1e0] sm:$0xff]
        %v7894 = vld [vmem:[#allocation6 + $0x1e8] sm:$0xff]
        %v7895 = vld [vmem:[#allocation6 + $0x1f0] sm:$0xff]
        %v7896 = vld [vmem:[#allocation6 + $0x1f8] sm:$0xff]
        %v7897 = vpack.c.bf16 %v7835, %v7833
        %v7898 = vpack.c.bf16 %v7836, %v7834
        %v7899 = vpack.c.bf16 %v7839, %v7837
        %v7900 = vpack.c.bf16 %v7840, %v7838
        %v7901 = vpack.c.bf16 %v7843, %v7841
        %v7902 = vpack.c.bf16 %v7844, %v7842
        %v7903 = vpack.c.bf16 %v7847, %v7845
        %v7904 = vpack.c.bf16 %v7848, %v7846
        %v7905 = vpack.c.bf16 %v7851, %v7849
        %v7906 = vpack.c.bf16 %v7852, %v7850
        %v7907 = vpack.c.bf16 %v7855, %v7853
        %v7908 = vpack.c.bf16 %v7856, %v7854
        %v7909 = vpack.c.bf16 %v7859, %v7857
        %v7910 = vpack.c.bf16 %v7860, %v7858
        %v7911 = vpack.c.bf16 %v7863, %v7861
        %v7912 = vpack.c.bf16 %v7864, %v7862
        %v7913 = vpack.c.bf16 %v7867, %v7865
        %v7914 = vpack.c.bf16 %v7868, %v7866
        %v7915 = vpack.c.bf16 %v7871, %v7869
        %v7916 = vpack.c.bf16 %v7872, %v7870
        %v7917 = vpack.c.bf16 %v7875, %v7873
        %v7918 = vpack.c.bf16 %v7876, %v7874
        %v7919 = vpack.c.bf16 %v7879, %v7877
        %v7920 = vpack.c.bf16 %v7880, %v7878
        %v7921 = vpack.c.bf16 %v7883, %v7881
        %v7922 = vpack.c.bf16 %v7884, %v7882
        %v7923 = vpack.c.bf16 %v7887, %v7885
        %v7924 = vpack.c.bf16 %v7888, %v7886
        %v7925 = vpack.c.bf16 %v7891, %v7889
        %v7926 = vpack.c.bf16 %v7892, %v7890
        %v7927 = vpack.c.bf16 %v7895, %v7893
        %v7928 = vpack.c.bf16 %v7896, %v7894
        %v7929 = vld [vmem:[%s9] sm:$0xf]
        %v7930 = vld [vmem:[%s9 + $0x4] sm:$0xf]
        %v7931 = vld [vmem:[%s9 + $0x8] sm:$0xf]
        %v7932 = vld [vmem:[%s9 + $0xc] sm:$0xf]
        %v7933 = vld [vmem:[%s9 + $0x10] sm:$0xf]
        %v7934 = vld [vmem:[%s9 + $0x14] sm:$0xf]
        %v7935 = vld [vmem:[%s9 + $0x18] sm:$0xf]
        %v7936 = vld [vmem:[%s9 + $0x1c] sm:$0xf]
        %v7937 = vld [vmem:[%s9 + $0x20] sm:$0xf]
        %v7938 = vld [vmem:[%s9 + $0x24] sm:$0xf]
        %v7939 = vld [vmem:[%s9 + $0x28] sm:$0xf]
        %v7940 = vld [vmem:[%s9 + $0x2c] sm:$0xf]
        %v7941 = vld [vmem:[%s9 + $0x30] sm:$0xf]
        %v7942 = vld [vmem:[%s9 + $0x34] sm:$0xf]
        %v7943 = vld [vmem:[%s9 + $0x38] sm:$0xf]
        %v7944 = vld [vmem:[%s9 + $0x3c] sm:$0xf]
        %v7945 = vld [vmem:[%s9 + $0x40] sm:$0xf]
        %v7946 = vld [vmem:[%s9 + $0x44] sm:$0xf]
        %v7947 = vld [vmem:[%s9 + $0x48] sm:$0xf]
        %v7948 = vld [vmem:[%s9 + $0x4c] sm:$0xf]
        %v7949 = vld [vmem:[%s9 + $0x50] sm:$0xf]
        %v7950 = vld [vmem:[%s9 + $0x54] sm:$0xf]
        %v7951 = vld [vmem:[%s9 + $0x58] sm:$0xf]
        %v7952 = vld [vmem:[%s9 + $0x5c] sm:$0xf]
        %v7953 = vld [vmem:[%s9 + $0x60] sm:$0xf]
        %v7954 = vld [vmem:[%s10] sm:$0x1]
        %v7956 = vlaneseq
        %v7957 = vshrl.u32 %v7956, 7
        %v7958 = vsub.s32 0, %v7957
        %v7959 = vrot.slane %v7954, %v7958
        %v7986 = vunpack.c.l.b16 %v7929
        %v7987 = vunpack.c.l.b16 %v7930
        %v7988 = vunpack.c.l.b16 %v7931
        %v7989 = vunpack.c.l.b16 %v7932
        %v7990 = vunpack.c.l.b16 %v7933
        %v7991 = vunpack.c.l.b16 %v7934
        %v7992 = vunpack.c.l.b16 %v7935
        %v7993 = vunpack.c.l.b16 %v7936
        %v7994 = vunpack.c.l.b16 %v7937
        %v7995 = vunpack.c.l.b16 %v7938
        %v7996 = vunpack.c.l.b16 %v7939
        %v7997 = vunpack.c.l.b16 %v7940
        %v7998 = vunpack.c.l.b16 %v7941
        %v7999 = vunpack.c.l.b16 %v7942
        %v8000 = vunpack.c.l.b16 %v7943
        %v8001 = vunpack.c.l.b16 %v7944
        %v8002 = vunpack.c.l.b16 %v7945
        %v8003 = vunpack.c.l.b16 %v7946
        %v8004 = vunpack.c.l.b16 %v7947
        %v8005 = vunpack.c.l.b16 %v7948
        %v8006 = vunpack.c.l.b16 %v7949
        %v8007 = vunpack.c.l.b16 %v7950
        %v8008 = vunpack.c.l.b16 %v7951
        %v8009 = vunpack.c.l.b16 %v7952
        %v8010 = vunpack.c.l.b16 %v7953
        %v8011 = vpack.c.b16 %v7987, %v7986
        %v8012 = vpack.c.b16 %v7989, %v7988
        %v8013 = vpack.c.b16 %v7991, %v7990
        %v8014 = vpack.c.b16 %v7993, %v7992
        %v8015 = vpack.c.b16 %v7995, %v7994
        %v8016 = vpack.c.b16 %v7997, %v7996
        %v8017 = vpack.c.b16 %v7999, %v7998
        %v8018 = vpack.c.b16 %v8001, %v8000
        %v8019 = vpack.c.b16 %v8003, %v8002
        %v8020 = vpack.c.b16 %v8005, %v8004
        %v8021 = vpack.c.b16 %v8007, %v8006
        %v8022 = vpack.c.b16 %v8009, %v8008
        %v8023 = vpack.c.b16 %v8010, %v8010
        %v8037 = vsel %vm2735, %v7898, 0
        %v8040 = vsel %vm2735, %v7900, 0
        %v8043 = vsel %vm2735, %v7902, 0
        %v8046 = vsel %vm2735, %v7904, 0
        %v8049 = vsel %vm2735, %v7906, 0
        %v8052 = vsel %vm2735, %v7908, 0
        %v8055 = vsel %vm2735, %v7910, 0
        %v8058 = vsel %vm2735, %v7912, 0
        %v8061 = vsel %vm2735, %v7914, 0
        %v8064 = vsel %vm2735, %v7916, 0
        %v8067 = vsel %vm2735, %v7918, 0
        %v8070 = vsel %vm2735, %v7920, 0
        %v8073 = vsel %vm2735, %v7922, 0
        %v8076 = vsel %vm2735, %v7924, 0
        %v8079 = vsel %vm2735, %v7926, 0
        %v8082 = vsel %vm2735, %v7928, 0
        %v8085 = vsel %vm2784, %v8023, 0
        %8087 = vmatprep.subr.bf16.mxu0 0
        %8088 = vmatpush1.bf16.msra.mxu0 %v8011
        %8089 = vmatprep.subr.bf16.mxu0 0
        %8090 = vmatpush1.bf16.msra.mxu0 %v8012
        %8091 = vmatprep.subr.bf16.mxu0 0
        %8092 = vmatpush1.bf16.msra.mxu0 %v8013
        %8093 = vmatprep.subr.bf16.mxu0 0
        %8094 = vmatpush1.bf16.msra.mxu0 %v8014
        %8095 = vmatprep.subr.bf16.mxu0 0
        %8096 = vmatpush1.bf16.msra.mxu0 %v8015
        %8097 = vmatprep.subr.bf16.mxu0 0
        %8098 = vmatpush1.bf16.msra.mxu0 %v8016
        %8099 = vmatprep.subr.bf16.mxu0 0
        %8100 = vmatpush1.bf16.msra.mxu0 %v8017
        %8101 = vmatprep.subr.bf16.mxu0 0
        %8102 = vmatpush1.bf16.msra.mxu0 %v8018
        %8103 = vmatprep.subr.bf16.mxu0 0
        %8104 = vmatpush1.bf16.msra.mxu0 %v8019
        %8105 = vmatprep.subr.bf16.mxu0 0
        %8106 = vmatpush1.bf16.msra.mxu0 %v8020
        %8107 = vmatprep.subr.bf16.mxu0 0
        %8108 = vmatpush1.bf16.msra.mxu0 %v8021
        %8109 = vmatprep.subr.bf16.mxu0 0
        %8110 = vmatpush1.bf16.msra.mxu0 %v8022
        %8111 = vmatprep.subr.bf16.mxu0 0
        %8112 = vmatpush1.bf16.msra.mxu0 %v8085
        %8113 = vmatprep.subr.bf16.mxu0 0
        %8114 = vmatpush1.bf16.msra.mxu0 0
        %8115 = vmatprep.subr.bf16.mxu0 0
        %8116 = vmatpush1.bf16.msra.mxu0 0
        %8117 = vmatprep.subr.bf16.mxu0 0
        %8118 = vmatpush1.bf16.msra.mxu0 0
        %8119 = vmatprep.mubr.bf16.mxu0 %v8037
        %8120 = vmatmul.mubr.bf16.gmra.mrb[0].mxu0 %v7897
        %v8121 = vpop.f32.mrb[0].mxu0
        %v8122 = vadd.f32 %v7959, %v8121
        %v8123 = vpop.f32.mrb[0].mxu0
        %v8124 = vpop.f32.mrb[0].mxu0
        %v8125 = vadd.f32 %v7959, %v8124
        %v8126 = vpop.f32.mrb[0].mxu0
        %8127 = vmatprep.mubr.bf16.mxu0 %v8040
        %8128 = vmatmul.mubr.bf16.gmra.mrb[0].mxu0 %v7899
        %v8129 = vpop.f32.mrb[0].mxu0
        %v8130 = vadd.f32 %v7959, %v8129
        %v8131 = vpop.f32.mrb[0].mxu0
        %v8132 = vpop.f32.mrb[0].mxu0
        %v8133 = vadd.f32 %v7959, %v8132
        %v8134 = vpop.f32.mrb[0].mxu0
        %8135 = vmatprep.mubr.bf16.mxu0 %v8043
        %8136 = vmatmul.mubr.bf16.gmra.mrb[0].mxu0 %v7901
        %v8137 = vpop.f32.mrb[0].mxu0
        %v8138 = vadd.f32 %v7959, %v8137
        %v8139 = vpop.f32.mrb[0].mxu0
        %v8140 = vpop.f32.mrb[0].mxu0
        %v8141 = vadd.f32 %v7959, %v8140
        %v8142 = vpop.f32.mrb[0].mxu0
        %8143 = vmatprep.mubr.bf16.mxu0 %v8046
        %8144 = vmatmul.mubr.bf16.gmra.mrb[0].mxu0 %v7903
        %v8145 = vpop.f32.mrb[0].mxu0
        %v8146 = vadd.f32 %v7959, %v8145
        %v8147 = vpop.f32.mrb[0].mxu0
        %v8148 = vpop.f32.mrb[0].mxu0
        %v8149 = vadd.f32 %v7959, %v8148
        %v8150 = vpop.f32.mrb[0].mxu0
        %8151 = vmatprep.mubr.bf16.mxu0 %v8049
        %8152 = vmatmul.mubr.bf16.gmra.mrb[0].mxu0 %v7905
        %v8153 = vpop.f32.mrb[0].mxu0
        %v8154 = vadd.f32 %v7959, %v8153
        %v8155 = vpop.f32.mrb[0].mxu0
        %v8156 = vpop.f32.mrb[0].mxu0
        %v8157 = vadd.f32 %v7959, %v8156
        %v8158 = vpop.f32.mrb[0].mxu0
        %8159 = vmatprep.mubr.bf16.mxu0 %v8052
        %8160 = vmatmul.mubr.bf16.gmra.mrb[0].mxu0 %v7907
        %v8161 = vpop.f32.mrb[0].mxu0
        %v8162 = vadd.f32 %v7959, %v8161
        %v8163 = vpop.f32.mrb[0].mxu0
        %v8164 = vpop.f32.mrb[0].mxu0
        %v8165 = vadd.f32 %v7959, %v8164
        %v8166 = vpop.f32.mrb[0].mxu0
        %8167 = vmatprep.mubr.bf16.mxu0 %v8055
        %8168 = vmatmul.mubr.bf16.gmra.mrb[0].mxu0 %v7909
        %v8169 = vpop.f32.mrb[0].mxu0
        %v8170 = vadd.f32 %v7959, %v8169
        %v8171 = vpop.f32.mrb[0].mxu0
        %v8172 = vpop.f32.mrb[0].mxu0
        %v8173 = vadd.f32 %v7959, %v8172
        %v8174 = vpop.f32.mrb[0].mxu0
        %8175 = vmatprep.mubr.bf16.mxu0 %v8058
        %8176 = vmatmul.mubr.bf16.gmra.mrb[0].mxu0 %v7911
        %v8177 = vpop.f32.mrb[0].mxu0
        %v8178 = vadd.f32 %v7959, %v8177
        %v8179 = vpop.f32.mrb[0].mxu0
        %v8180 = vpop.f32.mrb[0].mxu0
        %v8181 = vadd.f32 %v7959, %v8180
        %v8182 = vpop.f32.mrb[0].mxu0
        %8183 = vmatprep.mubr.bf16.mxu0 %v8061
        %8184 = vmatmul.mubr.bf16.gmra.mrb[0].mxu0 %v7913
        %v8185 = vpop.f32.mrb[0].mxu0
        %v8186 = vadd.f32 %v7959, %v8185
        %v8187 = vpop.f32.mrb[0].mxu0
        %v8188 = vpop.f32.mrb[0].mxu0
        %v8189 = vadd.f32 %v7959, %v8188
        %v8190 = vpop.f32.mrb[0].mxu0
        %8191 = vmatprep.mubr.bf16.mxu0 %v8064
        %8192 = vmatmul.mubr.bf16.gmra.mrb[0].mxu0 %v7915
        %v8193 = vpop.f32.mrb[0].mxu0
        %v8194 = vadd.f32 %v7959, %v8193
        %v8195 = vpop.f32.mrb[0].mxu0
        %v8196 = vpop.f32.mrb[0].mxu0
        %v8197 = vadd.f32 %v7959, %v8196
        %v8198 = vpop.f32.mrb[0].mxu0
        %8199 = vmatprep.mubr.bf16.mxu0 %v8067
        %8200 = vmatmul.mubr.bf16.gmra.mrb[0].mxu0 %v7917
        %v8201 = vpop.f32.mrb[0].mxu0
        %v8202 = vadd.f32 %v7959, %v8201
        %v8203 = vpop.f32.mrb[0].mxu0
        %v8204 = vpop.f32.mrb[0].mxu0
        %v8205 = vadd.f32 %v7959, %v8204
        %v8206 = vpop.f32.mrb[0].mxu0
        %8207 = vmatprep.mubr.bf16.mxu0 %v8070
        %8208 = vmatmul.mubr.bf16.gmra.mrb[0].mxu0 %v7919
        %v8209 = vpop.f32.mrb[0].mxu0
        %v8210 = vadd.f32 %v7959, %v8209
        %v8211 = vpop.f32.mrb[0].mxu0
        %v8212 = vpop.f32.mrb[0].mxu0
        %v8213 = vadd.f32 %v7959, %v8212
        %v8214 = vpop.f32.mrb[0].mxu0
        %8215 = vmatprep.mubr.bf16.mxu0 %v8073
        %8216 = vmatmul.mubr.bf16.gmra.mrb[0].mxu0 %v7921
        %v8217 = vpop.f32.mrb[0].mxu0
        %v8218 = vadd.f32 %v7959, %v8217
        %v8219 = vpop.f32.mrb[0].mxu0
        %v8220 = vpop.f32.mrb[0].mxu0
        %v8221 = vadd.f32 %v7959, %v8220
        %v8222 = vpop.f32.mrb[0].mxu0
        %8223 = vmatprep.mubr.bf16.mxu0 %v8076
        %8224 = vmatmul.mubr.bf16.gmra.mrb[0].mxu0 %v7923
        %v8225 = vpop.f32.mrb[0].mxu0
        %v8226 = vadd.f32 %v7959, %v8225
        %v8227 = vpop.f32.mrb[0].mxu0
        %v8228 = vpop.f32.mrb[0].mxu0
        %v8229 = vadd.f32 %v7959, %v8228
        %v8230 = vpop.f32.mrb[0].mxu0
        %8231 = vmatprep.mubr.bf16.mxu0 %v8079
        %8232 = vmatmul.mubr.bf16.gmra.mrb[0].mxu0 %v7925
        %v8233 = vpop.f32.mrb[0].mxu0
        %v8234 = vadd.f32 %v7959, %v8233
        %v8235 = vpop.f32.mrb[0].mxu0
        %v8236 = vpop.f32.mrb[0].mxu0
        %v8237 = vadd.f32 %v7959, %v8236
        %v8238 = vpop.f32.mrb[0].mxu0
        %8239 = vmatprep.mubr.bf16.mxu0 %v8082
        %8240 = vmatmul.mubr.bf16.gmra.mrb[0].mxu0 %v7927
        %v8241 = vpop.f32.mrb[0].mxu0
        %v8242 = vadd.f32 %v7959, %v8241
        %v8243 = vpop.f32.mrb[0].mxu0
        %v8244 = vpop.f32.mrb[0].mxu0
        %v8245 = vadd.f32 %v7959, %v8244
        %v8246 = vpop.f32.mrb[0].mxu0
        %8247 = vdwg.mxu0
        %v8248 = vmax.f32 %v8122, 0.0
        %v8249 = vmax.f32 %v8125, 0.0
        %v8250 = vmax.f32 %v8130, 0.0
        %v8251 = vmax.f32 %v8133, 0.0
        %v8252 = vmax.f32 %v8138, 0.0
        %v8253 = vmax.f32 %v8141, 0.0
        %v8254 = vmax.f32 %v8146, 0.0
        %v8255 = vmax.f32 %v8149, 0.0
        %v8256 = vmax.f32 %v8154, 0.0
        %v8257 = vmax.f32 %v8157, 0.0
        %v8258 = vmax.f32 %v8162, 0.0
        %v8259 = vmax.f32 %v8165, 0.0
        %v8260 = vmax.f32 %v8170, 0.0
        %v8261 = vmax.f32 %v8173, 0.0
        %v8262 = vmax.f32 %v8178, 0.0
        %v8263 = vmax.f32 %v8181, 0.0
        %v8264 = vmax.f32 %v8186, 0.0
        %v8265 = vmax.f32 %v8189, 0.0
        %v8266 = vmax.f32 %v8194, 0.0
        %v8267 = vmax.f32 %v8197, 0.0
        %v8268 = vmax.f32 %v8202, 0.0
        %v8269 = vmax.f32 %v8205, 0.0
        %v8270 = vmax.f32 %v8210, 0.0
        %v8271 = vmax.f32 %v8213, 0.0
        %v8272 = vmax.f32 %v8218, 0.0
        %v8273 = vmax.f32 %v8221, 0.0
        %v8274 = vmax.f32 %v8226, 0.0
        %v8275 = vmax.f32 %v8229, 0.0
        %v8276 = vmax.f32 %v8234, 0.0
        %v8277 = vmax.f32 %v8237, 0.0
        %v8278 = vmax.f32 %v8242, 0.0
        %v8279 = vmax.f32 %v8245, 0.0
        %8280 = vst.msk [vmem:[#allocation4] sm:$0xff] %vm496, -inf
        %8281 = vst.msk [vmem:[#allocation4 + $0x8] sm:$0xff] %vm496, -inf
        %vm8282 = vcmask 25600
        %8283 = vst.msk [vmem:[#allocation4 + $0x10] sm:$0x3] %vm8282, -inf
        %8284 = vst.msk [vmem:[#allocation4 + $0x18] sm:$0xff] %vm496, -inf
        %8285 = vst.msk [vmem:[#allocation4 + $0x20] sm:$0xff] %vm496, -inf
        %8286 = vst.msk [vmem:[#allocation4 + $0x28] sm:$0x3] %vm8282, -inf
        %8287 = vst.msk [vmem:[#allocation4 + $0x30] sm:$0xff] %vm496, -inf
        %8288 = vst.msk [vmem:[#allocation4 + $0x38] sm:$0xff] %vm496, -inf
        %8289 = vst.msk [vmem:[#allocation4 + $0x40] sm:$0x3] %vm8282, -inf
        %8290 = vst.msk [vmem:[#allocation4 + $0x48] sm:$0xff] %vm496, -inf
        %8291 = vst.msk [vmem:[#allocation4 + $0x50] sm:$0xff] %vm496, -inf
        %8292 = vst.msk [vmem:[#allocation4 + $0x58] sm:$0x3] %vm8282, -inf
        %8293 = vst.msk [vmem:[#allocation4 + $0x60] sm:$0xff] %vm496, -inf
        %8294 = vst.msk [vmem:[#allocation4 + $0x68] sm:$0xff] %vm496, -inf
        %8295 = vst.msk [vmem:[#allocation4 + $0x70] sm:$0x3] %vm8282, -inf
        %8296 = vst.msk [vmem:[#allocation4 + $0x78] sm:$0xff] %vm496, -inf
        %8297 = vst.msk [vmem:[#allocation4 + $0x80] sm:$0xff] %vm496, -inf
        %8298 = vst.msk [vmem:[#allocation4 + $0x88] sm:$0x3] %vm8282, -inf
        %8299 = vst.msk [vmem:[#allocation4 + $0x90] sm:$0xff] %vm496, -inf
        %8300 = vst.msk [vmem:[#allocation4 + $0x98] sm:$0xff] %vm496, -inf
        %8301 = vst.msk [vmem:[#allocation4 + $0xa0] sm:$0x3] %vm8282, -inf
        %8302 = vst.msk [vmem:[#allocation4 + $0xa8] sm:$0xff] %vm496, -inf
        %8303 = vst.msk [vmem:[#allocation4 + $0xb0] sm:$0xff] %vm496, -inf
        %8304 = vst.msk [vmem:[#allocation4 + $0xb8] sm:$0x3] %vm8282, -inf
        %8305 = vst.msk [vmem:[#allocation4 + $0xc0] sm:$0xff] %vm496, -inf
        %8306 = vst.msk [vmem:[#allocation4 + $0xc8] sm:$0xff] %vm496, -inf
        %8307 = vst.msk [vmem:[#allocation4 + $0xd0] sm:$0x3] %vm8282, -inf
        %8308 = vst.msk [vmem:[#allocation4 + $0xd8] sm:$0xff] %vm496, -inf
        %8309 = vst.msk [vmem:[#allocation4 + $0xe0] sm:$0xff] %vm496, -inf
        %8310 = vst.msk [vmem:[#allocation4 + $0xe8] sm:$0x3] %vm8282, -inf
        %8311 = vst.msk [vmem:[#allocation4 + $0xf0] sm:$0xff] %vm496, -inf
        %8312 = vst.msk [vmem:[#allocation4 + $0xf8] sm:$0xff] %vm496, -inf
        %8313 = vst.msk [vmem:[#allocation4 + $0x100] sm:$0x3] %vm8282, -inf
        %8314 = vst.msk [vmem:[#allocation4 + $0x108] sm:$0xff] %vm496, -inf
        %8315 = vst.msk [vmem:[#allocation4 + $0x110] sm:$0xff] %vm496, -inf
        %8316 = vst.msk [vmem:[#allocation4 + $0x118] sm:$0x3] %vm8282, -inf
        %8317 = vst.msk [vmem:[#allocation4 + $0x120] sm:$0xff] %vm496, -inf
        %8318 = vst.msk [vmem:[#allocation4 + $0x128] sm:$0xff] %vm496, -inf
        %8319 = vst.msk [vmem:[#allocation4 + $0x130] sm:$0x3] %vm8282, -inf
        %8320 = vst.msk [vmem:[#allocation4 + $0x138] sm:$0xff] %vm496, -inf
        %8321 = vst.msk [vmem:[#allocation4 + $0x140] sm:$0xff] %vm496, -inf
        %8322 = vst.msk [vmem:[#allocation4 + $0x148] sm:$0x3] %vm8282, -inf
        %8323 = vst.msk [vmem:[#allocation4 + $0x150] sm:$0xff] %vm496, -inf
        %8324 = vst.msk [vmem:[#allocation4 + $0x158] sm:$0xff] %vm496, -inf
        %8325 = vst.msk [vmem:[#allocation4 + $0x160] sm:$0x3] %vm8282, -inf
        %8326 = vst.msk [vmem:[#allocation4 + $0x168] sm:$0xff] %vm496, -inf
        %8327 = vst.msk [vmem:[#allocation4 + $0x170] sm:$0xff] %vm496, -inf
        %8328 = vst.msk [vmem:[#allocation4 + $0x178] sm:$0x3] %vm8282, -inf
        %8329 = vst.msk [vmem:[#allocation4 + $0x180] sm:$0xff] %vm496, -inf
        %8330 = vst.msk [vmem:[#allocation4 + $0x188] sm:$0xff] %vm496, -inf
        %8331 = vst.msk [vmem:[#allocation4 + $0x190] sm:$0x3] %vm8282, -inf
        %8332 = vst.msk [vmem:[#allocation4 + $0x198] sm:$0xff] %vm496, -inf
        %8333 = vst.msk [vmem:[#allocation4 + $0x1a0] sm:$0xff] %vm496, -inf
        %8334 = vst.msk [vmem:[#allocation4 + $0x1a8] sm:$0x3] %vm8282, -inf
        %s8335 = scalar_lea.vmem [#allocation4], 24
        %8336 = vst.msk [vmem:[%s8335 + $0x1] sm:$0xff] %vm496, %v440
        %8337 = vst.msk [vmem:[%s8335 + $0x9] sm:$0xff] %vm496, %v441
        %8338 = vst.msk [vmem:[%s8335 + $0x19] sm:$0xff] %vm496, %v442
        %8339 = vst.msk [vmem:[%s8335 + $0x21] sm:$0xff] %vm496, %v443
        %8340 = vst.msk [vmem:[%s8335 + $0x31] sm:$0xff] %vm496, %v444
        %8341 = vst.msk [vmem:[%s8335 + $0x39] sm:$0xff] %vm496, %v445
        %8342 = vst.msk [vmem:[%s8335 + $0x49] sm:$0xff] %vm496, %v446
        %8343 = vst.msk [vmem:[%s8335 + $0x51] sm:$0xff] %vm496, %v447
        %8344 = vst.msk [vmem:[%s8335 + $0x61] sm:$0xff] %vm496, %v448
        %8345 = vst.msk [vmem:[%s8335 + $0x69] sm:$0xff] %vm496, %v449
        %8346 = vst.msk [vmem:[%s8335 + $0x79] sm:$0xff] %vm496, %v450
        %8347 = vst.msk [vmem:[%s8335 + $0x81] sm:$0xff] %vm496, %v451
        %8348 = vst.msk [vmem:[%s8335 + $0x91] sm:$0xff] %vm496, %v452
        %8349 = vst.msk [vmem:[%s8335 + $0x99] sm:$0xff] %vm496, %v453
        %8350 = vst.msk [vmem:[%s8335 + $0xa9] sm:$0xff] %vm496, %v454
        %8351 = vst.msk [vmem:[%s8335 + $0xb1] sm:$0xff] %vm496, %v455
        %8352 = vst.msk [vmem:[%s8335 + $0xc1] sm:$0xff] %vm496, %v456
        %8353 = vst.msk [vmem:[%s8335 + $0xc9] sm:$0xff] %vm496, %v457
        %8354 = vst.msk [vmem:[%s8335 + $0xd9] sm:$0xff] %vm496, %v458
        %8355 = vst.msk [vmem:[%s8335 + $0xe1] sm:$0xff] %vm496, %v459
        %8356 = vst.msk [vmem:[%s8335 + $0xf1] sm:$0xff] %vm496, %v460
        %8357 = vst.msk [vmem:[%s8335 + $0xf9] sm:$0xff] %vm496, %v461
        %8358 = vst.msk [vmem:[%s8335 + $0x109] sm:$0xff] %vm496, %v462
        %8359 = vst.msk [vmem:[%s8335 + $0x111] sm:$0xff] %vm496, %v463
        %8360 = vst.msk [vmem:[%s8335 + $0x121] sm:$0xff] %vm496, %v464
        %8361 = vst.msk [vmem:[%s8335 + $0x129] sm:$0xff] %vm496, %v465
        %8362 = vst.msk [vmem:[%s8335 + $0x139] sm:$0xff] %vm496, %v466
        %8363 = vst.msk [vmem:[%s8335 + $0x141] sm:$0xff] %vm496, %v467
        %8364 = vst.msk [vmem:[%s8335 + $0x151] sm:$0xff] %vm496, %v468
        %8365 = vst.msk [vmem:[%s8335 + $0x159] sm:$0xff] %vm496, %v469
        %8366 = vst.msk [vmem:[%s8335 + $0x169] sm:$0xff] %vm496, %v470
        %8367 = vst.msk [vmem:[%s8335 + $0x171] sm:$0xff] %vm496, %v471
        %v8368 = vld [vmem:[#allocation4] sm:$0xff]
        %v8369 = vld [vmem:[#allocation4 + $0x8] sm:$0xff]
        %v8370 = vld [vmem:[#allocation4 + $0x18] sm:$0xff]
        %v8371 = vld [vmem:[#allocation4 + $0x20] sm:$0xff]
        %v8372 = vld [vmem:[#allocation4 + $0x30] sm:$0xff]
        %v8373 = vld [vmem:[#allocation4 + $0x38] sm:$0xff]
        %v8374 = vld [vmem:[#allocation4 + $0x48] sm:$0xff]
        %v8375 = vld [vmem:[#allocation4 + $0x50] sm:$0xff]
        %v8376 = vld [vmem:[#allocation4 + $0x60] sm:$0xff]
        %v8377 = vld [vmem:[#allocation4 + $0x68] sm:$0xff]
        %v8378 = vld [vmem:[#allocation4 + $0x78] sm:$0xff]
        %v8379 = vld [vmem:[#allocation4 + $0x80] sm:$0xff]
        %v8380 = vld [vmem:[#allocation4 + $0x90] sm:$0xff]
        %v8381 = vld [vmem:[#allocation4 + $0x98] sm:$0xff]
        %v8382 = vld [vmem:[#allocation4 + $0xa8] sm:$0xff]
        %v8383 = vld [vmem:[#allocation4 + $0xb0] sm:$0xff]
        %v8384 = vld [vmem:[#allocation4 + $0xc0] sm:$0xff]
        %v8385 = vld [vmem:[#allocation4 + $0xc8] sm:$0xff]
        %v8386 = vld [vmem:[#allocation4 + $0xd8] sm:$0xff]
        %v8387 = vld [vmem:[#allocation4 + $0xe0] sm:$0xff]
        %v8388 = vld [vmem:[#allocation4 + $0xf0] sm:$0xff]
        %v8389 = vld [vmem:[#allocation4 + $0xf8] sm:$0xff]
        %v8390 = vld [vmem:[#allocation4 + $0x108] sm:$0xff]
        %v8391 = vld [vmem:[#allocation4 + $0x110] sm:$0xff]
        %v8392 = vld [vmem:[#allocation4 + $0x120] sm:$0xff]
        %v8393 = vld [vmem:[#allocation4 + $0x128] sm:$0xff]
        %v8394 = vld [vmem:[#allocation4 + $0x138] sm:$0xff]
        %v8395 = vld [vmem:[#allocation4 + $0x140] sm:$0xff]
        %v8396 = vld [vmem:[#allocation4 + $0x150] sm:$0xff]
        %v8397 = vld [vmem:[#allocation4 + $0x158] sm:$0xff]
        %v8398 = vld [vmem:[#allocation4 + $0x168] sm:$0xff]
        %v8399 = vld [vmem:[#allocation4 + $0x170] sm:$0xff]
        %v8400 = vld [vmem:[#allocation4 + $0x1] sm:$0xff]
        %v8401 = vld [vmem:[#allocation4 + $0x9] sm:$0xff]
        %v8402 = vld [vmem:[#allocation4 + $0x19] sm:$0xff]
        %v8403 = vld [vmem:[#allocation4 + $0x21] sm:$0xff]
        %v8404 = vld [vmem:[#allocation4 + $0x31] sm:$0xff]
        %v8405 = vld [vmem:[#allocation4 + $0x39] sm:$0xff]
        %v8406 = vld [vmem:[#allocation4 + $0x49] sm:$0xff]
        %v8407 = vld [vmem:[#allocation4 + $0x51] sm:$0xff]
        %v8408 = vld [vmem:[#allocation4 + $0x61] sm:$0xff]
        %v8409 = vld [vmem:[#allocation4 + $0x69] sm:$0xff]
        %v8410 = vld [vmem:[#allocation4 + $0x79] sm:$0xff]
        %v8411 = vld [vmem:[#allocation4 + $0x81] sm:$0xff]
        %v8412 = vld [vmem:[#allocation4 + $0x91] sm:$0xff]
        %v8413 = vld [vmem:[#allocation4 + $0x99] sm:$0xff]
        %v8414 = vld [vmem:[#allocation4 + $0xa9] sm:$0xff]
        %v8415 = vld [vmem:[#allocation4 + $0xb1] sm:$0xff]
        %v8416 = vld [vmem:[#allocation4 + $0xc1] sm:$0xff]
        %v8417 = vld [vmem:[#allocation4 + $0xc9] sm:$0xff]
        %v8418 = vld [vmem:[#allocation4 + $0xd9] sm:$0xff]
        %v8419 = vld [vmem:[#allocation4 + $0xe1] sm:$0xff]
        %v8420 = vld [vmem:[#allocation4 + $0xf1] sm:$0xff]
        %v8421 = vld [vmem:[#allocation4 + $0xf9] sm:$0xff]
        %v8422 = vld [vmem:[#allocation4 + $0x109] sm:$0xff]
        %v8423 = vld [vmem:[#allocation4 + $0x111] sm:$0xff]
        %v8424 = vld [vmem:[#allocation4 + $0x121] sm:$0xff]
        %v8425 = vld [vmem:[#allocation4 + $0x129] sm:$0xff]
        %v8426 = vld [vmem:[#allocation4 + $0x139] sm:$0xff]
        %v8427 = vld [vmem:[#allocation4 + $0x141] sm:$0xff]
        %v8428 = vld [vmem:[#allocation4 + $0x151] sm:$0xff]
        %v8429 = vld [vmem:[#allocation4 + $0x159] sm:$0xff]
        %v8430 = vld [vmem:[#allocation4 + $0x169] sm:$0xff]
        %v8431 = vld [vmem:[#allocation4 + $0x171] sm:$0xff]
        %v8432 = vmax.f32 %v8368, %v8400
        %v8433 = vmax.f32 %v8369, %v8401
        %v8434 = vmax.f32 %v8370, %v8402
        %v8435 = vmax.f32 %v8371, %v8403
        %v8436 = vmax.f32 %v8372, %v8404
        %v8437 = vmax.f32 %v8373, %v8405
        %v8438 = vmax.f32 %v8374, %v8406
        %v8439 = vmax.f32 %v8375, %v8407
        %v8440 = vmax.f32 %v8376, %v8408
        %v8441 = vmax.f32 %v8377, %v8409
        %v8442 = vmax.f32 %v8378, %v8410
        %v8443 = vmax.f32 %v8379, %v8411
        %v8444 = vmax.f32 %v8380, %v8412
        %v8445 = vmax.f32 %v8381, %v8413
        %v8446 = vmax.f32 %v8382, %v8414
        %v8447 = vmax.f32 %v8383, %v8415
        %v8448 = vmax.f32 %v8384, %v8416
        %v8449 = vmax.f32 %v8385, %v8417
        %v8450 = vmax.f32 %v8386, %v8418
        %v8451 = vmax.f32 %v8387, %v8419
        %v8452 = vmax.f32 %v8388, %v8420
        %v8453 = vmax.f32 %v8389, %v8421
        %v8454 = vmax.f32 %v8390, %v8422
        %v8455 = vmax.f32 %v8391, %v8423
        %v8456 = vmax.f32 %v8392, %v8424
        %v8457 = vmax.f32 %v8393, %v8425
        %v8458 = vmax.f32 %v8394, %v8426
        %v8459 = vmax.f32 %v8395, %v8427
        %v8460 = vmax.f32 %v8396, %v8428
        %v8461 = vmax.f32 %v8397, %v8429
        %v8462 = vmax.f32 %v8398, %v8430
        %v8463 = vmax.f32 %v8399, %v8431
        %v8464 = vld [vmem:[#allocation4 + $0x2] sm:$0xff]
        %v8465 = vld [vmem:[#allocation4 + $0xa] sm:$0xff]
        %v8466 = vld [vmem:[#allocation4 + $0x1a] sm:$0xff]
        %v8467 = vld [vmem:[#allocation4 + $0x22] sm:$0xff]
        %v8468 = vld [vmem:[#allocation4 + $0x32] sm:$0xff]
        %v8469 = vld [vmem:[#allocation4 + $0x3a] sm:$0xff]
        %v8470 = vld [vmem:[#allocation4 + $0x4a] sm:$0xff]
        %v8471 = vld [vmem:[#allocation4 + $0x52] sm:$0xff]
        %v8472 = vld [vmem:[#allocation4 + $0x62] sm:$0xff]
        %v8473 = vld [vmem:[#allocation4 + $0x6a] sm:$0xff]
        %v8474 = vld [vmem:[#allocation4 + $0x7a] sm:$0xff]
        %v8475 = vld [vmem:[#allocation4 + $0x82] sm:$0xff]
        %v8476 = vld [vmem:[#allocation4 + $0x92] sm:$0xff]
        %v8477 = vld [vmem:[#allocation4 + $0x9a] sm:$0xff]
        %v8478 = vld [vmem:[#allocation4 + $0xaa] sm:$0xff]
        %v8479 = vld [vmem:[#allocation4 + $0xb2] sm:$0xff]
        %v8480 = vld [vmem:[#allocation4 + $0xc2] sm:$0xff]
        %v8481 = vld [vmem:[#allocation4 + $0xca] sm:$0xff]
        %v8482 = vld [vmem:[#allocation4 + $0xda] sm:$0xff]
        %v8483 = vld [vmem:[#allocation4 + $0xe2] sm:$0xff]
        %v8484 = vld [vmem:[#allocation4 + $0xf2] sm:$0xff]
        %v8485 = vld [vmem:[#allocation4 + $0xfa] sm:$0xff]
        %v8486 = vld [vmem:[#allocation4 + $0x10a] sm:$0xff]
        %v8487 = vld [vmem:[#allocation4 + $0x112] sm:$0xff]
        %v8488 = vld [vmem:[#allocation4 + $0x122] sm:$0xff]
        %v8489 = vld [vmem:[#allocation4 + $0x12a] sm:$0xff]
        %v8490 = vld [vmem:[#allocation4 + $0x13a] sm:$0xff]
        %v8491 = vld [vmem:[#allocation4 + $0x142] sm:$0xff]
        %v8492 = vld [vmem:[#allocation4 + $0x152] sm:$0xff]
        %v8493 = vld [vmem:[#allocation4 + $0x15a] sm:$0xff]
        %v8494 = vld [vmem:[#allocation4 + $0x16a] sm:$0xff]
        %v8495 = vld [vmem:[#allocation4 + $0x172] sm:$0xff]
        %v8496 = vmax.f32 %v8432, %v8464
        %v8497 = vmax.f32 %v8433, %v8465
        %v8498 = vmax.f32 %v8434, %v8466
        %v8499 = vmax.f32 %v8435, %v8467
        %v8500 = vmax.f32 %v8436, %v8468
        %v8501 = vmax.f32 %v8437, %v8469
        %v8502 = vmax.f32 %v8438, %v8470
        %v8503 = vmax.f32 %v8439, %v8471
        %v8504 = vmax.f32 %v8440, %v8472
        %v8505 = vmax.f32 %v8441, %v8473
        %v8506 = vmax.f32 %v8442, %v8474
        %v8507 = vmax.f32 %v8443, %v8475
        %v8508 = vmax.f32 %v8444, %v8476
        %v8509 = vmax.f32 %v8445, %v8477
        %v8510 = vmax.f32 %v8446, %v8478
        %v8511 = vmax.f32 %v8447, %v8479
        %v8512 = vmax.f32 %v8448, %v8480
        %v8513 = vmax.f32 %v8449, %v8481
        %v8514 = vmax.f32 %v8450, %v8482
        %v8515 = vmax.f32 %v8451, %v8483
        %v8516 = vmax.f32 %v8452, %v8484
        %v8517 = vmax.f32 %v8453, %v8485
        %v8518 = vmax.f32 %v8454, %v8486
        %v8519 = vmax.f32 %v8455, %v8487
        %v8520 = vmax.f32 %v8456, %v8488
        %v8521 = vmax.f32 %v8457, %v8489
        %v8522 = vmax.f32 %v8458, %v8490
        %v8523 = vmax.f32 %v8459, %v8491
        %v8524 = vmax.f32 %v8460, %v8492
        %v8525 = vmax.f32 %v8461, %v8493
        %v8526 = vmax.f32 %v8462, %v8494
        %v8527 = vmax.f32 %v8463, %v8495
        %v8528 = vld [vmem:[%s8335] sm:$0xff]
        %v8529 = vld [vmem:[%s8335 + $0x8] sm:$0xff]
        %v8530 = vld [vmem:[%s8335 + $0x18] sm:$0xff]
        %v8531 = vld [vmem:[%s8335 + $0x20] sm:$0xff]
        %v8532 = vld [vmem:[%s8335 + $0x30] sm:$0xff]
        %v8533 = vld [vmem:[%s8335 + $0x38] sm:$0xff]
        %v8534 = vld [vmem:[%s8335 + $0x48] sm:$0xff]
        %v8535 = vld [vmem:[%s8335 + $0x50] sm:$0xff]
        %v8536 = vld [vmem:[%s8335 + $0x60] sm:$0xff]
        %v8537 = vld [vmem:[%s8335 + $0x68] sm:$0xff]
        %v8538 = vld [vmem:[%s8335 + $0x78] sm:$0xff]
        %v8539 = vld [vmem:[%s8335 + $0x80] sm:$0xff]
        %v8540 = vld [vmem:[%s8335 + $0x90] sm:$0xff]
        %v8541 = vld [vmem:[%s8335 + $0x98] sm:$0xff]
        %v8542 = vld [vmem:[%s8335 + $0xa8] sm:$0xff]
        %v8543 = vld [vmem:[%s8335 + $0xb0] sm:$0xff]
        %v8544 = vld [vmem:[%s8335 + $0xc0] sm:$0xff]
        %v8545 = vld [vmem:[%s8335 + $0xc8] sm:$0xff]
        %v8546 = vld [vmem:[%s8335 + $0xd8] sm:$0xff]
        %v8547 = vld [vmem:[%s8335 + $0xe0] sm:$0xff]
        %v8548 = vld [vmem:[%s8335 + $0xf0] sm:$0xff]
        %v8549 = vld [vmem:[%s8335 + $0xf8] sm:$0xff]
        %v8550 = vld [vmem:[%s8335 + $0x108] sm:$0xff]
        %v8551 = vld [vmem:[%s8335 + $0x110] sm:$0xff]
        %v8552 = vld [vmem:[%s8335 + $0x120] sm:$0xff]
        %v8553 = vld [vmem:[%s8335 + $0x128] sm:$0xff]
        %v8554 = vld [vmem:[%s8335 + $0x138] sm:$0xff]
        %v8555 = vld [vmem:[%s8335 + $0x140] sm:$0xff]
        %v8556 = vld [vmem:[%s8335 + $0x150] sm:$0xff]
        %v8557 = vld [vmem:[%s8335 + $0x158] sm:$0xff]
        %v8558 = vld [vmem:[%s8335 + $0x168] sm:$0xff]
        %v8559 = vld [vmem:[%s8335 + $0x170] sm:$0xff]
        %v8560 = vmax.f32 %v8496, %v8528
        %v8561 = vmax.f32 %v8497, %v8529
        %v8562 = vmax.f32 %v8498, %v8530
        %v8563 = vmax.f32 %v8499, %v8531
        %v8564 = vmax.f32 %v8500, %v8532
        %v8565 = vmax.f32 %v8501, %v8533
        %v8566 = vmax.f32 %v8502, %v8534
        %v8567 = vmax.f32 %v8503, %v8535
        %v8568 = vmax.f32 %v8504, %v8536
        %v8569 = vmax.f32 %v8505, %v8537
        %v8570 = vmax.f32 %v8506, %v8538
        %v8571 = vmax.f32 %v8507, %v8539
        %v8572 = vmax.f32 %v8508, %v8540
        %v8573 = vmax.f32 %v8509, %v8541
        %v8574 = vmax.f32 %v8510, %v8542
        %v8575 = vmax.f32 %v8511, %v8543
        %v8576 = vmax.f32 %v8512, %v8544
        %v8577 = vmax.f32 %v8513, %v8545
        %v8578 = vmax.f32 %v8514, %v8546
        %v8579 = vmax.f32 %v8515, %v8547
        %v8580 = vmax.f32 %v8516, %v8548
        %v8581 = vmax.f32 %v8517, %v8549
        %v8582 = vmax.f32 %v8518, %v8550
        %v8583 = vmax.f32 %v8519, %v8551
        %v8584 = vmax.f32 %v8520, %v8552
        %v8585 = vmax.f32 %v8521, %v8553
        %v8586 = vmax.f32 %v8522, %v8554
        %v8587 = vmax.f32 %v8523, %v8555
        %v8588 = vmax.f32 %v8524, %v8556
        %v8589 = vmax.f32 %v8525, %v8557
        %v8590 = vmax.f32 %v8526, %v8558
        %v8591 = vmax.f32 %v8527, %v8559
        %v8592 = vld [vmem:[%s8335 + $0x1] sm:$0xff]
        %v8593 = vld [vmem:[%s8335 + $0x9] sm:$0xff]
        %v8594 = vld [vmem:[%s8335 + $0x19] sm:$0xff]
        %v8595 = vld [vmem:[%s8335 + $0x21] sm:$0xff]
        %v8596 = vld [vmem:[%s8335 + $0x31] sm:$0xff]
        %v8597 = vld [vmem:[%s8335 + $0x39] sm:$0xff]
        %v8598 = vld [vmem:[%s8335 + $0x49] sm:$0xff]
        %v8599 = vld [vmem:[%s8335 + $0x51] sm:$0xff]
        %v8600 = vld [vmem:[%s8335 + $0x61] sm:$0xff]
        %v8601 = vld [vmem:[%s8335 + $0x69] sm:$0xff]
        %v8602 = vld [vmem:[%s8335 + $0x79] sm:$0xff]
        %v8603 = vld [vmem:[%s8335 + $0x81] sm:$0xff]
        %v8604 = vld [vmem:[%s8335 + $0x91] sm:$0xff]
        %v8605 = vld [vmem:[%s8335 + $0x99] sm:$0xff]
        %v8606 = vld [vmem:[%s8335 + $0xa9] sm:$0xff]
        %v8607 = vld [vmem:[%s8335 + $0xb1] sm:$0xff]
        %v8608 = vld [vmem:[%s8335 + $0xc1] sm:$0xff]
        %v8609 = vld [vmem:[%s8335 + $0xc9] sm:$0xff]
        %v8610 = vld [vmem:[%s8335 + $0xd9] sm:$0xff]
        %v8611 = vld [vmem:[%s8335 + $0xe1] sm:$0xff]
        %v8612 = vld [vmem:[%s8335 + $0xf1] sm:$0xff]
        %v8613 = vld [vmem:[%s8335 + $0xf9] sm:$0xff]
        %v8614 = vld [vmem:[%s8335 + $0x109] sm:$0xff]
        %v8615 = vld [vmem:[%s8335 + $0x111] sm:$0xff]
        %v8616 = vld [vmem:[%s8335 + $0x121] sm:$0xff]
        %v8617 = vld [vmem:[%s8335 + $0x129] sm:$0xff]
        %v8618 = vld [vmem:[%s8335 + $0x139] sm:$0xff]
        %v8619 = vld [vmem:[%s8335 + $0x141] sm:$0xff]
        %v8620 = vld [vmem:[%s8335 + $0x151] sm:$0xff]
        %v8621 = vld [vmem:[%s8335 + $0x159] sm:$0xff]
        %v8622 = vld [vmem:[%s8335 + $0x169] sm:$0xff]
        %v8623 = vld [vmem:[%s8335 + $0x171] sm:$0xff]
        %v8624 = vmax.f32 %v8560, %v8592
        %v8625 = vmax.f32 %v8561, %v8593
        %v8626 = vmax.f32 %v8562, %v8594
        %v8627 = vmax.f32 %v8563, %v8595
        %v8628 = vmax.f32 %v8564, %v8596
        %v8629 = vmax.f32 %v8565, %v8597
        %v8630 = vmax.f32 %v8566, %v8598
        %v8631 = vmax.f32 %v8567, %v8599
        %v8632 = vmax.f32 %v8568, %v8600
        %v8633 = vmax.f32 %v8569, %v8601
        %v8634 = vmax.f32 %v8570, %v8602
        %v8635 = vmax.f32 %v8571, %v8603
        %v8636 = vmax.f32 %v8572, %v8604
        %v8637 = vmax.f32 %v8573, %v8605
        %v8638 = vmax.f32 %v8574, %v8606
        %v8639 = vmax.f32 %v8575, %v8607
        %v8640 = vmax.f32 %v8576, %v8608
        %v8641 = vmax.f32 %v8577, %v8609
        %v8642 = vmax.f32 %v8578, %v8610
        %v8643 = vmax.f32 %v8579, %v8611
        %v8644 = vmax.f32 %v8580, %v8612
        %v8645 = vmax.f32 %v8581, %v8613
        %v8646 = vmax.f32 %v8582, %v8614
        %v8647 = vmax.f32 %v8583, %v8615
        %v8648 = vmax.f32 %v8584, %v8616
        %v8649 = vmax.f32 %v8585, %v8617
        %v8650 = vmax.f32 %v8586, %v8618
        %v8651 = vmax.f32 %v8587, %v8619
        %v8652 = vmax.f32 %v8588, %v8620
        %v8653 = vmax.f32 %v8589, %v8621
        %v8654 = vmax.f32 %v8590, %v8622
        %v8655 = vmax.f32 %v8591, %v8623
        %v8656 = vld [vmem:[%s8335 + $0x2] sm:$0xff]
        %v8657 = vld [vmem:[%s8335 + $0xa] sm:$0xff]
        %v8658 = vld [vmem:[%s8335 + $0x1a] sm:$0xff]
        %v8659 = vld [vmem:[%s8335 + $0x22] sm:$0xff]
        %v8660 = vld [vmem:[%s8335 + $0x32] sm:$0xff]
        %v8661 = vld [vmem:[%s8335 + $0x3a] sm:$0xff]
        %v8662 = vld [vmem:[%s8335 + $0x4a] sm:$0xff]
        %v8663 = vld [vmem:[%s8335 + $0x52] sm:$0xff]
        %v8664 = vld [vmem:[%s8335 + $0x62] sm:$0xff]
        %v8665 = vld [vmem:[%s8335 + $0x6a] sm:$0xff]
        %v8666 = vld [vmem:[%s8335 + $0x7a] sm:$0xff]
        %v8667 = vld [vmem:[%s8335 + $0x82] sm:$0xff]
        %v8668 = vld [vmem:[%s8335 + $0x92] sm:$0xff]
        %v8669 = vld [vmem:[%s8335 + $0x9a] sm:$0xff]
        %v8670 = vld [vmem:[%s8335 + $0xaa] sm:$0xff]
        %v8671 = vld [vmem:[%s8335 + $0xb2] sm:$0xff]
        %v8672 = vld [vmem:[%s8335 + $0xc2] sm:$0xff]
        %v8673 = vld [vmem:[%s8335 + $0xca] sm:$0xff]
        %v8674 = vld [vmem:[%s8335 + $0xda] sm:$0xff]
        %v8675 = vld [vmem:[%s8335 + $0xe2] sm:$0xff]
        %v8676 = vld [vmem:[%s8335 + $0xf2] sm:$0xff]
        %v8677 = vld [vmem:[%s8335 + $0xfa] sm:$0xff]
        %v8678 = vld [vmem:[%s8335 + $0x10a] sm:$0xff]
        %v8679 = vld [vmem:[%s8335 + $0x112] sm:$0xff]
        %v8680 = vld [vmem:[%s8335 + $0x122] sm:$0xff]
        %v8681 = vld [vmem:[%s8335 + $0x12a] sm:$0xff]
        %v8682 = vld [vmem:[%s8335 + $0x13a] sm:$0xff]
        %v8683 = vld [vmem:[%s8335 + $0x142] sm:$0xff]
        %v8684 = vld [vmem:[%s8335 + $0x152] sm:$0xff]
        %v8685 = vld [vmem:[%s8335 + $0x15a] sm:$0xff]
        %v8686 = vld [vmem:[%s8335 + $0x16a] sm:$0xff]
        %v8687 = vld [vmem:[%s8335 + $0x172] sm:$0xff]
        %v8688 = vmax.f32 %v8624, %v8656
        %v8689 = vmax.f32 %v8625, %v8657
        %v8690 = vmax.f32 %v8626, %v8658
        %v8691 = vmax.f32 %v8627, %v8659
        %v8692 = vmax.f32 %v8628, %v8660
        %v8693 = vmax.f32 %v8629, %v8661
        %v8694 = vmax.f32 %v8630, %v8662
        %v8695 = vmax.f32 %v8631, %v8663
        %v8696 = vmax.f32 %v8632, %v8664
        %v8697 = vmax.f32 %v8633, %v8665
        %v8698 = vmax.f32 %v8634, %v8666
        %v8699 = vmax.f32 %v8635, %v8667
        %v8700 = vmax.f32 %v8636, %v8668
        %v8701 = vmax.f32 %v8637, %v8669
        %v8702 = vmax.f32 %v8638, %v8670
        %v8703 = vmax.f32 %v8639, %v8671
        %v8704 = vmax.f32 %v8640, %v8672
        %v8705 = vmax.f32 %v8641, %v8673
        %v8706 = vmax.f32 %v8642, %v8674
        %v8707 = vmax.f32 %v8643, %v8675
        %v8708 = vmax.f32 %v8644, %v8676
        %v8709 = vmax.f32 %v8645, %v8677
        %v8710 = vmax.f32 %v8646, %v8678
        %v8711 = vmax.f32 %v8647, %v8679
        %v8712 = vmax.f32 %v8648, %v8680
        %v8713 = vmax.f32 %v8649, %v8681
        %v8714 = vmax.f32 %v8650, %v8682
        %v8715 = vmax.f32 %v8651, %v8683
        %v8716 = vmax.f32 %v8652, %v8684
        %v8717 = vmax.f32 %v8653, %v8685
        %v8718 = vmax.f32 %v8654, %v8686
        %v8719 = vmax.f32 %v8655, %v8687
        %s8720 = scalar_lea.vmem [#allocation4], 48
        %v8721 = vld [vmem:[%s8720] sm:$0xff]
        %v8722 = vld [vmem:[%s8720 + $0x8] sm:$0xff]
        %v8723 = vld [vmem:[%s8720 + $0x18] sm:$0xff]
        %v8724 = vld [vmem:[%s8720 + $0x20] sm:$0xff]
        %v8725 = vld [vmem:[%s8720 + $0x30] sm:$0xff]
        %v8726 = vld [vmem:[%s8720 + $0x38] sm:$0xff]
        %v8727 = vld [vmem:[%s8720 + $0x48] sm:$0xff]
        %v8728 = vld [vmem:[%s8720 + $0x50] sm:$0xff]
        %v8729 = vld [vmem:[%s8720 + $0x60] sm:$0xff]
        %v8730 = vld [vmem:[%s8720 + $0x68] sm:$0xff]
        %v8731 = vld [vmem:[%s8720 + $0x78] sm:$0xff]
        %v8732 = vld [vmem:[%s8720 + $0x80] sm:$0xff]
        %v8733 = vld [vmem:[%s8720 + $0x90] sm:$0xff]
        %v8734 = vld [vmem:[%s8720 + $0x98] sm:$0xff]
        %v8735 = vld [vmem:[%s8720 + $0xa8] sm:$0xff]
        %v8736 = vld [vmem:[%s8720 + $0xb0] sm:$0xff]
        %v8737 = vld [vmem:[%s8720 + $0xc0] sm:$0xff]
        %v8738 = vld [vmem:[%s8720 + $0xc8] sm:$0xff]
        %v8739 = vld [vmem:[%s8720 + $0xd8] sm:$0xff]
        %v8740 = vld [vmem:[%s8720 + $0xe0] sm:$0xff]
        %v8741 = vld [vmem:[%s8720 + $0xf0] sm:$0xff]
        %v8742 = vld [vmem:[%s8720 + $0xf8] sm:$0xff]
        %v8743 = vld [vmem:[%s8720 + $0x108] sm:$0xff]
        %v8744 = vld [vmem:[%s8720 + $0x110] sm:$0xff]
        %v8745 = vld [vmem:[%s8720 + $0x120] sm:$0xff]
        %v8746 = vld [vmem:[%s8720 + $0x128] sm:$0xff]
        %v8747 = vld [vmem:[%s8720 + $0x138] sm:$0xff]
        %v8748 = vld [vmem:[%s8720 + $0x140] sm:$0xff]
        %v8749 = vld [vmem:[%s8720 + $0x150] sm:$0xff]
        %v8750 = vld [vmem:[%s8720 + $0x158] sm:$0xff]
        %v8751 = vld [vmem:[%s8720 + $0x168] sm:$0xff]
        %v8752 = vld [vmem:[%s8720 + $0x170] sm:$0xff]
        %v8753 = vmax.f32 %v8688, %v8721
        %v8754 = vmax.f32 %v8689, %v8722
        %v8755 = vmax.f32 %v8690, %v8723
        %v8756 = vmax.f32 %v8691, %v8724
        %v8757 = vmax.f32 %v8692, %v8725
        %v8758 = vmax.f32 %v8693, %v8726
        %v8759 = vmax.f32 %v8694, %v8727
        %v8760 = vmax.f32 %v8695, %v8728
        %v8761 = vmax.f32 %v8696, %v8729
        %v8762 = vmax.f32 %v8697, %v8730
        %v8763 = vmax.f32 %v8698, %v8731
        %v8764 = vmax.f32 %v8699, %v8732
        %v8765 = vmax.f32 %v8700, %v8733
        %v8766 = vmax.f32 %v8701, %v8734
        %v8767 = vmax.f32 %v8702, %v8735
        %v8768 = vmax.f32 %v8703, %v8736
        %v8769 = vmax.f32 %v8704, %v8737
        %v8770 = vmax.f32 %v8705, %v8738
        %v8771 = vmax.f32 %v8706, %v8739
        %v8772 = vmax.f32 %v8707, %v8740
        %v8773 = vmax.f32 %v8708, %v8741
        %v8774 = vmax.f32 %v8709, %v8742
        %v8775 = vmax.f32 %v8710, %v8743
        %v8776 = vmax.f32 %v8711, %v8744
        %v8777 = vmax.f32 %v8712, %v8745
        %v8778 = vmax.f32 %v8713, %v8746
        %v8779 = vmax.f32 %v8714, %v8747
        %v8780 = vmax.f32 %v8715, %v8748
        %v8781 = vmax.f32 %v8716, %v8749
        %v8782 = vmax.f32 %v8717, %v8750
        %v8783 = vmax.f32 %v8718, %v8751
        %v8784 = vmax.f32 %v8719, %v8752
        %v8785 = vld [vmem:[%s8720 + $0x1] sm:$0xff]
        %v8786 = vld [vmem:[%s8720 + $0x9] sm:$0xff]
        %v8787 = vld [vmem:[%s8720 + $0x19] sm:$0xff]
        %v8788 = vld [vmem:[%s8720 + $0x21] sm:$0xff]
        %v8789 = vld [vmem:[%s8720 + $0x31] sm:$0xff]
        %v8790 = vld [vmem:[%s8720 + $0x39] sm:$0xff]
        %v8791 = vld [vmem:[%s8720 + $0x49] sm:$0xff]
        %v8792 = vld [vmem:[%s8720 + $0x51] sm:$0xff]
        %v8793 = vld [vmem:[%s8720 + $0x61] sm:$0xff]
        %v8794 = vld [vmem:[%s8720 + $0x69] sm:$0xff]
        %v8795 = vld [vmem:[%s8720 + $0x79] sm:$0xff]
        %v8796 = vld [vmem:[%s8720 + $0x81] sm:$0xff]
        %v8797 = vld [vmem:[%s8720 + $0x91] sm:$0xff]
        %v8798 = vld [vmem:[%s8720 + $0x99] sm:$0xff]
        %v8799 = vld [vmem:[%s8720 + $0xa9] sm:$0xff]
        %v8800 = vld [vmem:[%s8720 + $0xb1] sm:$0xff]
        %v8801 = vld [vmem:[%s8720 + $0xc1] sm:$0xff]
        %v8802 = vld [vmem:[%s8720 + $0xc9] sm:$0xff]
        %v8803 = vld [vmem:[%s8720 + $0xd9] sm:$0xff]
        %v8804 = vld [vmem:[%s8720 + $0xe1] sm:$0xff]
        %v8805 = vld [vmem:[%s8720 + $0xf1] sm:$0xff]
        %v8806 = vld [vmem:[%s8720 + $0xf9] sm:$0xff]
        %v8807 = vld [vmem:[%s8720 + $0x109] sm:$0xff]
        %v8808 = vld [vmem:[%s8720 + $0x111] sm:$0xff]
        %v8809 = vld [vmem:[%s8720 + $0x121] sm:$0xff]
        %v8810 = vld [vmem:[%s8720 + $0x129] sm:$0xff]
        %v8811 = vld [vmem:[%s8720 + $0x139] sm:$0xff]
        %v8812 = vld [vmem:[%s8720 + $0x141] sm:$0xff]
        %v8813 = vld [vmem:[%s8720 + $0x151] sm:$0xff]
        %v8814 = vld [vmem:[%s8720 + $0x159] sm:$0xff]
        %v8815 = vld [vmem:[%s8720 + $0x169] sm:$0xff]
        %v8816 = vld [vmem:[%s8720 + $0x171] sm:$0xff]
        %v8817 = vmax.f32 %v8753, %v8785
        %v8818 = vmax.f32 %v8754, %v8786
        %v8819 = vmax.f32 %v8755, %v8787
        %v8820 = vmax.f32 %v8756, %v8788
        %v8821 = vmax.f32 %v8757, %v8789
        %v8822 = vmax.f32 %v8758, %v8790
        %v8823 = vmax.f32 %v8759, %v8791
        %v8824 = vmax.f32 %v8760, %v8792
        %v8825 = vmax.f32 %v8761, %v8793
        %v8826 = vmax.f32 %v8762, %v8794
        %v8827 = vmax.f32 %v8763, %v8795
        %v8828 = vmax.f32 %v8764, %v8796
        %v8829 = vmax.f32 %v8765, %v8797
        %v8830 = vmax.f32 %v8766, %v8798
        %v8831 = vmax.f32 %v8767, %v8799
        %v8832 = vmax.f32 %v8768, %v8800
        %v8833 = vmax.f32 %v8769, %v8801
        %v8834 = vmax.f32 %v8770, %v8802
        %v8835 = vmax.f32 %v8771, %v8803
        %v8836 = vmax.f32 %v8772, %v8804
        %v8837 = vmax.f32 %v8773, %v8805
        %v8838 = vmax.f32 %v8774, %v8806
        %v8839 = vmax.f32 %v8775, %v8807
        %v8840 = vmax.f32 %v8776, %v8808
        %v8841 = vmax.f32 %v8777, %v8809
        %v8842 = vmax.f32 %v8778, %v8810
        %v8843 = vmax.f32 %v8779, %v8811
        %v8844 = vmax.f32 %v8780, %v8812
        %v8845 = vmax.f32 %v8781, %v8813
        %v8846 = vmax.f32 %v8782, %v8814
        %v8847 = vmax.f32 %v8783, %v8815
        %v8848 = vmax.f32 %v8784, %v8816
        %v8849 = vld [vmem:[%s8720 + $0x2] sm:$0xff]
        %v8850 = vld [vmem:[%s8720 + $0xa] sm:$0xff]
        %v8851 = vld [vmem:[%s8720 + $0x1a] sm:$0xff]
        %v8852 = vld [vmem:[%s8720 + $0x22] sm:$0xff]
        %v8853 = vld [vmem:[%s8720 + $0x32] sm:$0xff]
        %v8854 = vld [vmem:[%s8720 + $0x3a] sm:$0xff]
        %v8855 = vld [vmem:[%s8720 + $0x4a] sm:$0xff]
        %v8856 = vld [vmem:[%s8720 + $0x52] sm:$0xff]
        %v8857 = vld [vmem:[%s8720 + $0x62] sm:$0xff]
        %v8858 = vld [vmem:[%s8720 + $0x6a] sm:$0xff]
        %v8859 = vld [vmem:[%s8720 + $0x7a] sm:$0xff]
        %v8860 = vld [vmem:[%s8720 + $0x82] sm:$0xff]
        %v8861 = vld [vmem:[%s8720 + $0x92] sm:$0xff]
        %v8862 = vld [vmem:[%s8720 + $0x9a] sm:$0xff]
        %v8863 = vld [vmem:[%s8720 + $0xaa] sm:$0xff]
        %v8864 = vld [vmem:[%s8720 + $0xb2] sm:$0xff]
        %v8865 = vld [vmem:[%s8720 + $0xc2] sm:$0xff]
        %v8866 = vld [vmem:[%s8720 + $0xca] sm:$0xff]
        %v8867 = vld [vmem:[%s8720 + $0xda] sm:$0xff]
        %v8868 = vld [vmem:[%s8720 + $0xe2] sm:$0xff]
        %v8869 = vld [vmem:[%s8720 + $0xf2] sm:$0xff]
        %v8870 = vld [vmem:[%s8720 + $0xfa] sm:$0xff]
        %v8871 = vld [vmem:[%s8720 + $0x10a] sm:$0xff]
        %v8872 = vld [vmem:[%s8720 + $0x112] sm:$0xff]
        %v8873 = vld [vmem:[%s8720 + $0x122] sm:$0xff]
        %v8874 = vld [vmem:[%s8720 + $0x12a] sm:$0xff]
        %v8875 = vld [vmem:[%s8720 + $0x13a] sm:$0xff]
        %v8876 = vld [vmem:[%s8720 + $0x142] sm:$0xff]
        %v8877 = vld [vmem:[%s8720 + $0x152] sm:$0xff]
        %v8878 = vld [vmem:[%s8720 + $0x15a] sm:$0xff]
        %v8879 = vld [vmem:[%s8720 + $0x16a] sm:$0xff]
        %v8880 = vld [vmem:[%s8720 + $0x172] sm:$0xff]
        %v8881 = vmax.f32 %v8817, %v8849
        %v8882 = vmax.f32 %v8818, %v8850
        %v8883 = vmax.f32 %v8819, %v8851
        %v8884 = vmax.f32 %v8820, %v8852
        %v8885 = vmax.f32 %v8821, %v8853
        %v8886 = vmax.f32 %v8822, %v8854
        %v8887 = vmax.f32 %v8823, %v8855
        %v8888 = vmax.f32 %v8824, %v8856
        %v8889 = vmax.f32 %v8825, %v8857
        %v8890 = vmax.f32 %v8826, %v8858
        %v8891 = vmax.f32 %v8827, %v8859
        %v8892 = vmax.f32 %v8828, %v8860
        %v8893 = vmax.f32 %v8829, %v8861
        %v8894 = vmax.f32 %v8830, %v8862
        %v8895 = vmax.f32 %v8831, %v8863
        %v8896 = vmax.f32 %v8832, %v8864
        %v8897 = vmax.f32 %v8833, %v8865
        %v8898 = vmax.f32 %v8834, %v8866
        %v8899 = vmax.f32 %v8835, %v8867
        %v8900 = vmax.f32 %v8836, %v8868
        %v8901 = vmax.f32 %v8837, %v8869
        %v8902 = vmax.f32 %v8838, %v8870
        %v8903 = vmax.f32 %v8839, %v8871
        %v8904 = vmax.f32 %v8840, %v8872
        %v8905 = vmax.f32 %v8841, %v8873
        %v8906 = vmax.f32 %v8842, %v8874
        %v8907 = vmax.f32 %v8843, %v8875
        %v8908 = vmax.f32 %v8844, %v8876
        %v8909 = vmax.f32 %v8845, %v8877
        %v8910 = vmax.f32 %v8846, %v8878
        %v8911 = vmax.f32 %v8847, %v8879
        %v8912 = vmax.f32 %v8848, %v8880
        %v8913 = vpack.c.bf16 %v8882, %v8881
        %v8914 = vpack.c.bf16 %v8884, %v8883
        %v8915 = vpack.c.bf16 %v8886, %v8885
        %v8916 = vpack.c.bf16 %v8888, %v8887
        %v8917 = vpack.c.bf16 %v8890, %v8889
        %v8918 = vpack.c.bf16 %v8892, %v8891
        %v8919 = vpack.c.bf16 %v8894, %v8893
        %v8920 = vpack.c.bf16 %v8896, %v8895
        %v8921 = vpack.c.bf16 %v8898, %v8897
        %v8922 = vpack.c.bf16 %v8900, %v8899
        %v8923 = vpack.c.bf16 %v8902, %v8901
        %v8924 = vpack.c.bf16 %v8904, %v8903
        %v8925 = vpack.c.bf16 %v8906, %v8905
        %v8926 = vpack.c.bf16 %v8908, %v8907
        %v8927 = vpack.c.bf16 %v8910, %v8909
        %v8928 = vpack.c.bf16 %v8912, %v8911
        %v8929 = vld [vmem:[%s11] sm:$0x3]
        %v8930 = vld [vmem:[%s12] sm:$0x1]
        %v8932 = vlaneseq
        %v8933 = vshrl.u32 %v8932, 7
        %v8934 = vsub.s32 0, %v8933
        %v8935 = vrot.slane %v8930, %v8934
        %v8938 = vsel %vm496, %v8913, 0
        %v8941 = vsel %vm496, %v8914, 0
        %v8944 = vsel %vm496, %v8915, 0
        %v8947 = vsel %vm496, %v8916, 0
        %v8950 = vsel %vm496, %v8917, 0
        %v8953 = vsel %vm496, %v8918, 0
        %v8956 = vsel %vm496, %v8919, 0
        %v8959 = vsel %vm496, %v8920, 0
        %v8962 = vsel %vm496, %v8921, 0
        %v8965 = vsel %vm496, %v8922, 0
        %v8968 = vsel %vm496, %v8923, 0
        %v8971 = vsel %vm496, %v8924, 0
        %v8974 = vsel %vm496, %v8925, 0
        %v8977 = vsel %vm496, %v8926, 0
        %v8980 = vsel %vm496, %v8927, 0
        %v8983 = vsel %vm496, %v8928, 0
        %v8986 = vsel %vm545, %v8929, 0
        %8988 = vmatprep.subr.bf16.mxu0 0
        %8989 = vmatpush1.bf16.msra.mxu0 %v8986
        %8990 = vmatprep.subr.bf16.mxu0 0
        %8991 = vmatpush1.bf16.msra.mxu0 0
        %8992 = vmatprep.subr.bf16.mxu0 0
        %8993 = vmatpush1.bf16.msra.mxu0 0
        %8994 = vmatprep.subr.bf16.mxu0 0
        %8995 = vmatpush1.bf16.msra.mxu0 0
        %8996 = vmatprep.subr.bf16.mxu0 0
        %8997 = vmatpush1.bf16.msra.mxu0 0
        %8998 = vmatprep.subr.bf16.mxu0 0
        %8999 = vmatpush1.bf16.msra.mxu0 0
        %9000 = vmatprep.subr.bf16.mxu0 0
        %9001 = vmatpush1.bf16.msra.mxu0 0
        %9002 = vmatprep.subr.bf16.mxu0 0
        %9003 = vmatpush1.bf16.msra.mxu0 0
        %9004 = vmatprep.subr.bf16.mxu0 0
        %9005 = vmatpush1.bf16.msra.mxu0 0
        %9006 = vmatprep.subr.bf16.mxu0 0
        %9007 = vmatpush1.bf16.msra.mxu0 0
        %9008 = vmatprep.subr.bf16.mxu0 0
        %9009 = vmatpush1.bf16.msra.mxu0 0
        %9010 = vmatprep.subr.bf16.mxu0 0
        %9011 = vmatpush1.bf16.msra.mxu0 0
        %9012 = vmatprep.subr.bf16.mxu0 0
        %9013 = vmatpush1.bf16.msra.mxu0 0
        %9014 = vmatprep.subr.bf16.mxu0 0
        %9015 = vmatpush1.bf16.msra.mxu0 0
        %9016 = vmatprep.subr.bf16.mxu0 0
        %9017 = vmatpush1.bf16.msra.mxu0 0
        %9018 = vmatprep.subr.bf16.mxu0 0
        %9019 = vmatpush1.bf16.msra.mxu0 0
        %9020 = vmatprep.mubr.bf16.mxu0 0
        %9021 = vmatmul.mubr.bf16.gmra.mrb[0].mxu0 %v8938
        %v9022 = vpop.f32.mrb[0].mxu0
        %v9023 = vadd.f32 %v8935, %v9022
        %v9024 = vpop.f32.mrb[0].mxu0
        %v9025 = vpop.f32.mrb[0].mxu0
        %v9026 = vadd.f32 %v8935, %v9025
        %v9027 = vpop.f32.mrb[0].mxu0
        %9028 = vmatprep.mubr.bf16.mxu0 0
        %9029 = vmatmul.mubr.bf16.gmra.mrb[0].mxu0 %v8941
        %v9030 = vpop.f32.mrb[0].mxu0
        %v9031 = vadd.f32 %v8935, %v9030
        %v9032 = vpop.f32.mrb[0].mxu0
        %v9033 = vpop.f32.mrb[0].mxu0
        %v9034 = vadd.f32 %v8935, %v9033
        %v9035 = vpop.f32.mrb[0].mxu0
        %9036 = vmatprep.mubr.bf16.mxu0 0
        %9037 = vmatmul.mubr.bf16.gmra.mrb[0].mxu0 %v8944
        %v9038 = vpop.f32.mrb[0].mxu0
        %v9039 = vadd.f32 %v8935, %v9038
        %v9040 = vpop.f32.mrb[0].mxu0
        %v9041 = vpop.f32.mrb[0].mxu0
        %v9042 = vadd.f32 %v8935, %v9041
        %v9043 = vpop.f32.mrb[0].mxu0
        %9044 = vmatprep.mubr.bf16.mxu0 0
        %9045 = vmatmul.mubr.bf16.gmra.mrb[0].mxu0 %v8947
        %v9046 = vpop.f32.mrb[0].mxu0
        %v9047 = vadd.f32 %v8935, %v9046
        %v9048 = vpop.f32.mrb[0].mxu0
        %v9049 = vpop.f32.mrb[0].mxu0
        %v9050 = vadd.f32 %v8935, %v9049
        %v9051 = vpop.f32.mrb[0].mxu0
        %9052 = vmatprep.mubr.bf16.mxu0 0
        %9053 = vmatmul.mubr.bf16.gmra.mrb[0].mxu0 %v8950
        %v9054 = vpop.f32.mrb[0].mxu0
        %v9055 = vadd.f32 %v8935, %v9054
        %v9056 = vpop.f32.mrb[0].mxu0
        %v9057 = vpop.f32.mrb[0].mxu0
        %v9058 = vadd.f32 %v8935, %v9057
        %v9059 = vpop.f32.mrb[0].mxu0
        %9060 = vmatprep.mubr.bf16.mxu0 0
        %9061 = vmatmul.mubr.bf16.gmra.mrb[0].mxu0 %v8953
        %v9062 = vpop.f32.mrb[0].mxu0
        %v9063 = vadd.f32 %v8935, %v9062
        %v9064 = vpop.f32.mrb[0].mxu0
        %v9065 = vpop.f32.mrb[0].mxu0
        %v9066 = vadd.f32 %v8935, %v9065
        %v9067 = vpop.f32.mrb[0].mxu0
        %9068 = vmatprep.mubr.bf16.mxu0 0
        %9069 = vmatmul.mubr.bf16.gmra.mrb[0].mxu0 %v8956
        %v9070 = vpop.f32.mrb[0].mxu0
        %v9071 = vadd.f32 %v8935, %v9070
        %v9072 = vpop.f32.mrb[0].mxu0
        %v9073 = vpop.f32.mrb[0].mxu0
        %v9074 = vadd.f32 %v8935, %v9073
        %v9075 = vpop.f32.mrb[0].mxu0
        %9076 = vmatprep.mubr.bf16.mxu0 0
        %9077 = vmatmul.mubr.bf16.gmra.mrb[0].mxu0 %v8959
        %v9078 = vpop.f32.mrb[0].mxu0
        %v9079 = vadd.f32 %v8935, %v9078
        %v9080 = vpop.f32.mrb[0].mxu0
        %v9081 = vpop.f32.mrb[0].mxu0
        %v9082 = vadd.f32 %v8935, %v9081
        %v9083 = vpop.f32.mrb[0].mxu0
        %9084 = vmatprep.mubr.bf16.mxu0 0
        %9085 = vmatmul.mubr.bf16.gmra.mrb[0].mxu0 %v8962
        %v9086 = vpop.f32.mrb[0].mxu0
        %v9087 = vadd.f32 %v8935, %v9086
        %v9088 = vpop.f32.mrb[0].mxu0
        %v9089 = vpop.f32.mrb[0].mxu0
        %v9090 = vadd.f32 %v8935, %v9089
        %v9091 = vpop.f32.mrb[0].mxu0
        %9092 = vmatprep.mubr.bf16.mxu0 0
        %9093 = vmatmul.mubr.bf16.gmra.mrb[0].mxu0 %v8965
        %v9094 = vpop.f32.mrb[0].mxu0
        %v9095 = vadd.f32 %v8935, %v9094
        %v9096 = vpop.f32.mrb[0].mxu0
        %v9097 = vpop.f32.mrb[0].mxu0
        %v9098 = vadd.f32 %v8935, %v9097
        %v9099 = vpop.f32.mrb[0].mxu0
        %9100 = vmatprep.mubr.bf16.mxu0 0
        %9101 = vmatmul.mubr.bf16.gmra.mrb[0].mxu0 %v8968
        %v9102 = vpop.f32.mrb[0].mxu0
        %v9103 = vadd.f32 %v8935, %v9102
        %v9104 = vpop.f32.mrb[0].mxu0
        %v9105 = vpop.f32.mrb[0].mxu0
        %v9106 = vadd.f32 %v8935, %v9105
        %v9107 = vpop.f32.mrb[0].mxu0
        %9108 = vmatprep.mubr.bf16.mxu0 0
        %9109 = vmatmul.mubr.bf16.gmra.mrb[0].mxu0 %v8971
        %v9110 = vpop.f32.mrb[0].mxu0
        %v9111 = vadd.f32 %v8935, %v9110
        %v9112 = vpop.f32.mrb[0].mxu0
        %v9113 = vpop.f32.mrb[0].mxu0
        %v9114 = vadd.f32 %v8935, %v9113
        %v9115 = vpop.f32.mrb[0].mxu0
        %9116 = vmatprep.mubr.bf16.mxu0 0
        %9117 = vmatmul.mubr.bf16.gmra.mrb[0].mxu0 %v8974
        %v9118 = vpop.f32.mrb[0].mxu0
        %v9119 = vadd.f32 %v8935, %v9118
        %v9120 = vpop.f32.mrb[0].mxu0
        %v9121 = vpop.f32.mrb[0].mxu0
        %v9122 = vadd.f32 %v8935, %v9121
        %v9123 = vpop.f32.mrb[0].mxu0
        %9124 = vmatprep.mubr.bf16.mxu0 0
        %9125 = vmatmul.mubr.bf16.gmra.mrb[0].mxu0 %v8977
        %v9126 = vpop.f32.mrb[0].mxu0
        %v9127 = vadd.f32 %v8935, %v9126
        %v9128 = vpop.f32.mrb[0].mxu0
        %v9129 = vpop.f32.mrb[0].mxu0
        %v9130 = vadd.f32 %v8935, %v9129
        %v9131 = vpop.f32.mrb[0].mxu0
        %9132 = vmatprep.mubr.bf16.mxu0 0
        %9133 = vmatmul.mubr.bf16.gmra.mrb[0].mxu0 %v8980
        %v9134 = vpop.f32.mrb[0].mxu0
        %v9135 = vadd.f32 %v8935, %v9134
        %v9136 = vpop.f32.mrb[0].mxu0
        %v9137 = vpop.f32.mrb[0].mxu0
        %v9138 = vadd.f32 %v8935, %v9137
        %v9139 = vpop.f32.mrb[0].mxu0
        %9140 = vmatprep.mubr.bf16.mxu0 0
        %9141 = vmatmul.mubr.bf16.gmra.mrb[0].mxu0 %v8983
        %v9142 = vpop.f32.mrb[0].mxu0
        %v9143 = vadd.f32 %v8935, %v9142
        %v9144 = vpop.f32.mrb[0].mxu0
        %v9145 = vpop.f32.mrb[0].mxu0
        %v9146 = vadd.f32 %v8935, %v9145
        %v9147 = vpop.f32.mrb[0].mxu0
        %9148 = vdwg.mxu0
        %v9149 = vmax.f32 %v9023, 0.0
        %v9150 = vmax.f32 %v9026, 0.0
        %v9151 = vmax.f32 %v9031, 0.0
        %v9152 = vmax.f32 %v9034, 0.0
        %v9153 = vmax.f32 %v9039, 0.0
        %v9154 = vmax.f32 %v9042, 0.0
        %v9155 = vmax.f32 %v9047, 0.0
        %v9156 = vmax.f32 %v9050, 0.0
        %v9157 = vmax.f32 %v9055, 0.0
        %v9158 = vmax.f32 %v9058, 0.0
        %v9159 = vmax.f32 %v9063, 0.0
        %v9160 = vmax.f32 %v9066, 0.0
        %v9161 = vmax.f32 %v9071, 0.0
        %v9162 = vmax.f32 %v9074, 0.0
        %v9163 = vmax.f32 %v9079, 0.0
        %v9164 = vmax.f32 %v9082, 0.0
        %v9165 = vmax.f32 %v9087, 0.0
        %v9166 = vmax.f32 %v9090, 0.0
        %v9167 = vmax.f32 %v9095, 0.0
        %v9168 = vmax.f32 %v9098, 0.0
        %v9169 = vmax.f32 %v9103, 0.0
        %v9170 = vmax.f32 %v9106, 0.0
        %v9171 = vmax.f32 %v9111, 0.0
        %v9172 = vmax.f32 %v9114, 0.0
        %v9173 = vmax.f32 %v9119, 0.0
        %v9174 = vmax.f32 %v9122, 0.0
        %v9175 = vmax.f32 %v9127, 0.0
        %v9176 = vmax.f32 %v9130, 0.0
        %v9177 = vmax.f32 %v9135, 0.0
        %v9178 = vmax.f32 %v9138, 0.0
        %v9179 = vmax.f32 %v9143, 0.0
        %v9180 = vmax.f32 %v9146, 0.0
        %9181 = vst.msk [vmem:[%s433] sm:$0xff] %vm946, %v710
        %9182 = vst.msk [vmem:[%s433 + $0x8] sm:$0xff] %vm946, %v711
        %9183 = vst.msk [vmem:[%s433 + $0x10] sm:$0xff] %vm946, %v712
        %9184 = vst.msk [vmem:[%s433 + $0x18] sm:$0xff] %vm946, %v713
        %9185 = vst.msk [vmem:[%s433 + $0x20] sm:$0xff] %vm946, %v714
        %9186 = vst.msk [vmem:[%s433 + $0x28] sm:$0xff] %vm946, %v715
        %9187 = vst.msk [vmem:[%s433 + $0x30] sm:$0xff] %vm946, %v716
        %9188 = vst.msk [vmem:[%s433 + $0x38] sm:$0xff] %vm946, %v717
        %9189 = vst.msk [vmem:[%s433 + $0x40] sm:$0xff] %vm946, %v718
        %9190 = vst.msk [vmem:[%s433 + $0x48] sm:$0xff] %vm946, %v719
        %9191 = vst.msk [vmem:[%s433 + $0x50] sm:$0xff] %vm946, %v720
        %9192 = vst.msk [vmem:[%s433 + $0x58] sm:$0xff] %vm946, %v721
        %9193 = vst.msk [vmem:[%s433 + $0x60] sm:$0xff] %vm946, %v722
        %9194 = vst.msk [vmem:[%s433 + $0x68] sm:$0xff] %vm946, %v723
        %9195 = vst.msk [vmem:[%s433 + $0x70] sm:$0xff] %vm946, %v724
        %9196 = vst.msk [vmem:[%s433 + $0x78] sm:$0xff] %vm946, %v725
        %9197 = vst.msk [vmem:[%s433 + $0x80] sm:$0xff] %vm946, %v726
        %9198 = vst.msk [vmem:[%s433 + $0x88] sm:$0xff] %vm946, %v727
        %9199 = vst.msk [vmem:[%s433 + $0x90] sm:$0xff] %vm946, %v728
        %9200 = vst.msk [vmem:[%s433 + $0x98] sm:$0xff] %vm946, %v729
        %9201 = vst.msk [vmem:[%s433 + $0xa0] sm:$0xff] %vm946, %v730
        %9202 = vst.msk [vmem:[%s433 + $0xa8] sm:$0xff] %vm946, %v731
        %9203 = vst.msk [vmem:[%s433 + $0xb0] sm:$0xff] %vm946, %v732
        %9204 = vst.msk [vmem:[%s433 + $0xb8] sm:$0xff] %vm946, %v733
        %9205 = vst.msk [vmem:[%s433 + $0xc0] sm:$0xff] %vm946, %v734
        %9206 = vst.msk [vmem:[%s433 + $0xc8] sm:$0xff] %vm946, %v735
        %9207 = vst.msk [vmem:[%s433 + $0xd0] sm:$0xff] %vm946, %v736
        %9208 = vst.msk [vmem:[%s433 + $0xd8] sm:$0xff] %vm946, %v737
        %9209 = vst.msk [vmem:[%s433 + $0xe0] sm:$0xff] %vm946, %v738
        %9210 = vst.msk [vmem:[%s433 + $0xe8] sm:$0xff] %vm946, %v739
        %9211 = vst.msk [vmem:[%s433 + $0xf0] sm:$0xff] %vm946, %v740
        %9212 = vst.msk [vmem:[%s433 + $0xf8] sm:$0xff] %vm946, %v741
        %9245 = vrot.lane.b32.xlu0 %v2949, 8
        %v9246 = vpop.permute.xlu0 %9245
        %9247 = vrot.lane.b32.xlu0 %v2950, 8
        %v9248 = vpop.permute.xlu0 %9247
        %9249 = vrot.lane.b32.xlu0 %v2951, 8
        %v9250 = vpop.permute.xlu0 %9249
        %9251 = vrot.lane.b32.xlu0 %v2952, 8
        %v9252 = vpop.permute.xlu0 %9251
        %9253 = vrot.lane.b32.xlu0 %v2953, 8
        %v9254 = vpop.permute.xlu0 %9253
        %9255 = vrot.lane.b32.xlu0 %v2954, 8
        %v9256 = vpop.permute.xlu0 %9255
        %9257 = vrot.lane.b32.xlu0 %v2955, 8
        %v9258 = vpop.permute.xlu0 %9257
        %9259 = vrot.lane.b32.xlu0 %v2956, 8
        %v9260 = vpop.permute.xlu0 %9259
        %9261 = vrot.lane.b32.xlu0 %v2957, 8
        %v9262 = vpop.permute.xlu0 %9261
        %9263 = vrot.lane.b32.xlu0 %v2958, 8
        %v9264 = vpop.permute.xlu0 %9263
        %9265 = vrot.lane.b32.xlu0 %v2959, 8
        %v9266 = vpop.permute.xlu0 %9265
        %9267 = vrot.lane.b32.xlu0 %v2960, 8
        %v9268 = vpop.permute.xlu0 %9267
        %9269 = vrot.lane.b32.xlu0 %v2961, 8
        %v9270 = vpop.permute.xlu0 %9269
        %9271 = vrot.lane.b32.xlu0 %v2962, 8
        %v9272 = vpop.permute.xlu0 %9271
        %9273 = vrot.lane.b32.xlu0 %v2963, 8
        %v9274 = vpop.permute.xlu0 %9273
        %9275 = vrot.lane.b32.xlu0 %v2964, 8
        %v9276 = vpop.permute.xlu0 %9275
        %9277 = vrot.lane.b32.xlu0 %v2965, 8
        %v9278 = vpop.permute.xlu0 %9277
        %9279 = vrot.lane.b32.xlu0 %v2966, 8
        %v9280 = vpop.permute.xlu0 %9279
        %9281 = vrot.lane.b32.xlu0 %v2967, 8
        %v9282 = vpop.permute.xlu0 %9281
        %9283 = vrot.lane.b32.xlu0 %v2968, 8
        %v9284 = vpop.permute.xlu0 %9283
        %9285 = vrot.lane.b32.xlu0 %v2969, 8
        %v9286 = vpop.permute.xlu0 %9285
        %9287 = vrot.lane.b32.xlu0 %v2970, 8
        %v9288 = vpop.permute.xlu0 %9287
        %9289 = vrot.lane.b32.xlu0 %v2971, 8
        %v9290 = vpop.permute.xlu0 %9289
        %9291 = vrot.lane.b32.xlu0 %v2972, 8
        %v9292 = vpop.permute.xlu0 %9291
        %9293 = vrot.lane.b32.xlu0 %v2973, 8
        %v9294 = vpop.permute.xlu0 %9293
        %9295 = vrot.lane.b32.xlu0 %v2974, 8
        %v9296 = vpop.permute.xlu0 %9295
        %9297 = vrot.lane.b32.xlu0 %v2975, 8
        %v9298 = vpop.permute.xlu0 %9297
        %9299 = vrot.lane.b32.xlu0 %v2976, 8
        %v9300 = vpop.permute.xlu0 %9299
        %9301 = vrot.lane.b32.xlu0 %v2977, 8
        %v9302 = vpop.permute.xlu0 %9301
        %9303 = vrot.lane.b32.xlu0 %v2978, 8
        %v9304 = vpop.permute.xlu0 %9303
        %9305 = vrot.lane.b32.xlu0 %v2979, 8
        %v9306 = vpop.permute.xlu0 %9305
        %9307 = vrot.lane.b32.xlu0 %v2980, 8
        %v9308 = vpop.permute.xlu0 %9307
        %vm9341 = vcmask 195648
        %9342 = vst.msk [vmem:[%s433] sm:$0xff] %vm9341, %v9246
        %9343 = vst.msk [vmem:[%s433 + $0x8] sm:$0xff] %vm9341, %v9248
        %9344 = vst.msk [vmem:[%s433 + $0x10] sm:$0xff] %vm9341, %v9250
        %9345 = vst.msk [vmem:[%s433 + $0x18] sm:$0xff] %vm9341, %v9252
        %9346 = vst.msk [vmem:[%s433 + $0x20] sm:$0xff] %vm9341, %v9254
        %9347 = vst.msk [vmem:[%s433 + $0x28] sm:$0xff] %vm9341, %v9256
        %9348 = vst.msk [vmem:[%s433 + $0x30] sm:$0xff] %vm9341, %v9258
        %9349 = vst.msk [vmem:[%s433 + $0x38] sm:$0xff] %vm9341, %v9260
        %9350 = vst.msk [vmem:[%s433 + $0x40] sm:$0xff] %vm9341, %v9262
        %9351 = vst.msk [vmem:[%s433 + $0x48] sm:$0xff] %vm9341, %v9264
        %9352 = vst.msk [vmem:[%s433 + $0x50] sm:$0xff] %vm9341, %v9266
        %9353 = vst.msk [vmem:[%s433 + $0x58] sm:$0xff] %vm9341, %v9268
        %9354 = vst.msk [vmem:[%s433 + $0x60] sm:$0xff] %vm9341, %v9270
        %9355 = vst.msk [vmem:[%s433 + $0x68] sm:$0xff] %vm9341, %v9272
        %9356 = vst.msk [vmem:[%s433 + $0x70] sm:$0xff] %vm9341, %v9274
        %9357 = vst.msk [vmem:[%s433 + $0x78] sm:$0xff] %vm9341, %v9276
        %9358 = vst.msk [vmem:[%s433 + $0x80] sm:$0xff] %vm9341, %v9278
        %9359 = vst.msk [vmem:[%s433 + $0x88] sm:$0xff] %vm9341, %v9280
        %9360 = vst.msk [vmem:[%s433 + $0x90] sm:$0xff] %vm9341, %v9282
        %9361 = vst.msk [vmem:[%s433 + $0x98] sm:$0xff] %vm9341, %v9284
        %9362 = vst.msk [vmem:[%s433 + $0xa0] sm:$0xff] %vm9341, %v9286
        %9363 = vst.msk [vmem:[%s433 + $0xa8] sm:$0xff] %vm9341, %v9288
        %9364 = vst.msk [vmem:[%s433 + $0xb0] sm:$0xff] %vm9341, %v9290
        %9365 = vst.msk [vmem:[%s433 + $0xb8] sm:$0xff] %vm9341, %v9292
        %9366 = vst.msk [vmem:[%s433 + $0xc0] sm:$0xff] %vm9341, %v9294
        %9367 = vst.msk [vmem:[%s433 + $0xc8] sm:$0xff] %vm9341, %v9296
        %9368 = vst.msk [vmem:[%s433 + $0xd0] sm:$0xff] %vm9341, %v9298
        %9369 = vst.msk [vmem:[%s433 + $0xd8] sm:$0xff] %vm9341, %v9300
        %9370 = vst.msk [vmem:[%s433 + $0xe0] sm:$0xff] %vm9341, %v9302
        %9371 = vst.msk [vmem:[%s433 + $0xe8] sm:$0xff] %vm9341, %v9304
        %9372 = vst.msk [vmem:[%s433 + $0xf0] sm:$0xff] %vm9341, %v9306
        %9373 = vst.msk [vmem:[%s433 + $0xf8] sm:$0xff] %vm9341, %v9308
        %9406 = vrot.lane.b32.xlu0 %v8248, 24
        %v9407 = vpop.permute.xlu0 %9406
        %9408 = vrot.lane.b32.xlu0 %v8249, 24
        %v9409 = vpop.permute.xlu0 %9408
        %9410 = vrot.lane.b32.xlu0 %v8250, 24
        %v9411 = vpop.permute.xlu0 %9410
        %9412 = vrot.lane.b32.xlu0 %v8251, 24
        %v9413 = vpop.permute.xlu0 %9412
        %9414 = vrot.lane.b32.xlu0 %v8252, 24
        %v9415 = vpop.permute.xlu0 %9414
        %9416 = vrot.lane.b32.xlu0 %v8253, 24
        %v9417 = vpop.permute.xlu0 %9416
        %9418 = vrot.lane.b32.xlu0 %v8254, 24
        %v9419 = vpop.permute.xlu0 %9418
        %9420 = vrot.lane.b32.xlu0 %v8255, 24
        %v9421 = vpop.permute.xlu0 %9420
        %9422 = vrot.lane.b32.xlu0 %v8256, 24
        %v9423 = vpop.permute.xlu0 %9422
        %9424 = vrot.lane.b32.xlu0 %v8257, 24
        %v9425 = vpop.permute.xlu0 %9424
        %9426 = vrot.lane.b32.xlu0 %v8258, 24
        %v9427 = vpop.permute.xlu0 %9426
        %9428 = vrot.lane.b32.xlu0 %v8259, 24
        %v9429 = vpop.permute.xlu0 %9428
        %9430 = vrot.lane.b32.xlu0 %v8260, 24
        %v9431 = vpop.permute.xlu0 %9430
        %9432 = vrot.lane.b32.xlu0 %v8261, 24
        %v9433 = vpop.permute.xlu0 %9432
        %9434 = vrot.lane.b32.xlu0 %v8262, 24
        %v9435 = vpop.permute.xlu0 %9434
        %9436 = vrot.lane.b32.xlu0 %v8263, 24
        %v9437 = vpop.permute.xlu0 %9436
        %9438 = vrot.lane.b32.xlu0 %v8264, 24
        %v9439 = vpop.permute.xlu0 %9438
        %9440 = vrot.lane.b32.xlu0 %v8265, 24
        %v9441 = vpop.permute.xlu0 %9440
        %9442 = vrot.lane.b32.xlu0 %v8266, 24
        %v9443 = vpop.permute.xlu0 %9442
        %9444 = vrot.lane.b32.xlu0 %v8267, 24
        %v9445 = vpop.permute.xlu0 %9444
        %9446 = vrot.lane.b32.xlu0 %v8268, 24
        %v9447 = vpop.permute.xlu0 %9446
        %9448 = vrot.lane.b32.xlu0 %v8269, 24
        %v9449 = vpop.permute.xlu0 %9448
        %9450 = vrot.lane.b32.xlu0 %v8270, 24
        %v9451 = vpop.permute.xlu0 %9450
        %9452 = vrot.lane.b32.xlu0 %v8271, 24
        %v9453 = vpop.permute.xlu0 %9452
        %9454 = vrot.lane.b32.xlu0 %v8272, 24
        %v9455 = vpop.permute.xlu0 %9454
        %9456 = vrot.lane.b32.xlu0 %v8273, 24
        %v9457 = vpop.permute.xlu0 %9456
        %9458 = vrot.lane.b32.xlu0 %v8274, 24
        %v9459 = vpop.permute.xlu0 %9458
        %9460 = vrot.lane.b32.xlu0 %v8275, 24
        %v9461 = vpop.permute.xlu0 %9460
        %9462 = vrot.lane.b32.xlu0 %v8276, 24
        %v9463 = vpop.permute.xlu0 %9462
        %9464 = vrot.lane.b32.xlu0 %v8277, 24
        %v9465 = vpop.permute.xlu0 %9464
        %9466 = vrot.lane.b32.xlu0 %v8278, 24
        %v9467 = vpop.permute.xlu0 %9466
        %9468 = vrot.lane.b32.xlu0 %v8279, 24
        %v9469 = vpop.permute.xlu0 %9468
        %9502 = vst.msk [vmem:[%s433] sm:$0xff] %vm1645, %v9407
        %9503 = vst.msk [vmem:[%s433 + $0x8] sm:$0xff] %vm1645, %v9409
        %9504 = vst.msk [vmem:[%s433 + $0x10] sm:$0xff] %vm1645, %v9411
        %9505 = vst.msk [vmem:[%s433 + $0x18] sm:$0xff] %vm1645, %v9413
        %9506 = vst.msk [vmem:[%s433 + $0x20] sm:$0xff] %vm1645, %v9415
        %9507 = vst.msk [vmem:[%s433 + $0x28] sm:$0xff] %vm1645, %v9417
        %9508 = vst.msk [vmem:[%s433 + $0x30] sm:$0xff] %vm1645, %v9419
        %9509 = vst.msk [vmem:[%s433 + $0x38] sm:$0xff] %vm1645, %v9421
        %9510 = vst.msk [vmem:[%s433 + $0x40] sm:$0xff] %vm1645, %v9423
        %9511 = vst.msk [vmem:[%s433 + $0x48] sm:$0xff] %vm1645, %v9425
        %9512 = vst.msk [vmem:[%s433 + $0x50] sm:$0xff] %vm1645, %v9427
        %9513 = vst.msk [vmem:[%s433 + $0x58] sm:$0xff] %vm1645, %v9429
        %9514 = vst.msk [vmem:[%s433 + $0x60] sm:$0xff] %vm1645, %v9431
        %9515 = vst.msk [vmem:[%s433 + $0x68] sm:$0xff] %vm1645, %v9433
        %9516 = vst.msk [vmem:[%s433 + $0x70] sm:$0xff] %vm1645, %v9435
        %9517 = vst.msk [vmem:[%s433 + $0x78] sm:$0xff] %vm1645, %v9437
        %9518 = vst.msk [vmem:[%s433 + $0x80] sm:$0xff] %vm1645, %v9439
        %9519 = vst.msk [vmem:[%s433 + $0x88] sm:$0xff] %vm1645, %v9441
        %9520 = vst.msk [vmem:[%s433 + $0x90] sm:$0xff] %vm1645, %v9443
        %9521 = vst.msk [vmem:[%s433 + $0x98] sm:$0xff] %vm1645, %v9445
        %9522 = vst.msk [vmem:[%s433 + $0xa0] sm:$0xff] %vm1645, %v9447
        %9523 = vst.msk [vmem:[%s433 + $0xa8] sm:$0xff] %vm1645, %v9449
        %9524 = vst.msk [vmem:[%s433 + $0xb0] sm:$0xff] %vm1645, %v9451
        %9525 = vst.msk [vmem:[%s433 + $0xb8] sm:$0xff] %vm1645, %v9453
        %9526 = vst.msk [vmem:[%s433 + $0xc0] sm:$0xff] %vm1645, %v9455
        %9527 = vst.msk [vmem:[%s433 + $0xc8] sm:$0xff] %vm1645, %v9457
        %9528 = vst.msk [vmem:[%s433 + $0xd0] sm:$0xff] %vm1645, %v9459
        %9529 = vst.msk [vmem:[%s433 + $0xd8] sm:$0xff] %vm1645, %v9461
        %9530 = vst.msk [vmem:[%s433 + $0xe0] sm:$0xff] %vm1645, %v9463
        %9531 = vst.msk [vmem:[%s433 + $0xe8] sm:$0xff] %vm1645, %v9465
        %9532 = vst.msk [vmem:[%s433 + $0xf0] sm:$0xff] %vm1645, %v9467
        %9533 = vst.msk [vmem:[%s433 + $0xf8] sm:$0xff] %vm1645, %v9469
        %9566 = vrot.lane.b32.xlu0 %v9149, 32
        %v9567 = vpop.permute.xlu0 %9566
        %9568 = vrot.lane.b32.xlu0 %v9150, 32
        %v9569 = vpop.permute.xlu0 %9568
        %9570 = vrot.lane.b32.xlu0 %v9151, 32
        %v9571 = vpop.permute.xlu0 %9570
        %9572 = vrot.lane.b32.xlu0 %v9152, 32
        %v9573 = vpop.permute.xlu0 %9572
        %9574 = vrot.lane.b32.xlu0 %v9153, 32
        %v9575 = vpop.permute.xlu0 %9574
        %9576 = vrot.lane.b32.xlu0 %v9154, 32
        %v9577 = vpop.permute.xlu0 %9576
        %9578 = vrot.lane.b32.xlu0 %v9155, 32
        %v9579 = vpop.permute.xlu0 %9578
        %9580 = vrot.lane.b32.xlu0 %v9156, 32
        %v9581 = vpop.permute.xlu0 %9580
        %9582 = vrot.lane.b32.xlu0 %v9157, 32
        %v9583 = vpop.permute.xlu0 %9582
        %9584 = vrot.lane.b32.xlu0 %v9158, 32
        %v9585 = vpop.permute.xlu0 %9584
        %9586 = vrot.lane.b32.xlu0 %v9159, 32
        %v9587 = vpop.permute.xlu0 %9586
        %9588 = vrot.lane.b32.xlu0 %v9160, 32
        %v9589 = vpop.permute.xlu0 %9588
        %9590 = vrot.lane.b32.xlu0 %v9161, 32
        %v9591 = vpop.permute.xlu0 %9590
        %9592 = vrot.lane.b32.xlu0 %v9162, 32
        %v9593 = vpop.permute.xlu0 %9592
        %9594 = vrot.lane.b32.xlu0 %v9163, 32
        %v9595 = vpop.permute.xlu0 %9594
        %9596 = vrot.lane.b32.xlu0 %v9164, 32
        %v9597 = vpop.permute.xlu0 %9596
        %9598 = vrot.lane.b32.xlu0 %v9165, 32
        %v9599 = vpop.permute.xlu0 %9598
        %9600 = vrot.lane.b32.xlu0 %v9166, 32
        %v9601 = vpop.permute.xlu0 %9600
        %9602 = vrot.lane.b32.xlu0 %v9167, 32
        %v9603 = vpop.permute.xlu0 %9602
        %9604 = vrot.lane.b32.xlu0 %v9168, 32
        %v9605 = vpop.permute.xlu0 %9604
        %9606 = vrot.lane.b32.xlu0 %v9169, 32
        %v9607 = vpop.permute.xlu0 %9606
        %9608 = vrot.lane.b32.xlu0 %v9170, 32
        %v9609 = vpop.permute.xlu0 %9608
        %9610 = vrot.lane.b32.xlu0 %v9171, 32
        %v9611 = vpop.permute.xlu0 %9610
        %9612 = vrot.lane.b32.xlu0 %v9172, 32
        %v9613 = vpop.permute.xlu0 %9612
        %9614 = vrot.lane.b32.xlu0 %v9173, 32
        %v9615 = vpop.permute.xlu0 %9614
        %9616 = vrot.lane.b32.xlu0 %v9174, 32
        %v9617 = vpop.permute.xlu0 %9616
        %9618 = vrot.lane.b32.xlu0 %v9175, 32
        %v9619 = vpop.permute.xlu0 %9618
        %9620 = vrot.lane.b32.xlu0 %v9176, 32
        %v9621 = vpop.permute.xlu0 %9620
        %9622 = vrot.lane.b32.xlu0 %v9177, 32
        %v9623 = vpop.permute.xlu0 %9622
        %9624 = vrot.lane.b32.xlu0 %v9178, 32
        %v9625 = vpop.permute.xlu0 %9624
        %9626 = vrot.lane.b32.xlu0 %v9179, 32
        %v9627 = vpop.permute.xlu0 %9626
        %9628 = vrot.lane.b32.xlu0 %v9180, 32
        %v9629 = vpop.permute.xlu0 %9628
        %9662 = vst.msk [vmem:[%s433] sm:$0xff] %vm1838, %v9567
        %9663 = vst.msk [vmem:[%s433 + $0x8] sm:$0xff] %vm1838, %v9569
        %9664 = vst.msk [vmem:[%s433 + $0x10] sm:$0xff] %vm1838, %v9571
        %9665 = vst.msk [vmem:[%s433 + $0x18] sm:$0xff] %vm1838, %v9573
        %9666 = vst.msk [vmem:[%s433 + $0x20] sm:$0xff] %vm1838, %v9575
        %9667 = vst.msk [vmem:[%s433 + $0x28] sm:$0xff] %vm1838, %v9577
        %9668 = vst.msk [vmem:[%s433 + $0x30] sm:$0xff] %vm1838, %v9579
        %9669 = vst.msk [vmem:[%s433 + $0x38] sm:$0xff] %vm1838, %v9581
        %9670 = vst.msk [vmem:[%s433 + $0x40] sm:$0xff] %vm1838, %v9583
        %9671 = vst.msk [vmem:[%s433 + $0x48] sm:$0xff] %vm1838, %v9585
        %9672 = vst.msk [vmem:[%s433 + $0x50] sm:$0xff] %vm1838, %v9587
        %9673 = vst.msk [vmem:[%s433 + $0x58] sm:$0xff] %vm1838, %v9589
        %9674 = vst.msk [vmem:[%s433 + $0x60] sm:$0xff] %vm1838, %v9591
        %9675 = vst.msk [vmem:[%s433 + $0x68] sm:$0xff] %vm1838, %v9593
        %9676 = vst.msk [vmem:[%s433 + $0x70] sm:$0xff] %vm1838, %v9595
        %9677 = vst.msk [vmem:[%s433 + $0x78] sm:$0xff] %vm1838, %v9597
        %9678 = vst.msk [vmem:[%s433 + $0x80] sm:$0xff] %vm1838, %v9599
        %9679 = vst.msk [vmem:[%s433 + $0x88] sm:$0xff] %vm1838, %v9601
        %9680 = vst.msk [vmem:[%s433 + $0x90] sm:$0xff] %vm1838, %v9603
        %9681 = vst.msk [vmem:[%s433 + $0x98] sm:$0xff] %vm1838, %v9605
        %9682 = vst.msk [vmem:[%s433 + $0xa0] sm:$0xff] %vm1838, %v9607
        %9683 = vst.msk [vmem:[%s433 + $0xa8] sm:$0xff] %vm1838, %v9609
        %9684 = vst.msk [vmem:[%s433 + $0xb0] sm:$0xff] %vm1838, %v9611
        %9685 = vst.msk [vmem:[%s433 + $0xb8] sm:$0xff] %vm1838, %v9613
        %9686 = vst.msk [vmem:[%s433 + $0xc0] sm:$0xff] %vm1838, %v9615
        %9687 = vst.msk [vmem:[%s433 + $0xc8] sm:$0xff] %vm1838, %v9617
        %9688 = vst.msk [vmem:[%s433 + $0xd0] sm:$0xff] %vm1838, %v9619
        %9689 = vst.msk [vmem:[%s433 + $0xd8] sm:$0xff] %vm1838, %v9621
        %9690 = vst.msk [vmem:[%s433 + $0xe0] sm:$0xff] %vm1838, %v9623
        %9691 = vst.msk [vmem:[%s433 + $0xe8] sm:$0xff] %vm1838, %v9625
        %9692 = vst.msk [vmem:[%s433 + $0xf0] sm:$0xff] %vm1838, %v9627
        %9693 = vst.msk [vmem:[%s433 + $0xf8] sm:$0xff] %vm1838, %v9629
        %s9694 = sand.u32 %s313, 1
        %s9695 = scalar_lea.sflag [#allocation8], %s9694
        %s9696 = sand.u32 %s313, 1
        %s9697 = smul.addr %s9696, 256
        %s9698 = scalar_lea.vmem [#allocation7], %s9697
        // Predicated region
        $region73: #{inception_forward.1} parent=71 // pred_check
          %p9699 = pneg %p323
        $region74: #{inception_forward.1} parent=71 // pred_check_branch
          %9701 = sbr.rel (%p9699) target = $region76
        $region75: #{inception_forward.1} parent=71 // pred_region
          %s9703 = ssub.s32 4096, 4096
          %9704 = vsyncadd %s9695, %s9703
          %s9705 = smul.addr %s27, 32
          %s9706 = smul.addr %s9705, 128
          %s9707 = scalar_lea.hbm %s13, %s9706
          %s9708 = sshll.u32 %s9698, 4
          %s9709 = int_to_ptr.vmem [resolvable:$true] %s9708
          %9714 = dma.vmem_to_hbm [thread:$0]  %s9709, 4096, %s9707, %s9695, 128, 128, 8
        $region76: #{inception_forward.1} parent=71 // pred_fallthru
          _
      $region72: #{inception_forward.1} parent=5 // pred_fallthru
        _
      %p9715 = scmp.le.s32.totalorder 2, %s22
      // Predicated region
      $region77: #{inception_forward.1} parent=5 // pred_check
        %p9716 = pneg %p9715
      $region78: #{inception_forward.1} parent=5 // pred_check_branch
        %9718 = sbr.rel (%p9716) target = $region80
      $region79: #{inception_forward.1} parent=5 // pred_region
        %s9719 = ssub.s32 %s22, 2
        // Predicated region
        $region81: #{inception_forward.1} parent=79 // pred_check
          %p9720 = pneg %p329
        $region82: #{inception_forward.1} parent=79 // pred_check_branch
          %9722 = sbr.rel (%p9720) target = $region84
        $region83: #{inception_forward.1} parent=79 // pred_region
          %s9723 = sand.u32 %s314, 1
          %s9724 = scalar_lea.sflag [#allocation8], %s9723
          %s9725 = sand.u32 %s314, 1
          %s9726 = smul.addr %s9725, 256
          %s9727 = scalar_lea.vmem [#allocation7], %s9726
          %9728 = dma.done %s9724, 4096
        $region84: #{inception_forward.1} parent=79 // pred_fallthru
          _
      $region80: #{inception_forward.1} parent=5 // pred_fallthru
        _
    $region6: #{inception_forward.1} parent=1 // loop_footer
      %s26 = sadd.s32 1, %s22
    $region7: #{inception_forward.1} parent=1 // loop_footer_branch
      %21 = sbr.rel target = $region3
    $region8: #{inception_forward.1} parent=1 // loop_exit
      _
    %9729 = vsyncpa [#allocation8], 1
    %s9730 = scalar_lea.sflag [#allocation8], 1
    %9731 = vsyncpa %s9730, 1

</llo_original>
